<compile_context>
chip_gen: v7x
topology: tpu7x:2x2x1
jax: 0.10.0
libtpu: 0.0.40
codegen_flags: <defaults>
</compile_context>

<pallas_src>
import functools

import jax
import jax.numpy as jnp
import numpy as np
from jax import lax
from jax.experimental import pallas as pl
from jax.experimental.pallas import tpu as pltpu

LANE = 128   # channel dims are zero-padded to the TPU lane width
_ROW0 = 1    # interior row offset inside scratch buffers (1-row halo)
_COL0 = 8    # interior col offset (sublane-aligned; left halo col is 7)


def _round_up(x, m):
    return ((x + m - 1) // m) * m


# ----------------------------------------------------------------------------
# Parameters (PyTorch layouts), mirroring the nn.Module construction.
# ----------------------------------------------------------------------------
def make_params(key, input_channels, output_channels, upsample_stages):
    conv_channels = [input_channels] + [16 for _ in range(upsample_stages)]
    params = []
    for k in range(upsample_stages):
        key, k1, k2 = jax.random.split(key, 3)
        # ConvTranspose2d(C_k, C_{k+1}, 6, stride=2, padding=2); bias zero-init
        w1 = jax.random.normal(
            k1, (conv_channels[k], conv_channels[k + 1], 6, 6), jnp.float32) * 0.05
        params.append(("tconv", w1,
                       jnp.zeros((conv_channels[k + 1],), jnp.float32), 2, 2))
        # ConvTranspose2d(C_{k+1}, C_{k+1}, 5, stride=1, padding=2); bias zero-init
        w2 = jax.random.normal(
            k2, (conv_channels[k + 1], conv_channels[k + 1], 5, 5), jnp.float32) * 0.05
        params.append(("tconv", w2,
                       jnp.zeros((conv_channels[k + 1],), jnp.float32), 1, 2))
    key, k3 = jax.random.split(key)
    # Conv2d(C_last, output_channels, 5, stride=1, padding=2); bias zero-init
    wf = jax.random.normal(
        k3, (output_channels, conv_channels[-1], 5, 5), jnp.float32) * 0.05
    params.append(("conv", wf, jnp.zeros((output_channels,), jnp.float32), 1, 2))
    return params


# ----------------------------------------------------------------------------
# Exact pull-back of each layer to a 3x3 / pad-1 conv on the base (input) grid.
#
# Phase representation at factor F:  P[m, q, (F*ay+ax)*C + c] = X[F*m+ay, F*q+ax, c].
# For a conv (cross-correlation) or a ConvTranspose2d, the coefficient linking
# input position F_in*(m+s)+a to output position F_out*m+p depends only on
# (p, a, s); scattering the original kernel entries over those triples gives a
# 3x3 conv on the base grid (halo of 1 suffices for every layer of this model;
# this is asserted below).
# ----------------------------------------------------------------------------
def _phase_weight(kind, w, b, stride, padding, f_in):
    w = np.asarray(w, np.float64)
    b = np.asarray(b, np.float64)
    if kind == "tconv":
        cin, cout, kh, kw = w.shape
        f_out = f_in * stride
        coeff = lambda iy, ix: w[:, :, iy, ix]                 # (cin, cout)
        kidx = lambda p, a, s: p + padding - stride * (f_in * s + a)
    else:  # plain Conv2d
        cout, cin, kh, kw = w.shape
        assert stride == 1
        f_out = f_in
        coeff = lambda iy, ix: w[:, :, iy, ix].T               # (cin, cout)
        kidx = lambda p, a, s: (f_in * s + a) - p + padding

    # a 1-pixel halo on the base grid must be enough (|s| <= 1)
    for s in (-2, 2):
        for p in range(f_out):
            for a in range(f_in):
                assert not (0 <= kidx(p, a, s) < kh), "halo of 1 insufficient"

    wp = np.zeros((3, 3, f_in * f_in * cin, f_out * f_out * cout), np.float64)
    for py in range(f_out):
        for px in range(f_out):
            for ay in range(f_in):
                for ax in range(f_in):
                    for sy in (-1, 0, 1):
                        iy = kidx(py, ay, sy)
                        if not (0 <= iy < kh):
                            continue
                        for sx in (-1, 0, 1):
                            ix = kidx(px, ax, sx)
                            if not (0 <= ix < kw):
                                continue
                            ci = (f_in * ay + ax) * cin
                            co = (f_out * py + px) * cout
                            wp[sy + 1, sx + 1,
                               ci:ci + cin, co:co + cout] += coeff(iy, ix)
    bp = np.tile(b, f_out * f_out)
    return wp, bp, f_out


def pack_params(params):
    """Phase-space weights, channel-padded to 128 lanes, K-folded for one dot."""
    f = 1
    layers = []
    n_layers = len(params)
    for idx, (kind, w, b, stride, padding) in enumerate(params):
        wp, bp, f = _phase_weight(kind, w, b, stride, padding, f)
        cin_ph, cout_ph = wp.shape[2], wp.shape[3]
        cin_p, cout_p = _round_up(cin_ph, LANE), _round_up(cout_ph, LANE)
        w_pad = np.zeros((3, 3, cin_p, cout_p), np.float32)
        w_pad[:, :, :cin_ph, :cout_ph] = wp
        b_pad = np.zeros((1, cout_p), np.float32)
        b_pad[0, :cout_ph] = bp
        layers.append(dict(
            # rows ordered (tap=dy*3+dx, channel) to match the in-kernel patch
            w=jnp.asarray(w_pad.reshape(9 * cin_p, cout_p), dtype=jnp.bfloat16),
            b=jnp.asarray(b_pad),                       # f32
            cin_p=cin_p, cout_p=cout_p,
            act="sigmoid" if idx == n_layers - 1 else "relu"))
    for a, nxt in zip(layers[:-1], layers[1:]):
        assert a["cout_p"] == nxt["cin_p"]
    return layers, f


# ----------------------------------------------------------------------------
# The fused kernel: one grid step per batch element, all layers in VMEM.
# ----------------------------------------------------------------------------
def _decoder_kernel(*refs, h0, w0, acts):
    n_layers = len(acts)
    x_ref = refs[0]
    w_refs = [refs[1 + 2 * i] for i in range(n_layers)]
    b_refs = [refs[2 + 2 * i] for i in range(n_layers)]
    o_ref = refs[1 + 2 * n_layers]
    bufs = refs[2 + 2 * n_layers:]
    m = h0 * w0

    # zero-fill keeps every buffer's 1-pixel halo at zero (in-kernel "padding")
    for buf in bufs:
        buf[...] = jnp.zeros_like(buf)
    bufs[0][_ROW0:_ROW0 + h0, _COL0:_COL0 + w0, :] = x_ref[...]

    for li in range(n_layers):
        buf = bufs[li]
        cin_p = buf.shape[-1]
        cout_p = w_refs[li].shape[-1]
        # 3x3 taps, K-concatenated so the whole layer is ONE MXU matmul with
        # K = 9*cin_p and a single accumulator drain.
        taps = [buf[dy:dy + h0, _COL0 - 1 + dx:_COL0 - 1 + dx + w0, :]
                .reshape(m, cin_p)
                for dy in range(3) for dx in range(3)]
        patch = jnp.concatenate(taps, axis=-1).astype(jnp.bfloat16)  # (m, 9*cin_p)
        y = jnp.dot(patch, w_refs[li][...], preferred_element_type=jnp.float32)
        y = y + b_refs[li][...]
        if acts[li] == "sigmoid":
            y = jax.nn.sigmoid(y)
        else:
            y = jnp.maximum(y, 0.0)
        if li + 1 < n_layers:
            bufs[li + 1][_ROW0:_ROW0 + h0, _COL0:_COL0 + w0, :] = (
                y.reshape(h0, w0, cout_p))
        else:
            o_ref[...] = y.reshape(h0, w0, cout_p).astype(o_ref.dtype)


def decoder_pallas(x_pad, layers, h0, w0):
    """x_pad: (N, h0, w0, Cp0) f32.  Returns (N, h0, w0, Cp_last) f32 phase-packed."""
    n = x_pad.shape[0]
    assert x_pad.shape[-1] == layers[0]["cin_p"]
    w_sub = _round_up(w0 + _COL0 + 1, 8)       # halo cols at COL0-1 and COL0+w0
    cout_last = layers[-1]["cout_p"]

    in_specs = [pl.BlockSpec((None, h0, w0, layers[0]["cin_p"]),
                             lambda i: (i, 0, 0, 0))]
    args = [x_pad]
    for L in layers:
        in_specs.append(pl.BlockSpec(L["w"].shape, lambda i: (0, 0)))
        in_specs.append(pl.BlockSpec(L["b"].shape, lambda i: (0, 0)))
        args += [L["w"], L["b"]]

    kern = functools.partial(_decoder_kernel, h0=h0, w0=w0,
                             acts=tuple(L["act"] for L in layers))
    out = pl.pallas_call(
        kern,
        out_shape=jax.ShapeDtypeStruct((n, h0, w0, cout_last), jnp.float32),
        grid_spec=pltpu.PrefetchScalarGridSpec(
            num_scalar_prefetch=0,
            grid=(n,),                              # one step per batch element
            in_specs=in_specs,
            out_specs=pl.BlockSpec((None, h0, w0, cout_last),
                                   lambda i: (i, 0, 0, 0)),
            scratch_shapes=[pltpu.VMEM((h0 + 2, w_sub, L["cin_p"]), jnp.float32)
                            for L in layers]),
        compiler_params=pltpu.CompilerParams(
            dimension_semantics=("parallel",),      # batch across v7x cores
            vmem_limit_bytes=48 * 1024 * 1024),
    )(*args)
    return out


# ----------------------------------------------------------------------------
# Forward pass (wrapper does only tiny layout work on the ends).
# ----------------------------------------------------------------------------
def decoder_forward(x_nchw, layers, f_total, output_channels):
    n, cin, h0, w0 = x_nchw.shape
    cin_p = layers[0]["cin_p"]
    x = jnp.transpose(x_nchw, (0, 2, 3, 1)).astype(jnp.float32)     # NHWC
    x = jnp.pad(x, ((0, 0), (0, 0), (0, 0), (0, cin_p - cin)))
    y = decoder_pallas(x, layers, h0, w0)            # (n, h0, w0, Cp_last)
    # single depth-to-space of the phase-packed final output
    y = y[..., :f_total * f_total * output_channels]
    y = y.reshape(n, h0, w0, f_total, f_total, output_channels)
    y = jnp.transpose(y, (0, 1, 3, 2, 4, 5)).reshape(
        n, f_total * h0, f_total * w0, output_channels)
    return jnp.transpose(y, (0, 3, 1, 2))            # back to NCHW


# ----------------------------------------------------------------------------
# Pure-JAX f32 reference (validation only)
# ----------------------------------------------------------------------------
def ref_forward(x_nchw, params):
    x = jnp.transpose(x_nchw, (0, 2, 3, 1)).astype(jnp.float32)
    n_layers = len(params)
    for idx, (kind, w, b, stride, padding) in enumerate(params):
        if kind == "tconv":
            kh = w.shape[2]
            w_conv = jnp.transpose(w[:, :, ::-1, ::-1], (2, 3, 0, 1))
            pad = kh - 1 - padding
            y = lax.conv_general_dilated(
                x, w_conv, window_strides=(1, 1),
                padding=[(pad, pad), (pad, pad)], lhs_dilation=(stride, stride),
                dimension_numbers=("NHWC", "HWIO", "NHWC"),
                precision=lax.Precision.HIGHEST)
        else:
            w_conv = jnp.transpose(w, (2, 3, 1, 0))
            y = lax.conv_general_dilated(
                x, w_conv, window_strides=(1, 1),
                padding=[(padding, padding), (padding, padding)],
                dimension_numbers=("NHWC", "HWIO", "NHWC"),
                precision=lax.Precision.HIGHEST)
        y = y + b.reshape(1, 1, 1, -1)
        x = jax.nn.sigmoid(y) if idx == n_layers - 1 else jnp.maximum(y, 0.0)
    return jnp.transpose(x, (0, 3, 1, 2))


if __name__ == "__main__":
    key = jax.random.PRNGKey(0)
    kx, kp = jax.random.split(key)

    input_channels = 32      # latent feature dim (32 for StereoNet)
    output_channels = 3      # RGB
    upsample_stages = 2      # 8x8 -> 16x16 -> 32x32
    batch, h, w = 2, 8, 8

    x = jax.random.normal(kx, (batch, input_channels, h, w), jnp.float32)
    params = make_params(kp, input_channels, output_channels, upsample_stages)
    layers, f_total = pack_params(params)
    assert f_total == 2 ** upsample_stages

    fwd = jax.jit(lambda inp: decoder_forward(inp, layers, f_total, output_channels))
    out = jax.block_until_ready(fwd(x))

    expected = (batch, output_channels, h * (2 ** upsample_stages),
                w * (2 ** upsample_stages))
    assert out.shape == expected, (out.shape, expected)
    assert bool(jnp.all((out >= 0.0) & (out <= 1.0)))        # sigmoid range

    ref = jax.block_until_ready(ref_forward(x, params))
    max_err = float(jnp.max(jnp.abs(out - ref)))
    assert max_err < 3e-2, f"max abs err vs f32 reference: {max_err}"
    print("KERNEL_OK")
</pallas_src>

<mosaic_0001>
module attributes {stable_mosaic.version = 11 : i64} {
  func.func @_decoder_kernel(%arg0: i32, %arg1: memref<1x8x8x128xf32, #tpu.memory_space<vmem>>, %arg2: memref<1152x128xbf16, #tpu.memory_space<vmem>>, %arg3: memref<1x128xf32, #tpu.memory_space<vmem>>, %arg4: memref<1152x128xbf16, #tpu.memory_space<vmem>>, %arg5: memref<1x128xf32, #tpu.memory_space<vmem>>, %arg6: memref<1152x256xbf16, #tpu.memory_space<vmem>>, %arg7: memref<1x256xf32, #tpu.memory_space<vmem>>, %arg8: memref<2304x256xbf16, #tpu.memory_space<vmem>>, %arg9: memref<1x256xf32, #tpu.memory_space<vmem>>, %arg10: memref<2304x128xbf16, #tpu.memory_space<vmem>>, %arg11: memref<1x128xf32, #tpu.memory_space<vmem>>, %arg12: memref<1x8x8x128xf32, #tpu.memory_space<vmem>>, %arg13: memref<10x24x128xf32, #tpu.memory_space<vmem>>, %arg14: memref<10x24x128xf32, #tpu.memory_space<vmem>>, %arg15: memref<10x24x128xf32, #tpu.memory_space<vmem>>, %arg16: memref<10x24x256xf32, #tpu.memory_space<vmem>>, %arg17: memref<10x24x256xf32, #tpu.memory_space<vmem>>) attributes {dimension_semantics = [#tpu.dimension_semantics<parallel>], iteration_bounds = array<i64: 2>, scalar_prefetch = 0 : i64, scratch_operands = 5 : i64, tpu.core_type = #tpu.core_type<tc>, window_params = [{transform_indices = @transform_0, window_bounds = array<i64: 1, 8, 8, 128>}, {pipeline_mode = #tpu.pipeline_mode<synchronous>, transform_indices = @transform_1, window_bounds = array<i64: 1152, 128>}, {pipeline_mode = #tpu.pipeline_mode<synchronous>, transform_indices = @transform_2, window_bounds = array<i64: 1, 128>}, {pipeline_mode = #tpu.pipeline_mode<synchronous>, transform_indices = @transform_3, window_bounds = array<i64: 1152, 128>}, {pipeline_mode = #tpu.pipeline_mode<synchronous>, transform_indices = @transform_4, window_bounds = array<i64: 1, 128>}, {pipeline_mode = #tpu.pipeline_mode<synchronous>, transform_indices = @transform_5, window_bounds = array<i64: 1152, 256>}, {pipeline_mode = #tpu.pipeline_mode<synchronous>, transform_indices = @transform_6, window_bounds = array<i64: 1, 256>}, {pipeline_mode = #tpu.pipeline_mode<synchronous>, transform_indices = @transform_7, window_bounds = array<i64: 2304, 256>}, {pipeline_mode = #tpu.pipeline_mode<synchronous>, transform_indices = @transform_8, window_bounds = array<i64: 1, 256>}, {pipeline_mode = #tpu.pipeline_mode<synchronous>, transform_indices = @transform_9, window_bounds = array<i64: 2304, 128>}, {pipeline_mode = #tpu.pipeline_mode<synchronous>, transform_indices = @transform_10, window_bounds = array<i64: 1, 128>}, {transform_indices = @transform_11, window_bounds = array<i64: 1, 8, 8, 128>}]} {
    %cst = arith.constant 0.000000e+00 : f32
    %0 = vector.broadcast %cst : f32 to vector<10x24x128xf32>
    %c0 = arith.constant 0 : index
    %c0_0 = arith.constant 0 : index
    %c0_1 = arith.constant 0 : index
    %1 = vector.load %arg13[%c0, %c0_0, %c0_1] : memref<10x24x128xf32, #tpu.memory_space<vmem>>, vector<10x24x128xf32>
    tpu.vector_store %arg13[%c0, %c0_0, %c0_1], %0 {strides = array<i32>} : memref<10x24x128xf32, #tpu.memory_space<vmem>>, vector<10x24x128xf32>,
    %cst_2 = arith.constant 0.000000e+00 : f32
    %2 = vector.broadcast %cst_2 : f32 to vector<10x24x128xf32>
    %c0_3 = arith.constant 0 : index
    %c0_4 = arith.constant 0 : index
    %c0_5 = arith.constant 0 : index
    %3 = vector.load %arg14[%c0_3, %c0_4, %c0_5] : memref<10x24x128xf32, #tpu.memory_space<vmem>>, vector<10x24x128xf32>
    tpu.vector_store %arg14[%c0_3, %c0_4, %c0_5], %2 {strides = array<i32>} : memref<10x24x128xf32, #tpu.memory_space<vmem>>, vector<10x24x128xf32>,
    %cst_6 = arith.constant 0.000000e+00 : f32
    %4 = vector.broadcast %cst_6 : f32 to vector<10x24x128xf32>
    %c0_7 = arith.constant 0 : index
    %c0_8 = arith.constant 0 : index
    %c0_9 = arith.constant 0 : index
    %5 = vector.load %arg15[%c0_7, %c0_8, %c0_9] : memref<10x24x128xf32, #tpu.memory_space<vmem>>, vector<10x24x128xf32>
    tpu.vector_store %arg15[%c0_7, %c0_8, %c0_9], %4 {strides = array<i32>} : memref<10x24x128xf32, #tpu.memory_space<vmem>>, vector<10x24x128xf32>,
    %cst_10 = arith.constant 0.000000e+00 : f32
    %6 = vector.broadcast %cst_10 : f32 to vector<10x24x256xf32>
    %c0_11 = arith.constant 0 : index
    %c0_12 = arith.constant 0 : index
    %c0_13 = arith.constant 0 : index
    %7 = vector.load %arg16[%c0_11, %c0_12, %c0_13] : memref<10x24x256xf32, #tpu.memory_space<vmem>>, vector<10x24x256xf32>
    tpu.vector_store %arg16[%c0_11, %c0_12, %c0_13], %6 {strides = array<i32>} : memref<10x24x256xf32, #tpu.memory_space<vmem>>, vector<10x24x256xf32>,
    %cst_14 = arith.constant 0.000000e+00 : f32
    %8 = vector.broadcast %cst_14 : f32 to vector<10x24x256xf32>
    %c0_15 = arith.constant 0 : index
    %c0_16 = arith.constant 0 : index
    %c0_17 = arith.constant 0 : index
    %9 = vector.load %arg17[%c0_15, %c0_16, %c0_17] : memref<10x24x256xf32, #tpu.memory_space<vmem>>, vector<10x24x256xf32>
    tpu.vector_store %arg17[%c0_15, %c0_16, %c0_17], %8 {strides = array<i32>} : memref<10x24x256xf32, #tpu.memory_space<vmem>>, vector<10x24x256xf32>,
    %c0_18 = arith.constant 0 : index
    %c0_19 = arith.constant 0 : index
    %c0_20 = arith.constant 0 : index
    %c0_21 = arith.constant 0 : index
    %10 = vector.load %arg1[%c0_18, %c0_19, %c0_20, %c0_21] : memref<1x8x8x128xf32, #tpu.memory_space<vmem>>, vector<1x8x8x128xf32>
    %11 = vector.shape_cast %10 : vector<1x8x8x128xf32> to vector<8x8x128xf32>
    %c1 = arith.constant 1 : index
    %c8 = arith.constant 8 : index
    %c0_22 = arith.constant 0 : index
    %12 = vector.load %arg13[%c1, %c8, %c0_22] : memref<10x24x128xf32, #tpu.memory_space<vmem>>, vector<8x8x128xf32>
    tpu.vector_store %arg13[%c1, %c8, %c0_22], %11 {strides = array<i32>} : memref<10x24x128xf32, #tpu.memory_space<vmem>>, vector<8x8x128xf32>,
    %c0_23 = arith.constant 0 : index
    %c7 = arith.constant 7 : index
    %c0_24 = arith.constant 0 : index
    %13 = vector.load %arg13[%c0_23, %c7, %c0_24] : memref<10x24x128xf32, #tpu.memory_space<vmem>>, vector<8x8x128xf32>
    %14 = vector.shape_cast %13 : vector<8x8x128xf32> to vector<64x128xf32>
    %c0_25 = arith.constant 0 : index
    %c8_26 = arith.constant 8 : index
    %c0_27 = arith.constant 0 : index
    %15 = vector.load %arg13[%c0_25, %c8_26, %c0_27] : memref<10x24x128xf32, #tpu.memory_space<vmem>>, vector<8x8x128xf32>
    %16 = vector.shape_cast %15 : vector<8x8x128xf32> to vector<64x128xf32>
    %c0_28 = arith.constant 0 : index
    %c9 = arith.constant 9 : index
    %c0_29 = arith.constant 0 : index
    %17 = vector.load %arg13[%c0_28, %c9, %c0_29] : memref<10x24x128xf32, #tpu.memory_space<vmem>>, vector<8x8x128xf32>
    %18 = vector.shape_cast %17 : vector<8x8x128xf32> to vector<64x128xf32>
    %c1_30 = arith.constant 1 : index
    %c7_31 = arith.constant 7 : index
    %c0_32 = arith.constant 0 : index
    %19 = vector.load %arg13[%c1_30, %c7_31, %c0_32] : memref<10x24x128xf32, #tpu.memory_space<vmem>>, vector<8x8x128xf32>
    %20 = vector.shape_cast %19 : vector<8x8x128xf32> to vector<64x128xf32>
    %c1_33 = arith.constant 1 : index
    %c8_34 = arith.constant 8 : index
    %c0_35 = arith.constant 0 : index
    %21 = vector.load %arg13[%c1_33, %c8_34, %c0_35] : memref<10x24x128xf32, #tpu.memory_space<vmem>>, vector<8x8x128xf32>
    %22 = vector.shape_cast %21 : vector<8x8x128xf32> to vector<64x128xf32>
    %c1_36 = arith.constant 1 : index
    %c9_37 = arith.constant 9 : index
    %c0_38 = arith.constant 0 : index
    %23 = vector.load %arg13[%c1_36, %c9_37, %c0_38] : memref<10x24x128xf32, #tpu.memory_space<vmem>>, vector<8x8x128xf32>
    %24 = vector.shape_cast %23 : vector<8x8x128xf32> to vector<64x128xf32>
    %c2 = arith.constant 2 : index
    %c7_39 = arith.constant 7 : index
    %c0_40 = arith.constant 0 : index
    %25 = vector.load %arg13[%c2, %c7_39, %c0_40] : memref<10x24x128xf32, #tpu.memory_space<vmem>>, vector<8x8x128xf32>
    %26 = vector.shape_cast %25 : vector<8x8x128xf32> to vector<64x128xf32>
    %c2_41 = arith.constant 2 : index
    %c8_42 = arith.constant 8 : index
    %c0_43 = arith.constant 0 : index
    %27 = vector.load %arg13[%c2_41, %c8_42, %c0_43] : memref<10x24x128xf32, #tpu.memory_space<vmem>>, vector<8x8x128xf32>
    %28 = vector.shape_cast %27 : vector<8x8x128xf32> to vector<64x128xf32>
    %c2_44 = arith.constant 2 : index
    %c9_45 = arith.constant 9 : index
    %c0_46 = arith.constant 0 : index
    %29 = vector.load %arg13[%c2_44, %c9_45, %c0_46] : memref<10x24x128xf32, #tpu.memory_space<vmem>>, vector<8x8x128xf32>
    %30 = vector.shape_cast %29 : vector<8x8x128xf32> to vector<64x128xf32>
    %31 = tpu.concatenate %14, %16, %18, %20, %22, %24, %26, %28, %30 in 1 : vector<64x128xf32>, vector<64x128xf32>, vector<64x128xf32>, vector<64x128xf32>, vector<64x128xf32>, vector<64x128xf32>, vector<64x128xf32>, vector<64x128xf32>, vector<64x128xf32> -> vector<64x1152xf32>
    %32 = arith.truncf %31 : vector<64x1152xf32> to vector<64x1152xbf16>
    %c0_47 = arith.constant 0 : index
    %c0_48 = arith.constant 0 : index
    %33 = vector.load %arg2[%c0_47, %c0_48] : memref<1152x128xbf16, #tpu.memory_space<vmem>>, vector<1152x128xbf16>
    %cst_49 = arith.constant dense<0.000000e+00> : vector<64x128xf32>
    %34 = tpu.matmul %32, %33, %cst_49 {dimension_numbers = #tpu.dot_dimension_numbers<[1], [0], [0], [1], [0, 0, 1, 1], [], []>} : vector<64x1152xbf16>, vector<1152x128xbf16>, vector<64x128xf32> -> vector<64x128xf32>
    %c0_50 = arith.constant 0 : index
    %c0_51 = arith.constant 0 : index
    %35 = vector.load %arg3[%c0_50, %c0_51] : memref<1x128xf32, #tpu.memory_space<vmem>>, vector<1x128xf32>
    %36 = vector.broadcast %35 : vector<1x128xf32> to vector<64x128xf32>
    %37 = arith.addf %34, %36 : vector<64x128xf32>
    %cst_52 = arith.constant 0.000000e+00 : f32
    %38 = vector.broadcast %cst_52 : f32 to vector<64x128xf32>
    %39 = arith.maximumf %37, %38 : vector<64x128xf32>
    %40 = vector.shape_cast %39 : vector<64x128xf32> to vector<8x8x128xf32>
    %c1_53 = arith.constant 1 : index
    %c8_54 = arith.constant 8 : index
    %c0_55 = arith.constant 0 : index
    %41 = vector.load %arg14[%c1_53, %c8_54, %c0_55] : memref<10x24x128xf32, #tpu.memory_space<vmem>>, vector<8x8x128xf32>
    tpu.vector_store %arg14[%c1_53, %c8_54, %c0_55], %40 {strides = array<i32>} : memref<10x24x128xf32, #tpu.memory_space<vmem>>, vector<8x8x128xf32>,
    %c0_56 = arith.constant 0 : index
    %c7_57 = arith.constant 7 : index
    %c0_58 = arith.constant 0 : index
    %42 = vector.load %arg14[%c0_56, %c7_57, %c0_58] : memref<10x24x128xf32, #tpu.memory_space<vmem>>, vector<8x8x128xf32>
    %43 = vector.shape_cast %42 : vector<8x8x128xf32> to vector<64x128xf32>
    %c0_59 = arith.constant 0 : index
    %c8_60 = arith.constant 8 : index
    %c0_61 = arith.constant 0 : index
    %44 = vector.load %arg14[%c0_59, %c8_60, %c0_61] : memref<10x24x128xf32, #tpu.memory_space<vmem>>, vector<8x8x128xf32>
    %45 = vector.shape_cast %44 : vector<8x8x128xf32> to vector<64x128xf32>
    %c0_62 = arith.constant 0 : index
    %c9_63 = arith.constant 9 : index
    %c0_64 = arith.constant 0 : index
    %46 = vector.load %arg14[%c0_62, %c9_63, %c0_64] : memref<10x24x128xf32, #tpu.memory_space<vmem>>, vector<8x8x128xf32>
    %47 = vector.shape_cast %46 : vector<8x8x128xf32> to vector<64x128xf32>
    %c1_65 = arith.constant 1 : index
    %c7_66 = arith.constant 7 : index
    %c0_67 = arith.constant 0 : index
    %48 = vector.load %arg14[%c1_65, %c7_66, %c0_67] : memref<10x24x128xf32, #tpu.memory_space<vmem>>, vector<8x8x128xf32>
    %49 = vector.shape_cast %48 : vector<8x8x128xf32> to vector<64x128xf32>
    %c1_68 = arith.constant 1 : index
    %c8_69 = arith.constant 8 : index
    %c0_70 = arith.constant 0 : index
    %50 = vector.load %arg14[%c1_68, %c8_69, %c0_70] : memref<10x24x128xf32, #tpu.memory_space<vmem>>, vector<8x8x128xf32>
    %51 = vector.shape_cast %50 : vector<8x8x128xf32> to vector<64x128xf32>
    %c1_71 = arith.constant 1 : index
    %c9_72 = arith.constant 9 : index
    %c0_73 = arith.constant 0 : index
    %52 = vector.load %arg14[%c1_71, %c9_72, %c0_73] : memref<10x24x128xf32, #tpu.memory_space<vmem>>, vector<8x8x128xf32>
    %53 = vector.shape_cast %52 : vector<8x8x128xf32> to vector<64x128xf32>
    %c2_74 = arith.constant 2 : index
    %c7_75 = arith.constant 7 : index
    %c0_76 = arith.constant 0 : index
    %54 = vector.load %arg14[%c2_74, %c7_75, %c0_76] : memref<10x24x128xf32, #tpu.memory_space<vmem>>, vector<8x8x128xf32>
    %55 = vector.shape_cast %54 : vector<8x8x128xf32> to vector<64x128xf32>
    %c2_77 = arith.constant 2 : index
    %c8_78 = arith.constant 8 : index
    %c0_79 = arith.constant 0 : index
    %56 = vector.load %arg14[%c2_77, %c8_78, %c0_79] : memref<10x24x128xf32, #tpu.memory_space<vmem>>, vector<8x8x128xf32>
    %57 = vector.shape_cast %56 : vector<8x8x128xf32> to vector<64x128xf32>
    %c2_80 = arith.constant 2 : index
    %c9_81 = arith.constant 9 : index
    %c0_82 = arith.constant 0 : index
    %58 = vector.load %arg14[%c2_80, %c9_81, %c0_82] : memref<10x24x128xf32, #tpu.memory_space<vmem>>, vector<8x8x128xf32>
    %59 = vector.shape_cast %58 : vector<8x8x128xf32> to vector<64x128xf32>
    %60 = tpu.concatenate %43, %45, %47, %49, %51, %53, %55, %57, %59 in 1 : vector<64x128xf32>, vector<64x128xf32>, vector<64x128xf32>, vector<64x128xf32>, vector<64x128xf32>, vector<64x128xf32>, vector<64x128xf32>, vector<64x128xf32>, vector<64x128xf32> -> vector<64x1152xf32>
    %61 = arith.truncf %60 : vector<64x1152xf32> to vector<64x1152xbf16>
    %c0_83 = arith.constant 0 : index
    %c0_84 = arith.constant 0 : index
    %62 = vector.load %arg4[%c0_83, %c0_84] : memref<1152x128xbf16, #tpu.memory_space<vmem>>, vector<1152x128xbf16>
    %cst_85 = arith.constant dense<0.000000e+00> : vector<64x128xf32>
    %63 = tpu.matmul %61, %62, %cst_85 {dimension_numbers = #tpu.dot_dimension_numbers<[1], [0], [0], [1], [0, 0, 1, 1], [], []>} : vector<64x1152xbf16>, vector<1152x128xbf16>, vector<64x128xf32> -> vector<64x128xf32>
    %c0_86 = arith.constant 0 : index
    %c0_87 = arith.constant 0 : index
    %64 = vector.load %arg5[%c0_86, %c0_87] : memref<1x128xf32, #tpu.memory_space<vmem>>, vector<1x128xf32>
    %65 = vector.broadcast %64 : vector<1x128xf32> to vector<64x128xf32>
    %66 = arith.addf %63, %65 : vector<64x128xf32>
    %cst_88 = arith.constant 0.000000e+00 : f32
    %67 = vector.broadcast %cst_88 : f32 to vector<64x128xf32>
    %68 = arith.maximumf %66, %67 : vector<64x128xf32>
    %69 = vector.shape_cast %68 : vector<64x128xf32> to vector<8x8x128xf32>
    %c1_89 = arith.constant 1 : index
    %c8_90 = arith.constant 8 : index
    %c0_91 = arith.constant 0 : index
    %70 = vector.load %arg15[%c1_89, %c8_90, %c0_91] : memref<10x24x128xf32, #tpu.memory_space<vmem>>, vector<8x8x128xf32>
    tpu.vector_store %arg15[%c1_89, %c8_90, %c0_91], %69 {strides = array<i32>} : memref<10x24x128xf32, #tpu.memory_space<vmem>>, vector<8x8x128xf32>,
    %c0_92 = arith.constant 0 : index
    %c7_93 = arith.constant 7 : index
    %c0_94 = arith.constant 0 : index
    %71 = vector.load %arg15[%c0_92, %c7_93, %c0_94] : memref<10x24x128xf32, #tpu.memory_space<vmem>>, vector<8x8x128xf32>
    %72 = vector.shape_cast %71 : vector<8x8x128xf32> to vector<64x128xf32>
    %c0_95 = arith.constant 0 : index
    %c8_96 = arith.constant 8 : index
    %c0_97 = arith.constant 0 : index
    %73 = vector.load %arg15[%c0_95, %c8_96, %c0_97] : memref<10x24x128xf32, #tpu.memory_space<vmem>>, vector<8x8x128xf32>
    %74 = vector.shape_cast %73 : vector<8x8x128xf32> to vector<64x128xf32>
    %c0_98 = arith.constant 0 : index
    %c9_99 = arith.constant 9 : index
    %c0_100 = arith.constant 0 : index
    %75 = vector.load %arg15[%c0_98, %c9_99, %c0_100] : memref<10x24x128xf32, #tpu.memory_space<vmem>>, vector<8x8x128xf32>
    %76 = vector.shape_cast %75 : vector<8x8x128xf32> to vector<64x128xf32>
    %c1_101 = arith.constant 1 : index
    %c7_102 = arith.constant 7 : index
    %c0_103 = arith.constant 0 : index
    %77 = vector.load %arg15[%c1_101, %c7_102, %c0_103] : memref<10x24x128xf32, #tpu.memory_space<vmem>>, vector<8x8x128xf32>
    %78 = vector.shape_cast %77 : vector<8x8x128xf32> to vector<64x128xf32>
    %c1_104 = arith.constant 1 : index
    %c8_105 = arith.constant 8 : index
    %c0_106 = arith.constant 0 : index
    %79 = vector.load %arg15[%c1_104, %c8_105, %c0_106] : memref<10x24x128xf32, #tpu.memory_space<vmem>>, vector<8x8x128xf32>
    %80 = vector.shape_cast %79 : vector<8x8x128xf32> to vector<64x128xf32>
    %c1_107 = arith.constant 1 : index
    %c9_108 = arith.constant 9 : index
    %c0_109 = arith.constant 0 : index
    %81 = vector.load %arg15[%c1_107, %c9_108, %c0_109] : memref<10x24x128xf32, #tpu.memory_space<vmem>>, vector<8x8x128xf32>
    %82 = vector.shape_cast %81 : vector<8x8x128xf32> to vector<64x128xf32>
    %c2_110 = arith.constant 2 : index
    %c7_111 = arith.constant 7 : index
    %c0_112 = arith.constant 0 : index
    %83 = vector.load %arg15[%c2_110, %c7_111, %c0_112] : memref<10x24x128xf32, #tpu.memory_space<vmem>>, vector<8x8x128xf32>
    %84 = vector.shape_cast %83 : vector<8x8x128xf32> to vector<64x128xf32>
    %c2_113 = arith.constant 2 : index
    %c8_114 = arith.constant 8 : index
    %c0_115 = arith.constant 0 : index
    %85 = vector.load %arg15[%c2_113, %c8_114, %c0_115] : memref<10x24x128xf32, #tpu.memory_space<vmem>>, vector<8x8x128xf32>
    %86 = vector.shape_cast %85 : vector<8x8x128xf32> to vector<64x128xf32>
    %c2_116 = arith.constant 2 : index
    %c9_117 = arith.constant 9 : index
    %c0_118 = arith.constant 0 : index
    %87 = vector.load %arg15[%c2_116, %c9_117, %c0_118] : memref<10x24x128xf32, #tpu.memory_space<vmem>>, vector<8x8x128xf32>
    %88 = vector.shape_cast %87 : vector<8x8x128xf32> to vector<64x128xf32>
    %89 = tpu.concatenate %72, %74, %76, %78, %80, %82, %84, %86, %88 in 1 : vector<64x128xf32>, vector<64x128xf32>, vector<64x128xf32>, vector<64x128xf32>, vector<64x128xf32>, vector<64x128xf32>, vector<64x128xf32>, vector<64x128xf32>, vector<64x128xf32> -> vector<64x1152xf32>
    %90 = arith.truncf %89 : vector<64x1152xf32> to vector<64x1152xbf16>
    %c0_119 = arith.constant 0 : index
    %c0_120 = arith.constant 0 : index
    %91 = vector.load %arg6[%c0_119, %c0_120] : memref<1152x256xbf16, #tpu.memory_space<vmem>>, vector<1152x256xbf16>
    %cst_121 = arith.constant dense<0.000000e+00> : vector<64x256xf32>
    %92 = tpu.matmul %90, %91, %cst_121 {dimension_numbers = #tpu.dot_dimension_numbers<[1], [0], [0], [1], [0, 0, 1, 1], [], []>} : vector<64x1152xbf16>, vector<1152x256xbf16>, vector<64x256xf32> -> vector<64x256xf32>
    %c0_122 = arith.constant 0 : index
    %c0_123 = arith.constant 0 : index
    %93 = vector.load %arg7[%c0_122, %c0_123] : memref<1x256xf32, #tpu.memory_space<vmem>>, vector<1x256xf32>
    %94 = vector.broadcast %93 : vector<1x256xf32> to vector<64x256xf32>
    %95 = arith.addf %92, %94 : vector<64x256xf32>
    %cst_124 = arith.constant 0.000000e+00 : f32
    %96 = vector.broadcast %cst_124 : f32 to vector<64x256xf32>
    %97 = arith.maximumf %95, %96 : vector<64x256xf32>
    %98 = vector.shape_cast %97 : vector<64x256xf32> to vector<8x8x256xf32>
    %c1_125 = arith.constant 1 : index
    %c8_126 = arith.constant 8 : index
    %c0_127 = arith.constant 0 : index
    %99 = vector.load %arg16[%c1_125, %c8_126, %c0_127] : memref<10x24x256xf32, #tpu.memory_space<vmem>>, vector<8x8x256xf32>
    tpu.vector_store %arg16[%c1_125, %c8_126, %c0_127], %98 {strides = array<i32>} : memref<10x24x256xf32, #tpu.memory_space<vmem>>, vector<8x8x256xf32>,
    %c0_128 = arith.constant 0 : index
    %c7_129 = arith.constant 7 : index
    %c0_130 = arith.constant 0 : index
    %100 = vector.load %arg16[%c0_128, %c7_129, %c0_130] : memref<10x24x256xf32, #tpu.memory_space<vmem>>, vector<8x8x256xf32>
    %101 = vector.shape_cast %100 : vector<8x8x256xf32> to vector<64x256xf32>
    %c0_131 = arith.constant 0 : index
    %c8_132 = arith.constant 8 : index
    %c0_133 = arith.constant 0 : index
    %102 = vector.load %arg16[%c0_131, %c8_132, %c0_133] : memref<10x24x256xf32, #tpu.memory_space<vmem>>, vector<8x8x256xf32>
    %103 = vector.shape_cast %102 : vector<8x8x256xf32> to vector<64x256xf32>
    %c0_134 = arith.constant 0 : index
    %c9_135 = arith.constant 9 : index
    %c0_136 = arith.constant 0 : index
    %104 = vector.load %arg16[%c0_134, %c9_135, %c0_136] : memref<10x24x256xf32, #tpu.memory_space<vmem>>, vector<8x8x256xf32>
    %105 = vector.shape_cast %104 : vector<8x8x256xf32> to vector<64x256xf32>
    %c1_137 = arith.constant 1 : index
    %c7_138 = arith.constant 7 : index
    %c0_139 = arith.constant 0 : index
    %106 = vector.load %arg16[%c1_137, %c7_138, %c0_139] : memref<10x24x256xf32, #tpu.memory_space<vmem>>, vector<8x8x256xf32>
    %107 = vector.shape_cast %106 : vector<8x8x256xf32> to vector<64x256xf32>
    %c1_140 = arith.constant 1 : index
    %c8_141 = arith.constant 8 : index
    %c0_142 = arith.constant 0 : index
    %108 = vector.load %arg16[%c1_140, %c8_141, %c0_142] : memref<10x24x256xf32, #tpu.memory_space<vmem>>, vector<8x8x256xf32>
    %109 = vector.shape_cast %108 : vector<8x8x256xf32> to vector<64x256xf32>
    %c1_143 = arith.constant 1 : index
    %c9_144 = arith.constant 9 : index
    %c0_145 = arith.constant 0 : index
    %110 = vector.load %arg16[%c1_143, %c9_144, %c0_145] : memref<10x24x256xf32, #tpu.memory_space<vmem>>, vector<8x8x256xf32>
    %111 = vector.shape_cast %110 : vector<8x8x256xf32> to vector<64x256xf32>
    %c2_146 = arith.constant 2 : index
    %c7_147 = arith.constant 7 : index
    %c0_148 = arith.constant 0 : index
    %112 = vector.load %arg16[%c2_146, %c7_147, %c0_148] : memref<10x24x256xf32, #tpu.memory_space<vmem>>, vector<8x8x256xf32>
    %113 = vector.shape_cast %112 : vector<8x8x256xf32> to vector<64x256xf32>
    %c2_149 = arith.constant 2 : index
    %c8_150 = arith.constant 8 : index
    %c0_151 = arith.constant 0 : index
    %114 = vector.load %arg16[%c2_149, %c8_150, %c0_151] : memref<10x24x256xf32, #tpu.memory_space<vmem>>, vector<8x8x256xf32>
    %115 = vector.shape_cast %114 : vector<8x8x256xf32> to vector<64x256xf32>
    %c2_152 = arith.constant 2 : index
    %c9_153 = arith.constant 9 : index
    %c0_154 = arith.constant 0 : index
    %116 = vector.load %arg16[%c2_152, %c9_153, %c0_154] : memref<10x24x256xf32, #tpu.memory_space<vmem>>, vector<8x8x256xf32>
    %117 = vector.shape_cast %116 : vector<8x8x256xf32> to vector<64x256xf32>
    %118 = tpu.concatenate %101, %103, %105, %107, %109, %111, %113, %115, %117 in 1 : vector<64x256xf32>, vector<64x256xf32>, vector<64x256xf32>, vector<64x256xf32>, vector<64x256xf32>, vector<64x256xf32>, vector<64x256xf32>, vector<64x256xf32>, vector<64x256xf32> -> vector<64x2304xf32>
    %119 = arith.truncf %118 : vector<64x2304xf32> to vector<64x2304xbf16>
    %c0_155 = arith.constant 0 : index
    %c0_156 = arith.constant 0 : index
    %120 = vector.load %arg8[%c0_155, %c0_156] : memref<2304x256xbf16, #tpu.memory_space<vmem>>, vector<2304x256xbf16>
    %cst_157 = arith.constant dense<0.000000e+00> : vector<64x256xf32>
    %121 = tpu.matmul %119, %120, %cst_157 {dimension_numbers = #tpu.dot_dimension_numbers<[1], [0], [0], [1], [0, 0, 1, 1], [], []>} : vector<64x2304xbf16>, vector<2304x256xbf16>, vector<64x256xf32> -> vector<64x256xf32>
    %c0_158 = arith.constant 0 : index
    %c0_159 = arith.constant 0 : index
    %122 = vector.load %arg9[%c0_158, %c0_159] : memref<1x256xf32, #tpu.memory_space<vmem>>, vector<1x256xf32>
    %123 = vector.broadcast %122 : vector<1x256xf32> to vector<64x256xf32>
    %124 = arith.addf %121, %123 : vector<64x256xf32>
    %cst_160 = arith.constant 0.000000e+00 : f32
    %125 = vector.broadcast %cst_160 : f32 to vector<64x256xf32>
    %126 = arith.maximumf %124, %125 : vector<64x256xf32>
    %127 = vector.shape_cast %126 : vector<64x256xf32> to vector<8x8x256xf32>
    %c1_161 = arith.constant 1 : index
    %c8_162 = arith.constant 8 : index
    %c0_163 = arith.constant 0 : index
    %128 = vector.load %arg17[%c1_161, %c8_162, %c0_163] : memref<10x24x256xf32, #tpu.memory_space<vmem>>, vector<8x8x256xf32>
    tpu.vector_store %arg17[%c1_161, %c8_162, %c0_163], %127 {strides = array<i32>} : memref<10x24x256xf32, #tpu.memory_space<vmem>>, vector<8x8x256xf32>,
    %c0_164 = arith.constant 0 : index
    %c7_165 = arith.constant 7 : index
    %c0_166 = arith.constant 0 : index
    %129 = vector.load %arg17[%c0_164, %c7_165, %c0_166] : memref<10x24x256xf32, #tpu.memory_space<vmem>>, vector<8x8x256xf32>
    %130 = vector.shape_cast %129 : vector<8x8x256xf32> to vector<64x256xf32>
    %c0_167 = arith.constant 0 : index
    %c8_168 = arith.constant 8 : index
    %c0_169 = arith.constant 0 : index
    %131 = vector.load %arg17[%c0_167, %c8_168, %c0_169] : memref<10x24x256xf32, #tpu.memory_space<vmem>>, vector<8x8x256xf32>
    %132 = vector.shape_cast %131 : vector<8x8x256xf32> to vector<64x256xf32>
    %c0_170 = arith.constant 0 : index
    %c9_171 = arith.constant 9 : index
    %c0_172 = arith.constant 0 : index
    %133 = vector.load %arg17[%c0_170, %c9_171, %c0_172] : memref<10x24x256xf32, #tpu.memory_space<vmem>>, vector<8x8x256xf32>
    %134 = vector.shape_cast %133 : vector<8x8x256xf32> to vector<64x256xf32>
    %c1_173 = arith.constant 1 : index
    %c7_174 = arith.constant 7 : index
    %c0_175 = arith.constant 0 : index
    %135 = vector.load %arg17[%c1_173, %c7_174, %c0_175] : memref<10x24x256xf32, #tpu.memory_space<vmem>>, vector<8x8x256xf32>
    %136 = vector.shape_cast %135 : vector<8x8x256xf32> to vector<64x256xf32>
    %c1_176 = arith.constant 1 : index
    %c8_177 = arith.constant 8 : index
    %c0_178 = arith.constant 0 : index
    %137 = vector.load %arg17[%c1_176, %c8_177, %c0_178] : memref<10x24x256xf32, #tpu.memory_space<vmem>>, vector<8x8x256xf32>
    %138 = vector.shape_cast %137 : vector<8x8x256xf32> to vector<64x256xf32>
    %c1_179 = arith.constant 1 : index
    %c9_180 = arith.constant 9 : index
    %c0_181 = arith.constant 0 : index
    %139 = vector.load %arg17[%c1_179, %c9_180, %c0_181] : memref<10x24x256xf32, #tpu.memory_space<vmem>>, vector<8x8x256xf32>
    %140 = vector.shape_cast %139 : vector<8x8x256xf32> to vector<64x256xf32>
    %c2_182 = arith.constant 2 : index
    %c7_183 = arith.constant 7 : index
    %c0_184 = arith.constant 0 : index
    %141 = vector.load %arg17[%c2_182, %c7_183, %c0_184] : memref<10x24x256xf32, #tpu.memory_space<vmem>>, vector<8x8x256xf32>
    %142 = vector.shape_cast %141 : vector<8x8x256xf32> to vector<64x256xf32>
    %c2_185 = arith.constant 2 : index
    %c8_186 = arith.constant 8 : index
    %c0_187 = arith.constant 0 : index
    %143 = vector.load %arg17[%c2_185, %c8_186, %c0_187] : memref<10x24x256xf32, #tpu.memory_space<vmem>>, vector<8x8x256xf32>
    %144 = vector.shape_cast %143 : vector<8x8x256xf32> to vector<64x256xf32>
    %c2_188 = arith.constant 2 : index
    %c9_189 = arith.constant 9 : index
    %c0_190 = arith.constant 0 : index
    %145 = vector.load %arg17[%c2_188, %c9_189, %c0_190] : memref<10x24x256xf32, #tpu.memory_space<vmem>>, vector<8x8x256xf32>
    %146 = vector.shape_cast %145 : vector<8x8x256xf32> to vector<64x256xf32>
    %147 = tpu.concatenate %130, %132, %134, %136, %138, %140, %142, %144, %146 in 1 : vector<64x256xf32>, vector<64x256xf32>, vector<64x256xf32>, vector<64x256xf32>, vector<64x256xf32>, vector<64x256xf32>, vector<64x256xf32>, vector<64x256xf32>, vector<64x256xf32> -> vector<64x2304xf32>
    %148 = arith.truncf %147 : vector<64x2304xf32> to vector<64x2304xbf16>
    %c0_191 = arith.constant 0 : index
    %c0_192 = arith.constant 0 : index
    %149 = vector.load %arg10[%c0_191, %c0_192] : memref<2304x128xbf16, #tpu.memory_space<vmem>>, vector<2304x128xbf16>
    %cst_193 = arith.constant dense<0.000000e+00> : vector<64x128xf32>
    %150 = tpu.matmul %148, %149, %cst_193 {dimension_numbers = #tpu.dot_dimension_numbers<[1], [0], [0], [1], [0, 0, 1, 1], [], []>} : vector<64x2304xbf16>, vector<2304x128xbf16>, vector<64x128xf32> -> vector<64x128xf32>
    %c0_194 = arith.constant 0 : index
    %c0_195 = arith.constant 0 : index
    %151 = vector.load %arg11[%c0_194, %c0_195] : memref<1x128xf32, #tpu.memory_space<vmem>>, vector<1x128xf32>
    %152 = vector.broadcast %151 : vector<1x128xf32> to vector<64x128xf32>
    %153 = arith.addf %150, %152 : vector<64x128xf32>
    %154 = arith.negf %153 : vector<64x128xf32>
    %155 = math.exp %154 : vector<64x128xf32>
    %cst_196 = arith.constant 1.000000e+00 : f32
    %156 = vector.broadcast %cst_196 : f32 to vector<64x128xf32>
    %157 = arith.addf %156, %155 : vector<64x128xf32>
    %158 = arith.divf %156, %157 : vector<64x128xf32>
    %159 = vector.shape_cast %158 : vector<64x128xf32> to vector<8x8x128xf32>
    %c0_197 = arith.constant 0 : index
    %c0_198 = arith.constant 0 : index
    %c0_199 = arith.constant 0 : index
    %c0_200 = arith.constant 0 : index
    %160 = vector.load %arg12[%c0_197, %c0_198, %c0_199, %c0_200] : memref<1x8x8x128xf32, #tpu.memory_space<vmem>>, vector<1x8x8x128xf32>
    %161 = vector.shape_cast %160 : vector<1x8x8x128xf32> to vector<8x8x128xf32>
    %162 = vector.shape_cast %159 : vector<8x8x128xf32> to vector<1x8x8x128xf32>
    tpu.vector_store %arg12[%c0_197, %c0_198, %c0_199, %c0_200], %162 {strides = array<i32>} : memref<1x8x8x128xf32, #tpu.memory_space<vmem>>, vector<1x8x8x128xf32>,
    return
  }
  func.func @transform_0(%arg0: i32) -> (i32, i32, i32, i32) {
    %c0_i32 = arith.constant 0 : i32
    %c0_i32_0 = arith.constant 0 : i32
    %c0_i32_1 = arith.constant 0 : i32
    %c0_i32_2 = arith.constant 0 : i32
    return %arg0, %c0_i32, %c0_i32_0, %c0_i32_1 : i32, i32, i32, i32
  }
  func.func @transform_1(%arg0: i32) -> (i32, i32) {
    %c0_i32 = arith.constant 0 : i32
    %c0_i32_0 = arith.constant 0 : i32
    %c0_i32_1 = arith.constant 0 : i32
    return %c0_i32, %c0_i32_0 : i32, i32
  }
  func.func @transform_2(%arg0: i32) -> (i32, i32) {
    %c0_i32 = arith.constant 0 : i32
    %c0_i32_0 = arith.constant 0 : i32
    %c0_i32_1 = arith.constant 0 : i32
    return %c0_i32, %c0_i32_0 : i32, i32
  }
  func.func @transform_3(%arg0: i32) -> (i32, i32) {
    %c0_i32 = arith.constant 0 : i32
    %c0_i32_0 = arith.constant 0 : i32
    %c0_i32_1 = arith.constant 0 : i32
    return %c0_i32, %c0_i32_0 : i32, i32
  }
  func.func @transform_4(%arg0: i32) -> (i32, i32) {
    %c0_i32 = arith.constant 0 : i32
    %c0_i32_0 = arith.constant 0 : i32
    %c0_i32_1 = arith.constant 0 : i32
    return %c0_i32, %c0_i32_0 : i32, i32
  }
  func.func @transform_5(%arg0: i32) -> (i32, i32) {
    %c0_i32 = arith.constant 0 : i32
    %c0_i32_0 = arith.constant 0 : i32
    %c0_i32_1 = arith.constant 0 : i32
    return %c0_i32, %c0_i32_0 : i32, i32
  }
  func.func @transform_6(%arg0: i32) -> (i32, i32) {
    %c0_i32 = arith.constant 0 : i32
    %c0_i32_0 = arith.constant 0 : i32
    %c0_i32_1 = arith.constant 0 : i32
    return %c0_i32, %c0_i32_0 : i32, i32
  }
  func.func @transform_7(%arg0: i32) -> (i32, i32) {
    %c0_i32 = arith.constant 0 : i32
    %c0_i32_0 = arith.constant 0 : i32
    %c0_i32_1 = arith.constant 0 : i32
    return %c0_i32, %c0_i32_0 : i32, i32
  }
  func.func @transform_8(%arg0: i32) -> (i32, i32) {
    %c0_i32 = arith.constant 0 : i32
    %c0_i32_0 = arith.constant 0 : i32
    %c0_i32_1 = arith.constant 0 : i32
    return %c0_i32, %c0_i32_0 : i32, i32
  }
  func.func @transform_9(%arg0: i32) -> (i32, i32) {
    %c0_i32 = arith.constant 0 : i32
    %c0_i32_0 = arith.constant 0 : i32
    %c0_i32_1 = arith.constant 0 : i32
    return %c0_i32, %c0_i32_0 : i32, i32
  }
  func.func @transform_10(%arg0: i32) -> (i32, i32) {
    %c0_i32 = arith.constant 0 : i32
    %c0_i32_0 = arith.constant 0 : i32
    %c0_i32_1 = arith.constant 0 : i32
    return %c0_i32, %c0_i32_0 : i32, i32
  }
  func.func @transform_11(%arg0: i32) -> (i32, i32, i32, i32) {
    %c0_i32 = arith.constant 0 : i32
    %c0_i32_0 = arith.constant 0 : i32
    %c0_i32_1 = arith.constant 0 : i32
    %c0_i32_2 = arith.constant 0 : i32
    return %arg0, %c0_i32, %c0_i32_0, %c0_i32_1 : i32, i32, i32, i32
  }
}

</mosaic_0001>

<llo_original>
// kernel: _lambda_.1
$region0: #{_lambda_.1}
  #allocation0 [shape = 'u32[]', space=smem, size = 0x4, offset = 0x4, fixed_abs, tag = 'smem constant byte address 0x4 - core index']
  #allocation1 [shape = 'u32[144,128]{1,0:T(1,128)}', space=vmem, size = 0x12000, scoped, tag = 'internal scratch']
  #allocation2 [shape = 'f32[10,24,128]{2,1,0:T(8,128)}', space=vmem, size = 0x1e000, scoped, tag = 'scratch operand']
  #allocation3 [shape = 'f32[10,24,128]{2,1,0:T(8,128)}', space=vmem, size = 0x1e000, scoped, tag = 'scratch operand']
  #allocation4 [shape = 'f32[10,24,128]{2,1,0:T(8,128)}', space=vmem, size = 0x1e000, scoped, tag = 'scratch operand']
  #allocation5 [shape = 'f32[10,24,256]{2,1,0:T(8,128)}', space=vmem, size = 0x3c000, scoped, tag = 'scratch operand']
  #allocation6 [shape = 'f32[10,24,256]{2,1,0:T(8,128)}', space=vmem, size = 0x3c000, scoped, tag = 'scratch operand']
  %s0 = inlined_call_operand.vmem [shape: f32[2,8,8,128], index: 0, kind: input, shape index: {}]
  %s1 = inlined_call_operand.vmem [shape: bf16[1152,128], index: 1, kind: input, shape index: {}]
  %s2 = inlined_call_operand.vmem [shape: f32[1,128], index: 2, kind: input, shape index: {}, may-alias: {2,4,10}]
  %s3 = inlined_call_operand.vmem [shape: bf16[1152,128], index: 3, kind: input, shape index: {}]
  %s4 = inlined_call_operand.vmem [shape: f32[1,128], index: 4, kind: input, shape index: {}, may-alias: {2,4,10}]
  %s5 = inlined_call_operand.vmem [shape: bf16[1152,256], index: 5, kind: input, shape index: {}]
  %s6 = inlined_call_operand.vmem [shape: f32[1,256], index: 6, kind: input, shape index: {}, may-alias: {6,8}]
  %s7 = inlined_call_operand.vmem [shape: bf16[2304,256], index: 7, kind: input, shape index: {}]
  %s8 = inlined_call_operand.vmem [shape: f32[1,256], index: 8, kind: input, shape index: {}, may-alias: {6,8}]
  %s9 = inlined_call_operand.vmem [shape: bf16[2304,128], index: 9, kind: input, shape index: {}]
  %s10 = inlined_call_operand.vmem [shape: f32[1,128], index: 10, kind: input, shape index: {}, may-alias: {2,4,10}]
  %s11 = inlined_call_operand.vmem [shape: f32[2,8,8,128], index: 11, kind: output, shape index: {}]
  %s12 = sld [smem:[#allocation0]]
  $region77: #{_lambda_.1} parent=0
    _
  %s14 = ssub.s32 1, %s12
  %s15 = scalar_select 0, %s14, %s12
  loop: start=0, step=1, limit=4
  $region2: #{_lambda_.1} parent=0 // loop_pre_header
    _
  $region3: #{_lambda_.1} parent=0 // loop_header
    %s17 = sphi 0, %s21
    %p18 = scmp.ge.s32.totalorder %s17, 4
    %s27 = sphi 0, %s29
    %s30 = sphi 0, %s27
    %s31 = sphi 0, %s30
    %s47 = sphi 0, %s31
    %s51 = sphi 0, %s51
    %s53 = sphi 0, %s51
    %s54 = sphi 0, %s53
    %s68 = sphi 0, %s54
    %s72 = sphi 0, %s72
    %s74 = sphi 0, %s72
    %s75 = sphi 0, %s74
    %s89 = sphi 0, %s75
    %s93 = sphi 0, %s93
    %s95 = sphi 0, %s93
    %s96 = sphi 0, %s95
    %s110 = sphi 0, %s96
    %s114 = sphi 0, %s114
    %s116 = sphi 0, %s114
    %s117 = sphi 0, %s116
    %s131 = sphi 0, %s117
    %s135 = sphi 0, %s135
    %s137 = sphi 0, %s135
    %s138 = sphi 0, %s137
    %s152 = sphi 0, %s138
    %s156 = sphi 0, %s156
    %s158 = sphi 0, %s156
    %s159 = sphi 0, %s158
    %s173 = sphi 0, %s159
    %s177 = sphi 0, %s177
    %s179 = sphi 0, %s177
    %s180 = sphi 0, %s179
    %s194 = sphi 0, %s180
    %s198 = sphi 0, %s198
    %s200 = sphi 0, %s198
    %s201 = sphi 0, %s200
    %s215 = sphi 0, %s201
    %s219 = sphi 0, %s219
    %s221 = sphi 0, %s219
    %s222 = sphi 0, %s221
    %s236 = sphi 0, %s222
    %s240 = sphi 0, %s240
    %s242 = sphi 0, %s240
    %s243 = sphi 0, %s242
    %s257 = sphi 0, %s243
    %s263 = sphi 0, %s265
    %s266 = sphi 0, %s263
    %s267 = sphi 0, %s266
    %s283 = sphi 0, %s267
  $region4: #{_lambda_.1} parent=0 // loop_header_branch
    %20 = sbr.rel (%p18) target = $region8
  $region5: #{_lambda_.1} parent=0 // loop_body
    %s22 = ssub.s32 %s17, 1
    %s23 = ssub.s32 %s17, 2
    %s24 = sadd.s32 %s17, 1
    %s25 = ssub.s32 %s17, %s24
    %p26 = scmp.eq.s32.totalorder %s25, 0
    %s28 = sadd.s32 %s27, 1
    %s29 = scalar_select %p26, %s27, %s28
    %p32 = pneg %p26
    %p33 = scmp.eq.s32.totalorder %s17, 1
    %p34 = por %p32, %p33
    %p35 = scmp.ne.s32.totalorder %s27, %s30
    %p36 = scmp.eq.s32.totalorder %s17, 0
    %p37 = por %p35, %p36
    %p38 = scmp.ne.s32.totalorder %s27, %s30
    %p39 = scmp.eq.s32.totalorder %s22, 1
    %p40 = por %p38, %p39
    %p41 = scmp.ne.s32.totalorder %s30, %s31
    %p42 = scmp.eq.s32.totalorder %s22, 0
    %p43 = por %p41, %p42
    %p44 = scmp.ne.s32.totalorder %s30, %s31
    %p45 = scmp.eq.s32.totalorder %s23, 1
    %p46 = por %p44, %p45
    %p48 = scmp.ne.s32.totalorder %s31, %s47
    %p49 = scmp.eq.s32.totalorder %s23, 0
    %p50 = por %p48, %p49
    %s52 = sadd.s32 %s51, 1
    %p55 = scmp.eq.s32.totalorder %s17, 1
    %p56 = scmp.ne.s32.totalorder %s51, %s53
    %p57 = scmp.eq.s32.totalorder %s17, 0
    %p58 = por %p56, %p57
    %p59 = scmp.ne.s32.totalorder %s51, %s53
    %p60 = scmp.eq.s32.totalorder %s22, 1
    %p61 = por %p59, %p60
    %p62 = scmp.ne.s32.totalorder %s53, %s54
    %p63 = scmp.eq.s32.totalorder %s22, 0
    %p64 = por %p62, %p63
    %p65 = scmp.ne.s32.totalorder %s53, %s54
    %p66 = scmp.eq.s32.totalorder %s23, 1
    %p67 = por %p65, %p66
    %p69 = scmp.ne.s32.totalorder %s54, %s68
    %p70 = scmp.eq.s32.totalorder %s23, 0
    %p71 = por %p69, %p70
    %s73 = sadd.s32 %s72, 1
    %p76 = scmp.eq.s32.totalorder %s17, 1
    %p77 = scmp.ne.s32.totalorder %s72, %s74
    %p78 = scmp.eq.s32.totalorder %s17, 0
    %p79 = por %p77, %p78
    %p80 = scmp.ne.s32.totalorder %s72, %s74
    %p81 = scmp.eq.s32.totalorder %s22, 1
    %p82 = por %p80, %p81
    %p83 = scmp.ne.s32.totalorder %s74, %s75
    %p84 = scmp.eq.s32.totalorder %s22, 0
    %p85 = por %p83, %p84
    %p86 = scmp.ne.s32.totalorder %s74, %s75
    %p87 = scmp.eq.s32.totalorder %s23, 1
    %p88 = por %p86, %p87
    %p90 = scmp.ne.s32.totalorder %s75, %s89
    %p91 = scmp.eq.s32.totalorder %s23, 0
    %p92 = por %p90, %p91
    %s94 = sadd.s32 %s93, 1
    %p97 = scmp.eq.s32.totalorder %s17, 1
    %p98 = scmp.ne.s32.totalorder %s93, %s95
    %p99 = scmp.eq.s32.totalorder %s17, 0
    %p100 = por %p98, %p99
    %p101 = scmp.ne.s32.totalorder %s93, %s95
    %p102 = scmp.eq.s32.totalorder %s22, 1
    %p103 = por %p101, %p102
    %p104 = scmp.ne.s32.totalorder %s95, %s96
    %p105 = scmp.eq.s32.totalorder %s22, 0
    %p106 = por %p104, %p105
    %p107 = scmp.ne.s32.totalorder %s95, %s96
    %p108 = scmp.eq.s32.totalorder %s23, 1
    %p109 = por %p107, %p108
    %p111 = scmp.ne.s32.totalorder %s96, %s110
    %p112 = scmp.eq.s32.totalorder %s23, 0
    %p113 = por %p111, %p112
    %s115 = sadd.s32 %s114, 1
    %p118 = scmp.eq.s32.totalorder %s17, 1
    %p119 = scmp.ne.s32.totalorder %s114, %s116
    %p120 = scmp.eq.s32.totalorder %s17, 0
    %p121 = por %p119, %p120
    %p122 = scmp.ne.s32.totalorder %s114, %s116
    %p123 = scmp.eq.s32.totalorder %s22, 1
    %p124 = por %p122, %p123
    %p125 = scmp.ne.s32.totalorder %s116, %s117
    %p126 = scmp.eq.s32.totalorder %s22, 0
    %p127 = por %p125, %p126
    %p128 = scmp.ne.s32.totalorder %s116, %s117
    %p129 = scmp.eq.s32.totalorder %s23, 1
    %p130 = por %p128, %p129
    %p132 = scmp.ne.s32.totalorder %s117, %s131
    %p133 = scmp.eq.s32.totalorder %s23, 0
    %p134 = por %p132, %p133
    %s136 = sadd.s32 %s135, 1
    %p139 = scmp.eq.s32.totalorder %s17, 1
    %p140 = scmp.ne.s32.totalorder %s135, %s137
    %p141 = scmp.eq.s32.totalorder %s17, 0
    %p142 = por %p140, %p141
    %p143 = scmp.ne.s32.totalorder %s135, %s137
    %p144 = scmp.eq.s32.totalorder %s22, 1
    %p145 = por %p143, %p144
    %p146 = scmp.ne.s32.totalorder %s137, %s138
    %p147 = scmp.eq.s32.totalorder %s22, 0
    %p148 = por %p146, %p147
    %p149 = scmp.ne.s32.totalorder %s137, %s138
    %p150 = scmp.eq.s32.totalorder %s23, 1
    %p151 = por %p149, %p150
    %p153 = scmp.ne.s32.totalorder %s138, %s152
    %p154 = scmp.eq.s32.totalorder %s23, 0
    %p155 = por %p153, %p154
    %s157 = sadd.s32 %s156, 1
    %p160 = scmp.eq.s32.totalorder %s17, 1
    %p161 = scmp.ne.s32.totalorder %s156, %s158
    %p162 = scmp.eq.s32.totalorder %s17, 0
    %p163 = por %p161, %p162
    %p164 = scmp.ne.s32.totalorder %s156, %s158
    %p165 = scmp.eq.s32.totalorder %s22, 1
    %p166 = por %p164, %p165
    %p167 = scmp.ne.s32.totalorder %s158, %s159
    %p168 = scmp.eq.s32.totalorder %s22, 0
    %p169 = por %p167, %p168
    %p170 = scmp.ne.s32.totalorder %s158, %s159
    %p171 = scmp.eq.s32.totalorder %s23, 1
    %p172 = por %p170, %p171
    %p174 = scmp.ne.s32.totalorder %s159, %s173
    %p175 = scmp.eq.s32.totalorder %s23, 0
    %p176 = por %p174, %p175
    %s178 = sadd.s32 %s177, 1
    %p181 = scmp.eq.s32.totalorder %s17, 1
    %p182 = scmp.ne.s32.totalorder %s177, %s179
    %p183 = scmp.eq.s32.totalorder %s17, 0
    %p184 = por %p182, %p183
    %p185 = scmp.ne.s32.totalorder %s177, %s179
    %p186 = scmp.eq.s32.totalorder %s22, 1
    %p187 = por %p185, %p186
    %p188 = scmp.ne.s32.totalorder %s179, %s180
    %p189 = scmp.eq.s32.totalorder %s22, 0
    %p190 = por %p188, %p189
    %p191 = scmp.ne.s32.totalorder %s179, %s180
    %p192 = scmp.eq.s32.totalorder %s23, 1
    %p193 = por %p191, %p192
    %p195 = scmp.ne.s32.totalorder %s180, %s194
    %p196 = scmp.eq.s32.totalorder %s23, 0
    %p197 = por %p195, %p196
    %s199 = sadd.s32 %s198, 1
    %p202 = scmp.eq.s32.totalorder %s17, 1
    %p203 = scmp.ne.s32.totalorder %s198, %s200
    %p204 = scmp.eq.s32.totalorder %s17, 0
    %p205 = por %p203, %p204
    %p206 = scmp.ne.s32.totalorder %s198, %s200
    %p207 = scmp.eq.s32.totalorder %s22, 1
    %p208 = por %p206, %p207
    %p209 = scmp.ne.s32.totalorder %s200, %s201
    %p210 = scmp.eq.s32.totalorder %s22, 0
    %p211 = por %p209, %p210
    %p212 = scmp.ne.s32.totalorder %s200, %s201
    %p213 = scmp.eq.s32.totalorder %s23, 1
    %p214 = por %p212, %p213
    %p216 = scmp.ne.s32.totalorder %s201, %s215
    %p217 = scmp.eq.s32.totalorder %s23, 0
    %p218 = por %p216, %p217
    %s220 = sadd.s32 %s219, 1
    %p223 = scmp.eq.s32.totalorder %s17, 1
    %p224 = scmp.ne.s32.totalorder %s219, %s221
    %p225 = scmp.eq.s32.totalorder %s17, 0
    %p226 = por %p224, %p225
    %p227 = scmp.ne.s32.totalorder %s219, %s221
    %p228 = scmp.eq.s32.totalorder %s22, 1
    %p229 = por %p227, %p228
    %p230 = scmp.ne.s32.totalorder %s221, %s222
    %p231 = scmp.eq.s32.totalorder %s22, 0
    %p232 = por %p230, %p231
    %p233 = scmp.ne.s32.totalorder %s221, %s222
    %p234 = scmp.eq.s32.totalorder %s23, 1
    %p235 = por %p233, %p234
    %p237 = scmp.ne.s32.totalorder %s222, %s236
    %p238 = scmp.eq.s32.totalorder %s23, 0
    %p239 = por %p237, %p238
    %s241 = sadd.s32 %s240, 1
    %p244 = scmp.eq.s32.totalorder %s17, 1
    %p245 = scmp.ne.s32.totalorder %s240, %s242
    %p246 = scmp.eq.s32.totalorder %s17, 0
    %p247 = por %p245, %p246
    %p248 = scmp.ne.s32.totalorder %s240, %s242
    %p249 = scmp.eq.s32.totalorder %s22, 1
    %p250 = por %p248, %p249
    %p251 = scmp.ne.s32.totalorder %s242, %s243
    %p252 = scmp.eq.s32.totalorder %s22, 0
    %p253 = por %p251, %p252
    %p254 = scmp.ne.s32.totalorder %s242, %s243
    %p255 = scmp.eq.s32.totalorder %s23, 1
    %p256 = por %p254, %p255
    %p258 = scmp.ne.s32.totalorder %s243, %s257
    %p259 = scmp.eq.s32.totalorder %s23, 0
    %p260 = por %p258, %p259
    %s261 = ssub.s32 %s17, %s24
    %p262 = scmp.eq.s32.totalorder %s261, 0
    %s264 = sadd.s32 %s263, 1
    %s265 = scalar_select %p262, %s263, %s264
    %p268 = pneg %p262
    %p269 = scmp.eq.s32.totalorder %s17, 1
    %p270 = por %p268, %p269
    %p271 = scmp.ne.s32.totalorder %s263, %s266
    %p272 = scmp.eq.s32.totalorder %s17, 0
    %p273 = por %p271, %p272
    %p274 = scmp.ne.s32.totalorder %s263, %s266
    %p275 = scmp.eq.s32.totalorder %s22, 1
    %p276 = por %p274, %p275
    %p277 = scmp.ne.s32.totalorder %s266, %s267
    %p278 = scmp.eq.s32.totalorder %s22, 0
    %p279 = por %p277, %p278
    %p280 = scmp.ne.s32.totalorder %s266, %s267
    %p281 = scmp.eq.s32.totalorder %s23, 1
    %p282 = por %p280, %p281
    %p284 = scmp.ne.s32.totalorder %s267, %s283
    %p285 = scmp.eq.s32.totalorder %s23, 0
    %p286 = por %p284, %p285
    %p287 = scmp.le.s32.totalorder 1, %s17
    %p288 = scmp.lt.s32.totalorder %s17, 3
    %p289 = pnand %p287, %p288
    %p290 = pneg %p289
    // Predicated region
    $region9: #{_lambda_.1} parent=5 // pred_check
      _
    $region10: #{_lambda_.1} parent=5 // pred_check_branch
      %292 = sbr.rel (%p289) target = $region12
    $region11: #{_lambda_.1} parent=5 // pred_region
      %s293 = ssub.s32 %s17, 1
      // Predicated region
      $region13: #{_lambda_.1} parent=11 // pred_check
        %p294 = pneg %p64
      $region14: #{_lambda_.1} parent=11 // pred_check_branch
        %296 = sbr.rel (%p294) target = $region16
      $region15: #{_lambda_.1} parent=11 // pred_region
        _
      $region16: #{_lambda_.1} parent=11 // pred_fallthru
        _
      // Predicated region
      $region17: #{_lambda_.1} parent=11 // pred_check
        %p297 = pneg %p85
      $region18: #{_lambda_.1} parent=11 // pred_check_branch
        %299 = sbr.rel (%p297) target = $region20
      $region19: #{_lambda_.1} parent=11 // pred_region
        _
      $region20: #{_lambda_.1} parent=11 // pred_fallthru
        _
      // Predicated region
      $region21: #{_lambda_.1} parent=11 // pred_check
        %p300 = pneg %p106
      $region22: #{_lambda_.1} parent=11 // pred_check_branch
        %302 = sbr.rel (%p300) target = $region24
      $region23: #{_lambda_.1} parent=11 // pred_region
        _
      $region24: #{_lambda_.1} parent=11 // pred_fallthru
        _
      // Predicated region
      $region25: #{_lambda_.1} parent=11 // pred_check
        %p303 = pneg %p127
      $region26: #{_lambda_.1} parent=11 // pred_check_branch
        %305 = sbr.rel (%p303) target = $region28
      $region27: #{_lambda_.1} parent=11 // pred_region
        _
      $region28: #{_lambda_.1} parent=11 // pred_fallthru
        _
      // Predicated region
      $region29: #{_lambda_.1} parent=11 // pred_check
        %p306 = pneg %p148
      $region30: #{_lambda_.1} parent=11 // pred_check_branch
        %308 = sbr.rel (%p306) target = $region32
      $region31: #{_lambda_.1} parent=11 // pred_region
        _
      $region32: #{_lambda_.1} parent=11 // pred_fallthru
        _
      // Predicated region
      $region33: #{_lambda_.1} parent=11 // pred_check
        %p309 = pneg %p169
      $region34: #{_lambda_.1} parent=11 // pred_check_branch
        %311 = sbr.rel (%p309) target = $region36
      $region35: #{_lambda_.1} parent=11 // pred_region
        _
      $region36: #{_lambda_.1} parent=11 // pred_fallthru
        _
      // Predicated region
      $region37: #{_lambda_.1} parent=11 // pred_check
        %p312 = pneg %p190
      $region38: #{_lambda_.1} parent=11 // pred_check_branch
        %314 = sbr.rel (%p312) target = $region40
      $region39: #{_lambda_.1} parent=11 // pred_region
        _
      $region40: #{_lambda_.1} parent=11 // pred_fallthru
        _
      // Predicated region
      $region41: #{_lambda_.1} parent=11 // pred_check
        %p315 = pneg %p211
      $region42: #{_lambda_.1} parent=11 // pred_check_branch
        %317 = sbr.rel (%p315) target = $region44
      $region43: #{_lambda_.1} parent=11 // pred_region
        _
      $region44: #{_lambda_.1} parent=11 // pred_fallthru
        _
      // Predicated region
      $region45: #{_lambda_.1} parent=11 // pred_check
        %p318 = pneg %p232
      $region46: #{_lambda_.1} parent=11 // pred_check_branch
        %320 = sbr.rel (%p318) target = $region48
      $region47: #{_lambda_.1} parent=11 // pred_region
        _
      $region48: #{_lambda_.1} parent=11 // pred_fallthru
        _
      // Predicated region
      $region49: #{_lambda_.1} parent=11 // pred_check
        %p321 = pneg %p253
      $region50: #{_lambda_.1} parent=11 // pred_check_branch
        %323 = sbr.rel (%p321) target = $region52
      $region51: #{_lambda_.1} parent=11 // pred_region
        _
      $region52: #{_lambda_.1} parent=11 // pred_fallthru
        _
    $region12: #{_lambda_.1} parent=5 // pred_fallthru
      _
    %p324 = scmp.lt.s32.totalorder %s17, 2
    // Predicated region
    $region53: #{_lambda_.1} parent=5 // pred_check
      %p325 = pneg %p324
    $region54: #{_lambda_.1} parent=5 // pred_check_branch
      %327 = sbr.rel (%p325) target = $region56
    $region55: #{_lambda_.1} parent=5 // pred_region
      // Predicated region
      $region57: #{_lambda_.1} parent=55 // pred_check
        %p328 = pneg %p37
      $region58: #{_lambda_.1} parent=55 // pred_check_branch
        %330 = sbr.rel (%p328) target = $region60
      $region59: #{_lambda_.1} parent=55 // pred_region
        %p331 = scmp.lt.s32.totalorder %s17, 1
        %s332 = scalar_select %p331, %s17, 1
        %s333 = smul.addr %s332, 8
        %s334 = smul.addr %s333, 8
        %s335 = scalar_lea.vmem %s0, %s334
      $region60: #{_lambda_.1} parent=55 // pred_fallthru
        _
    $region56: #{_lambda_.1} parent=5 // pred_fallthru
      _
    %p336 = scmp.le.s32.totalorder 1, %s17
    %p337 = scmp.lt.s32.totalorder %s17, 3
    %p338 = pnand %p336, %p337
    %p339 = pneg %p338
    // Predicated region
    $region61: #{_lambda_.1} parent=5 // pred_check
      _
    $region62: #{_lambda_.1} parent=5 // pred_check_branch
      %341 = sbr.rel (%p338) target = $region64
    $region63: #{_lambda_.1} parent=5 // pred_region
      %s342 = ssub.s32 %s17, 1
      %p343 = scmp.lt.s32.totalorder %s22, 1
      %s344 = scalar_select %p343, %s22, 1
      %s345 = smul.addr %s344, 8
      %s346 = smul.addr %s345, 8
      %s347 = scalar_lea.vmem %s0, %s346
      %p348 = pneg %p43
      %p349 = pneg %p40
      %p350 = pneg %p64
      %p351 = pneg %p61
      %p352 = pneg %p85
      %p353 = pneg %p82
      %p354 = pneg %p106
      %p355 = pneg %p103
      %p356 = pneg %p127
      %p357 = pneg %p124
      %p358 = pneg %p148
      %p359 = pneg %p145
      %p360 = pneg %p169
      %p361 = pneg %p166
      %p362 = pneg %p190
      %p363 = pneg %p187
      %p364 = pneg %p211
      %p365 = pneg %p208
      %p366 = pneg %p232
      %p367 = pneg %p229
      %p368 = pneg %p253
      %p369 = pneg %p250
      %p370 = pneg %p279
      %p371 = pneg %p276
      %p372 = scmp.lt.s32.totalorder %s22, 1
      %s373 = scalar_select %p372, %s22, 1
      %s374 = smul.addr %s373, 8
      %s375 = smul.addr %s374, 8
      %s376 = scalar_lea.vmem %s11, %s375
      %p377 = scmp.lt.s32.totalorder %s22, 1
      %s378 = scalar_select %p377, %s22, 1
      %s379 = smul.addr %s378, 8
      %s380 = smul.addr %s379, 8
      %s381 = scalar_lea.vmem %s0, %s380
      %p382 = scmp.lt.s32.totalorder %s22, 1
      %s383 = scalar_select %p382, %s22, 1
      %s384 = smul.addr %s383, 8
      %s385 = smul.addr %s384, 8
      %s386 = scalar_lea.vmem %s11, %s385
      %388 = vst [vmem:[#allocation2] sm:$0xff] 0.0
      %389 = vst [vmem:[#allocation2 + $0x8] sm:$0xff] 0.0
      %390 = vst [vmem:[#allocation2 + $0x10] sm:$0xff] 0.0
      %391 = vst [vmem:[#allocation2 + $0x18] sm:$0xff] 0.0
      %392 = vst [vmem:[#allocation2 + $0x20] sm:$0xff] 0.0
      %393 = vst [vmem:[#allocation2 + $0x28] sm:$0xff] 0.0
      %394 = vst [vmem:[#allocation2 + $0x30] sm:$0xff] 0.0
      %395 = vst [vmem:[#allocation2 + $0x38] sm:$0xff] 0.0
      %396 = vst [vmem:[#allocation2 + $0x40] sm:$0xff] 0.0
      %397 = vst [vmem:[#allocation2 + $0x48] sm:$0xff] 0.0
      %398 = vst [vmem:[#allocation2 + $0x50] sm:$0xff] 0.0
      %399 = vst [vmem:[#allocation2 + $0x58] sm:$0xff] 0.0
      %400 = vst [vmem:[#allocation2 + $0x60] sm:$0xff] 0.0
      %401 = vst [vmem:[#allocation2 + $0x68] sm:$0xff] 0.0
      %402 = vst [vmem:[#allocation2 + $0x70] sm:$0xff] 0.0
      %403 = vst [vmem:[#allocation2 + $0x78] sm:$0xff] 0.0
      %404 = vst [vmem:[#allocation2 + $0x80] sm:$0xff] 0.0
      %405 = vst [vmem:[#allocation2 + $0x88] sm:$0xff] 0.0
      %406 = vst [vmem:[#allocation2 + $0x90] sm:$0xff] 0.0
      %407 = vst [vmem:[#allocation2 + $0x98] sm:$0xff] 0.0
      %408 = vst [vmem:[#allocation2 + $0xa0] sm:$0xff] 0.0
      %409 = vst [vmem:[#allocation2 + $0xa8] sm:$0xff] 0.0
      %410 = vst [vmem:[#allocation2 + $0xb0] sm:$0xff] 0.0
      %411 = vst [vmem:[#allocation2 + $0xb8] sm:$0xff] 0.0
      %412 = vst [vmem:[#allocation2 + $0xc0] sm:$0xff] 0.0
      %413 = vst [vmem:[#allocation2 + $0xc8] sm:$0xff] 0.0
      %414 = vst [vmem:[#allocation2 + $0xd0] sm:$0xff] 0.0
      %415 = vst [vmem:[#allocation2 + $0xd8] sm:$0xff] 0.0
      %416 = vst [vmem:[#allocation2 + $0xe0] sm:$0xff] 0.0
      %417 = vst [vmem:[#allocation2 + $0xe8] sm:$0xff] 0.0
      %418 = vst [vmem:[#allocation3] sm:$0xff] 0.0
      %419 = vst [vmem:[#allocation3 + $0x8] sm:$0xff] 0.0
      %420 = vst [vmem:[#allocation3 + $0x10] sm:$0xff] 0.0
      %421 = vst [vmem:[#allocation3 + $0x18] sm:$0xff] 0.0
      %422 = vst [vmem:[#allocation3 + $0x20] sm:$0xff] 0.0
      %423 = vst [vmem:[#allocation3 + $0x28] sm:$0xff] 0.0
      %424 = vst [vmem:[#allocation3 + $0x30] sm:$0xff] 0.0
      %425 = vst [vmem:[#allocation3 + $0x38] sm:$0xff] 0.0
      %426 = vst [vmem:[#allocation3 + $0x40] sm:$0xff] 0.0
      %427 = vst [vmem:[#allocation3 + $0x48] sm:$0xff] 0.0
      %428 = vst [vmem:[#allocation3 + $0x50] sm:$0xff] 0.0
      %429 = vst [vmem:[#allocation3 + $0x58] sm:$0xff] 0.0
      %430 = vst [vmem:[#allocation3 + $0x60] sm:$0xff] 0.0
      %431 = vst [vmem:[#allocation3 + $0x68] sm:$0xff] 0.0
      %432 = vst [vmem:[#allocation3 + $0x70] sm:$0xff] 0.0
      %433 = vst [vmem:[#allocation3 + $0x78] sm:$0xff] 0.0
      %434 = vst [vmem:[#allocation3 + $0x80] sm:$0xff] 0.0
      %435 = vst [vmem:[#allocation3 + $0x88] sm:$0xff] 0.0
      %436 = vst [vmem:[#allocation3 + $0x90] sm:$0xff] 0.0
      %437 = vst [vmem:[#allocation3 + $0x98] sm:$0xff] 0.0
      %438 = vst [vmem:[#allocation3 + $0xa0] sm:$0xff] 0.0
      %439 = vst [vmem:[#allocation3 + $0xa8] sm:$0xff] 0.0
      %440 = vst [vmem:[#allocation3 + $0xb0] sm:$0xff] 0.0
      %441 = vst [vmem:[#allocation3 + $0xb8] sm:$0xff] 0.0
      %442 = vst [vmem:[#allocation3 + $0xc0] sm:$0xff] 0.0
      %443 = vst [vmem:[#allocation3 + $0xc8] sm:$0xff] 0.0
      %444 = vst [vmem:[#allocation3 + $0xd0] sm:$0xff] 0.0
      %445 = vst [vmem:[#allocation3 + $0xd8] sm:$0xff] 0.0
      %446 = vst [vmem:[#allocation3 + $0xe0] sm:$0xff] 0.0
      %447 = vst [vmem:[#allocation3 + $0xe8] sm:$0xff] 0.0
      %448 = vst [vmem:[#allocation4] sm:$0xff] 0.0
      %449 = vst [vmem:[#allocation4 + $0x8] sm:$0xff] 0.0
      %450 = vst [vmem:[#allocation4 + $0x10] sm:$0xff] 0.0
      %451 = vst [vmem:[#allocation4 + $0x18] sm:$0xff] 0.0
      %452 = vst [vmem:[#allocation4 + $0x20] sm:$0xff] 0.0
      %453 = vst [vmem:[#allocation4 + $0x28] sm:$0xff] 0.0
      %454 = vst [vmem:[#allocation4 + $0x30] sm:$0xff] 0.0
      %455 = vst [vmem:[#allocation4 + $0x38] sm:$0xff] 0.0
      %456 = vst [vmem:[#allocation4 + $0x40] sm:$0xff] 0.0
      %457 = vst [vmem:[#allocation4 + $0x48] sm:$0xff] 0.0
      %458 = vst [vmem:[#allocation4 + $0x50] sm:$0xff] 0.0
      %459 = vst [vmem:[#allocation4 + $0x58] sm:$0xff] 0.0
      %460 = vst [vmem:[#allocation4 + $0x60] sm:$0xff] 0.0
      %461 = vst [vmem:[#allocation4 + $0x68] sm:$0xff] 0.0
      %462 = vst [vmem:[#allocation4 + $0x70] sm:$0xff] 0.0
      %463 = vst [vmem:[#allocation4 + $0x78] sm:$0xff] 0.0
      %464 = vst [vmem:[#allocation4 + $0x80] sm:$0xff] 0.0
      %465 = vst [vmem:[#allocation4 + $0x88] sm:$0xff] 0.0
      %466 = vst [vmem:[#allocation4 + $0x90] sm:$0xff] 0.0
      %467 = vst [vmem:[#allocation4 + $0x98] sm:$0xff] 0.0
      %468 = vst [vmem:[#allocation4 + $0xa0] sm:$0xff] 0.0
      %469 = vst [vmem:[#allocation4 + $0xa8] sm:$0xff] 0.0
      %470 = vst [vmem:[#allocation4 + $0xb0] sm:$0xff] 0.0
      %471 = vst [vmem:[#allocation4 + $0xb8] sm:$0xff] 0.0
      %472 = vst [vmem:[#allocation4 + $0xc0] sm:$0xff] 0.0
      %473 = vst [vmem:[#allocation4 + $0xc8] sm:$0xff] 0.0
      %474 = vst [vmem:[#allocation4 + $0xd0] sm:$0xff] 0.0
      %475 = vst [vmem:[#allocation4 + $0xd8] sm:$0xff] 0.0
      %476 = vst [vmem:[#allocation4 + $0xe0] sm:$0xff] 0.0
      %477 = vst [vmem:[#allocation4 + $0xe8] sm:$0xff] 0.0
      %478 = vst [vmem:[#allocation5] sm:$0xff] 0.0
      %479 = vst [vmem:[#allocation5 + $0x8] sm:$0xff] 0.0
      %480 = vst [vmem:[#allocation5 + $0x10] sm:$0xff] 0.0
      %481 = vst [vmem:[#allocation5 + $0x18] sm:$0xff] 0.0
      %482 = vst [vmem:[#allocation5 + $0x20] sm:$0xff] 0.0
      %483 = vst [vmem:[#allocation5 + $0x28] sm:$0xff] 0.0
      %484 = vst [vmem:[#allocation5 + $0x30] sm:$0xff] 0.0
      %485 = vst [vmem:[#allocation5 + $0x38] sm:$0xff] 0.0
      %486 = vst [vmem:[#allocation5 + $0x40] sm:$0xff] 0.0
      %487 = vst [vmem:[#allocation5 + $0x48] sm:$0xff] 0.0
      %488 = vst [vmem:[#allocation5 + $0x50] sm:$0xff] 0.0
      %489 = vst [vmem:[#allocation5 + $0x58] sm:$0xff] 0.0
      %490 = vst [vmem:[#allocation5 + $0x60] sm:$0xff] 0.0
      %491 = vst [vmem:[#allocation5 + $0x68] sm:$0xff] 0.0
      %492 = vst [vmem:[#allocation5 + $0x70] sm:$0xff] 0.0
      %493 = vst [vmem:[#allocation5 + $0x78] sm:$0xff] 0.0
      %494 = vst [vmem:[#allocation5 + $0x80] sm:$0xff] 0.0
      %495 = vst [vmem:[#allocation5 + $0x88] sm:$0xff] 0.0
      %496 = vst [vmem:[#allocation5 + $0x90] sm:$0xff] 0.0
      %497 = vst [vmem:[#allocation5 + $0x98] sm:$0xff] 0.0
      %498 = vst [vmem:[#allocation5 + $0xa0] sm:$0xff] 0.0
      %499 = vst [vmem:[#allocation5 + $0xa8] sm:$0xff] 0.0
      %500 = vst [vmem:[#allocation5 + $0xb0] sm:$0xff] 0.0
      %501 = vst [vmem:[#allocation5 + $0xb8] sm:$0xff] 0.0
      %502 = vst [vmem:[#allocation5 + $0xc0] sm:$0xff] 0.0
      %503 = vst [vmem:[#allocation5 + $0xc8] sm:$0xff] 0.0
      %504 = vst [vmem:[#allocation5 + $0xd0] sm:$0xff] 0.0
      %505 = vst [vmem:[#allocation5 + $0xd8] sm:$0xff] 0.0
      %506 = vst [vmem:[#allocation5 + $0xe0] sm:$0xff] 0.0
      %507 = vst [vmem:[#allocation5 + $0xe8] sm:$0xff] 0.0
      %508 = vst [vmem:[#allocation5 + $0xf0] sm:$0xff] 0.0
      %509 = vst [vmem:[#allocation5 + $0xf8] sm:$0xff] 0.0
      %510 = vst [vmem:[#allocation5 + $0x100] sm:$0xff] 0.0
      %511 = vst [vmem:[#allocation5 + $0x108] sm:$0xff] 0.0
      %512 = vst [vmem:[#allocation5 + $0x110] sm:$0xff] 0.0
      %513 = vst [vmem:[#allocation5 + $0x118] sm:$0xff] 0.0
      %514 = vst [vmem:[#allocation5 + $0x120] sm:$0xff] 0.0
      %515 = vst [vmem:[#allocation5 + $0x128] sm:$0xff] 0.0
      %516 = vst [vmem:[#allocation5 + $0x130] sm:$0xff] 0.0
      %517 = vst [vmem:[#allocation5 + $0x138] sm:$0xff] 0.0
      %518 = vst [vmem:[#allocation5 + $0x140] sm:$0xff] 0.0
      %519 = vst [vmem:[#allocation5 + $0x148] sm:$0xff] 0.0
      %520 = vst [vmem:[#allocation5 + $0x150] sm:$0xff] 0.0
      %521 = vst [vmem:[#allocation5 + $0x158] sm:$0xff] 0.0
      %522 = vst [vmem:[#allocation5 + $0x160] sm:$0xff] 0.0
      %523 = vst [vmem:[#allocation5 + $0x168] sm:$0xff] 0.0
      %524 = vst [vmem:[#allocation5 + $0x170] sm:$0xff] 0.0
      %525 = vst [vmem:[#allocation5 + $0x178] sm:$0xff] 0.0
      %526 = vst [vmem:[#allocation5 + $0x180] sm:$0xff] 0.0
      %527 = vst [vmem:[#allocation5 + $0x188] sm:$0xff] 0.0
      %528 = vst [vmem:[#allocation5 + $0x190] sm:$0xff] 0.0
      %529 = vst [vmem:[#allocation5 + $0x198] sm:$0xff] 0.0
      %530 = vst [vmem:[#allocation5 + $0x1a0] sm:$0xff] 0.0
      %531 = vst [vmem:[#allocation5 + $0x1a8] sm:$0xff] 0.0
      %532 = vst [vmem:[#allocation5 + $0x1b0] sm:$0xff] 0.0
      %533 = vst [vmem:[#allocation5 + $0x1b8] sm:$0xff] 0.0
      %534 = vst [vmem:[#allocation5 + $0x1c0] sm:$0xff] 0.0
      %535 = vst [vmem:[#allocation5 + $0x1c8] sm:$0xff] 0.0
      %536 = vst [vmem:[#allocation5 + $0x1d0] sm:$0xff] 0.0
      %537 = vst [vmem:[#allocation5 + $0x1d8] sm:$0xff] 0.0
      %538 = vst [vmem:[#allocation6] sm:$0xff] 0.0
      %539 = vst [vmem:[#allocation6 + $0x8] sm:$0xff] 0.0
      %540 = vst [vmem:[#allocation6 + $0x10] sm:$0xff] 0.0
      %541 = vst [vmem:[#allocation6 + $0x18] sm:$0xff] 0.0
      %542 = vst [vmem:[#allocation6 + $0x20] sm:$0xff] 0.0
      %543 = vst [vmem:[#allocation6 + $0x28] sm:$0xff] 0.0
      %544 = vst [vmem:[#allocation6 + $0x30] sm:$0xff] 0.0
      %545 = vst [vmem:[#allocation6 + $0x38] sm:$0xff] 0.0
      %546 = vst [vmem:[#allocation6 + $0x40] sm:$0xff] 0.0
      %547 = vst [vmem:[#allocation6 + $0x48] sm:$0xff] 0.0
      %548 = vst [vmem:[#allocation6 + $0x50] sm:$0xff] 0.0
      %549 = vst [vmem:[#allocation6 + $0x58] sm:$0xff] 0.0
      %550 = vst [vmem:[#allocation6 + $0x60] sm:$0xff] 0.0
      %551 = vst [vmem:[#allocation6 + $0x68] sm:$0xff] 0.0
      %552 = vst [vmem:[#allocation6 + $0x70] sm:$0xff] 0.0
      %553 = vst [vmem:[#allocation6 + $0x78] sm:$0xff] 0.0
      %554 = vst [vmem:[#allocation6 + $0x80] sm:$0xff] 0.0
      %555 = vst [vmem:[#allocation6 + $0x88] sm:$0xff] 0.0
      %556 = vst [vmem:[#allocation6 + $0x90] sm:$0xff] 0.0
      %557 = vst [vmem:[#allocation6 + $0x98] sm:$0xff] 0.0
      %558 = vst [vmem:[#allocation6 + $0xa0] sm:$0xff] 0.0
      %559 = vst [vmem:[#allocation6 + $0xa8] sm:$0xff] 0.0
      %560 = vst [vmem:[#allocation6 + $0xb0] sm:$0xff] 0.0
      %561 = vst [vmem:[#allocation6 + $0xb8] sm:$0xff] 0.0
      %562 = vst [vmem:[#allocation6 + $0xc0] sm:$0xff] 0.0
      %563 = vst [vmem:[#allocation6 + $0xc8] sm:$0xff] 0.0
      %564 = vst [vmem:[#allocation6 + $0xd0] sm:$0xff] 0.0
      %565 = vst [vmem:[#allocation6 + $0xd8] sm:$0xff] 0.0
      %566 = vst [vmem:[#allocation6 + $0xe0] sm:$0xff] 0.0
      %567 = vst [vmem:[#allocation6 + $0xe8] sm:$0xff] 0.0
      %568 = vst [vmem:[#allocation6 + $0xf0] sm:$0xff] 0.0
      %569 = vst [vmem:[#allocation6 + $0xf8] sm:$0xff] 0.0
      %570 = vst [vmem:[#allocation6 + $0x100] sm:$0xff] 0.0
      %571 = vst [vmem:[#allocation6 + $0x108] sm:$0xff] 0.0
      %572 = vst [vmem:[#allocation6 + $0x110] sm:$0xff] 0.0
      %573 = vst [vmem:[#allocation6 + $0x118] sm:$0xff] 0.0
      %574 = vst [vmem:[#allocation6 + $0x120] sm:$0xff] 0.0
      %575 = vst [vmem:[#allocation6 + $0x128] sm:$0xff] 0.0
      %576 = vst [vmem:[#allocation6 + $0x130] sm:$0xff] 0.0
      %577 = vst [vmem:[#allocation6 + $0x138] sm:$0xff] 0.0
      %578 = vst [vmem:[#allocation6 + $0x140] sm:$0xff] 0.0
      %579 = vst [vmem:[#allocation6 + $0x148] sm:$0xff] 0.0
      %580 = vst [vmem:[#allocation6 + $0x150] sm:$0xff] 0.0
      %581 = vst [vmem:[#allocation6 + $0x158] sm:$0xff] 0.0
      %582 = vst [vmem:[#allocation6 + $0x160] sm:$0xff] 0.0
      %583 = vst [vmem:[#allocation6 + $0x168] sm:$0xff] 0.0
      %584 = vst [vmem:[#allocation6 + $0x170] sm:$0xff] 0.0
      %585 = vst [vmem:[#allocation6 + $0x178] sm:$0xff] 0.0
      %586 = vst [vmem:[#allocation6 + $0x180] sm:$0xff] 0.0
      %587 = vst [vmem:[#allocation6 + $0x188] sm:$0xff] 0.0
      %588 = vst [vmem:[#allocation6 + $0x190] sm:$0xff] 0.0
      %589 = vst [vmem:[#allocation6 + $0x198] sm:$0xff] 0.0
      %590 = vst [vmem:[#allocation6 + $0x1a0] sm:$0xff] 0.0
      %591 = vst [vmem:[#allocation6 + $0x1a8] sm:$0xff] 0.0
      %592 = vst [vmem:[#allocation6 + $0x1b0] sm:$0xff] 0.0
      %593 = vst [vmem:[#allocation6 + $0x1b8] sm:$0xff] 0.0
      %594 = vst [vmem:[#allocation6 + $0x1c0] sm:$0xff] 0.0
      %595 = vst [vmem:[#allocation6 + $0x1c8] sm:$0xff] 0.0
      %596 = vst [vmem:[#allocation6 + $0x1d0] sm:$0xff] 0.0
      %597 = vst [vmem:[#allocation6 + $0x1d8] sm:$0xff] 0.0
      %v598 = vld [vmem:[%s381] sm:$0xff]
      %v599 = vld [vmem:[%s381 + $0x8] sm:$0xff]
      %v600 = vld [vmem:[%s381 + $0x10] sm:$0xff]
      %v601 = vld [vmem:[%s381 + $0x18] sm:$0xff]
      %v602 = vld [vmem:[%s381 + $0x20] sm:$0xff]
      %v603 = vld [vmem:[%s381 + $0x28] sm:$0xff]
      %v604 = vld [vmem:[%s381 + $0x30] sm:$0xff]
      %v605 = vld [vmem:[%s381 + $0x38] sm:$0xff]
      %s606 = scalar_lea.vmem [#allocation2], 24
      %607 = vst [vmem:[%s606 + $0x8] sm:$0xff] %v598
      %608 = vst [vmem:[%s606 + $0x20] sm:$0xff] %v599
      %609 = vst [vmem:[%s606 + $0x38] sm:$0xff] %v600
      %610 = vst [vmem:[%s606 + $0x50] sm:$0xff] %v601
      %611 = vst [vmem:[%s606 + $0x68] sm:$0xff] %v602
      %612 = vst [vmem:[%s606 + $0x80] sm:$0xff] %v603
      %613 = vst [vmem:[%s606 + $0x98] sm:$0xff] %v604
      %614 = vst [vmem:[%s606 + $0xb0] sm:$0xff] %v605
      %v615 = vld [vmem:[#allocation2 + $0x7] sm:$0xff]
      %v616 = vld [vmem:[#allocation2 + $0x1f] sm:$0xff]
      %v617 = vld [vmem:[#allocation2 + $0x37] sm:$0xff]
      %v618 = vld [vmem:[#allocation2 + $0x4f] sm:$0xff]
      %v619 = vld [vmem:[#allocation2 + $0x67] sm:$0xff]
      %v620 = vld [vmem:[#allocation2 + $0x7f] sm:$0xff]
      %v621 = vld [vmem:[#allocation2 + $0x97] sm:$0xff]
      %v622 = vld [vmem:[#allocation2 + $0xaf] sm:$0xff]
      %v623 = vld [vmem:[#allocation2 + $0x8] sm:$0xff]
      %v624 = vld [vmem:[#allocation2 + $0x20] sm:$0xff]
      %v625 = vld [vmem:[#allocation2 + $0x38] sm:$0xff]
      %v626 = vld [vmem:[#allocation2 + $0x50] sm:$0xff]
      %v627 = vld [vmem:[#allocation2 + $0x68] sm:$0xff]
      %v628 = vld [vmem:[#allocation2 + $0x80] sm:$0xff]
      %v629 = vld [vmem:[#allocation2 + $0x98] sm:$0xff]
      %v630 = vld [vmem:[#allocation2 + $0xb0] sm:$0xff]
      %v631 = vld [vmem:[#allocation2 + $0x9] sm:$0xff]
      %v632 = vld [vmem:[#allocation2 + $0x21] sm:$0xff]
      %v633 = vld [vmem:[#allocation2 + $0x39] sm:$0xff]
      %v634 = vld [vmem:[#allocation2 + $0x51] sm:$0xff]
      %v635 = vld [vmem:[#allocation2 + $0x69] sm:$0xff]
      %v636 = vld [vmem:[#allocation2 + $0x81] sm:$0xff]
      %v637 = vld [vmem:[#allocation2 + $0x99] sm:$0xff]
      %v638 = vld [vmem:[#allocation2 + $0xb1] sm:$0xff]
      %v639 = vld [vmem:[%s606 + $0x7] sm:$0xff]
      %v640 = vld [vmem:[%s606 + $0x1f] sm:$0xff]
      %v641 = vld [vmem:[%s606 + $0x37] sm:$0xff]
      %v642 = vld [vmem:[%s606 + $0x4f] sm:$0xff]
      %v643 = vld [vmem:[%s606 + $0x67] sm:$0xff]
      %v644 = vld [vmem:[%s606 + $0x7f] sm:$0xff]
      %v645 = vld [vmem:[%s606 + $0x97] sm:$0xff]
      %v646 = vld [vmem:[%s606 + $0xaf] sm:$0xff]
      %v647 = vld [vmem:[%s606 + $0x8] sm:$0xff]
      %v648 = vld [vmem:[%s606 + $0x20] sm:$0xff]
      %v649 = vld [vmem:[%s606 + $0x38] sm:$0xff]
      %v650 = vld [vmem:[%s606 + $0x50] sm:$0xff]
      %v651 = vld [vmem:[%s606 + $0x68] sm:$0xff]
      %v652 = vld [vmem:[%s606 + $0x80] sm:$0xff]
      %v653 = vld [vmem:[%s606 + $0x98] sm:$0xff]
      %v654 = vld [vmem:[%s606 + $0xb0] sm:$0xff]
      %v655 = vld [vmem:[%s606 + $0x9] sm:$0xff]
      %v656 = vld [vmem:[%s606 + $0x21] sm:$0xff]
      %v657 = vld [vmem:[%s606 + $0x39] sm:$0xff]
      %v658 = vld [vmem:[%s606 + $0x51] sm:$0xff]
      %v659 = vld [vmem:[%s606 + $0x69] sm:$0xff]
      %v660 = vld [vmem:[%s606 + $0x81] sm:$0xff]
      %v661 = vld [vmem:[%s606 + $0x99] sm:$0xff]
      %v662 = vld [vmem:[%s606 + $0xb1] sm:$0xff]
      %s663 = scalar_lea.vmem [#allocation2], 48
      %v664 = vld [vmem:[%s663 + $0x7] sm:$0xff]
      %v665 = vld [vmem:[%s663 + $0x1f] sm:$0xff]
      %v666 = vld [vmem:[%s663 + $0x37] sm:$0xff]
      %v667 = vld [vmem:[%s663 + $0x4f] sm:$0xff]
      %v668 = vld [vmem:[%s663 + $0x67] sm:$0xff]
      %v669 = vld [vmem:[%s663 + $0x7f] sm:$0xff]
      %v670 = vld [vmem:[%s663 + $0x97] sm:$0xff]
      %v671 = vld [vmem:[%s663 + $0xaf] sm:$0xff]
      %v672 = vld [vmem:[%s663 + $0x8] sm:$0xff]
      %v673 = vld [vmem:[%s663 + $0x20] sm:$0xff]
      %v674 = vld [vmem:[%s663 + $0x38] sm:$0xff]
      %v675 = vld [vmem:[%s663 + $0x50] sm:$0xff]
      %v676 = vld [vmem:[%s663 + $0x68] sm:$0xff]
      %v677 = vld [vmem:[%s663 + $0x80] sm:$0xff]
      %v678 = vld [vmem:[%s663 + $0x98] sm:$0xff]
      %v679 = vld [vmem:[%s663 + $0xb0] sm:$0xff]
      %v680 = vld [vmem:[%s663 + $0x9] sm:$0xff]
      %v681 = vld [vmem:[%s663 + $0x21] sm:$0xff]
      %v682 = vld [vmem:[%s663 + $0x39] sm:$0xff]
      %v683 = vld [vmem:[%s663 + $0x51] sm:$0xff]
      %v684 = vld [vmem:[%s663 + $0x69] sm:$0xff]
      %v685 = vld [vmem:[%s663 + $0x81] sm:$0xff]
      %v686 = vld [vmem:[%s663 + $0x99] sm:$0xff]
      %v687 = vld [vmem:[%s663 + $0xb1] sm:$0xff]
      %v688 = vpack.c.bf16 %v616, %v615
      %v689 = vpack.c.bf16 %v624, %v623
      %v690 = vpack.c.bf16 %v632, %v631
      %v691 = vpack.c.bf16 %v640, %v639
      %v692 = vpack.c.bf16 %v648, %v647
      %v693 = vpack.c.bf16 %v656, %v655
      %v694 = vpack.c.bf16 %v665, %v664
      %v695 = vpack.c.bf16 %v673, %v672
      %v696 = vpack.c.bf16 %v681, %v680
      %v697 = vpack.c.bf16 %v618, %v617
      %v698 = vpack.c.bf16 %v626, %v625
      %v699 = vpack.c.bf16 %v634, %v633
      %v700 = vpack.c.bf16 %v642, %v641
      %v701 = vpack.c.bf16 %v650, %v649
      %v702 = vpack.c.bf16 %v658, %v657
      %v703 = vpack.c.bf16 %v667, %v666
      %v704 = vpack.c.bf16 %v675, %v674
      %v705 = vpack.c.bf16 %v683, %v682
      %v706 = vpack.c.bf16 %v620, %v619
      %v707 = vpack.c.bf16 %v628, %v627
      %v708 = vpack.c.bf16 %v636, %v635
      %v709 = vpack.c.bf16 %v644, %v643
      %v710 = vpack.c.bf16 %v652, %v651
      %v711 = vpack.c.bf16 %v660, %v659
      %v712 = vpack.c.bf16 %v669, %v668
      %v713 = vpack.c.bf16 %v677, %v676
      %v714 = vpack.c.bf16 %v685, %v684
      %v715 = vpack.c.bf16 %v622, %v621
      %v716 = vpack.c.bf16 %v630, %v629
      %v717 = vpack.c.bf16 %v638, %v637
      %v718 = vpack.c.bf16 %v646, %v645
      %v719 = vpack.c.bf16 %v654, %v653
      %v720 = vpack.c.bf16 %v662, %v661
      %v721 = vpack.c.bf16 %v671, %v670
      %v722 = vpack.c.bf16 %v679, %v678
      %v723 = vpack.c.bf16 %v687, %v686
      %v724 = vld [vmem:[%s1] sm:$0xf]
      %v725 = vld [vmem:[%s1 + $0x4] sm:$0xf]
      %v726 = vld [vmem:[%s1 + $0x8] sm:$0xf]
      %v727 = vld [vmem:[%s1 + $0xc] sm:$0xf]
      %v728 = vld [vmem:[%s1 + $0x10] sm:$0xf]
      %v729 = vld [vmem:[%s1 + $0x14] sm:$0xf]
      %v730 = vld [vmem:[%s1 + $0x18] sm:$0xf]
      %v731 = vld [vmem:[%s1 + $0x1c] sm:$0xf]
      %v732 = vld [vmem:[%s1 + $0x20] sm:$0xf]
      %v733 = vld [vmem:[%s1 + $0x24] sm:$0xf]
      %v734 = vld [vmem:[%s1 + $0x28] sm:$0xf]
      %v735 = vld [vmem:[%s1 + $0x2c] sm:$0xf]
      %v736 = vld [vmem:[%s1 + $0x30] sm:$0xf]
      %v737 = vld [vmem:[%s1 + $0x34] sm:$0xf]
      %v738 = vld [vmem:[%s1 + $0x38] sm:$0xf]
      %v739 = vld [vmem:[%s1 + $0x3c] sm:$0xf]
      %v740 = vld [vmem:[%s1 + $0x40] sm:$0xf]
      %v741 = vld [vmem:[%s1 + $0x44] sm:$0xf]
      %v742 = vld [vmem:[%s1 + $0x48] sm:$0xf]
      %v743 = vld [vmem:[%s1 + $0x4c] sm:$0xf]
      %v744 = vld [vmem:[%s1 + $0x50] sm:$0xf]
      %v745 = vld [vmem:[%s1 + $0x54] sm:$0xf]
      %v746 = vld [vmem:[%s1 + $0x58] sm:$0xf]
      %v747 = vld [vmem:[%s1 + $0x5c] sm:$0xf]
      %v748 = vld [vmem:[%s1 + $0x60] sm:$0xf]
      %v749 = vld [vmem:[%s1 + $0x64] sm:$0xf]
      %v750 = vld [vmem:[%s1 + $0x68] sm:$0xf]
      %v751 = vld [vmem:[%s1 + $0x6c] sm:$0xf]
      %v752 = vld [vmem:[%s1 + $0x70] sm:$0xf]
      %v753 = vld [vmem:[%s1 + $0x74] sm:$0xf]
      %v754 = vld [vmem:[%s1 + $0x78] sm:$0xf]
      %v755 = vld [vmem:[%s1 + $0x7c] sm:$0xf]
      %v756 = vld [vmem:[%s1 + $0x80] sm:$0xf]
      %v757 = vld [vmem:[%s1 + $0x84] sm:$0xf]
      %v758 = vld [vmem:[%s1 + $0x88] sm:$0xf]
      %v759 = vld [vmem:[%s1 + $0x8c] sm:$0xf]
      %v760 = vld [vmem:[%s1 + $0x90] sm:$0xf]
      %v761 = vld [vmem:[%s1 + $0x94] sm:$0xf]
      %v762 = vld [vmem:[%s1 + $0x98] sm:$0xf]
      %v763 = vld [vmem:[%s1 + $0x9c] sm:$0xf]
      %v764 = vld [vmem:[%s1 + $0xa0] sm:$0xf]
      %v765 = vld [vmem:[%s1 + $0xa4] sm:$0xf]
      %v766 = vld [vmem:[%s1 + $0xa8] sm:$0xf]
      %v767 = vld [vmem:[%s1 + $0xac] sm:$0xf]
      %v768 = vld [vmem:[%s1 + $0xb0] sm:$0xf]
      %v769 = vld [vmem:[%s1 + $0xb4] sm:$0xf]
      %v770 = vld [vmem:[%s1 + $0xb8] sm:$0xf]
      %v771 = vld [vmem:[%s1 + $0xbc] sm:$0xf]
      %v772 = vld [vmem:[%s1 + $0xc0] sm:$0xf]
      %v773 = vld [vmem:[%s1 + $0xc4] sm:$0xf]
      %v774 = vld [vmem:[%s1 + $0xc8] sm:$0xf]
      %v775 = vld [vmem:[%s1 + $0xcc] sm:$0xf]
      %v776 = vld [vmem:[%s1 + $0xd0] sm:$0xf]
      %v777 = vld [vmem:[%s1 + $0xd4] sm:$0xf]
      %v778 = vld [vmem:[%s1 + $0xd8] sm:$0xf]
      %v779 = vld [vmem:[%s1 + $0xdc] sm:$0xf]
      %v780 = vld [vmem:[%s1 + $0xe0] sm:$0xf]
      %v781 = vld [vmem:[%s1 + $0xe4] sm:$0xf]
      %v782 = vld [vmem:[%s1 + $0xe8] sm:$0xf]
      %v783 = vld [vmem:[%s1 + $0xec] sm:$0xf]
      %v784 = vld [vmem:[%s1 + $0xf0] sm:$0xf]
      %v785 = vld [vmem:[%s1 + $0xf4] sm:$0xf]
      %v786 = vld [vmem:[%s1 + $0xf8] sm:$0xf]
      %v787 = vld [vmem:[%s1 + $0xfc] sm:$0xf]
      %v788 = vld [vmem:[%s1 + $0x100] sm:$0xf]
      %v789 = vld [vmem:[%s1 + $0x104] sm:$0xf]
      %v790 = vld [vmem:[%s1 + $0x108] sm:$0xf]
      %v791 = vld [vmem:[%s1 + $0x10c] sm:$0xf]
      %v792 = vld [vmem:[%s1 + $0x110] sm:$0xf]
      %v793 = vld [vmem:[%s1 + $0x114] sm:$0xf]
      %v794 = vld [vmem:[%s1 + $0x118] sm:$0xf]
      %v795 = vld [vmem:[%s1 + $0x11c] sm:$0xf]
      %v796 = vld [vmem:[%s1 + $0x120] sm:$0xf]
      %v797 = vld [vmem:[%s1 + $0x124] sm:$0xf]
      %v798 = vld [vmem:[%s1 + $0x128] sm:$0xf]
      %v799 = vld [vmem:[%s1 + $0x12c] sm:$0xf]
      %v800 = vld [vmem:[%s1 + $0x130] sm:$0xf]
      %v801 = vld [vmem:[%s1 + $0x134] sm:$0xf]
      %v802 = vld [vmem:[%s1 + $0x138] sm:$0xf]
      %v803 = vld [vmem:[%s1 + $0x13c] sm:$0xf]
      %v804 = vld [vmem:[%s1 + $0x140] sm:$0xf]
      %v805 = vld [vmem:[%s1 + $0x144] sm:$0xf]
      %v806 = vld [vmem:[%s1 + $0x148] sm:$0xf]
      %v807 = vld [vmem:[%s1 + $0x14c] sm:$0xf]
      %v808 = vld [vmem:[%s1 + $0x150] sm:$0xf]
      %v809 = vld [vmem:[%s1 + $0x154] sm:$0xf]
      %v810 = vld [vmem:[%s1 + $0x158] sm:$0xf]
      %v811 = vld [vmem:[%s1 + $0x15c] sm:$0xf]
      %v812 = vld [vmem:[%s1 + $0x160] sm:$0xf]
      %v813 = vld [vmem:[%s1 + $0x164] sm:$0xf]
      %v814 = vld [vmem:[%s1 + $0x168] sm:$0xf]
      %v815 = vld [vmem:[%s1 + $0x16c] sm:$0xf]
      %v816 = vld [vmem:[%s1 + $0x170] sm:$0xf]
      %v817 = vld [vmem:[%s1 + $0x174] sm:$0xf]
      %v818 = vld [vmem:[%s1 + $0x178] sm:$0xf]
      %v819 = vld [vmem:[%s1 + $0x17c] sm:$0xf]
      %v820 = vld [vmem:[%s1 + $0x180] sm:$0xf]
      %v821 = vld [vmem:[%s1 + $0x184] sm:$0xf]
      %v822 = vld [vmem:[%s1 + $0x188] sm:$0xf]
      %v823 = vld [vmem:[%s1 + $0x18c] sm:$0xf]
      %v824 = vld [vmem:[%s1 + $0x190] sm:$0xf]
      %v825 = vld [vmem:[%s1 + $0x194] sm:$0xf]
      %v826 = vld [vmem:[%s1 + $0x198] sm:$0xf]
      %v827 = vld [vmem:[%s1 + $0x19c] sm:$0xf]
      %v828 = vld [vmem:[%s1 + $0x1a0] sm:$0xf]
      %v829 = vld [vmem:[%s1 + $0x1a4] sm:$0xf]
      %v830 = vld [vmem:[%s1 + $0x1a8] sm:$0xf]
      %v831 = vld [vmem:[%s1 + $0x1ac] sm:$0xf]
      %v832 = vld [vmem:[%s1 + $0x1b0] sm:$0xf]
      %v833 = vld [vmem:[%s1 + $0x1b4] sm:$0xf]
      %v834 = vld [vmem:[%s1 + $0x1b8] sm:$0xf]
      %v835 = vld [vmem:[%s1 + $0x1bc] sm:$0xf]
      %v836 = vld [vmem:[%s1 + $0x1c0] sm:$0xf]
      %v837 = vld [vmem:[%s1 + $0x1c4] sm:$0xf]
      %v838 = vld [vmem:[%s1 + $0x1c8] sm:$0xf]
      %v839 = vld [vmem:[%s1 + $0x1cc] sm:$0xf]
      %v840 = vld [vmem:[%s1 + $0x1d0] sm:$0xf]
      %v841 = vld [vmem:[%s1 + $0x1d4] sm:$0xf]
      %v842 = vld [vmem:[%s1 + $0x1d8] sm:$0xf]
      %v843 = vld [vmem:[%s1 + $0x1dc] sm:$0xf]
      %v844 = vld [vmem:[%s1 + $0x1e0] sm:$0xf]
      %v845 = vld [vmem:[%s1 + $0x1e4] sm:$0xf]
      %v846 = vld [vmem:[%s1 + $0x1e8] sm:$0xf]
      %v847 = vld [vmem:[%s1 + $0x1ec] sm:$0xf]
      %v848 = vld [vmem:[%s1 + $0x1f0] sm:$0xf]
      %v849 = vld [vmem:[%s1 + $0x1f4] sm:$0xf]
      %v850 = vld [vmem:[%s1 + $0x1f8] sm:$0xf]
      %v851 = vld [vmem:[%s1 + $0x1fc] sm:$0xf]
      %v852 = vld [vmem:[%s1 + $0x200] sm:$0xf]
      %v853 = vld [vmem:[%s1 + $0x204] sm:$0xf]
      %v854 = vld [vmem:[%s1 + $0x208] sm:$0xf]
      %v855 = vld [vmem:[%s1 + $0x20c] sm:$0xf]
      %v856 = vld [vmem:[%s1 + $0x210] sm:$0xf]
      %v857 = vld [vmem:[%s1 + $0x214] sm:$0xf]
      %v858 = vld [vmem:[%s1 + $0x218] sm:$0xf]
      %v859 = vld [vmem:[%s1 + $0x21c] sm:$0xf]
      %v860 = vld [vmem:[%s1 + $0x220] sm:$0xf]
      %v861 = vld [vmem:[%s1 + $0x224] sm:$0xf]
      %v862 = vld [vmem:[%s1 + $0x228] sm:$0xf]
      %v863 = vld [vmem:[%s1 + $0x22c] sm:$0xf]
      %v864 = vld [vmem:[%s1 + $0x230] sm:$0xf]
      %v865 = vld [vmem:[%s1 + $0x234] sm:$0xf]
      %v866 = vld [vmem:[%s1 + $0x238] sm:$0xf]
      %v867 = vld [vmem:[%s1 + $0x23c] sm:$0xf]
      %v868 = vld [vmem:[%s2] sm:$0x1]
      %v870 = vlaneseq
      %v871 = vshrl.u32 %v870, 7
      %v872 = vsub.s32 0, %v871
      %v873 = vrot.slane %v868, %v872
      %v1019 = vunpack.c.l.b16 %v724
      %v1020 = vunpack.c.l.b16 %v725
      %v1021 = vunpack.c.l.b16 %v726
      %v1022 = vunpack.c.l.b16 %v727
      %v1023 = vunpack.c.l.b16 %v728
      %v1024 = vunpack.c.l.b16 %v729
      %v1025 = vunpack.c.l.b16 %v730
      %v1026 = vunpack.c.l.b16 %v731
      %v1027 = vunpack.c.l.b16 %v732
      %v1028 = vunpack.c.l.b16 %v733
      %v1029 = vunpack.c.l.b16 %v734
      %v1030 = vunpack.c.l.b16 %v735
      %v1031 = vunpack.c.l.b16 %v736
      %v1032 = vunpack.c.l.b16 %v737
      %v1033 = vunpack.c.l.b16 %v738
      %v1034 = vunpack.c.l.b16 %v739
      %v1035 = vunpack.c.l.b16 %v740
      %v1036 = vunpack.c.l.b16 %v741
      %v1037 = vunpack.c.l.b16 %v742
      %v1038 = vunpack.c.l.b16 %v743
      %v1039 = vunpack.c.l.b16 %v744
      %v1040 = vunpack.c.l.b16 %v745
      %v1041 = vunpack.c.l.b16 %v746
      %v1042 = vunpack.c.l.b16 %v747
      %v1043 = vunpack.c.l.b16 %v748
      %v1044 = vunpack.c.l.b16 %v749
      %v1045 = vunpack.c.l.b16 %v750
      %v1046 = vunpack.c.l.b16 %v751
      %v1047 = vunpack.c.l.b16 %v752
      %v1048 = vunpack.c.l.b16 %v753
      %v1049 = vunpack.c.l.b16 %v754
      %v1050 = vunpack.c.l.b16 %v755
      %v1051 = vunpack.c.l.b16 %v756
      %v1052 = vunpack.c.l.b16 %v757
      %v1053 = vunpack.c.l.b16 %v758
      %v1054 = vunpack.c.l.b16 %v759
      %v1055 = vunpack.c.l.b16 %v760
      %v1056 = vunpack.c.l.b16 %v761
      %v1057 = vunpack.c.l.b16 %v762
      %v1058 = vunpack.c.l.b16 %v763
      %v1059 = vunpack.c.l.b16 %v764
      %v1060 = vunpack.c.l.b16 %v765
      %v1061 = vunpack.c.l.b16 %v766
      %v1062 = vunpack.c.l.b16 %v767
      %v1063 = vunpack.c.l.b16 %v768
      %v1064 = vunpack.c.l.b16 %v769
      %v1065 = vunpack.c.l.b16 %v770
      %v1066 = vunpack.c.l.b16 %v771
      %v1067 = vunpack.c.l.b16 %v772
      %v1068 = vunpack.c.l.b16 %v773
      %v1069 = vunpack.c.l.b16 %v774
      %v1070 = vunpack.c.l.b16 %v775
      %v1071 = vunpack.c.l.b16 %v776
      %v1072 = vunpack.c.l.b16 %v777
      %v1073 = vunpack.c.l.b16 %v778
      %v1074 = vunpack.c.l.b16 %v779
      %v1075 = vunpack.c.l.b16 %v780
      %v1076 = vunpack.c.l.b16 %v781
      %v1077 = vunpack.c.l.b16 %v782
      %v1078 = vunpack.c.l.b16 %v783
      %v1079 = vunpack.c.l.b16 %v784
      %v1080 = vunpack.c.l.b16 %v785
      %v1081 = vunpack.c.l.b16 %v786
      %v1082 = vunpack.c.l.b16 %v787
      %v1083 = vunpack.c.l.b16 %v788
      %v1084 = vunpack.c.l.b16 %v789
      %v1085 = vunpack.c.l.b16 %v790
      %v1086 = vunpack.c.l.b16 %v791
      %v1087 = vunpack.c.l.b16 %v792
      %v1088 = vunpack.c.l.b16 %v793
      %v1089 = vunpack.c.l.b16 %v794
      %v1090 = vunpack.c.l.b16 %v795
      %v1091 = vunpack.c.l.b16 %v796
      %v1092 = vunpack.c.l.b16 %v797
      %v1093 = vunpack.c.l.b16 %v798
      %v1094 = vunpack.c.l.b16 %v799
      %v1095 = vunpack.c.l.b16 %v800
      %v1096 = vunpack.c.l.b16 %v801
      %v1097 = vunpack.c.l.b16 %v802
      %v1098 = vunpack.c.l.b16 %v803
      %v1099 = vunpack.c.l.b16 %v804
      %v1100 = vunpack.c.l.b16 %v805
      %v1101 = vunpack.c.l.b16 %v806
      %v1102 = vunpack.c.l.b16 %v807
      %v1103 = vunpack.c.l.b16 %v808
      %v1104 = vunpack.c.l.b16 %v809
      %v1105 = vunpack.c.l.b16 %v810
      %v1106 = vunpack.c.l.b16 %v811
      %v1107 = vunpack.c.l.b16 %v812
      %v1108 = vunpack.c.l.b16 %v813
      %v1109 = vunpack.c.l.b16 %v814
      %v1110 = vunpack.c.l.b16 %v815
      %v1111 = vunpack.c.l.b16 %v816
      %v1112 = vunpack.c.l.b16 %v817
      %v1113 = vunpack.c.l.b16 %v818
      %v1114 = vunpack.c.l.b16 %v819
      %v1115 = vunpack.c.l.b16 %v820
      %v1116 = vunpack.c.l.b16 %v821
      %v1117 = vunpack.c.l.b16 %v822
      %v1118 = vunpack.c.l.b16 %v823
      %v1119 = vunpack.c.l.b16 %v824
      %v1120 = vunpack.c.l.b16 %v825
      %v1121 = vunpack.c.l.b16 %v826
      %v1122 = vunpack.c.l.b16 %v827
      %v1123 = vunpack.c.l.b16 %v828
      %v1124 = vunpack.c.l.b16 %v829
      %v1125 = vunpack.c.l.b16 %v830
      %v1126 = vunpack.c.l.b16 %v831
      %v1127 = vunpack.c.l.b16 %v832
      %v1128 = vunpack.c.l.b16 %v833
      %v1129 = vunpack.c.l.b16 %v834
      %v1130 = vunpack.c.l.b16 %v835
      %v1131 = vunpack.c.l.b16 %v836
      %v1132 = vunpack.c.l.b16 %v837
      %v1133 = vunpack.c.l.b16 %v838
      %v1134 = vunpack.c.l.b16 %v839
      %v1135 = vunpack.c.l.b16 %v840
      %v1136 = vunpack.c.l.b16 %v841
      %v1137 = vunpack.c.l.b16 %v842
      %v1138 = vunpack.c.l.b16 %v843
      %v1139 = vunpack.c.l.b16 %v844
      %v1140 = vunpack.c.l.b16 %v845
      %v1141 = vunpack.c.l.b16 %v846
      %v1142 = vunpack.c.l.b16 %v847
      %v1143 = vunpack.c.l.b16 %v848
      %v1144 = vunpack.c.l.b16 %v849
      %v1145 = vunpack.c.l.b16 %v850
      %v1146 = vunpack.c.l.b16 %v851
      %v1147 = vunpack.c.l.b16 %v852
      %v1148 = vunpack.c.l.b16 %v853
      %v1149 = vunpack.c.l.b16 %v854
      %v1150 = vunpack.c.l.b16 %v855
      %v1151 = vunpack.c.l.b16 %v856
      %v1152 = vunpack.c.l.b16 %v857
      %v1153 = vunpack.c.l.b16 %v858
      %v1154 = vunpack.c.l.b16 %v859
      %v1155 = vunpack.c.l.b16 %v860
      %v1156 = vunpack.c.l.b16 %v861
      %v1157 = vunpack.c.l.b16 %v862
      %v1158 = vunpack.c.l.b16 %v863
      %v1159 = vunpack.c.l.b16 %v864
      %v1160 = vunpack.c.l.b16 %v865
      %v1161 = vunpack.c.l.b16 %v866
      %v1162 = vunpack.c.l.b16 %v867
      %v1163 = vpack.c.b16 %v1020, %v1019
      %v1164 = vpack.c.b16 %v1022, %v1021
      %v1165 = vpack.c.b16 %v1024, %v1023
      %v1166 = vpack.c.b16 %v1026, %v1025
      %v1167 = vpack.c.b16 %v1028, %v1027
      %v1168 = vpack.c.b16 %v1030, %v1029
      %v1169 = vpack.c.b16 %v1032, %v1031
      %v1170 = vpack.c.b16 %v1034, %v1033
      %v1171 = vpack.c.b16 %v1036, %v1035
      %v1172 = vpack.c.b16 %v1038, %v1037
      %v1173 = vpack.c.b16 %v1040, %v1039
      %v1174 = vpack.c.b16 %v1042, %v1041
      %v1175 = vpack.c.b16 %v1044, %v1043
      %v1176 = vpack.c.b16 %v1046, %v1045
      %v1177 = vpack.c.b16 %v1048, %v1047
      %v1178 = vpack.c.b16 %v1050, %v1049
      %v1179 = vpack.c.b16 %v1052, %v1051
      %v1180 = vpack.c.b16 %v1054, %v1053
      %v1181 = vpack.c.b16 %v1056, %v1055
      %v1182 = vpack.c.b16 %v1058, %v1057
      %v1183 = vpack.c.b16 %v1060, %v1059
      %v1184 = vpack.c.b16 %v1062, %v1061
      %v1185 = vpack.c.b16 %v1064, %v1063
      %v1186 = vpack.c.b16 %v1066, %v1065
      %v1187 = vpack.c.b16 %v1068, %v1067
      %v1188 = vpack.c.b16 %v1070, %v1069
      %v1189 = vpack.c.b16 %v1072, %v1071
      %v1190 = vpack.c.b16 %v1074, %v1073
      %v1191 = vpack.c.b16 %v1076, %v1075
      %v1192 = vpack.c.b16 %v1078, %v1077
      %v1193 = vpack.c.b16 %v1080, %v1079
      %v1194 = vpack.c.b16 %v1082, %v1081
      %v1195 = vpack.c.b16 %v1084, %v1083
      %v1196 = vpack.c.b16 %v1086, %v1085
      %v1197 = vpack.c.b16 %v1088, %v1087
      %v1198 = vpack.c.b16 %v1090, %v1089
      %v1199 = vpack.c.b16 %v1092, %v1091
      %v1200 = vpack.c.b16 %v1094, %v1093
      %v1201 = vpack.c.b16 %v1096, %v1095
      %v1202 = vpack.c.b16 %v1098, %v1097
      %v1203 = vpack.c.b16 %v1100, %v1099
      %v1204 = vpack.c.b16 %v1102, %v1101
      %v1205 = vpack.c.b16 %v1104, %v1103
      %v1206 = vpack.c.b16 %v1106, %v1105
      %v1207 = vpack.c.b16 %v1108, %v1107
      %v1208 = vpack.c.b16 %v1110, %v1109
      %v1209 = vpack.c.b16 %v1112, %v1111
      %v1210 = vpack.c.b16 %v1114, %v1113
      %v1211 = vpack.c.b16 %v1116, %v1115
      %v1212 = vpack.c.b16 %v1118, %v1117
      %v1213 = vpack.c.b16 %v1120, %v1119
      %v1214 = vpack.c.b16 %v1122, %v1121
      %v1215 = vpack.c.b16 %v1124, %v1123
      %v1216 = vpack.c.b16 %v1126, %v1125
      %v1217 = vpack.c.b16 %v1128, %v1127
      %v1218 = vpack.c.b16 %v1130, %v1129
      %v1219 = vpack.c.b16 %v1132, %v1131
      %v1220 = vpack.c.b16 %v1134, %v1133
      %v1221 = vpack.c.b16 %v1136, %v1135
      %v1222 = vpack.c.b16 %v1138, %v1137
      %v1223 = vpack.c.b16 %v1140, %v1139
      %v1224 = vpack.c.b16 %v1142, %v1141
      %v1225 = vpack.c.b16 %v1144, %v1143
      %v1226 = vpack.c.b16 %v1146, %v1145
      %v1227 = vpack.c.b16 %v1148, %v1147
      %v1228 = vpack.c.b16 %v1150, %v1149
      %v1229 = vpack.c.b16 %v1152, %v1151
      %v1230 = vpack.c.b16 %v1154, %v1153
      %v1231 = vpack.c.b16 %v1156, %v1155
      %v1232 = vpack.c.b16 %v1158, %v1157
      %v1233 = vpack.c.b16 %v1160, %v1159
      %v1234 = vpack.c.b16 %v1162, %v1161
      %1307 = vmatprep.subr.bf16.mxu0 0
      %1308 = vmatpush1.bf16.msra.mxu0 %v1163
      %1309 = vmatprep.subr.bf16.mxu0 0
      %1310 = vmatpush1.bf16.msra.mxu0 %v1164
      %1311 = vmatprep.subr.bf16.mxu0 0
      %1312 = vmatpush1.bf16.msra.mxu0 %v1165
      %1313 = vmatprep.subr.bf16.mxu0 0
      %1314 = vmatpush1.bf16.msra.mxu0 %v1166
      %1315 = vmatprep.subr.bf16.mxu0 0
      %1316 = vmatpush1.bf16.msra.mxu0 %v1167
      %1317 = vmatprep.subr.bf16.mxu0 0
      %1318 = vmatpush1.bf16.msra.mxu0 %v1168
      %1319 = vmatprep.subr.bf16.mxu0 0
      %1320 = vmatpush1.bf16.msra.mxu0 %v1169
      %1321 = vmatprep.subr.bf16.mxu0 0
      %1322 = vmatpush1.bf16.msra.mxu0 %v1170
      %1323 = vmatprep.subr.bf16.mxu0 0
      %1324 = vmatpush1.bf16.msra.mxu0 %v1171
      %1325 = vmatprep.subr.bf16.mxu0 0
      %1326 = vmatpush1.bf16.msra.mxu0 %v1172
      %1327 = vmatprep.subr.bf16.mxu0 0
      %1328 = vmatpush1.bf16.msra.mxu0 %v1173
      %1329 = vmatprep.subr.bf16.mxu0 0
      %1330 = vmatpush1.bf16.msra.mxu0 %v1174
      %1331 = vmatprep.subr.bf16.mxu0 0
      %1332 = vmatpush1.bf16.msra.mxu0 %v1175
      %1333 = vmatprep.subr.bf16.mxu0 0
      %1334 = vmatpush1.bf16.msra.mxu0 %v1176
      %1335 = vmatprep.subr.bf16.mxu0 0
      %1336 = vmatpush1.bf16.msra.mxu0 %v1177
      %1337 = vmatprep.subr.bf16.mxu0 0
      %1338 = vmatpush1.bf16.msra.mxu0 %v1178
      %1339 = vmatprep.mubr.bf16.mxu0 %v689
      %1340 = vmatmul.mubr.bf16.gmra.mrb[0].mxu0 %v688
      %v1341 = vpop.f32.mrb[0].mxu0
      %v1342 = vadd.f32 %v873, %v1341
      %v1343 = vpop.f32.mrb[0].mxu0
      %v1344 = vpop.f32.mrb[0].mxu0
      %v1345 = vadd.f32 %v873, %v1344
      %v1346 = vpop.f32.mrb[0].mxu0
      %1347 = vmatprep.mubr.bf16.mxu0 %v698
      %1348 = vmatmul.mubr.bf16.gmra.mrb[0].mxu0 %v697
      %v1349 = vpop.f32.mrb[0].mxu0
      %v1350 = vadd.f32 %v873, %v1349
      %v1351 = vpop.f32.mrb[0].mxu0
      %v1352 = vpop.f32.mrb[0].mxu0
      %v1353 = vadd.f32 %v873, %v1352
      %v1354 = vpop.f32.mrb[0].mxu0
      %1355 = vmatprep.mubr.bf16.mxu0 %v707
      %1356 = vmatmul.mubr.bf16.gmra.mrb[0].mxu0 %v706
      %v1357 = vpop.f32.mrb[0].mxu0
      %v1358 = vadd.f32 %v873, %v1357
      %v1359 = vpop.f32.mrb[0].mxu0
      %v1360 = vpop.f32.mrb[0].mxu0
      %v1361 = vadd.f32 %v873, %v1360
      %v1362 = vpop.f32.mrb[0].mxu0
      %1363 = vmatprep.mubr.bf16.mxu0 %v716
      %1364 = vmatmul.mubr.bf16.gmra.mrb[0].mxu0 %v715
      %v1365 = vpop.f32.mrb[0].mxu0
      %v1366 = vadd.f32 %v873, %v1365
      %v1367 = vpop.f32.mrb[0].mxu0
      %v1368 = vpop.f32.mrb[0].mxu0
      %v1369 = vadd.f32 %v873, %v1368
      %v1370 = vpop.f32.mrb[0].mxu0
      %1371 = vdwg.mxu0
      %1372 = vmatprep.subr.bf16.mxu0 0
      %1373 = vmatpush1.bf16.msra.mxu0 %v1179
      %1374 = vmatprep.subr.bf16.mxu0 0
      %1375 = vmatpush1.bf16.msra.mxu0 %v1180
      %1376 = vmatprep.subr.bf16.mxu0 0
      %1377 = vmatpush1.bf16.msra.mxu0 %v1181
      %1378 = vmatprep.subr.bf16.mxu0 0
      %1379 = vmatpush1.bf16.msra.mxu0 %v1182
      %1380 = vmatprep.subr.bf16.mxu0 0
      %1381 = vmatpush1.bf16.msra.mxu0 %v1183
      %1382 = vmatprep.subr.bf16.mxu0 0
      %1383 = vmatpush1.bf16.msra.mxu0 %v1184
      %1384 = vmatprep.subr.bf16.mxu0 0
      %1385 = vmatpush1.bf16.msra.mxu0 %v1185
      %1386 = vmatprep.subr.bf16.mxu0 0
      %1387 = vmatpush1.bf16.msra.mxu0 %v1186
      %1388 = vmatprep.subr.bf16.mxu0 0
      %1389 = vmatpush1.bf16.msra.mxu0 %v1187
      %1390 = vmatprep.subr.bf16.mxu0 0
      %1391 = vmatpush1.bf16.msra.mxu0 %v1188
      %1392 = vmatprep.subr.bf16.mxu0 0
      %1393 = vmatpush1.bf16.msra.mxu0 %v1189
      %1394 = vmatprep.subr.bf16.mxu0 0
      %1395 = vmatpush1.bf16.msra.mxu0 %v1190
      %1396 = vmatprep.subr.bf16.mxu0 0
      %1397 = vmatpush1.bf16.msra.mxu0 %v1191
      %1398 = vmatprep.subr.bf16.mxu0 0
      %1399 = vmatpush1.bf16.msra.mxu0 %v1192
      %1400 = vmatprep.subr.bf16.mxu0 0
      %1401 = vmatpush1.bf16.msra.mxu0 %v1193
      %1402 = vmatprep.subr.bf16.mxu0 0
      %1403 = vmatpush1.bf16.msra.mxu0 %v1194
      %1404 = vmatprep.mubr.bf16.mxu0 %v691
      %1405 = vmatmul.mubr.bf16.gmra.mrb[0].mxu0 %v690
      %v1406 = vpop.f32.mrb[0].mxu0
      %v1407 = vadd.f32 %v1342, %v1406
      %v1408 = vpop.f32.mrb[0].mxu0
      %v1409 = vpop.f32.mrb[0].mxu0
      %v1410 = vadd.f32 %v1345, %v1409
      %v1411 = vpop.f32.mrb[0].mxu0
      %1412 = vmatprep.mubr.bf16.mxu0 %v700
      %1413 = vmatmul.mubr.bf16.gmra.mrb[0].mxu0 %v699
      %v1414 = vpop.f32.mrb[0].mxu0
      %v1415 = vadd.f32 %v1350, %v1414
      %v1416 = vpop.f32.mrb[0].mxu0
      %v1417 = vpop.f32.mrb[0].mxu0
      %v1418 = vadd.f32 %v1353, %v1417
      %v1419 = vpop.f32.mrb[0].mxu0
      %1420 = vmatprep.mubr.bf16.mxu0 %v709
      %1421 = vmatmul.mubr.bf16.gmra.mrb[0].mxu0 %v708
      %v1422 = vpop.f32.mrb[0].mxu0
      %v1423 = vadd.f32 %v1358, %v1422
      %v1424 = vpop.f32.mrb[0].mxu0
      %v1425 = vpop.f32.mrb[0].mxu0
      %v1426 = vadd.f32 %v1361, %v1425
      %v1427 = vpop.f32.mrb[0].mxu0
      %1428 = vmatprep.mubr.bf16.mxu0 %v718
      %1429 = vmatmul.mubr.bf16.gmra.mrb[0].mxu0 %v717
      %v1430 = vpop.f32.mrb[0].mxu0
      %v1431 = vadd.f32 %v1366, %v1430
      %v1432 = vpop.f32.mrb[0].mxu0
      %v1433 = vpop.f32.mrb[0].mxu0
      %v1434 = vadd.f32 %v1369, %v1433
      %v1435 = vpop.f32.mrb[0].mxu0
      %1436 = vdwg.mxu0
      %1437 = vmatprep.subr.bf16.mxu0 0
      %1438 = vmatpush1.bf16.msra.mxu0 %v1195
      %1439 = vmatprep.subr.bf16.mxu0 0
      %1440 = vmatpush1.bf16.msra.mxu0 %v1196
      %1441 = vmatprep.subr.bf16.mxu0 0
      %1442 = vmatpush1.bf16.msra.mxu0 %v1197
      %1443 = vmatprep.subr.bf16.mxu0 0
      %1444 = vmatpush1.bf16.msra.mxu0 %v1198
      %1445 = vmatprep.subr.bf16.mxu0 0
      %1446 = vmatpush1.bf16.msra.mxu0 %v1199
      %1447 = vmatprep.subr.bf16.mxu0 0
      %1448 = vmatpush1.bf16.msra.mxu0 %v1200
      %1449 = vmatprep.subr.bf16.mxu0 0
      %1450 = vmatpush1.bf16.msra.mxu0 %v1201
      %1451 = vmatprep.subr.bf16.mxu0 0
      %1452 = vmatpush1.bf16.msra.mxu0 %v1202
      %1453 = vmatprep.subr.bf16.mxu0 0
      %1454 = vmatpush1.bf16.msra.mxu0 %v1203
      %1455 = vmatprep.subr.bf16.mxu0 0
      %1456 = vmatpush1.bf16.msra.mxu0 %v1204
      %1457 = vmatprep.subr.bf16.mxu0 0
      %1458 = vmatpush1.bf16.msra.mxu0 %v1205
      %1459 = vmatprep.subr.bf16.mxu0 0
      %1460 = vmatpush1.bf16.msra.mxu0 %v1206
      %1461 = vmatprep.subr.bf16.mxu0 0
      %1462 = vmatpush1.bf16.msra.mxu0 %v1207
      %1463 = vmatprep.subr.bf16.mxu0 0
      %1464 = vmatpush1.bf16.msra.mxu0 %v1208
      %1465 = vmatprep.subr.bf16.mxu0 0
      %1466 = vmatpush1.bf16.msra.mxu0 %v1209
      %1467 = vmatprep.subr.bf16.mxu0 0
      %1468 = vmatpush1.bf16.msra.mxu0 %v1210
      %1469 = vmatprep.mubr.bf16.mxu0 %v693
      %1470 = vmatmul.mubr.bf16.gmra.mrb[0].mxu0 %v692
      %v1471 = vpop.f32.mrb[0].mxu0
      %v1472 = vadd.f32 %v1407, %v1471
      %v1473 = vpop.f32.mrb[0].mxu0
      %v1474 = vpop.f32.mrb[0].mxu0
      %v1475 = vadd.f32 %v1410, %v1474
      %v1476 = vpop.f32.mrb[0].mxu0
      %1477 = vmatprep.mubr.bf16.mxu0 %v702
      %1478 = vmatmul.mubr.bf16.gmra.mrb[0].mxu0 %v701
      %v1479 = vpop.f32.mrb[0].mxu0
      %v1480 = vadd.f32 %v1415, %v1479
      %v1481 = vpop.f32.mrb[0].mxu0
      %v1482 = vpop.f32.mrb[0].mxu0
      %v1483 = vadd.f32 %v1418, %v1482
      %v1484 = vpop.f32.mrb[0].mxu0
      %1485 = vmatprep.mubr.bf16.mxu0 %v711
      %1486 = vmatmul.mubr.bf16.gmra.mrb[0].mxu0 %v710
      %v1487 = vpop.f32.mrb[0].mxu0
      %v1488 = vadd.f32 %v1423, %v1487
      %v1489 = vpop.f32.mrb[0].mxu0
      %v1490 = vpop.f32.mrb[0].mxu0
      %v1491 = vadd.f32 %v1426, %v1490
      %v1492 = vpop.f32.mrb[0].mxu0
      %1493 = vmatprep.mubr.bf16.mxu0 %v720
      %1494 = vmatmul.mubr.bf16.gmra.mrb[0].mxu0 %v719
      %v1495 = vpop.f32.mrb[0].mxu0
      %v1496 = vadd.f32 %v1431, %v1495
      %v1497 = vpop.f32.mrb[0].mxu0
      %v1498 = vpop.f32.mrb[0].mxu0
      %v1499 = vadd.f32 %v1434, %v1498
      %v1500 = vpop.f32.mrb[0].mxu0
      %1501 = vdwg.mxu0
      %1502 = vmatprep.subr.bf16.mxu0 0
      %1503 = vmatpush1.bf16.msra.mxu0 %v1211
      %1504 = vmatprep.subr.bf16.mxu0 0
      %1505 = vmatpush1.bf16.msra.mxu0 %v1212
      %1506 = vmatprep.subr.bf16.mxu0 0
      %1507 = vmatpush1.bf16.msra.mxu0 %v1213
      %1508 = vmatprep.subr.bf16.mxu0 0
      %1509 = vmatpush1.bf16.msra.mxu0 %v1214
      %1510 = vmatprep.subr.bf16.mxu0 0
      %1511 = vmatpush1.bf16.msra.mxu0 %v1215
      %1512 = vmatprep.subr.bf16.mxu0 0
      %1513 = vmatpush1.bf16.msra.mxu0 %v1216
      %1514 = vmatprep.subr.bf16.mxu0 0
      %1515 = vmatpush1.bf16.msra.mxu0 %v1217
      %1516 = vmatprep.subr.bf16.mxu0 0
      %1517 = vmatpush1.bf16.msra.mxu0 %v1218
      %1518 = vmatprep.subr.bf16.mxu0 0
      %1519 = vmatpush1.bf16.msra.mxu0 %v1219
      %1520 = vmatprep.subr.bf16.mxu0 0
      %1521 = vmatpush1.bf16.msra.mxu0 %v1220
      %1522 = vmatprep.subr.bf16.mxu0 0
      %1523 = vmatpush1.bf16.msra.mxu0 %v1221
      %1524 = vmatprep.subr.bf16.mxu0 0
      %1525 = vmatpush1.bf16.msra.mxu0 %v1222
      %1526 = vmatprep.subr.bf16.mxu0 0
      %1527 = vmatpush1.bf16.msra.mxu0 %v1223
      %1528 = vmatprep.subr.bf16.mxu0 0
      %1529 = vmatpush1.bf16.msra.mxu0 %v1224
      %1530 = vmatprep.subr.bf16.mxu0 0
      %1531 = vmatpush1.bf16.msra.mxu0 %v1225
      %1532 = vmatprep.subr.bf16.mxu0 0
      %1533 = vmatpush1.bf16.msra.mxu0 %v1226
      %1534 = vmatprep.mubr.bf16.mxu0 %v695
      %1535 = vmatmul.mubr.bf16.gmra.mrb[0].mxu0 %v694
      %v1536 = vpop.f32.mrb[0].mxu0
      %v1537 = vadd.f32 %v1472, %v1536
      %v1538 = vpop.f32.mrb[0].mxu0
      %v1539 = vpop.f32.mrb[0].mxu0
      %v1540 = vadd.f32 %v1475, %v1539
      %v1541 = vpop.f32.mrb[0].mxu0
      %1542 = vmatprep.mubr.bf16.mxu0 %v704
      %1543 = vmatmul.mubr.bf16.gmra.mrb[0].mxu0 %v703
      %v1544 = vpop.f32.mrb[0].mxu0
      %v1545 = vadd.f32 %v1480, %v1544
      %v1546 = vpop.f32.mrb[0].mxu0
      %v1547 = vpop.f32.mrb[0].mxu0
      %v1548 = vadd.f32 %v1483, %v1547
      %v1549 = vpop.f32.mrb[0].mxu0
      %1550 = vmatprep.mubr.bf16.mxu0 %v713
      %1551 = vmatmul.mubr.bf16.gmra.mrb[0].mxu0 %v712
      %v1552 = vpop.f32.mrb[0].mxu0
      %v1553 = vadd.f32 %v1488, %v1552
      %v1554 = vpop.f32.mrb[0].mxu0
      %v1555 = vpop.f32.mrb[0].mxu0
      %v1556 = vadd.f32 %v1491, %v1555
      %v1557 = vpop.f32.mrb[0].mxu0
      %1558 = vmatprep.mubr.bf16.mxu0 %v722
      %1559 = vmatmul.mubr.bf16.gmra.mrb[0].mxu0 %v721
      %v1560 = vpop.f32.mrb[0].mxu0
      %v1561 = vadd.f32 %v1496, %v1560
      %v1562 = vpop.f32.mrb[0].mxu0
      %v1563 = vpop.f32.mrb[0].mxu0
      %v1564 = vadd.f32 %v1499, %v1563
      %v1565 = vpop.f32.mrb[0].mxu0
      %1566 = vdwg.mxu0
      %1567 = vmatprep.subr.bf16.mxu0 0
      %1568 = vmatpush1.bf16.msra.mxu0 %v1227
      %1569 = vmatprep.subr.bf16.mxu0 0
      %1570 = vmatpush1.bf16.msra.mxu0 %v1228
      %1571 = vmatprep.subr.bf16.mxu0 0
      %1572 = vmatpush1.bf16.msra.mxu0 %v1229
      %1573 = vmatprep.subr.bf16.mxu0 0
      %1574 = vmatpush1.bf16.msra.mxu0 %v1230
      %1575 = vmatprep.subr.bf16.mxu0 0
      %1576 = vmatpush1.bf16.msra.mxu0 %v1231
      %1577 = vmatprep.subr.bf16.mxu0 0
      %1578 = vmatpush1.bf16.msra.mxu0 %v1232
      %1579 = vmatprep.subr.bf16.mxu0 0
      %1580 = vmatpush1.bf16.msra.mxu0 %v1233
      %1581 = vmatprep.subr.bf16.mxu0 0
      %1582 = vmatpush1.bf16.msra.mxu0 %v1234
      %1583 = vmatprep.subr.bf16.mxu0 0
      %1584 = vmatpush1.bf16.msra.mxu0 0
      %1585 = vmatprep.subr.bf16.mxu0 0
      %1586 = vmatpush1.bf16.msra.mxu0 0
      %1587 = vmatprep.subr.bf16.mxu0 0
      %1588 = vmatpush1.bf16.msra.mxu0 0
      %1589 = vmatprep.subr.bf16.mxu0 0
      %1590 = vmatpush1.bf16.msra.mxu0 0
      %1591 = vmatprep.subr.bf16.mxu0 0
      %1592 = vmatpush1.bf16.msra.mxu0 0
      %1593 = vmatprep.subr.bf16.mxu0 0
      %1594 = vmatpush1.bf16.msra.mxu0 0
      %1595 = vmatprep.subr.bf16.mxu0 0
      %1596 = vmatpush1.bf16.msra.mxu0 0
      %1597 = vmatprep.subr.bf16.mxu0 0
      %1598 = vmatpush1.bf16.msra.mxu0 0
      %1599 = vmatprep.mubr.bf16.mxu0 0
      %1600 = vmatmul.mubr.bf16.gmra.mrb[0].mxu0 %v696
      %v1601 = vpop.f32.mrb[0].mxu0
      %v1602 = vadd.f32 %v1537, %v1601
      %v1603 = vpop.f32.mrb[0].mxu0
      %v1604 = vpop.f32.mrb[0].mxu0
      %v1605 = vadd.f32 %v1540, %v1604
      %v1606 = vpop.f32.mrb[0].mxu0
      %1607 = vmatprep.mubr.bf16.mxu0 0
      %1608 = vmatmul.mubr.bf16.gmra.mrb[0].mxu0 %v705
      %v1609 = vpop.f32.mrb[0].mxu0
      %v1610 = vadd.f32 %v1545, %v1609
      %v1611 = vpop.f32.mrb[0].mxu0
      %v1612 = vpop.f32.mrb[0].mxu0
      %v1613 = vadd.f32 %v1548, %v1612
      %v1614 = vpop.f32.mrb[0].mxu0
      %1615 = vmatprep.mubr.bf16.mxu0 0
      %1616 = vmatmul.mubr.bf16.gmra.mrb[0].mxu0 %v714
      %v1617 = vpop.f32.mrb[0].mxu0
      %v1618 = vadd.f32 %v1553, %v1617
      %v1619 = vpop.f32.mrb[0].mxu0
      %v1620 = vpop.f32.mrb[0].mxu0
      %v1621 = vadd.f32 %v1556, %v1620
      %v1622 = vpop.f32.mrb[0].mxu0
      %1623 = vmatprep.mubr.bf16.mxu0 0
      %1624 = vmatmul.mubr.bf16.gmra.mrb[0].mxu0 %v723
      %v1625 = vpop.f32.mrb[0].mxu0
      %v1626 = vadd.f32 %v1561, %v1625
      %v1627 = vpop.f32.mrb[0].mxu0
      %v1628 = vpop.f32.mrb[0].mxu0
      %v1629 = vadd.f32 %v1564, %v1628
      %v1630 = vpop.f32.mrb[0].mxu0
      %1631 = vdwg.mxu0
      %v1632 = vmax.f32 %v1602, 0.0
      %v1633 = vmax.f32 %v1605, 0.0
      %v1634 = vmax.f32 %v1610, 0.0
      %v1635 = vmax.f32 %v1613, 0.0
      %v1636 = vmax.f32 %v1618, 0.0
      %v1637 = vmax.f32 %v1621, 0.0
      %v1638 = vmax.f32 %v1626, 0.0
      %v1639 = vmax.f32 %v1629, 0.0
      %s1640 = scalar_lea.vmem [#allocation3], 24
      %1641 = vst [vmem:[%s1640 + $0x8] sm:$0xff] %v1632
      %1642 = vst [vmem:[%s1640 + $0x20] sm:$0xff] %v1633
      %1643 = vst [vmem:[%s1640 + $0x38] sm:$0xff] %v1634
      %1644 = vst [vmem:[%s1640 + $0x50] sm:$0xff] %v1635
      %1645 = vst [vmem:[%s1640 + $0x68] sm:$0xff] %v1636
      %1646 = vst [vmem:[%s1640 + $0x80] sm:$0xff] %v1637
      %1647 = vst [vmem:[%s1640 + $0x98] sm:$0xff] %v1638
      %1648 = vst [vmem:[%s1640 + $0xb0] sm:$0xff] %v1639
      %v1649 = vld [vmem:[#allocation3 + $0x7] sm:$0xff]
      %v1650 = vld [vmem:[#allocation3 + $0x1f] sm:$0xff]
      %v1651 = vld [vmem:[#allocation3 + $0x37] sm:$0xff]
      %v1652 = vld [vmem:[#allocation3 + $0x4f] sm:$0xff]
      %v1653 = vld [vmem:[#allocation3 + $0x67] sm:$0xff]
      %v1654 = vld [vmem:[#allocation3 + $0x7f] sm:$0xff]
      %v1655 = vld [vmem:[#allocation3 + $0x97] sm:$0xff]
      %v1656 = vld [vmem:[#allocation3 + $0xaf] sm:$0xff]
      %v1657 = vld [vmem:[#allocation3 + $0x8] sm:$0xff]
      %v1658 = vld [vmem:[#allocation3 + $0x20] sm:$0xff]
      %v1659 = vld [vmem:[#allocation3 + $0x38] sm:$0xff]
      %v1660 = vld [vmem:[#allocation3 + $0x50] sm:$0xff]
      %v1661 = vld [vmem:[#allocation3 + $0x68] sm:$0xff]
      %v1662 = vld [vmem:[#allocation3 + $0x80] sm:$0xff]
      %v1663 = vld [vmem:[#allocation3 + $0x98] sm:$0xff]
      %v1664 = vld [vmem:[#allocation3 + $0xb0] sm:$0xff]
      %v1665 = vld [vmem:[#allocation3 + $0x9] sm:$0xff]
      %v1666 = vld [vmem:[#allocation3 + $0x21] sm:$0xff]
      %v1667 = vld [vmem:[#allocation3 + $0x39] sm:$0xff]
      %v1668 = vld [vmem:[#allocation3 + $0x51] sm:$0xff]
      %v1669 = vld [vmem:[#allocation3 + $0x69] sm:$0xff]
      %v1670 = vld [vmem:[#allocation3 + $0x81] sm:$0xff]
      %v1671 = vld [vmem:[#allocation3 + $0x99] sm:$0xff]
      %v1672 = vld [vmem:[#allocation3 + $0xb1] sm:$0xff]
      %v1673 = vld [vmem:[%s1640 + $0x7] sm:$0xff]
      %v1674 = vld [vmem:[%s1640 + $0x1f] sm:$0xff]
      %v1675 = vld [vmem:[%s1640 + $0x37] sm:$0xff]
      %v1676 = vld [vmem:[%s1640 + $0x4f] sm:$0xff]
      %v1677 = vld [vmem:[%s1640 + $0x67] sm:$0xff]
      %v1678 = vld [vmem:[%s1640 + $0x7f] sm:$0xff]
      %v1679 = vld [vmem:[%s1640 + $0x97] sm:$0xff]
      %v1680 = vld [vmem:[%s1640 + $0xaf] sm:$0xff]
      %v1681 = vld [vmem:[%s1640 + $0x8] sm:$0xff]
      %v1682 = vld [vmem:[%s1640 + $0x20] sm:$0xff]
      %v1683 = vld [vmem:[%s1640 + $0x38] sm:$0xff]
      %v1684 = vld [vmem:[%s1640 + $0x50] sm:$0xff]
      %v1685 = vld [vmem:[%s1640 + $0x68] sm:$0xff]
      %v1686 = vld [vmem:[%s1640 + $0x80] sm:$0xff]
      %v1687 = vld [vmem:[%s1640 + $0x98] sm:$0xff]
      %v1688 = vld [vmem:[%s1640 + $0xb0] sm:$0xff]
      %v1689 = vld [vmem:[%s1640 + $0x9] sm:$0xff]
      %v1690 = vld [vmem:[%s1640 + $0x21] sm:$0xff]
      %v1691 = vld [vmem:[%s1640 + $0x39] sm:$0xff]
      %v1692 = vld [vmem:[%s1640 + $0x51] sm:$0xff]
      %v1693 = vld [vmem:[%s1640 + $0x69] sm:$0xff]
      %v1694 = vld [vmem:[%s1640 + $0x81] sm:$0xff]
      %v1695 = vld [vmem:[%s1640 + $0x99] sm:$0xff]
      %v1696 = vld [vmem:[%s1640 + $0xb1] sm:$0xff]
      %s1697 = scalar_lea.vmem [#allocation3], 48
      %v1698 = vld [vmem:[%s1697 + $0x7] sm:$0xff]
      %v1699 = vld [vmem:[%s1697 + $0x1f] sm:$0xff]
      %v1700 = vld [vmem:[%s1697 + $0x37] sm:$0xff]
      %v1701 = vld [vmem:[%s1697 + $0x4f] sm:$0xff]
      %v1702 = vld [vmem:[%s1697 + $0x67] sm:$0xff]
      %v1703 = vld [vmem:[%s1697 + $0x7f] sm:$0xff]
      %v1704 = vld [vmem:[%s1697 + $0x97] sm:$0xff]
      %v1705 = vld [vmem:[%s1697 + $0xaf] sm:$0xff]
      %v1706 = vld [vmem:[%s1697 + $0x8] sm:$0xff]
      %v1707 = vld [vmem:[%s1697 + $0x20] sm:$0xff]
      %v1708 = vld [vmem:[%s1697 + $0x38] sm:$0xff]
      %v1709 = vld [vmem:[%s1697 + $0x50] sm:$0xff]
      %v1710 = vld [vmem:[%s1697 + $0x68] sm:$0xff]
      %v1711 = vld [vmem:[%s1697 + $0x80] sm:$0xff]
      %v1712 = vld [vmem:[%s1697 + $0x98] sm:$0xff]
      %v1713 = vld [vmem:[%s1697 + $0xb0] sm:$0xff]
      %v1714 = vld [vmem:[%s1697 + $0x9] sm:$0xff]
      %v1715 = vld [vmem:[%s1697 + $0x21] sm:$0xff]
      %v1716 = vld [vmem:[%s1697 + $0x39] sm:$0xff]
      %v1717 = vld [vmem:[%s1697 + $0x51] sm:$0xff]
      %v1718 = vld [vmem:[%s1697 + $0x69] sm:$0xff]
      %v1719 = vld [vmem:[%s1697 + $0x81] sm:$0xff]
      %v1720 = vld [vmem:[%s1697 + $0x99] sm:$0xff]
      %v1721 = vld [vmem:[%s1697 + $0xb1] sm:$0xff]
      %v1722 = vpack.c.bf16 %v1650, %v1649
      %v1723 = vpack.c.bf16 %v1658, %v1657
      %v1724 = vpack.c.bf16 %v1666, %v1665
      %v1725 = vpack.c.bf16 %v1674, %v1673
      %v1726 = vpack.c.bf16 %v1682, %v1681
      %v1727 = vpack.c.bf16 %v1690, %v1689
      %v1728 = vpack.c.bf16 %v1699, %v1698
      %v1729 = vpack.c.bf16 %v1707, %v1706
      %v1730 = vpack.c.bf16 %v1715, %v1714
      %v1731 = vpack.c.bf16 %v1652, %v1651
      %v1732 = vpack.c.bf16 %v1660, %v1659
      %v1733 = vpack.c.bf16 %v1668, %v1667
      %v1734 = vpack.c.bf16 %v1676, %v1675
      %v1735 = vpack.c.bf16 %v1684, %v1683
      %v1736 = vpack.c.bf16 %v1692, %v1691
      %v1737 = vpack.c.bf16 %v1701, %v1700
      %v1738 = vpack.c.bf16 %v1709, %v1708
      %v1739 = vpack.c.bf16 %v1717, %v1716
      %v1740 = vpack.c.bf16 %v1654, %v1653
      %v1741 = vpack.c.bf16 %v1662, %v1661
      %v1742 = vpack.c.bf16 %v1670, %v1669
      %v1743 = vpack.c.bf16 %v1678, %v1677
      %v1744 = vpack.c.bf16 %v1686, %v1685
      %v1745 = vpack.c.bf16 %v1694, %v1693
      %v1746 = vpack.c.bf16 %v1703, %v1702
      %v1747 = vpack.c.bf16 %v1711, %v1710
      %v1748 = vpack.c.bf16 %v1719, %v1718
      %v1749 = vpack.c.bf16 %v1656, %v1655
      %v1750 = vpack.c.bf16 %v1664, %v1663
      %v1751 = vpack.c.bf16 %v1672, %v1671
      %v1752 = vpack.c.bf16 %v1680, %v1679
      %v1753 = vpack.c.bf16 %v1688, %v1687
      %v1754 = vpack.c.bf16 %v1696, %v1695
      %v1755 = vpack.c.bf16 %v1705, %v1704
      %v1756 = vpack.c.bf16 %v1713, %v1712
      %v1757 = vpack.c.bf16 %v1721, %v1720
      %v1758 = vld [vmem:[%s3] sm:$0xf]
      %v1759 = vld [vmem:[%s3 + $0x4] sm:$0xf]
      %v1760 = vld [vmem:[%s3 + $0x8] sm:$0xf]
      %v1761 = vld [vmem:[%s3 + $0xc] sm:$0xf]
      %v1762 = vld [vmem:[%s3 + $0x10] sm:$0xf]
      %v1763 = vld [vmem:[%s3 + $0x14] sm:$0xf]
      %v1764 = vld [vmem:[%s3 + $0x18] sm:$0xf]
      %v1765 = vld [vmem:[%s3 + $0x1c] sm:$0xf]
      %v1766 = vld [vmem:[%s3 + $0x20] sm:$0xf]
      %v1767 = vld [vmem:[%s3 + $0x24] sm:$0xf]
      %v1768 = vld [vmem:[%s3 + $0x28] sm:$0xf]
      %v1769 = vld [vmem:[%s3 + $0x2c] sm:$0xf]
      %v1770 = vld [vmem:[%s3 + $0x30] sm:$0xf]
      %v1771 = vld [vmem:[%s3 + $0x34] sm:$0xf]
      %v1772 = vld [vmem:[%s3 + $0x38] sm:$0xf]
      %v1773 = vld [vmem:[%s3 + $0x3c] sm:$0xf]
      %v1774 = vld [vmem:[%s3 + $0x40] sm:$0xf]
      %v1775 = vld [vmem:[%s3 + $0x44] sm:$0xf]
      %v1776 = vld [vmem:[%s3 + $0x48] sm:$0xf]
      %v1777 = vld [vmem:[%s3 + $0x4c] sm:$0xf]
      %v1778 = vld [vmem:[%s3 + $0x50] sm:$0xf]
      %v1779 = vld [vmem:[%s3 + $0x54] sm:$0xf]
      %v1780 = vld [vmem:[%s3 + $0x58] sm:$0xf]
      %v1781 = vld [vmem:[%s3 + $0x5c] sm:$0xf]
      %v1782 = vld [vmem:[%s3 + $0x60] sm:$0xf]
      %v1783 = vld [vmem:[%s3 + $0x64] sm:$0xf]
      %v1784 = vld [vmem:[%s3 + $0x68] sm:$0xf]
      %v1785 = vld [vmem:[%s3 + $0x6c] sm:$0xf]
      %v1786 = vld [vmem:[%s3 + $0x70] sm:$0xf]
      %v1787 = vld [vmem:[%s3 + $0x74] sm:$0xf]
      %v1788 = vld [vmem:[%s3 + $0x78] sm:$0xf]
      %v1789 = vld [vmem:[%s3 + $0x7c] sm:$0xf]
      %v1790 = vld [vmem:[%s3 + $0x80] sm:$0xf]
      %v1791 = vld [vmem:[%s3 + $0x84] sm:$0xf]
      %v1792 = vld [vmem:[%s3 + $0x88] sm:$0xf]
      %v1793 = vld [vmem:[%s3 + $0x8c] sm:$0xf]
      %v1794 = vld [vmem:[%s3 + $0x90] sm:$0xf]
      %v1795 = vld [vmem:[%s3 + $0x94] sm:$0xf]
      %v1796 = vld [vmem:[%s3 + $0x98] sm:$0xf]
      %v1797 = vld [vmem:[%s3 + $0x9c] sm:$0xf]
      %v1798 = vld [vmem:[%s3 + $0xa0] sm:$0xf]
      %v1799 = vld [vmem:[%s3 + $0xa4] sm:$0xf]
      %v1800 = vld [vmem:[%s3 + $0xa8] sm:$0xf]
      %v1801 = vld [vmem:[%s3 + $0xac] sm:$0xf]
      %v1802 = vld [vmem:[%s3 + $0xb0] sm:$0xf]
      %v1803 = vld [vmem:[%s3 + $0xb4] sm:$0xf]
      %v1804 = vld [vmem:[%s3 + $0xb8] sm:$0xf]
      %v1805 = vld [vmem:[%s3 + $0xbc] sm:$0xf]
      %v1806 = vld [vmem:[%s3 + $0xc0] sm:$0xf]
      %v1807 = vld [vmem:[%s3 + $0xc4] sm:$0xf]
      %v1808 = vld [vmem:[%s3 + $0xc8] sm:$0xf]
      %v1809 = vld [vmem:[%s3 + $0xcc] sm:$0xf]
      %v1810 = vld [vmem:[%s3 + $0xd0] sm:$0xf]
      %v1811 = vld [vmem:[%s3 + $0xd4] sm:$0xf]
      %v1812 = vld [vmem:[%s3 + $0xd8] sm:$0xf]
      %v1813 = vld [vmem:[%s3 + $0xdc] sm:$0xf]
      %v1814 = vld [vmem:[%s3 + $0xe0] sm:$0xf]
      %v1815 = vld [vmem:[%s3 + $0xe4] sm:$0xf]
      %v1816 = vld [vmem:[%s3 + $0xe8] sm:$0xf]
      %v1817 = vld [vmem:[%s3 + $0xec] sm:$0xf]
      %v1818 = vld [vmem:[%s3 + $0xf0] sm:$0xf]
      %v1819 = vld [vmem:[%s3 + $0xf4] sm:$0xf]
      %v1820 = vld [vmem:[%s3 + $0xf8] sm:$0xf]
      %v1821 = vld [vmem:[%s3 + $0xfc] sm:$0xf]
      %v1822 = vld [vmem:[%s3 + $0x100] sm:$0xf]
      %v1823 = vld [vmem:[%s3 + $0x104] sm:$0xf]
      %v1824 = vld [vmem:[%s3 + $0x108] sm:$0xf]
      %v1825 = vld [vmem:[%s3 + $0x10c] sm:$0xf]
      %v1826 = vld [vmem:[%s3 + $0x110] sm:$0xf]
      %v1827 = vld [vmem:[%s3 + $0x114] sm:$0xf]
      %v1828 = vld [vmem:[%s3 + $0x118] sm:$0xf]
      %v1829 = vld [vmem:[%s3 + $0x11c] sm:$0xf]
      %v1830 = vld [vmem:[%s3 + $0x120] sm:$0xf]
      %v1831 = vld [vmem:[%s3 + $0x124] sm:$0xf]
      %v1832 = vld [vmem:[%s3 + $0x128] sm:$0xf]
      %v1833 = vld [vmem:[%s3 + $0x12c] sm:$0xf]
      %v1834 = vld [vmem:[%s3 + $0x130] sm:$0xf]
      %v1835 = vld [vmem:[%s3 + $0x134] sm:$0xf]
      %v1836 = vld [vmem:[%s3 + $0x138] sm:$0xf]
      %v1837 = vld [vmem:[%s3 + $0x13c] sm:$0xf]
      %v1838 = vld [vmem:[%s3 + $0x140] sm:$0xf]
      %v1839 = vld [vmem:[%s3 + $0x144] sm:$0xf]
      %v1840 = vld [vmem:[%s3 + $0x148] sm:$0xf]
      %v1841 = vld [vmem:[%s3 + $0x14c] sm:$0xf]
      %v1842 = vld [vmem:[%s3 + $0x150] sm:$0xf]
      %v1843 = vld [vmem:[%s3 + $0x154] sm:$0xf]
      %v1844 = vld [vmem:[%s3 + $0x158] sm:$0xf]
      %v1845 = vld [vmem:[%s3 + $0x15c] sm:$0xf]
      %v1846 = vld [vmem:[%s3 + $0x160] sm:$0xf]
      %v1847 = vld [vmem:[%s3 + $0x164] sm:$0xf]
      %v1848 = vld [vmem:[%s3 + $0x168] sm:$0xf]
      %v1849 = vld [vmem:[%s3 + $0x16c] sm:$0xf]
      %v1850 = vld [vmem:[%s3 + $0x170] sm:$0xf]
      %v1851 = vld [vmem:[%s3 + $0x174] sm:$0xf]
      %v1852 = vld [vmem:[%s3 + $0x178] sm:$0xf]
      %v1853 = vld [vmem:[%s3 + $0x17c] sm:$0xf]
      %v1854 = vld [vmem:[%s3 + $0x180] sm:$0xf]
      %v1855 = vld [vmem:[%s3 + $0x184] sm:$0xf]
      %v1856 = vld [vmem:[%s3 + $0x188] sm:$0xf]
      %v1857 = vld [vmem:[%s3 + $0x18c] sm:$0xf]
      %v1858 = vld [vmem:[%s3 + $0x190] sm:$0xf]
      %v1859 = vld [vmem:[%s3 + $0x194] sm:$0xf]
      %v1860 = vld [vmem:[%s3 + $0x198] sm:$0xf]
      %v1861 = vld [vmem:[%s3 + $0x19c] sm:$0xf]
      %v1862 = vld [vmem:[%s3 + $0x1a0] sm:$0xf]
      %v1863 = vld [vmem:[%s3 + $0x1a4] sm:$0xf]
      %v1864 = vld [vmem:[%s3 + $0x1a8] sm:$0xf]
      %v1865 = vld [vmem:[%s3 + $0x1ac] sm:$0xf]
      %v1866 = vld [vmem:[%s3 + $0x1b0] sm:$0xf]
      %v1867 = vld [vmem:[%s3 + $0x1b4] sm:$0xf]
      %v1868 = vld [vmem:[%s3 + $0x1b8] sm:$0xf]
      %v1869 = vld [vmem:[%s3 + $0x1bc] sm:$0xf]
      %v1870 = vld [vmem:[%s3 + $0x1c0] sm:$0xf]
      %v1871 = vld [vmem:[%s3 + $0x1c4] sm:$0xf]
      %v1872 = vld [vmem:[%s3 + $0x1c8] sm:$0xf]
      %v1873 = vld [vmem:[%s3 + $0x1cc] sm:$0xf]
      %v1874 = vld [vmem:[%s3 + $0x1d0] sm:$0xf]
      %v1875 = vld [vmem:[%s3 + $0x1d4] sm:$0xf]
      %v1876 = vld [vmem:[%s3 + $0x1d8] sm:$0xf]
      %v1877 = vld [vmem:[%s3 + $0x1dc] sm:$0xf]
      %v1878 = vld [vmem:[%s3 + $0x1e0] sm:$0xf]
      %v1879 = vld [vmem:[%s3 + $0x1e4] sm:$0xf]
      %v1880 = vld [vmem:[%s3 + $0x1e8] sm:$0xf]
      %v1881 = vld [vmem:[%s3 + $0x1ec] sm:$0xf]
      %v1882 = vld [vmem:[%s3 + $0x1f0] sm:$0xf]
      %v1883 = vld [vmem:[%s3 + $0x1f4] sm:$0xf]
      %v1884 = vld [vmem:[%s3 + $0x1f8] sm:$0xf]
      %v1885 = vld [vmem:[%s3 + $0x1fc] sm:$0xf]
      %v1886 = vld [vmem:[%s3 + $0x200] sm:$0xf]
      %v1887 = vld [vmem:[%s3 + $0x204] sm:$0xf]
      %v1888 = vld [vmem:[%s3 + $0x208] sm:$0xf]
      %v1889 = vld [vmem:[%s3 + $0x20c] sm:$0xf]
      %v1890 = vld [vmem:[%s3 + $0x210] sm:$0xf]
      %v1891 = vld [vmem:[%s3 + $0x214] sm:$0xf]
      %v1892 = vld [vmem:[%s3 + $0x218] sm:$0xf]
      %v1893 = vld [vmem:[%s3 + $0x21c] sm:$0xf]
      %v1894 = vld [vmem:[%s3 + $0x220] sm:$0xf]
      %v1895 = vld [vmem:[%s3 + $0x224] sm:$0xf]
      %v1896 = vld [vmem:[%s3 + $0x228] sm:$0xf]
      %v1897 = vld [vmem:[%s3 + $0x22c] sm:$0xf]
      %v1898 = vld [vmem:[%s3 + $0x230] sm:$0xf]
      %v1899 = vld [vmem:[%s3 + $0x234] sm:$0xf]
      %v1900 = vld [vmem:[%s3 + $0x238] sm:$0xf]
      %v1901 = vld [vmem:[%s3 + $0x23c] sm:$0xf]
      %v1902 = vld [vmem:[%s4] sm:$0x1]
      %v1904 = vlaneseq
      %v1905 = vshrl.u32 %v1904, 7
      %v1906 = vsub.s32 0, %v1905
      %v1907 = vrot.slane %v1902, %v1906
      %v2053 = vunpack.c.l.b16 %v1758
      %v2054 = vunpack.c.l.b16 %v1759
      %v2055 = vunpack.c.l.b16 %v1760
      %v2056 = vunpack.c.l.b16 %v1761
      %v2057 = vunpack.c.l.b16 %v1762
      %v2058 = vunpack.c.l.b16 %v1763
      %v2059 = vunpack.c.l.b16 %v1764
      %v2060 = vunpack.c.l.b16 %v1765
      %v2061 = vunpack.c.l.b16 %v1766
      %v2062 = vunpack.c.l.b16 %v1767
      %v2063 = vunpack.c.l.b16 %v1768
      %v2064 = vunpack.c.l.b16 %v1769
      %v2065 = vunpack.c.l.b16 %v1770
      %v2066 = vunpack.c.l.b16 %v1771
      %v2067 = vunpack.c.l.b16 %v1772
      %v2068 = vunpack.c.l.b16 %v1773
      %v2069 = vunpack.c.l.b16 %v1774
      %v2070 = vunpack.c.l.b16 %v1775
      %v2071 = vunpack.c.l.b16 %v1776
      %v2072 = vunpack.c.l.b16 %v1777
      %v2073 = vunpack.c.l.b16 %v1778
      %v2074 = vunpack.c.l.b16 %v1779
      %v2075 = vunpack.c.l.b16 %v1780
      %v2076 = vunpack.c.l.b16 %v1781
      %v2077 = vunpack.c.l.b16 %v1782
      %v2078 = vunpack.c.l.b16 %v1783
      %v2079 = vunpack.c.l.b16 %v1784
      %v2080 = vunpack.c.l.b16 %v1785
      %v2081 = vunpack.c.l.b16 %v1786
      %v2082 = vunpack.c.l.b16 %v1787
      %v2083 = vunpack.c.l.b16 %v1788
      %v2084 = vunpack.c.l.b16 %v1789
      %v2085 = vunpack.c.l.b16 %v1790
      %v2086 = vunpack.c.l.b16 %v1791
      %v2087 = vunpack.c.l.b16 %v1792
      %v2088 = vunpack.c.l.b16 %v1793
      %v2089 = vunpack.c.l.b16 %v1794
      %v2090 = vunpack.c.l.b16 %v1795
      %v2091 = vunpack.c.l.b16 %v1796
      %v2092 = vunpack.c.l.b16 %v1797
      %v2093 = vunpack.c.l.b16 %v1798
      %v2094 = vunpack.c.l.b16 %v1799
      %v2095 = vunpack.c.l.b16 %v1800
      %v2096 = vunpack.c.l.b16 %v1801
      %v2097 = vunpack.c.l.b16 %v1802
      %v2098 = vunpack.c.l.b16 %v1803
      %v2099 = vunpack.c.l.b16 %v1804
      %v2100 = vunpack.c.l.b16 %v1805
      %v2101 = vunpack.c.l.b16 %v1806
      %v2102 = vunpack.c.l.b16 %v1807
      %v2103 = vunpack.c.l.b16 %v1808
      %v2104 = vunpack.c.l.b16 %v1809
      %v2105 = vunpack.c.l.b16 %v1810
      %v2106 = vunpack.c.l.b16 %v1811
      %v2107 = vunpack.c.l.b16 %v1812
      %v2108 = vunpack.c.l.b16 %v1813
      %v2109 = vunpack.c.l.b16 %v1814
      %v2110 = vunpack.c.l.b16 %v1815
      %v2111 = vunpack.c.l.b16 %v1816
      %v2112 = vunpack.c.l.b16 %v1817
      %v2113 = vunpack.c.l.b16 %v1818
      %v2114 = vunpack.c.l.b16 %v1819
      %v2115 = vunpack.c.l.b16 %v1820
      %v2116 = vunpack.c.l.b16 %v1821
      %v2117 = vunpack.c.l.b16 %v1822
      %v2118 = vunpack.c.l.b16 %v1823
      %v2119 = vunpack.c.l.b16 %v1824
      %v2120 = vunpack.c.l.b16 %v1825
      %v2121 = vunpack.c.l.b16 %v1826
      %v2122 = vunpack.c.l.b16 %v1827
      %v2123 = vunpack.c.l.b16 %v1828
      %v2124 = vunpack.c.l.b16 %v1829
      %v2125 = vunpack.c.l.b16 %v1830
      %v2126 = vunpack.c.l.b16 %v1831
      %v2127 = vunpack.c.l.b16 %v1832
      %v2128 = vunpack.c.l.b16 %v1833
      %v2129 = vunpack.c.l.b16 %v1834
      %v2130 = vunpack.c.l.b16 %v1835
      %v2131 = vunpack.c.l.b16 %v1836
      %v2132 = vunpack.c.l.b16 %v1837
      %v2133 = vunpack.c.l.b16 %v1838
      %v2134 = vunpack.c.l.b16 %v1839
      %v2135 = vunpack.c.l.b16 %v1840
      %v2136 = vunpack.c.l.b16 %v1841
      %v2137 = vunpack.c.l.b16 %v1842
      %v2138 = vunpack.c.l.b16 %v1843
      %v2139 = vunpack.c.l.b16 %v1844
      %v2140 = vunpack.c.l.b16 %v1845
      %v2141 = vunpack.c.l.b16 %v1846
      %v2142 = vunpack.c.l.b16 %v1847
      %v2143 = vunpack.c.l.b16 %v1848
      %v2144 = vunpack.c.l.b16 %v1849
      %v2145 = vunpack.c.l.b16 %v1850
      %v2146 = vunpack.c.l.b16 %v1851
      %v2147 = vunpack.c.l.b16 %v1852
      %v2148 = vunpack.c.l.b16 %v1853
      %v2149 = vunpack.c.l.b16 %v1854
      %v2150 = vunpack.c.l.b16 %v1855
      %v2151 = vunpack.c.l.b16 %v1856
      %v2152 = vunpack.c.l.b16 %v1857
      %v2153 = vunpack.c.l.b16 %v1858
      %v2154 = vunpack.c.l.b16 %v1859
      %v2155 = vunpack.c.l.b16 %v1860
      %v2156 = vunpack.c.l.b16 %v1861
      %v2157 = vunpack.c.l.b16 %v1862
      %v2158 = vunpack.c.l.b16 %v1863
      %v2159 = vunpack.c.l.b16 %v1864
      %v2160 = vunpack.c.l.b16 %v1865
      %v2161 = vunpack.c.l.b16 %v1866
      %v2162 = vunpack.c.l.b16 %v1867
      %v2163 = vunpack.c.l.b16 %v1868
      %v2164 = vunpack.c.l.b16 %v1869
      %v2165 = vunpack.c.l.b16 %v1870
      %v2166 = vunpack.c.l.b16 %v1871
      %v2167 = vunpack.c.l.b16 %v1872
      %v2168 = vunpack.c.l.b16 %v1873
      %v2169 = vunpack.c.l.b16 %v1874
      %v2170 = vunpack.c.l.b16 %v1875
      %v2171 = vunpack.c.l.b16 %v1876
      %v2172 = vunpack.c.l.b16 %v1877
      %v2173 = vunpack.c.l.b16 %v1878
      %v2174 = vunpack.c.l.b16 %v1879
      %v2175 = vunpack.c.l.b16 %v1880
      %v2176 = vunpack.c.l.b16 %v1881
      %v2177 = vunpack.c.l.b16 %v1882
      %v2178 = vunpack.c.l.b16 %v1883
      %v2179 = vunpack.c.l.b16 %v1884
      %v2180 = vunpack.c.l.b16 %v1885
      %v2181 = vunpack.c.l.b16 %v1886
      %v2182 = vunpack.c.l.b16 %v1887
      %v2183 = vunpack.c.l.b16 %v1888
      %v2184 = vunpack.c.l.b16 %v1889
      %v2185 = vunpack.c.l.b16 %v1890
      %v2186 = vunpack.c.l.b16 %v1891
      %v2187 = vunpack.c.l.b16 %v1892
      %v2188 = vunpack.c.l.b16 %v1893
      %v2189 = vunpack.c.l.b16 %v1894
      %v2190 = vunpack.c.l.b16 %v1895
      %v2191 = vunpack.c.l.b16 %v1896
      %v2192 = vunpack.c.l.b16 %v1897
      %v2193 = vunpack.c.l.b16 %v1898
      %v2194 = vunpack.c.l.b16 %v1899
      %v2195 = vunpack.c.l.b16 %v1900
      %v2196 = vunpack.c.l.b16 %v1901
      %v2197 = vpack.c.b16 %v2054, %v2053
      %v2198 = vpack.c.b16 %v2056, %v2055
      %v2199 = vpack.c.b16 %v2058, %v2057
      %v2200 = vpack.c.b16 %v2060, %v2059
      %v2201 = vpack.c.b16 %v2062, %v2061
      %v2202 = vpack.c.b16 %v2064, %v2063
      %v2203 = vpack.c.b16 %v2066, %v2065
      %v2204 = vpack.c.b16 %v2068, %v2067
      %v2205 = vpack.c.b16 %v2070, %v2069
      %v2206 = vpack.c.b16 %v2072, %v2071
      %v2207 = vpack.c.b16 %v2074, %v2073
      %v2208 = vpack.c.b16 %v2076, %v2075
      %v2209 = vpack.c.b16 %v2078, %v2077
      %v2210 = vpack.c.b16 %v2080, %v2079
      %v2211 = vpack.c.b16 %v2082, %v2081
      %v2212 = vpack.c.b16 %v2084, %v2083
      %v2213 = vpack.c.b16 %v2086, %v2085
      %v2214 = vpack.c.b16 %v2088, %v2087
      %v2215 = vpack.c.b16 %v2090, %v2089
      %v2216 = vpack.c.b16 %v2092, %v2091
      %v2217 = vpack.c.b16 %v2094, %v2093
      %v2218 = vpack.c.b16 %v2096, %v2095
      %v2219 = vpack.c.b16 %v2098, %v2097
      %v2220 = vpack.c.b16 %v2100, %v2099
      %v2221 = vpack.c.b16 %v2102, %v2101
      %v2222 = vpack.c.b16 %v2104, %v2103
      %v2223 = vpack.c.b16 %v2106, %v2105
      %v2224 = vpack.c.b16 %v2108, %v2107
      %v2225 = vpack.c.b16 %v2110, %v2109
      %v2226 = vpack.c.b16 %v2112, %v2111
      %v2227 = vpack.c.b16 %v2114, %v2113
      %v2228 = vpack.c.b16 %v2116, %v2115
      %v2229 = vpack.c.b16 %v2118, %v2117
      %v2230 = vpack.c.b16 %v2120, %v2119
      %v2231 = vpack.c.b16 %v2122, %v2121
      %v2232 = vpack.c.b16 %v2124, %v2123
      %v2233 = vpack.c.b16 %v2126, %v2125
      %v2234 = vpack.c.b16 %v2128, %v2127
      %v2235 = vpack.c.b16 %v2130, %v2129
      %v2236 = vpack.c.b16 %v2132, %v2131
      %v2237 = vpack.c.b16 %v2134, %v2133
      %v2238 = vpack.c.b16 %v2136, %v2135
      %v2239 = vpack.c.b16 %v2138, %v2137
      %v2240 = vpack.c.b16 %v2140, %v2139
      %v2241 = vpack.c.b16 %v2142, %v2141
      %v2242 = vpack.c.b16 %v2144, %v2143
      %v2243 = vpack.c.b16 %v2146, %v2145
      %v2244 = vpack.c.b16 %v2148, %v2147
      %v2245 = vpack.c.b16 %v2150, %v2149
      %v2246 = vpack.c.b16 %v2152, %v2151
      %v2247 = vpack.c.b16 %v2154, %v2153
      %v2248 = vpack.c.b16 %v2156, %v2155
      %v2249 = vpack.c.b16 %v2158, %v2157
      %v2250 = vpack.c.b16 %v2160, %v2159
      %v2251 = vpack.c.b16 %v2162, %v2161
      %v2252 = vpack.c.b16 %v2164, %v2163
      %v2253 = vpack.c.b16 %v2166, %v2165
      %v2254 = vpack.c.b16 %v2168, %v2167
      %v2255 = vpack.c.b16 %v2170, %v2169
      %v2256 = vpack.c.b16 %v2172, %v2171
      %v2257 = vpack.c.b16 %v2174, %v2173
      %v2258 = vpack.c.b16 %v2176, %v2175
      %v2259 = vpack.c.b16 %v2178, %v2177
      %v2260 = vpack.c.b16 %v2180, %v2179
      %v2261 = vpack.c.b16 %v2182, %v2181
      %v2262 = vpack.c.b16 %v2184, %v2183
      %v2263 = vpack.c.b16 %v2186, %v2185
      %v2264 = vpack.c.b16 %v2188, %v2187
      %v2265 = vpack.c.b16 %v2190, %v2189
      %v2266 = vpack.c.b16 %v2192, %v2191
      %v2267 = vpack.c.b16 %v2194, %v2193
      %v2268 = vpack.c.b16 %v2196, %v2195
      %2341 = vmatprep.subr.bf16.mxu0 0
      %2342 = vmatpush1.bf16.msra.mxu0 %v2197
      %2343 = vmatprep.subr.bf16.mxu0 0
      %2344 = vmatpush1.bf16.msra.mxu0 %v2198
      %2345 = vmatprep.subr.bf16.mxu0 0
      %2346 = vmatpush1.bf16.msra.mxu0 %v2199
      %2347 = vmatprep.subr.bf16.mxu0 0
      %2348 = vmatpush1.bf16.msra.mxu0 %v2200
      %2349 = vmatprep.subr.bf16.mxu0 0
      %2350 = vmatpush1.bf16.msra.mxu0 %v2201
      %2351 = vmatprep.subr.bf16.mxu0 0
      %2352 = vmatpush1.bf16.msra.mxu0 %v2202
      %2353 = vmatprep.subr.bf16.mxu0 0
      %2354 = vmatpush1.bf16.msra.mxu0 %v2203
      %2355 = vmatprep.subr.bf16.mxu0 0
      %2356 = vmatpush1.bf16.msra.mxu0 %v2204
      %2357 = vmatprep.subr.bf16.mxu0 0
      %2358 = vmatpush1.bf16.msra.mxu0 %v2205
      %2359 = vmatprep.subr.bf16.mxu0 0
      %2360 = vmatpush1.bf16.msra.mxu0 %v2206
      %2361 = vmatprep.subr.bf16.mxu0 0
      %2362 = vmatpush1.bf16.msra.mxu0 %v2207
      %2363 = vmatprep.subr.bf16.mxu0 0
      %2364 = vmatpush1.bf16.msra.mxu0 %v2208
      %2365 = vmatprep.subr.bf16.mxu0 0
      %2366 = vmatpush1.bf16.msra.mxu0 %v2209
      %2367 = vmatprep.subr.bf16.mxu0 0
      %2368 = vmatpush1.bf16.msra.mxu0 %v2210
      %2369 = vmatprep.subr.bf16.mxu0 0
      %2370 = vmatpush1.bf16.msra.mxu0 %v2211
      %2371 = vmatprep.subr.bf16.mxu0 0
      %2372 = vmatpush1.bf16.msra.mxu0 %v2212
      %2373 = vmatprep.mubr.bf16.mxu0 %v1723
      %2374 = vmatmul.mubr.bf16.gmra.mrb[0].mxu0 %v1722
      %v2375 = vpop.f32.mrb[0].mxu0
      %v2376 = vadd.f32 %v1907, %v2375
      %v2377 = vpop.f32.mrb[0].mxu0
      %v2378 = vpop.f32.mrb[0].mxu0
      %v2379 = vadd.f32 %v1907, %v2378
      %v2380 = vpop.f32.mrb[0].mxu0
      %2381 = vmatprep.mubr.bf16.mxu0 %v1732
      %2382 = vmatmul.mubr.bf16.gmra.mrb[0].mxu0 %v1731
      %v2383 = vpop.f32.mrb[0].mxu0
      %v2384 = vadd.f32 %v1907, %v2383
      %v2385 = vpop.f32.mrb[0].mxu0
      %v2386 = vpop.f32.mrb[0].mxu0
      %v2387 = vadd.f32 %v1907, %v2386
      %v2388 = vpop.f32.mrb[0].mxu0
      %2389 = vmatprep.mubr.bf16.mxu0 %v1741
      %2390 = vmatmul.mubr.bf16.gmra.mrb[0].mxu0 %v1740
      %v2391 = vpop.f32.mrb[0].mxu0
      %v2392 = vadd.f32 %v1907, %v2391
      %v2393 = vpop.f32.mrb[0].mxu0
      %v2394 = vpop.f32.mrb[0].mxu0
      %v2395 = vadd.f32 %v1907, %v2394
      %v2396 = vpop.f32.mrb[0].mxu0
      %2397 = vmatprep.mubr.bf16.mxu0 %v1750
      %2398 = vmatmul.mubr.bf16.gmra.mrb[0].mxu0 %v1749
      %v2399 = vpop.f32.mrb[0].mxu0
      %v2400 = vadd.f32 %v1907, %v2399
      %v2401 = vpop.f32.mrb[0].mxu0
      %v2402 = vpop.f32.mrb[0].mxu0
      %v2403 = vadd.f32 %v1907, %v2402
      %v2404 = vpop.f32.mrb[0].mxu0
      %2405 = vdwg.mxu0
      %2406 = vmatprep.subr.bf16.mxu0 0
      %2407 = vmatpush1.bf16.msra.mxu0 %v2213
      %2408 = vmatprep.subr.bf16.mxu0 0
      %2409 = vmatpush1.bf16.msra.mxu0 %v2214
      %2410 = vmatprep.subr.bf16.mxu0 0
      %2411 = vmatpush1.bf16.msra.mxu0 %v2215
      %2412 = vmatprep.subr.bf16.mxu0 0
      %2413 = vmatpush1.bf16.msra.mxu0 %v2216
      %2414 = vmatprep.subr.bf16.mxu0 0
      %2415 = vmatpush1.bf16.msra.mxu0 %v2217
      %2416 = vmatprep.subr.bf16.mxu0 0
      %2417 = vmatpush1.bf16.msra.mxu0 %v2218
      %2418 = vmatprep.subr.bf16.mxu0 0
      %2419 = vmatpush1.bf16.msra.mxu0 %v2219
      %2420 = vmatprep.subr.bf16.mxu0 0
      %2421 = vmatpush1.bf16.msra.mxu0 %v2220
      %2422 = vmatprep.subr.bf16.mxu0 0
      %2423 = vmatpush1.bf16.msra.mxu0 %v2221
      %2424 = vmatprep.subr.bf16.mxu0 0
      %2425 = vmatpush1.bf16.msra.mxu0 %v2222
      %2426 = vmatprep.subr.bf16.mxu0 0
      %2427 = vmatpush1.bf16.msra.mxu0 %v2223
      %2428 = vmatprep.subr.bf16.mxu0 0
      %2429 = vmatpush1.bf16.msra.mxu0 %v2224
      %2430 = vmatprep.subr.bf16.mxu0 0
      %2431 = vmatpush1.bf16.msra.mxu0 %v2225
      %2432 = vmatprep.subr.bf16.mxu0 0
      %2433 = vmatpush1.bf16.msra.mxu0 %v2226
      %2434 = vmatprep.subr.bf16.mxu0 0
      %2435 = vmatpush1.bf16.msra.mxu0 %v2227
      %2436 = vmatprep.subr.bf16.mxu0 0
      %2437 = vmatpush1.bf16.msra.mxu0 %v2228
      %2438 = vmatprep.mubr.bf16.mxu0 %v1725
      %2439 = vmatmul.mubr.bf16.gmra.mrb[0].mxu0 %v1724
      %v2440 = vpop.f32.mrb[0].mxu0
      %v2441 = vadd.f32 %v2376, %v2440
      %v2442 = vpop.f32.mrb[0].mxu0
      %v2443 = vpop.f32.mrb[0].mxu0
      %v2444 = vadd.f32 %v2379, %v2443
      %v2445 = vpop.f32.mrb[0].mxu0
      %2446 = vmatprep.mubr.bf16.mxu0 %v1734
      %2447 = vmatmul.mubr.bf16.gmra.mrb[0].mxu0 %v1733
      %v2448 = vpop.f32.mrb[0].mxu0
      %v2449 = vadd.f32 %v2384, %v2448
      %v2450 = vpop.f32.mrb[0].mxu0
      %v2451 = vpop.f32.mrb[0].mxu0
      %v2452 = vadd.f32 %v2387, %v2451
      %v2453 = vpop.f32.mrb[0].mxu0
      %2454 = vmatprep.mubr.bf16.mxu0 %v1743
      %2455 = vmatmul.mubr.bf16.gmra.mrb[0].mxu0 %v1742
      %v2456 = vpop.f32.mrb[0].mxu0
      %v2457 = vadd.f32 %v2392, %v2456
      %v2458 = vpop.f32.mrb[0].mxu0
      %v2459 = vpop.f32.mrb[0].mxu0
      %v2460 = vadd.f32 %v2395, %v2459
      %v2461 = vpop.f32.mrb[0].mxu0
      %2462 = vmatprep.mubr.bf16.mxu0 %v1752
      %2463 = vmatmul.mubr.bf16.gmra.mrb[0].mxu0 %v1751
      %v2464 = vpop.f32.mrb[0].mxu0
      %v2465 = vadd.f32 %v2400, %v2464
      %v2466 = vpop.f32.mrb[0].mxu0
      %v2467 = vpop.f32.mrb[0].mxu0
      %v2468 = vadd.f32 %v2403, %v2467
      %v2469 = vpop.f32.mrb[0].mxu0
      %2470 = vdwg.mxu0
      %2471 = vmatprep.subr.bf16.mxu0 0
      %2472 = vmatpush1.bf16.msra.mxu0 %v2229
      %2473 = vmatprep.subr.bf16.mxu0 0
      %2474 = vmatpush1.bf16.msra.mxu0 %v2230
      %2475 = vmatprep.subr.bf16.mxu0 0
      %2476 = vmatpush1.bf16.msra.mxu0 %v2231
      %2477 = vmatprep.subr.bf16.mxu0 0
      %2478 = vmatpush1.bf16.msra.mxu0 %v2232
      %2479 = vmatprep.subr.bf16.mxu0 0
      %2480 = vmatpush1.bf16.msra.mxu0 %v2233
      %2481 = vmatprep.subr.bf16.mxu0 0
      %2482 = vmatpush1.bf16.msra.mxu0 %v2234
      %2483 = vmatprep.subr.bf16.mxu0 0
      %2484 = vmatpush1.bf16.msra.mxu0 %v2235
      %2485 = vmatprep.subr.bf16.mxu0 0
      %2486 = vmatpush1.bf16.msra.mxu0 %v2236
      %2487 = vmatprep.subr.bf16.mxu0 0
      %2488 = vmatpush1.bf16.msra.mxu0 %v2237
      %2489 = vmatprep.subr.bf16.mxu0 0
      %2490 = vmatpush1.bf16.msra.mxu0 %v2238
      %2491 = vmatprep.subr.bf16.mxu0 0
      %2492 = vmatpush1.bf16.msra.mxu0 %v2239
      %2493 = vmatprep.subr.bf16.mxu0 0
      %2494 = vmatpush1.bf16.msra.mxu0 %v2240
      %2495 = vmatprep.subr.bf16.mxu0 0
      %2496 = vmatpush1.bf16.msra.mxu0 %v2241
      %2497 = vmatprep.subr.bf16.mxu0 0
      %2498 = vmatpush1.bf16.msra.mxu0 %v2242
      %2499 = vmatprep.subr.bf16.mxu0 0
      %2500 = vmatpush1.bf16.msra.mxu0 %v2243
      %2501 = vmatprep.subr.bf16.mxu0 0
      %2502 = vmatpush1.bf16.msra.mxu0 %v2244
      %2503 = vmatprep.mubr.bf16.mxu0 %v1727
      %2504 = vmatmul.mubr.bf16.gmra.mrb[0].mxu0 %v1726
      %v2505 = vpop.f32.mrb[0].mxu0
      %v2506 = vadd.f32 %v2441, %v2505
      %v2507 = vpop.f32.mrb[0].mxu0
      %v2508 = vpop.f32.mrb[0].mxu0
      %v2509 = vadd.f32 %v2444, %v2508
      %v2510 = vpop.f32.mrb[0].mxu0
      %2511 = vmatprep.mubr.bf16.mxu0 %v1736
      %2512 = vmatmul.mubr.bf16.gmra.mrb[0].mxu0 %v1735
      %v2513 = vpop.f32.mrb[0].mxu0
      %v2514 = vadd.f32 %v2449, %v2513
      %v2515 = vpop.f32.mrb[0].mxu0
      %v2516 = vpop.f32.mrb[0].mxu0
      %v2517 = vadd.f32 %v2452, %v2516
      %v2518 = vpop.f32.mrb[0].mxu0
      %2519 = vmatprep.mubr.bf16.mxu0 %v1745
      %2520 = vmatmul.mubr.bf16.gmra.mrb[0].mxu0 %v1744
      %v2521 = vpop.f32.mrb[0].mxu0
      %v2522 = vadd.f32 %v2457, %v2521
      %v2523 = vpop.f32.mrb[0].mxu0
      %v2524 = vpop.f32.mrb[0].mxu0
      %v2525 = vadd.f32 %v2460, %v2524
      %v2526 = vpop.f32.mrb[0].mxu0
      %2527 = vmatprep.mubr.bf16.mxu0 %v1754
      %2528 = vmatmul.mubr.bf16.gmra.mrb[0].mxu0 %v1753
      %v2529 = vpop.f32.mrb[0].mxu0
      %v2530 = vadd.f32 %v2465, %v2529
      %v2531 = vpop.f32.mrb[0].mxu0
      %v2532 = vpop.f32.mrb[0].mxu0
      %v2533 = vadd.f32 %v2468, %v2532
      %v2534 = vpop.f32.mrb[0].mxu0
      %2535 = vdwg.mxu0
      %2536 = vmatprep.subr.bf16.mxu0 0
      %2537 = vmatpush1.bf16.msra.mxu0 %v2245
      %2538 = vmatprep.subr.bf16.mxu0 0
      %2539 = vmatpush1.bf16.msra.mxu0 %v2246
      %2540 = vmatprep.subr.bf16.mxu0 0
      %2541 = vmatpush1.bf16.msra.mxu0 %v2247
      %2542 = vmatprep.subr.bf16.mxu0 0
      %2543 = vmatpush1.bf16.msra.mxu0 %v2248
      %2544 = vmatprep.subr.bf16.mxu0 0
      %2545 = vmatpush1.bf16.msra.mxu0 %v2249
      %2546 = vmatprep.subr.bf16.mxu0 0
      %2547 = vmatpush1.bf16.msra.mxu0 %v2250
      %2548 = vmatprep.subr.bf16.mxu0 0
      %2549 = vmatpush1.bf16.msra.mxu0 %v2251
      %2550 = vmatprep.subr.bf16.mxu0 0
      %2551 = vmatpush1.bf16.msra.mxu0 %v2252
      %2552 = vmatprep.subr.bf16.mxu0 0
      %2553 = vmatpush1.bf16.msra.mxu0 %v2253
      %2554 = vmatprep.subr.bf16.mxu0 0
      %2555 = vmatpush1.bf16.msra.mxu0 %v2254
      %2556 = vmatprep.subr.bf16.mxu0 0
      %2557 = vmatpush1.bf16.msra.mxu0 %v2255
      %2558 = vmatprep.subr.bf16.mxu0 0
      %2559 = vmatpush1.bf16.msra.mxu0 %v2256
      %2560 = vmatprep.subr.bf16.mxu0 0
      %2561 = vmatpush1.bf16.msra.mxu0 %v2257
      %2562 = vmatprep.subr.bf16.mxu0 0
      %2563 = vmatpush1.bf16.msra.mxu0 %v2258
      %2564 = vmatprep.subr.bf16.mxu0 0
      %2565 = vmatpush1.bf16.msra.mxu0 %v2259
      %2566 = vmatprep.subr.bf16.mxu0 0
      %2567 = vmatpush1.bf16.msra.mxu0 %v2260
      %2568 = vmatprep.mubr.bf16.mxu0 %v1729
      %2569 = vmatmul.mubr.bf16.gmra.mrb[0].mxu0 %v1728
      %v2570 = vpop.f32.mrb[0].mxu0
      %v2571 = vadd.f32 %v2506, %v2570
      %v2572 = vpop.f32.mrb[0].mxu0
      %v2573 = vpop.f32.mrb[0].mxu0
      %v2574 = vadd.f32 %v2509, %v2573
      %v2575 = vpop.f32.mrb[0].mxu0
      %2576 = vmatprep.mubr.bf16.mxu0 %v1738
      %2577 = vmatmul.mubr.bf16.gmra.mrb[0].mxu0 %v1737
      %v2578 = vpop.f32.mrb[0].mxu0
      %v2579 = vadd.f32 %v2514, %v2578
      %v2580 = vpop.f32.mrb[0].mxu0
      %v2581 = vpop.f32.mrb[0].mxu0
      %v2582 = vadd.f32 %v2517, %v2581
      %v2583 = vpop.f32.mrb[0].mxu0
      %2584 = vmatprep.mubr.bf16.mxu0 %v1747
      %2585 = vmatmul.mubr.bf16.gmra.mrb[0].mxu0 %v1746
      %v2586 = vpop.f32.mrb[0].mxu0
      %v2587 = vadd.f32 %v2522, %v2586
      %v2588 = vpop.f32.mrb[0].mxu0
      %v2589 = vpop.f32.mrb[0].mxu0
      %v2590 = vadd.f32 %v2525, %v2589
      %v2591 = vpop.f32.mrb[0].mxu0
      %2592 = vmatprep.mubr.bf16.mxu0 %v1756
      %2593 = vmatmul.mubr.bf16.gmra.mrb[0].mxu0 %v1755
      %v2594 = vpop.f32.mrb[0].mxu0
      %v2595 = vadd.f32 %v2530, %v2594
      %v2596 = vpop.f32.mrb[0].mxu0
      %v2597 = vpop.f32.mrb[0].mxu0
      %v2598 = vadd.f32 %v2533, %v2597
      %v2599 = vpop.f32.mrb[0].mxu0
      %2600 = vdwg.mxu0
      %2601 = vmatprep.subr.bf16.mxu0 0
      %2602 = vmatpush1.bf16.msra.mxu0 %v2261
      %2603 = vmatprep.subr.bf16.mxu0 0
      %2604 = vmatpush1.bf16.msra.mxu0 %v2262
      %2605 = vmatprep.subr.bf16.mxu0 0
      %2606 = vmatpush1.bf16.msra.mxu0 %v2263
      %2607 = vmatprep.subr.bf16.mxu0 0
      %2608 = vmatpush1.bf16.msra.mxu0 %v2264
      %2609 = vmatprep.subr.bf16.mxu0 0
      %2610 = vmatpush1.bf16.msra.mxu0 %v2265
      %2611 = vmatprep.subr.bf16.mxu0 0
      %2612 = vmatpush1.bf16.msra.mxu0 %v2266
      %2613 = vmatprep.subr.bf16.mxu0 0
      %2614 = vmatpush1.bf16.msra.mxu0 %v2267
      %2615 = vmatprep.subr.bf16.mxu0 0
      %2616 = vmatpush1.bf16.msra.mxu0 %v2268
      %2617 = vmatprep.subr.bf16.mxu0 0
      %2618 = vmatpush1.bf16.msra.mxu0 0
      %2619 = vmatprep.subr.bf16.mxu0 0
      %2620 = vmatpush1.bf16.msra.mxu0 0
      %2621 = vmatprep.subr.bf16.mxu0 0
      %2622 = vmatpush1.bf16.msra.mxu0 0
      %2623 = vmatprep.subr.bf16.mxu0 0
      %2624 = vmatpush1.bf16.msra.mxu0 0
      %2625 = vmatprep.subr.bf16.mxu0 0
      %2626 = vmatpush1.bf16.msra.mxu0 0
      %2627 = vmatprep.subr.bf16.mxu0 0
      %2628 = vmatpush1.bf16.msra.mxu0 0
      %2629 = vmatprep.subr.bf16.mxu0 0
      %2630 = vmatpush1.bf16.msra.mxu0 0
      %2631 = vmatprep.subr.bf16.mxu0 0
      %2632 = vmatpush1.bf16.msra.mxu0 0
      %2633 = vmatprep.mubr.bf16.mxu0 0
      %2634 = vmatmul.mubr.bf16.gmra.mrb[0].mxu0 %v1730
      %v2635 = vpop.f32.mrb[0].mxu0
      %v2636 = vadd.f32 %v2571, %v2635
      %v2637 = vpop.f32.mrb[0].mxu0
      %v2638 = vpop.f32.mrb[0].mxu0
      %v2639 = vadd.f32 %v2574, %v2638
      %v2640 = vpop.f32.mrb[0].mxu0
      %2641 = vmatprep.mubr.bf16.mxu0 0
      %2642 = vmatmul.mubr.bf16.gmra.mrb[0].mxu0 %v1739
      %v2643 = vpop.f32.mrb[0].mxu0
      %v2644 = vadd.f32 %v2579, %v2643
      %v2645 = vpop.f32.mrb[0].mxu0
      %v2646 = vpop.f32.mrb[0].mxu0
      %v2647 = vadd.f32 %v2582, %v2646
      %v2648 = vpop.f32.mrb[0].mxu0
      %2649 = vmatprep.mubr.bf16.mxu0 0
      %2650 = vmatmul.mubr.bf16.gmra.mrb[0].mxu0 %v1748
      %v2651 = vpop.f32.mrb[0].mxu0
      %v2652 = vadd.f32 %v2587, %v2651
      %v2653 = vpop.f32.mrb[0].mxu0
      %v2654 = vpop.f32.mrb[0].mxu0
      %v2655 = vadd.f32 %v2590, %v2654
      %v2656 = vpop.f32.mrb[0].mxu0
      %2657 = vmatprep.mubr.bf16.mxu0 0
      %2658 = vmatmul.mubr.bf16.gmra.mrb[0].mxu0 %v1757
      %v2659 = vpop.f32.mrb[0].mxu0
      %v2660 = vadd.f32 %v2595, %v2659
      %v2661 = vpop.f32.mrb[0].mxu0
      %v2662 = vpop.f32.mrb[0].mxu0
      %v2663 = vadd.f32 %v2598, %v2662
      %v2664 = vpop.f32.mrb[0].mxu0
      %2665 = vdwg.mxu0
      %v2666 = vmax.f32 %v2636, 0.0
      %v2667 = vmax.f32 %v2639, 0.0
      %v2668 = vmax.f32 %v2644, 0.0
      %v2669 = vmax.f32 %v2647, 0.0
      %v2670 = vmax.f32 %v2652, 0.0
      %v2671 = vmax.f32 %v2655, 0.0
      %v2672 = vmax.f32 %v2660, 0.0
      %v2673 = vmax.f32 %v2663, 0.0
      %s2674 = scalar_lea.vmem [#allocation4], 24
      %2675 = vst [vmem:[%s2674 + $0x8] sm:$0xff] %v2666
      %2676 = vst [vmem:[%s2674 + $0x20] sm:$0xff] %v2667
      %2677 = vst [vmem:[%s2674 + $0x38] sm:$0xff] %v2668
      %2678 = vst [vmem:[%s2674 + $0x50] sm:$0xff] %v2669
      %2679 = vst [vmem:[%s2674 + $0x68] sm:$0xff] %v2670
      %2680 = vst [vmem:[%s2674 + $0x80] sm:$0xff] %v2671
      %2681 = vst [vmem:[%s2674 + $0x98] sm:$0xff] %v2672
      %2682 = vst [vmem:[%s2674 + $0xb0] sm:$0xff] %v2673
      %v2683 = vld [vmem:[#allocation4 + $0x7] sm:$0xff]
      %v2684 = vld [vmem:[#allocation4 + $0x1f] sm:$0xff]
      %v2685 = vld [vmem:[#allocation4 + $0x37] sm:$0xff]
      %v2686 = vld [vmem:[#allocation4 + $0x4f] sm:$0xff]
      %v2687 = vld [vmem:[#allocation4 + $0x67] sm:$0xff]
      %v2688 = vld [vmem:[#allocation4 + $0x7f] sm:$0xff]
      %v2689 = vld [vmem:[#allocation4 + $0x97] sm:$0xff]
      %v2690 = vld [vmem:[#allocation4 + $0xaf] sm:$0xff]
      %v2691 = vld [vmem:[#allocation4 + $0x8] sm:$0xff]
      %v2692 = vld [vmem:[#allocation4 + $0x20] sm:$0xff]
      %v2693 = vld [vmem:[#allocation4 + $0x38] sm:$0xff]
      %v2694 = vld [vmem:[#allocation4 + $0x50] sm:$0xff]
      %v2695 = vld [vmem:[#allocation4 + $0x68] sm:$0xff]
      %v2696 = vld [vmem:[#allocation4 + $0x80] sm:$0xff]
      %v2697 = vld [vmem:[#allocation4 + $0x98] sm:$0xff]
      %v2698 = vld [vmem:[#allocation4 + $0xb0] sm:$0xff]
      %v2699 = vld [vmem:[#allocation4 + $0x9] sm:$0xff]
      %v2700 = vld [vmem:[#allocation4 + $0x21] sm:$0xff]
      %v2701 = vld [vmem:[#allocation4 + $0x39] sm:$0xff]
      %v2702 = vld [vmem:[#allocation4 + $0x51] sm:$0xff]
      %v2703 = vld [vmem:[#allocation4 + $0x69] sm:$0xff]
      %v2704 = vld [vmem:[#allocation4 + $0x81] sm:$0xff]
      %v2705 = vld [vmem:[#allocation4 + $0x99] sm:$0xff]
      %v2706 = vld [vmem:[#allocation4 + $0xb1] sm:$0xff]
      %v2707 = vld [vmem:[%s2674 + $0x7] sm:$0xff]
      %v2708 = vld [vmem:[%s2674 + $0x1f] sm:$0xff]
      %v2709 = vld [vmem:[%s2674 + $0x37] sm:$0xff]
      %v2710 = vld [vmem:[%s2674 + $0x4f] sm:$0xff]
      %v2711 = vld [vmem:[%s2674 + $0x67] sm:$0xff]
      %v2712 = vld [vmem:[%s2674 + $0x7f] sm:$0xff]
      %v2713 = vld [vmem:[%s2674 + $0x97] sm:$0xff]
      %v2714 = vld [vmem:[%s2674 + $0xaf] sm:$0xff]
      %v2715 = vld [vmem:[%s2674 + $0x8] sm:$0xff]
      %v2716 = vld [vmem:[%s2674 + $0x20] sm:$0xff]
      %v2717 = vld [vmem:[%s2674 + $0x38] sm:$0xff]
      %v2718 = vld [vmem:[%s2674 + $0x50] sm:$0xff]
      %v2719 = vld [vmem:[%s2674 + $0x68] sm:$0xff]
      %v2720 = vld [vmem:[%s2674 + $0x80] sm:$0xff]
      %v2721 = vld [vmem:[%s2674 + $0x98] sm:$0xff]
      %v2722 = vld [vmem:[%s2674 + $0xb0] sm:$0xff]
      %v2723 = vld [vmem:[%s2674 + $0x9] sm:$0xff]
      %v2724 = vld [vmem:[%s2674 + $0x21] sm:$0xff]
      %v2725 = vld [vmem:[%s2674 + $0x39] sm:$0xff]
      %v2726 = vld [vmem:[%s2674 + $0x51] sm:$0xff]
      %v2727 = vld [vmem:[%s2674 + $0x69] sm:$0xff]
      %v2728 = vld [vmem:[%s2674 + $0x81] sm:$0xff]
      %v2729 = vld [vmem:[%s2674 + $0x99] sm:$0xff]
      %v2730 = vld [vmem:[%s2674 + $0xb1] sm:$0xff]
      %s2731 = scalar_lea.vmem [#allocation4], 48
      %v2732 = vld [vmem:[%s2731 + $0x7] sm:$0xff]
      %v2733 = vld [vmem:[%s2731 + $0x1f] sm:$0xff]
      %v2734 = vld [vmem:[%s2731 + $0x37] sm:$0xff]
      %v2735 = vld [vmem:[%s2731 + $0x4f] sm:$0xff]
      %v2736 = vld [vmem:[%s2731 + $0x67] sm:$0xff]
      %v2737 = vld [vmem:[%s2731 + $0x7f] sm:$0xff]
      %v2738 = vld [vmem:[%s2731 + $0x97] sm:$0xff]
      %v2739 = vld [vmem:[%s2731 + $0xaf] sm:$0xff]
      %v2740 = vld [vmem:[%s2731 + $0x8] sm:$0xff]
      %v2741 = vld [vmem:[%s2731 + $0x20] sm:$0xff]
      %v2742 = vld [vmem:[%s2731 + $0x38] sm:$0xff]
      %v2743 = vld [vmem:[%s2731 + $0x50] sm:$0xff]
      %v2744 = vld [vmem:[%s2731 + $0x68] sm:$0xff]
      %v2745 = vld [vmem:[%s2731 + $0x80] sm:$0xff]
      %v2746 = vld [vmem:[%s2731 + $0x98] sm:$0xff]
      %v2747 = vld [vmem:[%s2731 + $0xb0] sm:$0xff]
      %v2748 = vld [vmem:[%s2731 + $0x9] sm:$0xff]
      %v2749 = vld [vmem:[%s2731 + $0x21] sm:$0xff]
      %v2750 = vld [vmem:[%s2731 + $0x39] sm:$0xff]
      %v2751 = vld [vmem:[%s2731 + $0x51] sm:$0xff]
      %v2752 = vld [vmem:[%s2731 + $0x69] sm:$0xff]
      %v2753 = vld [vmem:[%s2731 + $0x81] sm:$0xff]
      %v2754 = vld [vmem:[%s2731 + $0x99] sm:$0xff]
      %v2755 = vld [vmem:[%s2731 + $0xb1] sm:$0xff]
      %v2756 = vpack.c.bf16 %v2684, %v2683
      %v2757 = vpack.c.bf16 %v2692, %v2691
      %v2758 = vpack.c.bf16 %v2700, %v2699
      %v2759 = vpack.c.bf16 %v2708, %v2707
      %v2760 = vpack.c.bf16 %v2716, %v2715
      %v2761 = vpack.c.bf16 %v2724, %v2723
      %v2762 = vpack.c.bf16 %v2733, %v2732
      %v2763 = vpack.c.bf16 %v2741, %v2740
      %v2764 = vpack.c.bf16 %v2749, %v2748
      %v2765 = vpack.c.bf16 %v2686, %v2685
      %v2766 = vpack.c.bf16 %v2694, %v2693
      %v2767 = vpack.c.bf16 %v2702, %v2701
      %v2768 = vpack.c.bf16 %v2710, %v2709
      %v2769 = vpack.c.bf16 %v2718, %v2717
      %v2770 = vpack.c.bf16 %v2726, %v2725
      %v2771 = vpack.c.bf16 %v2735, %v2734
      %v2772 = vpack.c.bf16 %v2743, %v2742
      %v2773 = vpack.c.bf16 %v2751, %v2750
      %v2774 = vpack.c.bf16 %v2688, %v2687
      %v2775 = vpack.c.bf16 %v2696, %v2695
      %v2776 = vpack.c.bf16 %v2704, %v2703
      %v2777 = vpack.c.bf16 %v2712, %v2711
      %v2778 = vpack.c.bf16 %v2720, %v2719
      %v2779 = vpack.c.bf16 %v2728, %v2727
      %v2780 = vpack.c.bf16 %v2737, %v2736
      %v2781 = vpack.c.bf16 %v2745, %v2744
      %v2782 = vpack.c.bf16 %v2753, %v2752
      %v2783 = vpack.c.bf16 %v2690, %v2689
      %v2784 = vpack.c.bf16 %v2698, %v2697
      %v2785 = vpack.c.bf16 %v2706, %v2705
      %v2786 = vpack.c.bf16 %v2714, %v2713
      %v2787 = vpack.c.bf16 %v2722, %v2721
      %v2788 = vpack.c.bf16 %v2730, %v2729
      %v2789 = vpack.c.bf16 %v2739, %v2738
      %v2790 = vpack.c.bf16 %v2747, %v2746
      %v2791 = vpack.c.bf16 %v2755, %v2754
      %v2792 = vld [vmem:[%s5] sm:$0xff]
      %v2793 = vld [vmem:[%s5 + $0x8] sm:$0xff]
      %v2794 = vld [vmem:[%s5 + $0x10] sm:$0xff]
      %v2795 = vld [vmem:[%s5 + $0x18] sm:$0xff]
      %v2796 = vld [vmem:[%s5 + $0x20] sm:$0xff]
      %v2797 = vld [vmem:[%s5 + $0x28] sm:$0xff]
      %v2798 = vld [vmem:[%s5 + $0x30] sm:$0xff]
      %v2799 = vld [vmem:[%s5 + $0x38] sm:$0xff]
      %v2800 = vld [vmem:[%s5 + $0x40] sm:$0xff]
      %v2801 = vld [vmem:[%s5 + $0x48] sm:$0xff]
      %v2802 = vld [vmem:[%s5 + $0x50] sm:$0xff]
      %v2803 = vld [vmem:[%s5 + $0x58] sm:$0xff]
      %v2804 = vld [vmem:[%s5 + $0x60] sm:$0xff]
      %v2805 = vld [vmem:[%s5 + $0x68] sm:$0xff]
      %v2806 = vld [vmem:[%s5 + $0x70] sm:$0xff]
      %v2807 = vld [vmem:[%s5 + $0x78] sm:$0xff]
      %v2808 = vld [vmem:[%s5 + $0x80] sm:$0xff]
      %v2809 = vld [vmem:[%s5 + $0x88] sm:$0xff]
      %v2810 = vld [vmem:[%s5 + $0x90] sm:$0xff]
      %v2811 = vld [vmem:[%s5 + $0x98] sm:$0xff]
      %v2812 = vld [vmem:[%s5 + $0xa0] sm:$0xff]
      %v2813 = vld [vmem:[%s5 + $0xa8] sm:$0xff]
      %v2814 = vld [vmem:[%s5 + $0xb0] sm:$0xff]
      %v2815 = vld [vmem:[%s5 + $0xb8] sm:$0xff]
      %v2816 = vld [vmem:[%s5 + $0xc0] sm:$0xff]
      %v2817 = vld [vmem:[%s5 + $0xc8] sm:$0xff]
      %v2818 = vld [vmem:[%s5 + $0xd0] sm:$0xff]
      %v2819 = vld [vmem:[%s5 + $0xd8] sm:$0xff]
      %v2820 = vld [vmem:[%s5 + $0xe0] sm:$0xff]
      %v2821 = vld [vmem:[%s5 + $0xe8] sm:$0xff]
      %v2822 = vld [vmem:[%s5 + $0xf0] sm:$0xff]
      %v2823 = vld [vmem:[%s5 + $0xf8] sm:$0xff]
      %v2824 = vld [vmem:[%s5 + $0x100] sm:$0xff]
      %v2825 = vld [vmem:[%s5 + $0x108] sm:$0xff]
      %v2826 = vld [vmem:[%s5 + $0x110] sm:$0xff]
      %v2827 = vld [vmem:[%s5 + $0x118] sm:$0xff]
      %v2828 = vld [vmem:[%s5 + $0x120] sm:$0xff]
      %v2829 = vld [vmem:[%s5 + $0x128] sm:$0xff]
      %v2830 = vld [vmem:[%s5 + $0x130] sm:$0xff]
      %v2831 = vld [vmem:[%s5 + $0x138] sm:$0xff]
      %v2832 = vld [vmem:[%s5 + $0x140] sm:$0xff]
      %v2833 = vld [vmem:[%s5 + $0x148] sm:$0xff]
      %v2834 = vld [vmem:[%s5 + $0x150] sm:$0xff]
      %v2835 = vld [vmem:[%s5 + $0x158] sm:$0xff]
      %v2836 = vld [vmem:[%s5 + $0x160] sm:$0xff]
      %v2837 = vld [vmem:[%s5 + $0x168] sm:$0xff]
      %v2838 = vld [vmem:[%s5 + $0x170] sm:$0xff]
      %v2839 = vld [vmem:[%s5 + $0x178] sm:$0xff]
      %v2840 = vld [vmem:[%s5 + $0x180] sm:$0xff]
      %v2841 = vld [vmem:[%s5 + $0x188] sm:$0xff]
      %v2842 = vld [vmem:[%s5 + $0x190] sm:$0xff]
      %v2843 = vld [vmem:[%s5 + $0x198] sm:$0xff]
      %v2844 = vld [vmem:[%s5 + $0x1a0] sm:$0xff]
      %v2845 = vld [vmem:[%s5 + $0x1a8] sm:$0xff]
      %v2846 = vld [vmem:[%s5 + $0x1b0] sm:$0xff]
      %v2847 = vld [vmem:[%s5 + $0x1b8] sm:$0xff]
      %v2848 = vld [vmem:[%s5 + $0x1c0] sm:$0xff]
      %v2849 = vld [vmem:[%s5 + $0x1c8] sm:$0xff]
      %v2850 = vld [vmem:[%s5 + $0x1d0] sm:$0xff]
      %v2851 = vld [vmem:[%s5 + $0x1d8] sm:$0xff]
      %v2852 = vld [vmem:[%s5 + $0x1e0] sm:$0xff]
      %v2853 = vld [vmem:[%s5 + $0x1e8] sm:$0xff]
      %v2854 = vld [vmem:[%s5 + $0x1f0] sm:$0xff]
      %v2855 = vld [vmem:[%s5 + $0x1f8] sm:$0xff]
      %v2856 = vld [vmem:[%s5 + $0x200] sm:$0xff]
      %v2857 = vld [vmem:[%s5 + $0x208] sm:$0xff]
      %v2858 = vld [vmem:[%s5 + $0x210] sm:$0xff]
      %v2859 = vld [vmem:[%s5 + $0x218] sm:$0xff]
      %v2860 = vld [vmem:[%s5 + $0x220] sm:$0xff]
      %v2861 = vld [vmem:[%s5 + $0x228] sm:$0xff]
      %v2862 = vld [vmem:[%s5 + $0x230] sm:$0xff]
      %v2863 = vld [vmem:[%s5 + $0x238] sm:$0xff]
      %v2864 = vld [vmem:[%s5 + $0x240] sm:$0xff]
      %v2865 = vld [vmem:[%s5 + $0x248] sm:$0xff]
      %v2866 = vld [vmem:[%s5 + $0x250] sm:$0xff]
      %v2867 = vld [vmem:[%s5 + $0x258] sm:$0xff]
      %v2868 = vld [vmem:[%s5 + $0x260] sm:$0xff]
      %v2869 = vld [vmem:[%s5 + $0x268] sm:$0xff]
      %v2870 = vld [vmem:[%s5 + $0x270] sm:$0xff]
      %v2871 = vld [vmem:[%s5 + $0x278] sm:$0xff]
      %v2872 = vld [vmem:[%s5 + $0x280] sm:$0xff]
      %v2873 = vld [vmem:[%s5 + $0x288] sm:$0xff]
      %v2874 = vld [vmem:[%s5 + $0x290] sm:$0xff]
      %v2875 = vld [vmem:[%s5 + $0x298] sm:$0xff]
      %v2876 = vld [vmem:[%s5 + $0x2a0] sm:$0xff]
      %v2877 = vld [vmem:[%s5 + $0x2a8] sm:$0xff]
      %v2878 = vld [vmem:[%s5 + $0x2b0] sm:$0xff]
      %v2879 = vld [vmem:[%s5 + $0x2b8] sm:$0xff]
      %v2880 = vld [vmem:[%s5 + $0x2c0] sm:$0xff]
      %v2881 = vld [vmem:[%s5 + $0x2c8] sm:$0xff]
      %v2882 = vld [vmem:[%s5 + $0x2d0] sm:$0xff]
      %v2883 = vld [vmem:[%s5 + $0x2d8] sm:$0xff]
      %v2884 = vld [vmem:[%s5 + $0x2e0] sm:$0xff]
      %v2885 = vld [vmem:[%s5 + $0x2e8] sm:$0xff]
      %v2886 = vld [vmem:[%s5 + $0x2f0] sm:$0xff]
      %v2887 = vld [vmem:[%s5 + $0x2f8] sm:$0xff]
      %v2888 = vld [vmem:[%s5 + $0x300] sm:$0xff]
      %v2889 = vld [vmem:[%s5 + $0x308] sm:$0xff]
      %v2890 = vld [vmem:[%s5 + $0x310] sm:$0xff]
      %v2891 = vld [vmem:[%s5 + $0x318] sm:$0xff]
      %v2892 = vld [vmem:[%s5 + $0x320] sm:$0xff]
      %v2893 = vld [vmem:[%s5 + $0x328] sm:$0xff]
      %v2894 = vld [vmem:[%s5 + $0x330] sm:$0xff]
      %v2895 = vld [vmem:[%s5 + $0x338] sm:$0xff]
      %v2896 = vld [vmem:[%s5 + $0x340] sm:$0xff]
      %v2897 = vld [vmem:[%s5 + $0x348] sm:$0xff]
      %v2898 = vld [vmem:[%s5 + $0x350] sm:$0xff]
      %v2899 = vld [vmem:[%s5 + $0x358] sm:$0xff]
      %v2900 = vld [vmem:[%s5 + $0x360] sm:$0xff]
      %v2901 = vld [vmem:[%s5 + $0x368] sm:$0xff]
      %v2902 = vld [vmem:[%s5 + $0x370] sm:$0xff]
      %v2903 = vld [vmem:[%s5 + $0x378] sm:$0xff]
      %v2904 = vld [vmem:[%s5 + $0x380] sm:$0xff]
      %v2905 = vld [vmem:[%s5 + $0x388] sm:$0xff]
      %v2906 = vld [vmem:[%s5 + $0x390] sm:$0xff]
      %v2907 = vld [vmem:[%s5 + $0x398] sm:$0xff]
      %v2908 = vld [vmem:[%s5 + $0x3a0] sm:$0xff]
      %v2909 = vld [vmem:[%s5 + $0x3a8] sm:$0xff]
      %v2910 = vld [vmem:[%s5 + $0x3b0] sm:$0xff]
      %v2911 = vld [vmem:[%s5 + $0x3b8] sm:$0xff]
      %v2912 = vld [vmem:[%s5 + $0x3c0] sm:$0xff]
      %v2913 = vld [vmem:[%s5 + $0x3c8] sm:$0xff]
      %v2914 = vld [vmem:[%s5 + $0x3d0] sm:$0xff]
      %v2915 = vld [vmem:[%s5 + $0x3d8] sm:$0xff]
      %v2916 = vld [vmem:[%s5 + $0x3e0] sm:$0xff]
      %v2917 = vld [vmem:[%s5 + $0x3e8] sm:$0xff]
      %v2918 = vld [vmem:[%s5 + $0x3f0] sm:$0xff]
      %v2919 = vld [vmem:[%s5 + $0x3f8] sm:$0xff]
      %v2920 = vld [vmem:[%s5 + $0x400] sm:$0xff]
      %v2921 = vld [vmem:[%s5 + $0x408] sm:$0xff]
      %v2922 = vld [vmem:[%s5 + $0x410] sm:$0xff]
      %v2923 = vld [vmem:[%s5 + $0x418] sm:$0xff]
      %v2924 = vld [vmem:[%s5 + $0x420] sm:$0xff]
      %v2925 = vld [vmem:[%s5 + $0x428] sm:$0xff]
      %v2926 = vld [vmem:[%s5 + $0x430] sm:$0xff]
      %v2927 = vld [vmem:[%s5 + $0x438] sm:$0xff]
      %v2928 = vld [vmem:[%s5 + $0x440] sm:$0xff]
      %v2929 = vld [vmem:[%s5 + $0x448] sm:$0xff]
      %v2930 = vld [vmem:[%s5 + $0x450] sm:$0xff]
      %v2931 = vld [vmem:[%s5 + $0x458] sm:$0xff]
      %v2932 = vld [vmem:[%s5 + $0x460] sm:$0xff]
      %v2933 = vld [vmem:[%s5 + $0x468] sm:$0xff]
      %v2934 = vld [vmem:[%s5 + $0x470] sm:$0xff]
      %v2935 = vld [vmem:[%s5 + $0x478] sm:$0xff]
      %v2936 = vld [vmem:[%s6] sm:$0x3]
      %v2938 = vlaneseq
      %v2939 = vshrl.u32 %v2938, 7
      %v2940 = vsub.s32 0, %v2939
      %v2941 = vrot.slane %v2936, %v2940
      %v2942 = vlaneseq
      %v2943 = vshrl.u32 %v2942, 7
      %v2944 = vsub.s32 1, %v2943
      %v2945 = vrot.slane %v2936, %v2944
      %v3092 = vunpack.c.l.b16 %v2792
      %v3093 = vunpack.c.h.b16 %v2792
      %v3094 = vunpack.c.l.b16 %v2793
      %v3095 = vunpack.c.h.b16 %v2793
      %v3096 = vunpack.c.l.b16 %v2794
      %v3097 = vunpack.c.h.b16 %v2794
      %v3098 = vunpack.c.l.b16 %v2795
      %v3099 = vunpack.c.h.b16 %v2795
      %v3100 = vunpack.c.l.b16 %v2796
      %v3101 = vunpack.c.h.b16 %v2796
      %v3102 = vunpack.c.l.b16 %v2797
      %v3103 = vunpack.c.h.b16 %v2797
      %v3104 = vunpack.c.l.b16 %v2798
      %v3105 = vunpack.c.h.b16 %v2798
      %v3106 = vunpack.c.l.b16 %v2799
      %v3107 = vunpack.c.h.b16 %v2799
      %v3108 = vunpack.c.l.b16 %v2800
      %v3109 = vunpack.c.h.b16 %v2800
      %v3110 = vunpack.c.l.b16 %v2801
      %v3111 = vunpack.c.h.b16 %v2801
      %v3112 = vunpack.c.l.b16 %v2802
      %v3113 = vunpack.c.h.b16 %v2802
      %v3114 = vunpack.c.l.b16 %v2803
      %v3115 = vunpack.c.h.b16 %v2803
      %v3116 = vunpack.c.l.b16 %v2804
      %v3117 = vunpack.c.h.b16 %v2804
      %v3118 = vunpack.c.l.b16 %v2805
      %v3119 = vunpack.c.h.b16 %v2805
      %v3120 = vunpack.c.l.b16 %v2806
      %v3121 = vunpack.c.h.b16 %v2806
      %v3122 = vunpack.c.l.b16 %v2807
      %v3123 = vunpack.c.h.b16 %v2807
      %v3124 = vunpack.c.l.b16 %v2808
      %v3125 = vunpack.c.h.b16 %v2808
      %v3126 = vunpack.c.l.b16 %v2809
      %v3127 = vunpack.c.h.b16 %v2809
      %v3128 = vunpack.c.l.b16 %v2810
      %v3129 = vunpack.c.h.b16 %v2810
      %v3130 = vunpack.c.l.b16 %v2811
      %v3131 = vunpack.c.h.b16 %v2811
      %v3132 = vunpack.c.l.b16 %v2812
      %v3133 = vunpack.c.h.b16 %v2812
      %v3134 = vunpack.c.l.b16 %v2813
      %v3135 = vunpack.c.h.b16 %v2813
      %v3136 = vunpack.c.l.b16 %v2814
      %v3137 = vunpack.c.h.b16 %v2814
      %v3138 = vunpack.c.l.b16 %v2815
      %v3139 = vunpack.c.h.b16 %v2815
      %v3140 = vunpack.c.l.b16 %v2816
      %v3141 = vunpack.c.h.b16 %v2816
      %v3142 = vunpack.c.l.b16 %v2817
      %v3143 = vunpack.c.h.b16 %v2817
      %v3144 = vunpack.c.l.b16 %v2818
      %v3145 = vunpack.c.h.b16 %v2818
      %v3146 = vunpack.c.l.b16 %v2819
      %v3147 = vunpack.c.h.b16 %v2819
      %v3148 = vunpack.c.l.b16 %v2820
      %v3149 = vunpack.c.h.b16 %v2820
      %v3150 = vunpack.c.l.b16 %v2821
      %v3151 = vunpack.c.h.b16 %v2821
      %v3152 = vunpack.c.l.b16 %v2822
      %v3153 = vunpack.c.h.b16 %v2822
      %v3154 = vunpack.c.l.b16 %v2823
      %v3155 = vunpack.c.h.b16 %v2823
      %v3156 = vunpack.c.l.b16 %v2824
      %v3157 = vunpack.c.h.b16 %v2824
      %v3158 = vunpack.c.l.b16 %v2825
      %v3159 = vunpack.c.h.b16 %v2825
      %v3160 = vunpack.c.l.b16 %v2826
      %v3161 = vunpack.c.h.b16 %v2826
      %v3162 = vunpack.c.l.b16 %v2827
      %v3163 = vunpack.c.h.b16 %v2827
      %v3164 = vunpack.c.l.b16 %v2828
      %v3165 = vunpack.c.h.b16 %v2828
      %v3166 = vunpack.c.l.b16 %v2829
      %v3167 = vunpack.c.h.b16 %v2829
      %v3168 = vunpack.c.l.b16 %v2830
      %v3169 = vunpack.c.h.b16 %v2830
      %v3170 = vunpack.c.l.b16 %v2831
      %v3171 = vunpack.c.h.b16 %v2831
      %v3172 = vunpack.c.l.b16 %v2832
      %v3173 = vunpack.c.h.b16 %v2832
      %v3174 = vunpack.c.l.b16 %v2833
      %v3175 = vunpack.c.h.b16 %v2833
      %v3176 = vunpack.c.l.b16 %v2834
      %v3177 = vunpack.c.h.b16 %v2834
      %v3178 = vunpack.c.l.b16 %v2835
      %v3179 = vunpack.c.h.b16 %v2835
      %v3180 = vunpack.c.l.b16 %v2836
      %v3181 = vunpack.c.h.b16 %v2836
      %v3182 = vunpack.c.l.b16 %v2837
      %v3183 = vunpack.c.h.b16 %v2837
      %v3184 = vunpack.c.l.b16 %v2838
      %v3185 = vunpack.c.h.b16 %v2838
      %v3186 = vunpack.c.l.b16 %v2839
      %v3187 = vunpack.c.h.b16 %v2839
      %v3188 = vunpack.c.l.b16 %v2840
      %v3189 = vunpack.c.h.b16 %v2840
      %v3190 = vunpack.c.l.b16 %v2841
      %v3191 = vunpack.c.h.b16 %v2841
      %v3192 = vunpack.c.l.b16 %v2842
      %v3193 = vunpack.c.h.b16 %v2842
      %v3194 = vunpack.c.l.b16 %v2843
      %v3195 = vunpack.c.h.b16 %v2843
      %v3196 = vunpack.c.l.b16 %v2844
      %v3197 = vunpack.c.h.b16 %v2844
      %v3198 = vunpack.c.l.b16 %v2845
      %v3199 = vunpack.c.h.b16 %v2845
      %v3200 = vunpack.c.l.b16 %v2846
      %v3201 = vunpack.c.h.b16 %v2846
      %v3202 = vunpack.c.l.b16 %v2847
      %v3203 = vunpack.c.h.b16 %v2847
      %v3204 = vunpack.c.l.b16 %v2848
      %v3205 = vunpack.c.h.b16 %v2848
      %v3206 = vunpack.c.l.b16 %v2849
      %v3207 = vunpack.c.h.b16 %v2849
      %v3208 = vunpack.c.l.b16 %v2850
      %v3209 = vunpack.c.h.b16 %v2850
      %v3210 = vunpack.c.l.b16 %v2851
      %v3211 = vunpack.c.h.b16 %v2851
      %v3212 = vunpack.c.l.b16 %v2852
      %v3213 = vunpack.c.h.b16 %v2852
      %v3214 = vunpack.c.l.b16 %v2853
      %v3215 = vunpack.c.h.b16 %v2853
      %v3216 = vunpack.c.l.b16 %v2854
      %v3217 = vunpack.c.h.b16 %v2854
      %v3218 = vunpack.c.l.b16 %v2855
      %v3219 = vunpack.c.h.b16 %v2855
      %v3220 = vunpack.c.l.b16 %v2856
      %v3221 = vunpack.c.h.b16 %v2856
      %v3222 = vunpack.c.l.b16 %v2857
      %v3223 = vunpack.c.h.b16 %v2857
      %v3224 = vunpack.c.l.b16 %v2858
      %v3225 = vunpack.c.h.b16 %v2858
      %v3226 = vunpack.c.l.b16 %v2859
      %v3227 = vunpack.c.h.b16 %v2859
      %v3228 = vunpack.c.l.b16 %v2860
      %v3229 = vunpack.c.h.b16 %v2860
      %v3230 = vunpack.c.l.b16 %v2861
      %v3231 = vunpack.c.h.b16 %v2861
      %v3232 = vunpack.c.l.b16 %v2862
      %v3233 = vunpack.c.h.b16 %v2862
      %v3234 = vunpack.c.l.b16 %v2863
      %v3235 = vunpack.c.h.b16 %v2863
      %v3236 = vunpack.c.l.b16 %v2864
      %v3237 = vunpack.c.h.b16 %v2864
      %v3238 = vunpack.c.l.b16 %v2865
      %v3239 = vunpack.c.h.b16 %v2865
      %v3240 = vunpack.c.l.b16 %v2866
      %v3241 = vunpack.c.h.b16 %v2866
      %v3242 = vunpack.c.l.b16 %v2867
      %v3243 = vunpack.c.h.b16 %v2867
      %v3244 = vunpack.c.l.b16 %v2868
      %v3245 = vunpack.c.h.b16 %v2868
      %v3246 = vunpack.c.l.b16 %v2869
      %v3247 = vunpack.c.h.b16 %v2869
      %v3248 = vunpack.c.l.b16 %v2870
      %v3249 = vunpack.c.h.b16 %v2870
      %v3250 = vunpack.c.l.b16 %v2871
      %v3251 = vunpack.c.h.b16 %v2871
      %v3252 = vunpack.c.l.b16 %v2872
      %v3253 = vunpack.c.h.b16 %v2872
      %v3254 = vunpack.c.l.b16 %v2873
      %v3255 = vunpack.c.h.b16 %v2873
      %v3256 = vunpack.c.l.b16 %v2874
      %v3257 = vunpack.c.h.b16 %v2874
      %v3258 = vunpack.c.l.b16 %v2875
      %v3259 = vunpack.c.h.b16 %v2875
      %v3260 = vunpack.c.l.b16 %v2876
      %v3261 = vunpack.c.h.b16 %v2876
      %v3262 = vunpack.c.l.b16 %v2877
      %v3263 = vunpack.c.h.b16 %v2877
      %v3264 = vunpack.c.l.b16 %v2878
      %v3265 = vunpack.c.h.b16 %v2878
      %v3266 = vunpack.c.l.b16 %v2879
      %v3267 = vunpack.c.h.b16 %v2879
      %v3268 = vunpack.c.l.b16 %v2880
      %v3269 = vunpack.c.h.b16 %v2880
      %v3270 = vunpack.c.l.b16 %v2881
      %v3271 = vunpack.c.h.b16 %v2881
      %v3272 = vunpack.c.l.b16 %v2882
      %v3273 = vunpack.c.h.b16 %v2882
      %v3274 = vunpack.c.l.b16 %v2883
      %v3275 = vunpack.c.h.b16 %v2883
      %v3276 = vunpack.c.l.b16 %v2884
      %v3277 = vunpack.c.h.b16 %v2884
      %v3278 = vunpack.c.l.b16 %v2885
      %v3279 = vunpack.c.h.b16 %v2885
      %v3280 = vunpack.c.l.b16 %v2886
      %v3281 = vunpack.c.h.b16 %v2886
      %v3282 = vunpack.c.l.b16 %v2887
      %v3283 = vunpack.c.h.b16 %v2887
      %v3284 = vunpack.c.l.b16 %v2888
      %v3285 = vunpack.c.h.b16 %v2888
      %v3286 = vunpack.c.l.b16 %v2889
      %v3287 = vunpack.c.h.b16 %v2889
      %v3288 = vunpack.c.l.b16 %v2890
      %v3289 = vunpack.c.h.b16 %v2890
      %v3290 = vunpack.c.l.b16 %v2891
      %v3291 = vunpack.c.h.b16 %v2891
      %v3292 = vunpack.c.l.b16 %v2892
      %v3293 = vunpack.c.h.b16 %v2892
      %v3294 = vunpack.c.l.b16 %v2893
      %v3295 = vunpack.c.h.b16 %v2893
      %v3296 = vunpack.c.l.b16 %v2894
      %v3297 = vunpack.c.h.b16 %v2894
      %v3298 = vunpack.c.l.b16 %v2895
      %v3299 = vunpack.c.h.b16 %v2895
      %v3300 = vunpack.c.l.b16 %v2896
      %v3301 = vunpack.c.h.b16 %v2896
      %v3302 = vunpack.c.l.b16 %v2897
      %v3303 = vunpack.c.h.b16 %v2897
      %v3304 = vunpack.c.l.b16 %v2898
      %v3305 = vunpack.c.h.b16 %v2898
      %v3306 = vunpack.c.l.b16 %v2899
      %v3307 = vunpack.c.h.b16 %v2899
      %v3308 = vunpack.c.l.b16 %v2900
      %v3309 = vunpack.c.h.b16 %v2900
      %v3310 = vunpack.c.l.b16 %v2901
      %v3311 = vunpack.c.h.b16 %v2901
      %v3312 = vunpack.c.l.b16 %v2902
      %v3313 = vunpack.c.h.b16 %v2902
      %v3314 = vunpack.c.l.b16 %v2903
      %v3315 = vunpack.c.h.b16 %v2903
      %v3316 = vunpack.c.l.b16 %v2904
      %v3317 = vunpack.c.h.b16 %v2904
      %v3318 = vunpack.c.l.b16 %v2905
      %v3319 = vunpack.c.h.b16 %v2905
      %v3320 = vunpack.c.l.b16 %v2906
      %v3321 = vunpack.c.h.b16 %v2906
      %v3322 = vunpack.c.l.b16 %v2907
      %v3323 = vunpack.c.h.b16 %v2907
      %v3324 = vunpack.c.l.b16 %v2908
      %v3325 = vunpack.c.h.b16 %v2908
      %v3326 = vunpack.c.l.b16 %v2909
      %v3327 = vunpack.c.h.b16 %v2909
      %v3328 = vunpack.c.l.b16 %v2910
      %v3329 = vunpack.c.h.b16 %v2910
      %v3330 = vunpack.c.l.b16 %v2911
      %v3331 = vunpack.c.h.b16 %v2911
      %v3332 = vunpack.c.l.b16 %v2912
      %v3333 = vunpack.c.h.b16 %v2912
      %v3334 = vunpack.c.l.b16 %v2913
      %v3335 = vunpack.c.h.b16 %v2913
      %v3336 = vunpack.c.l.b16 %v2914
      %v3337 = vunpack.c.h.b16 %v2914
      %v3338 = vunpack.c.l.b16 %v2915
      %v3339 = vunpack.c.h.b16 %v2915
      %v3340 = vunpack.c.l.b16 %v2916
      %v3341 = vunpack.c.h.b16 %v2916
      %v3342 = vunpack.c.l.b16 %v2917
      %v3343 = vunpack.c.h.b16 %v2917
      %v3344 = vunpack.c.l.b16 %v2918
      %v3345 = vunpack.c.h.b16 %v2918
      %v3346 = vunpack.c.l.b16 %v2919
      %v3347 = vunpack.c.h.b16 %v2919
      %v3348 = vunpack.c.l.b16 %v2920
      %v3349 = vunpack.c.h.b16 %v2920
      %v3350 = vunpack.c.l.b16 %v2921
      %v3351 = vunpack.c.h.b16 %v2921
      %v3352 = vunpack.c.l.b16 %v2922
      %v3353 = vunpack.c.h.b16 %v2922
      %v3354 = vunpack.c.l.b16 %v2923
      %v3355 = vunpack.c.h.b16 %v2923
      %v3356 = vunpack.c.l.b16 %v2924
      %v3357 = vunpack.c.h.b16 %v2924
      %v3358 = vunpack.c.l.b16 %v2925
      %v3359 = vunpack.c.h.b16 %v2925
      %v3360 = vunpack.c.l.b16 %v2926
      %v3361 = vunpack.c.h.b16 %v2926
      %v3362 = vunpack.c.l.b16 %v2927
      %v3363 = vunpack.c.h.b16 %v2927
      %v3364 = vunpack.c.l.b16 %v2928
      %v3365 = vunpack.c.h.b16 %v2928
      %v3366 = vunpack.c.l.b16 %v2929
      %v3367 = vunpack.c.h.b16 %v2929
      %v3368 = vunpack.c.l.b16 %v2930
      %v3369 = vunpack.c.h.b16 %v2930
      %v3370 = vunpack.c.l.b16 %v2931
      %v3371 = vunpack.c.h.b16 %v2931
      %v3372 = vunpack.c.l.b16 %v2932
      %v3373 = vunpack.c.h.b16 %v2932
      %v3374 = vunpack.c.l.b16 %v2933
      %v3375 = vunpack.c.h.b16 %v2933
      %v3376 = vunpack.c.l.b16 %v2934
      %v3377 = vunpack.c.h.b16 %v2934
      %v3378 = vunpack.c.l.b16 %v2935
      %v3379 = vunpack.c.h.b16 %v2935
      %v3380 = vpack.c.b16 %v3094, %v3092
      %v3381 = vpack.c.b16 %v3095, %v3093
      %v3382 = vpack.c.b16 %v3098, %v3096
      %v3383 = vpack.c.b16 %v3099, %v3097
      %v3384 = vpack.c.b16 %v3102, %v3100
      %v3385 = vpack.c.b16 %v3103, %v3101
      %v3386 = vpack.c.b16 %v3106, %v3104
      %v3387 = vpack.c.b16 %v3107, %v3105
      %v3388 = vpack.c.b16 %v3110, %v3108
      %v3389 = vpack.c.b16 %v3111, %v3109
      %v3390 = vpack.c.b16 %v3114, %v3112
      %v3391 = vpack.c.b16 %v3115, %v3113
      %v3392 = vpack.c.b16 %v3118, %v3116
      %v3393 = vpack.c.b16 %v3119, %v3117
      %v3394 = vpack.c.b16 %v3122, %v3120
      %v3395 = vpack.c.b16 %v3123, %v3121
      %v3396 = vpack.c.b16 %v3126, %v3124
      %v3397 = vpack.c.b16 %v3127, %v3125
      %v3398 = vpack.c.b16 %v3130, %v3128
      %v3399 = vpack.c.b16 %v3131, %v3129
      %v3400 = vpack.c.b16 %v3134, %v3132
      %v3401 = vpack.c.b16 %v3135, %v3133
      %v3402 = vpack.c.b16 %v3138, %v3136
      %v3403 = vpack.c.b16 %v3139, %v3137
      %v3404 = vpack.c.b16 %v3142, %v3140
      %v3405 = vpack.c.b16 %v3143, %v3141
      %v3406 = vpack.c.b16 %v3146, %v3144
      %v3407 = vpack.c.b16 %v3147, %v3145
      %v3408 = vpack.c.b16 %v3150, %v3148
      %v3409 = vpack.c.b16 %v3151, %v3149
      %v3410 = vpack.c.b16 %v3154, %v3152
      %v3411 = vpack.c.b16 %v3155, %v3153
      %v3412 = vpack.c.b16 %v3158, %v3156
      %v3413 = vpack.c.b16 %v3159, %v3157
      %v3414 = vpack.c.b16 %v3162, %v3160
      %v3415 = vpack.c.b16 %v3163, %v3161
      %v3416 = vpack.c.b16 %v3166, %v3164
      %v3417 = vpack.c.b16 %v3167, %v3165
      %v3418 = vpack.c.b16 %v3170, %v3168
      %v3419 = vpack.c.b16 %v3171, %v3169
      %v3420 = vpack.c.b16 %v3174, %v3172
      %v3421 = vpack.c.b16 %v3175, %v3173
      %v3422 = vpack.c.b16 %v3178, %v3176
      %v3423 = vpack.c.b16 %v3179, %v3177
      %v3424 = vpack.c.b16 %v3182, %v3180
      %v3425 = vpack.c.b16 %v3183, %v3181
      %v3426 = vpack.c.b16 %v3186, %v3184
      %v3427 = vpack.c.b16 %v3187, %v3185
      %v3428 = vpack.c.b16 %v3190, %v3188
      %v3429 = vpack.c.b16 %v3191, %v3189
      %v3430 = vpack.c.b16 %v3194, %v3192
      %v3431 = vpack.c.b16 %v3195, %v3193
      %v3432 = vpack.c.b16 %v3198, %v3196
      %v3433 = vpack.c.b16 %v3199, %v3197
      %v3434 = vpack.c.b16 %v3202, %v3200
      %v3435 = vpack.c.b16 %v3203, %v3201
      %v3436 = vpack.c.b16 %v3206, %v3204
      %v3437 = vpack.c.b16 %v3207, %v3205
      %v3438 = vpack.c.b16 %v3210, %v3208
      %v3439 = vpack.c.b16 %v3211, %v3209
      %v3440 = vpack.c.b16 %v3214, %v3212
      %v3441 = vpack.c.b16 %v3215, %v3213
      %v3442 = vpack.c.b16 %v3218, %v3216
      %v3443 = vpack.c.b16 %v3219, %v3217
      %v3444 = vpack.c.b16 %v3222, %v3220
      %v3445 = vpack.c.b16 %v3223, %v3221
      %v3446 = vpack.c.b16 %v3226, %v3224
      %v3447 = vpack.c.b16 %v3227, %v3225
      %v3448 = vpack.c.b16 %v3230, %v3228
      %v3449 = vpack.c.b16 %v3231, %v3229
      %v3450 = vpack.c.b16 %v3234, %v3232
      %v3451 = vpack.c.b16 %v3235, %v3233
      %v3452 = vpack.c.b16 %v3238, %v3236
      %v3453 = vpack.c.b16 %v3239, %v3237
      %v3454 = vpack.c.b16 %v3242, %v3240
      %v3455 = vpack.c.b16 %v3243, %v3241
      %v3456 = vpack.c.b16 %v3246, %v3244
      %v3457 = vpack.c.b16 %v3247, %v3245
      %v3458 = vpack.c.b16 %v3250, %v3248
      %v3459 = vpack.c.b16 %v3251, %v3249
      %v3460 = vpack.c.b16 %v3254, %v3252
      %v3461 = vpack.c.b16 %v3255, %v3253
      %v3462 = vpack.c.b16 %v3258, %v3256
      %v3463 = vpack.c.b16 %v3259, %v3257
      %v3464 = vpack.c.b16 %v3262, %v3260
      %v3465 = vpack.c.b16 %v3263, %v3261
      %v3466 = vpack.c.b16 %v3266, %v3264
      %v3467 = vpack.c.b16 %v3267, %v3265
      %v3468 = vpack.c.b16 %v3270, %v3268
      %v3469 = vpack.c.b16 %v3271, %v3269
      %v3470 = vpack.c.b16 %v3274, %v3272
      %v3471 = vpack.c.b16 %v3275, %v3273
      %v3472 = vpack.c.b16 %v3278, %v3276
      %v3473 = vpack.c.b16 %v3279, %v3277
      %v3474 = vpack.c.b16 %v3282, %v3280
      %v3475 = vpack.c.b16 %v3283, %v3281
      %v3476 = vpack.c.b16 %v3286, %v3284
      %v3477 = vpack.c.b16 %v3287, %v3285
      %v3478 = vpack.c.b16 %v3290, %v3288
      %v3479 = vpack.c.b16 %v3291, %v3289
      %v3480 = vpack.c.b16 %v3294, %v3292
      %v3481 = vpack.c.b16 %v3295, %v3293
      %v3482 = vpack.c.b16 %v3298, %v3296
      %v3483 = vpack.c.b16 %v3299, %v3297
      %v3484 = vpack.c.b16 %v3302, %v3300
      %v3485 = vpack.c.b16 %v3303, %v3301
      %v3486 = vpack.c.b16 %v3306, %v3304
      %v3487 = vpack.c.b16 %v3307, %v3305
      %v3488 = vpack.c.b16 %v3310, %v3308
      %v3489 = vpack.c.b16 %v3311, %v3309
      %v3490 = vpack.c.b16 %v3314, %v3312
      %v3491 = vpack.c.b16 %v3315, %v3313
      %v3492 = vpack.c.b16 %v3318, %v3316
      %v3493 = vpack.c.b16 %v3319, %v3317
      %v3494 = vpack.c.b16 %v3322, %v3320
      %v3495 = vpack.c.b16 %v3323, %v3321
      %v3496 = vpack.c.b16 %v3326, %v3324
      %v3497 = vpack.c.b16 %v3327, %v3325
      %v3498 = vpack.c.b16 %v3330, %v3328
      %v3499 = vpack.c.b16 %v3331, %v3329
      %v3500 = vpack.c.b16 %v3334, %v3332
      %v3501 = vpack.c.b16 %v3335, %v3333
      %v3502 = vpack.c.b16 %v3338, %v3336
      %v3503 = vpack.c.b16 %v3339, %v3337
      %v3504 = vpack.c.b16 %v3342, %v3340
      %v3505 = vpack.c.b16 %v3343, %v3341
      %v3506 = vpack.c.b16 %v3346, %v3344
      %v3507 = vpack.c.b16 %v3347, %v3345
      %v3508 = vpack.c.b16 %v3350, %v3348
      %v3509 = vpack.c.b16 %v3351, %v3349
      %v3510 = vpack.c.b16 %v3354, %v3352
      %v3511 = vpack.c.b16 %v3355, %v3353
      %v3512 = vpack.c.b16 %v3358, %v3356
      %v3513 = vpack.c.b16 %v3359, %v3357
      %v3514 = vpack.c.b16 %v3362, %v3360
      %v3515 = vpack.c.b16 %v3363, %v3361
      %v3516 = vpack.c.b16 %v3366, %v3364
      %v3517 = vpack.c.b16 %v3367, %v3365
      %v3518 = vpack.c.b16 %v3370, %v3368
      %v3519 = vpack.c.b16 %v3371, %v3369
      %v3520 = vpack.c.b16 %v3374, %v3372
      %v3521 = vpack.c.b16 %v3375, %v3373
      %v3522 = vpack.c.b16 %v3378, %v3376
      %v3523 = vpack.c.b16 %v3379, %v3377
      %3668 = vmatprep.subr.bf16.mxu0 %v3381
      %3669 = vmatpush1.bf16.msra.mxu0 %v3380
      %3670 = vmatprep.subr.bf16.mxu0 %v3383
      %3671 = vmatpush1.bf16.msra.mxu0 %v3382
      %3672 = vmatprep.subr.bf16.mxu0 %v3385
      %3673 = vmatpush1.bf16.msra.mxu0 %v3384
      %3674 = vmatprep.subr.bf16.mxu0 %v3387
      %3675 = vmatpush1.bf16.msra.mxu0 %v3386
      %3676 = vmatprep.subr.bf16.mxu0 %v3389
      %3677 = vmatpush1.bf16.msra.mxu0 %v3388
      %3678 = vmatprep.subr.bf16.mxu0 %v3391
      %3679 = vmatpush1.bf16.msra.mxu0 %v3390
      %3680 = vmatprep.subr.bf16.mxu0 %v3393
      %3681 = vmatpush1.bf16.msra.mxu0 %v3392
      %3682 = vmatprep.subr.bf16.mxu0 %v3395
      %3683 = vmatpush1.bf16.msra.mxu0 %v3394
      %3684 = vmatprep.subr.bf16.mxu0 %v3397
      %3685 = vmatpush1.bf16.msra.mxu0 %v3396
      %3686 = vmatprep.subr.bf16.mxu0 %v3399
      %3687 = vmatpush1.bf16.msra.mxu0 %v3398
      %3688 = vmatprep.subr.bf16.mxu0 %v3401
      %3689 = vmatpush1.bf16.msra.mxu0 %v3400
      %3690 = vmatprep.subr.bf16.mxu0 %v3403
      %3691 = vmatpush1.bf16.msra.mxu0 %v3402
      %3692 = vmatprep.subr.bf16.mxu0 %v3405
      %3693 = vmatpush1.bf16.msra.mxu0 %v3404
      %3694 = vmatprep.subr.bf16.mxu0 %v3407
      %3695 = vmatpush1.bf16.msra.mxu0 %v3406
      %3696 = vmatprep.subr.bf16.mxu0 %v3409
      %3697 = vmatpush1.bf16.msra.mxu0 %v3408
      %3698 = vmatprep.subr.bf16.mxu0 %v3411
      %3699 = vmatpush1.bf16.msra.mxu0 %v3410
      %3700 = vmatprep.mubr.bf16.mxu0 %v2757
      %3701 = vmatmul.mubr.bf16.gmra.mrb[0].mxu0 %v2756
      %v3702 = vpop.f32.mrb[0].mxu0
      %v3703 = vadd.f32 %v2941, %v3702
      %v3704 = vpop.f32.mrb[0].mxu0
      %v3705 = vadd.f32 %v2945, %v3704
      %v3706 = vpop.f32.mrb[0].mxu0
      %v3707 = vadd.f32 %v2941, %v3706
      %v3708 = vpop.f32.mrb[0].mxu0
      %v3709 = vadd.f32 %v2945, %v3708
      %3710 = vmatprep.mubr.bf16.mxu0 %v2766
      %3711 = vmatmul.mubr.bf16.gmra.mrb[0].mxu0 %v2765
      %v3712 = vpop.f32.mrb[0].mxu0
      %v3713 = vadd.f32 %v2941, %v3712
      %v3714 = vpop.f32.mrb[0].mxu0
      %v3715 = vadd.f32 %v2945, %v3714
      %v3716 = vpop.f32.mrb[0].mxu0
      %v3717 = vadd.f32 %v2941, %v3716
      %v3718 = vpop.f32.mrb[0].mxu0
      %v3719 = vadd.f32 %v2945, %v3718
      %3720 = vmatprep.mubr.bf16.mxu0 %v2775
      %3721 = vmatmul.mubr.bf16.gmra.mrb[0].mxu0 %v2774
      %v3722 = vpop.f32.mrb[0].mxu0
      %v3723 = vadd.f32 %v2941, %v3722
      %v3724 = vpop.f32.mrb[0].mxu0
      %v3725 = vadd.f32 %v2945, %v3724
      %v3726 = vpop.f32.mrb[0].mxu0
      %v3727 = vadd.f32 %v2941, %v3726
      %v3728 = vpop.f32.mrb[0].mxu0
      %v3729 = vadd.f32 %v2945, %v3728
      %3730 = vmatprep.mubr.bf16.mxu0 %v2784
      %3731 = vmatmul.mubr.bf16.gmra.mrb[0].mxu0 %v2783
      %v3732 = vpop.f32.mrb[0].mxu0
      %v3733 = vadd.f32 %v2941, %v3732
      %v3734 = vpop.f32.mrb[0].mxu0
      %v3735 = vadd.f32 %v2945, %v3734
      %v3736 = vpop.f32.mrb[0].mxu0
      %v3737 = vadd.f32 %v2941, %v3736
      %v3738 = vpop.f32.mrb[0].mxu0
      %v3739 = vadd.f32 %v2945, %v3738
      %3740 = vdwg.mxu0
      %3741 = vmatprep.subr.bf16.mxu0 %v3413
      %3742 = vmatpush1.bf16.msra.mxu0 %v3412
      %3743 = vmatprep.subr.bf16.mxu0 %v3415
      %3744 = vmatpush1.bf16.msra.mxu0 %v3414
      %3745 = vmatprep.subr.bf16.mxu0 %v3417
      %3746 = vmatpush1.bf16.msra.mxu0 %v3416
      %3747 = vmatprep.subr.bf16.mxu0 %v3419
      %3748 = vmatpush1.bf16.msra.mxu0 %v3418
      %3749 = vmatprep.subr.bf16.mxu0 %v3421
      %3750 = vmatpush1.bf16.msra.mxu0 %v3420
      %3751 = vmatprep.subr.bf16.mxu0 %v3423
      %3752 = vmatpush1.bf16.msra.mxu0 %v3422
      %3753 = vmatprep.subr.bf16.mxu0 %v3425
      %3754 = vmatpush1.bf16.msra.mxu0 %v3424
      %3755 = vmatprep.subr.bf16.mxu0 %v3427
      %3756 = vmatpush1.bf16.msra.mxu0 %v3426
      %3757 = vmatprep.subr.bf16.mxu0 %v3429
      %3758 = vmatpush1.bf16.msra.mxu0 %v3428
      %3759 = vmatprep.subr.bf16.mxu0 %v3431
      %3760 = vmatpush1.bf16.msra.mxu0 %v3430
      %3761 = vmatprep.subr.bf16.mxu0 %v3433
      %3762 = vmatpush1.bf16.msra.mxu0 %v3432
      %3763 = vmatprep.subr.bf16.mxu0 %v3435
      %3764 = vmatpush1.bf16.msra.mxu0 %v3434
      %3765 = vmatprep.subr.bf16.mxu0 %v3437
      %3766 = vmatpush1.bf16.msra.mxu0 %v3436
      %3767 = vmatprep.subr.bf16.mxu0 %v3439
      %3768 = vmatpush1.bf16.msra.mxu0 %v3438
      %3769 = vmatprep.subr.bf16.mxu0 %v3441
      %3770 = vmatpush1.bf16.msra.mxu0 %v3440
      %3771 = vmatprep.subr.bf16.mxu0 %v3443
      %3772 = vmatpush1.bf16.msra.mxu0 %v3442
      %3773 = vmatprep.mubr.bf16.mxu0 %v2759
      %3774 = vmatmul.mubr.bf16.gmra.mrb[0].mxu0 %v2758
      %v3775 = vpop.f32.mrb[0].mxu0
      %v3776 = vadd.f32 %v3703, %v3775
      %v3777 = vpop.f32.mrb[0].mxu0
      %v3778 = vadd.f32 %v3705, %v3777
      %v3779 = vpop.f32.mrb[0].mxu0
      %v3780 = vadd.f32 %v3707, %v3779
      %v3781 = vpop.f32.mrb[0].mxu0
      %v3782 = vadd.f32 %v3709, %v3781
      %3783 = vmatprep.mubr.bf16.mxu0 %v2768
      %3784 = vmatmul.mubr.bf16.gmra.mrb[0].mxu0 %v2767
      %v3785 = vpop.f32.mrb[0].mxu0
      %v3786 = vadd.f32 %v3713, %v3785
      %v3787 = vpop.f32.mrb[0].mxu0
      %v3788 = vadd.f32 %v3715, %v3787
      %v3789 = vpop.f32.mrb[0].mxu0
      %v3790 = vadd.f32 %v3717, %v3789
      %v3791 = vpop.f32.mrb[0].mxu0
      %v3792 = vadd.f32 %v3719, %v3791
      %3793 = vmatprep.mubr.bf16.mxu0 %v2777
      %3794 = vmatmul.mubr.bf16.gmra.mrb[0].mxu0 %v2776
      %v3795 = vpop.f32.mrb[0].mxu0
      %v3796 = vadd.f32 %v3723, %v3795
      %v3797 = vpop.f32.mrb[0].mxu0
      %v3798 = vadd.f32 %v3725, %v3797
      %v3799 = vpop.f32.mrb[0].mxu0
      %v3800 = vadd.f32 %v3727, %v3799
      %v3801 = vpop.f32.mrb[0].mxu0
      %v3802 = vadd.f32 %v3729, %v3801
      %3803 = vmatprep.mubr.bf16.mxu0 %v2786
      %3804 = vmatmul.mubr.bf16.gmra.mrb[0].mxu0 %v2785
      %v3805 = vpop.f32.mrb[0].mxu0
      %v3806 = vadd.f32 %v3733, %v3805
      %v3807 = vpop.f32.mrb[0].mxu0
      %v3808 = vadd.f32 %v3735, %v3807
      %v3809 = vpop.f32.mrb[0].mxu0
      %v3810 = vadd.f32 %v3737, %v3809
      %v3811 = vpop.f32.mrb[0].mxu0
      %v3812 = vadd.f32 %v3739, %v3811
      %3813 = vdwg.mxu0
      %3814 = vmatprep.subr.bf16.mxu0 %v3445
      %3815 = vmatpush1.bf16.msra.mxu0 %v3444
      %3816 = vmatprep.subr.bf16.mxu0 %v3447
      %3817 = vmatpush1.bf16.msra.mxu0 %v3446
      %3818 = vmatprep.subr.bf16.mxu0 %v3449
      %3819 = vmatpush1.bf16.msra.mxu0 %v3448
      %3820 = vmatprep.subr.bf16.mxu0 %v3451
      %3821 = vmatpush1.bf16.msra.mxu0 %v3450
      %3822 = vmatprep.subr.bf16.mxu0 %v3453
      %3823 = vmatpush1.bf16.msra.mxu0 %v3452
      %3824 = vmatprep.subr.bf16.mxu0 %v3455
      %3825 = vmatpush1.bf16.msra.mxu0 %v3454
      %3826 = vmatprep.subr.bf16.mxu0 %v3457
      %3827 = vmatpush1.bf16.msra.mxu0 %v3456
      %3828 = vmatprep.subr.bf16.mxu0 %v3459
      %3829 = vmatpush1.bf16.msra.mxu0 %v3458
      %3830 = vmatprep.subr.bf16.mxu0 %v3461
      %3831 = vmatpush1.bf16.msra.mxu0 %v3460
      %3832 = vmatprep.subr.bf16.mxu0 %v3463
      %3833 = vmatpush1.bf16.msra.mxu0 %v3462
      %3834 = vmatprep.subr.bf16.mxu0 %v3465
      %3835 = vmatpush1.bf16.msra.mxu0 %v3464
      %3836 = vmatprep.subr.bf16.mxu0 %v3467
      %3837 = vmatpush1.bf16.msra.mxu0 %v3466
      %3838 = vmatprep.subr.bf16.mxu0 %v3469
      %3839 = vmatpush1.bf16.msra.mxu0 %v3468
      %3840 = vmatprep.subr.bf16.mxu0 %v3471
      %3841 = vmatpush1.bf16.msra.mxu0 %v3470
      %3842 = vmatprep.subr.bf16.mxu0 %v3473
      %3843 = vmatpush1.bf16.msra.mxu0 %v3472
      %3844 = vmatprep.subr.bf16.mxu0 %v3475
      %3845 = vmatpush1.bf16.msra.mxu0 %v3474
      %3846 = vmatprep.mubr.bf16.mxu0 %v2761
      %3847 = vmatmul.mubr.bf16.gmra.mrb[0].mxu0 %v2760
      %v3848 = vpop.f32.mrb[0].mxu0
      %v3849 = vadd.f32 %v3776, %v3848
      %v3850 = vpop.f32.mrb[0].mxu0
      %v3851 = vadd.f32 %v3778, %v3850
      %v3852 = vpop.f32.mrb[0].mxu0
      %v3853 = vadd.f32 %v3780, %v3852
      %v3854 = vpop.f32.mrb[0].mxu0
      %v3855 = vadd.f32 %v3782, %v3854
      %3856 = vmatprep.mubr.bf16.mxu0 %v2770
      %3857 = vmatmul.mubr.bf16.gmra.mrb[0].mxu0 %v2769
      %v3858 = vpop.f32.mrb[0].mxu0
      %v3859 = vadd.f32 %v3786, %v3858
      %v3860 = vpop.f32.mrb[0].mxu0
      %v3861 = vadd.f32 %v3788, %v3860
      %v3862 = vpop.f32.mrb[0].mxu0
      %v3863 = vadd.f32 %v3790, %v3862
      %v3864 = vpop.f32.mrb[0].mxu0
      %v3865 = vadd.f32 %v3792, %v3864
      %3866 = vmatprep.mubr.bf16.mxu0 %v2779
      %3867 = vmatmul.mubr.bf16.gmra.mrb[0].mxu0 %v2778
      %v3868 = vpop.f32.mrb[0].mxu0
      %v3869 = vadd.f32 %v3796, %v3868
      %v3870 = vpop.f32.mrb[0].mxu0
      %v3871 = vadd.f32 %v3798, %v3870
      %v3872 = vpop.f32.mrb[0].mxu0
      %v3873 = vadd.f32 %v3800, %v3872
      %v3874 = vpop.f32.mrb[0].mxu0
      %v3875 = vadd.f32 %v3802, %v3874
      %3876 = vmatprep.mubr.bf16.mxu0 %v2788
      %3877 = vmatmul.mubr.bf16.gmra.mrb[0].mxu0 %v2787
      %v3878 = vpop.f32.mrb[0].mxu0
      %v3879 = vadd.f32 %v3806, %v3878
      %v3880 = vpop.f32.mrb[0].mxu0
      %v3881 = vadd.f32 %v3808, %v3880
      %v3882 = vpop.f32.mrb[0].mxu0
      %v3883 = vadd.f32 %v3810, %v3882
      %v3884 = vpop.f32.mrb[0].mxu0
      %v3885 = vadd.f32 %v3812, %v3884
      %3886 = vdwg.mxu0
      %3887 = vmatprep.subr.bf16.mxu0 %v3477
      %3888 = vmatpush1.bf16.msra.mxu0 %v3476
      %3889 = vmatprep.subr.bf16.mxu0 %v3479
      %3890 = vmatpush1.bf16.msra.mxu0 %v3478
      %3891 = vmatprep.subr.bf16.mxu0 %v3481
      %3892 = vmatpush1.bf16.msra.mxu0 %v3480
      %3893 = vmatprep.subr.bf16.mxu0 %v3483
      %3894 = vmatpush1.bf16.msra.mxu0 %v3482
      %3895 = vmatprep.subr.bf16.mxu0 %v3485
      %3896 = vmatpush1.bf16.msra.mxu0 %v3484
      %3897 = vmatprep.subr.bf16.mxu0 %v3487
      %3898 = vmatpush1.bf16.msra.mxu0 %v3486
      %3899 = vmatprep.subr.bf16.mxu0 %v3489
      %3900 = vmatpush1.bf16.msra.mxu0 %v3488
      %3901 = vmatprep.subr.bf16.mxu0 %v3491
      %3902 = vmatpush1.bf16.msra.mxu0 %v3490
      %3903 = vmatprep.subr.bf16.mxu0 %v3493
      %3904 = vmatpush1.bf16.msra.mxu0 %v3492
      %3905 = vmatprep.subr.bf16.mxu0 %v3495
      %3906 = vmatpush1.bf16.msra.mxu0 %v3494
      %3907 = vmatprep.subr.bf16.mxu0 %v3497
      %3908 = vmatpush1.bf16.msra.mxu0 %v3496
      %3909 = vmatprep.subr.bf16.mxu0 %v3499
      %3910 = vmatpush1.bf16.msra.mxu0 %v3498
      %3911 = vmatprep.subr.bf16.mxu0 %v3501
      %3912 = vmatpush1.bf16.msra.mxu0 %v3500
      %3913 = vmatprep.subr.bf16.mxu0 %v3503
      %3914 = vmatpush1.bf16.msra.mxu0 %v3502
      %3915 = vmatprep.subr.bf16.mxu0 %v3505
      %3916 = vmatpush1.bf16.msra.mxu0 %v3504
      %3917 = vmatprep.subr.bf16.mxu0 %v3507
      %3918 = vmatpush1.bf16.msra.mxu0 %v3506
      %3919 = vmatprep.mubr.bf16.mxu0 %v2763
      %3920 = vmatmul.mubr.bf16.gmra.mrb[0].mxu0 %v2762
      %v3921 = vpop.f32.mrb[0].mxu0
      %v3922 = vadd.f32 %v3849, %v3921
      %v3923 = vpop.f32.mrb[0].mxu0
      %v3924 = vadd.f32 %v3851, %v3923
      %v3925 = vpop.f32.mrb[0].mxu0
      %v3926 = vadd.f32 %v3853, %v3925
      %v3927 = vpop.f32.mrb[0].mxu0
      %v3928 = vadd.f32 %v3855, %v3927
      %3929 = vmatprep.mubr.bf16.mxu0 %v2772
      %3930 = vmatmul.mubr.bf16.gmra.mrb[0].mxu0 %v2771
      %v3931 = vpop.f32.mrb[0].mxu0
      %v3932 = vadd.f32 %v3859, %v3931
      %v3933 = vpop.f32.mrb[0].mxu0
      %v3934 = vadd.f32 %v3861, %v3933
      %v3935 = vpop.f32.mrb[0].mxu0
      %v3936 = vadd.f32 %v3863, %v3935
      %v3937 = vpop.f32.mrb[0].mxu0
      %v3938 = vadd.f32 %v3865, %v3937
      %3939 = vmatprep.mubr.bf16.mxu0 %v2781
      %3940 = vmatmul.mubr.bf16.gmra.mrb[0].mxu0 %v2780
      %v3941 = vpop.f32.mrb[0].mxu0
      %v3942 = vadd.f32 %v3869, %v3941
      %v3943 = vpop.f32.mrb[0].mxu0
      %v3944 = vadd.f32 %v3871, %v3943
      %v3945 = vpop.f32.mrb[0].mxu0
      %v3946 = vadd.f32 %v3873, %v3945
      %v3947 = vpop.f32.mrb[0].mxu0
      %v3948 = vadd.f32 %v3875, %v3947
      %3949 = vmatprep.mubr.bf16.mxu0 %v2790
      %3950 = vmatmul.mubr.bf16.gmra.mrb[0].mxu0 %v2789
      %v3951 = vpop.f32.mrb[0].mxu0
      %v3952 = vadd.f32 %v3879, %v3951
      %v3953 = vpop.f32.mrb[0].mxu0
      %v3954 = vadd.f32 %v3881, %v3953
      %v3955 = vpop.f32.mrb[0].mxu0
      %v3956 = vadd.f32 %v3883, %v3955
      %v3957 = vpop.f32.mrb[0].mxu0
      %v3958 = vadd.f32 %v3885, %v3957
      %3959 = vdwg.mxu0
      %3960 = vmatprep.subr.bf16.mxu0 %v3509
      %3961 = vmatpush1.bf16.msra.mxu0 %v3508
      %3962 = vmatprep.subr.bf16.mxu0 %v3511
      %3963 = vmatpush1.bf16.msra.mxu0 %v3510
      %3964 = vmatprep.subr.bf16.mxu0 %v3513
      %3965 = vmatpush1.bf16.msra.mxu0 %v3512
      %3966 = vmatprep.subr.bf16.mxu0 %v3515
      %3967 = vmatpush1.bf16.msra.mxu0 %v3514
      %3968 = vmatprep.subr.bf16.mxu0 %v3517
      %3969 = vmatpush1.bf16.msra.mxu0 %v3516
      %3970 = vmatprep.subr.bf16.mxu0 %v3519
      %3971 = vmatpush1.bf16.msra.mxu0 %v3518
      %3972 = vmatprep.subr.bf16.mxu0 %v3521
      %3973 = vmatpush1.bf16.msra.mxu0 %v3520
      %3974 = vmatprep.subr.bf16.mxu0 %v3523
      %3975 = vmatpush1.bf16.msra.mxu0 %v3522
      %3976 = vmatprep.subr.bf16.mxu0 0
      %3977 = vmatpush1.bf16.msra.mxu0 0
      %3978 = vmatprep.subr.bf16.mxu0 0
      %3979 = vmatpush1.bf16.msra.mxu0 0
      %3980 = vmatprep.subr.bf16.mxu0 0
      %3981 = vmatpush1.bf16.msra.mxu0 0
      %3982 = vmatprep.subr.bf16.mxu0 0
      %3983 = vmatpush1.bf16.msra.mxu0 0
      %3984 = vmatprep.subr.bf16.mxu0 0
      %3985 = vmatpush1.bf16.msra.mxu0 0
      %3986 = vmatprep.subr.bf16.mxu0 0
      %3987 = vmatpush1.bf16.msra.mxu0 0
      %3988 = vmatprep.subr.bf16.mxu0 0
      %3989 = vmatpush1.bf16.msra.mxu0 0
      %3990 = vmatprep.subr.bf16.mxu0 0
      %3991 = vmatpush1.bf16.msra.mxu0 0
      %3992 = vmatprep.mubr.bf16.mxu0 0
      %3993 = vmatmul.mubr.bf16.gmra.mrb[0].mxu0 %v2764
      %v3994 = vpop.f32.mrb[0].mxu0
      %v3995 = vadd.f32 %v3922, %v3994
      %v3996 = vpop.f32.mrb[0].mxu0
      %v3997 = vadd.f32 %v3924, %v3996
      %v3998 = vpop.f32.mrb[0].mxu0
      %v3999 = vadd.f32 %v3926, %v3998
      %v4000 = vpop.f32.mrb[0].mxu0
      %v4001 = vadd.f32 %v3928, %v4000
      %4002 = vmatprep.mubr.bf16.mxu0 0
      %4003 = vmatmul.mubr.bf16.gmra.mrb[0].mxu0 %v2773
      %v4004 = vpop.f32.mrb[0].mxu0
      %v4005 = vadd.f32 %v3932, %v4004
      %v4006 = vpop.f32.mrb[0].mxu0
      %v4007 = vadd.f32 %v3934, %v4006
      %v4008 = vpop.f32.mrb[0].mxu0
      %v4009 = vadd.f32 %v3936, %v4008
      %v4010 = vpop.f32.mrb[0].mxu0
      %v4011 = vadd.f32 %v3938, %v4010
      %4012 = vmatprep.mubr.bf16.mxu0 0
      %4013 = vmatmul.mubr.bf16.gmra.mrb[0].mxu0 %v2782
      %v4014 = vpop.f32.mrb[0].mxu0
      %v4015 = vadd.f32 %v3942, %v4014
      %v4016 = vpop.f32.mrb[0].mxu0
      %v4017 = vadd.f32 %v3944, %v4016
      %v4018 = vpop.f32.mrb[0].mxu0
      %v4019 = vadd.f32 %v3946, %v4018
      %v4020 = vpop.f32.mrb[0].mxu0
      %v4021 = vadd.f32 %v3948, %v4020
      %4022 = vmatprep.mubr.bf16.mxu0 0
      %4023 = vmatmul.mubr.bf16.gmra.mrb[0].mxu0 %v2791
      %v4024 = vpop.f32.mrb[0].mxu0
      %v4025 = vadd.f32 %v3952, %v4024
      %v4026 = vpop.f32.mrb[0].mxu0
      %v4027 = vadd.f32 %v3954, %v4026
      %v4028 = vpop.f32.mrb[0].mxu0
      %v4029 = vadd.f32 %v3956, %v4028
      %v4030 = vpop.f32.mrb[0].mxu0
      %v4031 = vadd.f32 %v3958, %v4030
      %4032 = vdwg.mxu0
      %v4033 = vmax.f32 %v3995, 0.0
      %v4034 = vmax.f32 %v3997, 0.0
      %v4035 = vmax.f32 %v3999, 0.0
      %v4036 = vmax.f32 %v4001, 0.0
      %v4037 = vmax.f32 %v4005, 0.0
      %v4038 = vmax.f32 %v4007, 0.0
      %v4039 = vmax.f32 %v4009, 0.0
      %v4040 = vmax.f32 %v4011, 0.0
      %v4041 = vmax.f32 %v4015, 0.0
      %v4042 = vmax.f32 %v4017, 0.0
      %v4043 = vmax.f32 %v4019, 0.0
      %v4044 = vmax.f32 %v4021, 0.0
      %v4045 = vmax.f32 %v4025, 0.0
      %v4046 = vmax.f32 %v4027, 0.0
      %v4047 = vmax.f32 %v4029, 0.0
      %v4048 = vmax.f32 %v4031, 0.0
      %s4049 = scalar_lea.vmem [#allocation5], 48
      %4050 = vst [vmem:[%s4049 + $0x10] sm:$0xff] %v4033
      %4051 = vst [vmem:[%s4049 + $0x18] sm:$0xff] %v4034
      %4052 = vst [vmem:[%s4049 + $0x40] sm:$0xff] %v4035
      %4053 = vst [vmem:[%s4049 + $0x48] sm:$0xff] %v4036
      %4054 = vst [vmem:[%s4049 + $0x70] sm:$0xff] %v4037
      %4055 = vst [vmem:[%s4049 + $0x78] sm:$0xff] %v4038
      %4056 = vst [vmem:[%s4049 + $0xa0] sm:$0xff] %v4039
      %4057 = vst [vmem:[%s4049 + $0xa8] sm:$0xff] %v4040
      %4058 = vst [vmem:[%s4049 + $0xd0] sm:$0xff] %v4041
      %4059 = vst [vmem:[%s4049 + $0xd8] sm:$0xff] %v4042
      %4060 = vst [vmem:[%s4049 + $0x100] sm:$0xff] %v4043
      %4061 = vst [vmem:[%s4049 + $0x108] sm:$0xff] %v4044
      %4062 = vst [vmem:[%s4049 + $0x130] sm:$0xff] %v4045
      %4063 = vst [vmem:[%s4049 + $0x138] sm:$0xff] %v4046
      %4064 = vst [vmem:[%s4049 + $0x160] sm:$0xff] %v4047
      %4065 = vst [vmem:[%s4049 + $0x168] sm:$0xff] %v4048
      %v4066 = vld [vmem:[#allocation5] sm:$0x80]
      %v4067 = vld [vmem:[#allocation5 + $0x8] sm:$0x80]
      %v4068 = vld [vmem:[#allocation5 + $0x10] sm:$0x7f]
      %v4069 = vld [vmem:[#allocation5 + $0x18] sm:$0x7f]
      %v4070 = vld [vmem:[#allocation5 + $0x30] sm:$0x80]
      %v4071 = vld [vmem:[#allocation5 + $0x38] sm:$0x80]
      %v4072 = vld [vmem:[#allocation5 + $0x40] sm:$0x7f]
      %v4073 = vld [vmem:[#allocation5 + $0x48] sm:$0x7f]
      %v4074 = vld [vmem:[#allocation5 + $0x60] sm:$0x80]
      %v4075 = vld [vmem:[#allocation5 + $0x68] sm:$0x80]
      %v4076 = vld [vmem:[#allocation5 + $0x70] sm:$0x7f]
      %v4077 = vld [vmem:[#allocation5 + $0x78] sm:$0x7f]
      %v4078 = vld [vmem:[#allocation5 + $0x90] sm:$0x80]
      %v4079 = vld [vmem:[#allocation5 + $0x98] sm:$0x80]
      %v4080 = vld [vmem:[#allocation5 + $0xa0] sm:$0x7f]
      %v4081 = vld [vmem:[#allocation5 + $0xa8] sm:$0x7f]
      %v4082 = vld [vmem:[#allocation5 + $0xc0] sm:$0x80]
      %v4083 = vld [vmem:[#allocation5 + $0xc8] sm:$0x80]
      %v4084 = vld [vmem:[#allocation5 + $0xd0] sm:$0x7f]
      %v4085 = vld [vmem:[#allocation5 + $0xd8] sm:$0x7f]
      %v4086 = vld [vmem:[#allocation5 + $0xf0] sm:$0x80]
      %v4087 = vld [vmem:[#allocation5 + $0xf8] sm:$0x80]
      %v4088 = vld [vmem:[#allocation5 + $0x100] sm:$0x7f]
      %v4089 = vld [vmem:[#allocation5 + $0x108] sm:$0x7f]
      %v4090 = vld [vmem:[#allocation5 + $0x120] sm:$0x80]
      %v4091 = vld [vmem:[#allocation5 + $0x128] sm:$0x80]
      %v4092 = vld [vmem:[#allocation5 + $0x130] sm:$0x7f]
      %v4093 = vld [vmem:[#allocation5 + $0x138] sm:$0x7f]
      %v4094 = vld [vmem:[#allocation5 + $0x150] sm:$0x80]
      %v4095 = vld [vmem:[#allocation5 + $0x158] sm:$0x80]
      %v4096 = vld [vmem:[#allocation5 + $0x160] sm:$0x7f]
      %v4097 = vld [vmem:[#allocation5 + $0x168] sm:$0x7f]
      %vm4130 = vcmask 1040384
      %v4131 = vrot.slane %v4066, 7
      %v4132 = vrot.slane %v4068, 7
      %v4133 = vsel %vm4130, %v4131, %v4132
      %v4134 = vrot.slane %v4067, 7
      %v4135 = vrot.slane %v4069, 7
      %v4136 = vsel %vm4130, %v4134, %v4135
      %v4137 = vrot.slane %v4070, 7
      %v4138 = vrot.slane %v4072, 7
      %v4139 = vsel %vm4130, %v4137, %v4138
      %v4140 = vrot.slane %v4071, 7
      %v4141 = vrot.slane %v4073, 7
      %v4142 = vsel %vm4130, %v4140, %v4141
      %v4143 = vrot.slane %v4074, 7
      %v4144 = vrot.slane %v4076, 7
      %v4145 = vsel %vm4130, %v4143, %v4144
      %v4146 = vrot.slane %v4075, 7
      %v4147 = vrot.slane %v4077, 7
      %v4148 = vsel %vm4130, %v4146, %v4147
      %v4149 = vrot.slane %v4078, 7
      %v4150 = vrot.slane %v4080, 7
      %v4151 = vsel %vm4130, %v4149, %v4150
      %v4152 = vrot.slane %v4079, 7
      %v4153 = vrot.slane %v4081, 7
      %v4154 = vsel %vm4130, %v4152, %v4153
      %v4155 = vrot.slane %v4082, 7
      %v4156 = vrot.slane %v4084, 7
      %v4157 = vsel %vm4130, %v4155, %v4156
      %v4158 = vrot.slane %v4083, 7
      %v4159 = vrot.slane %v4085, 7
      %v4160 = vsel %vm4130, %v4158, %v4159
      %v4161 = vrot.slane %v4086, 7
      %v4162 = vrot.slane %v4088, 7
      %v4163 = vsel %vm4130, %v4161, %v4162
      %v4164 = vrot.slane %v4087, 7
      %v4165 = vrot.slane %v4089, 7
      %v4166 = vsel %vm4130, %v4164, %v4165
      %v4167 = vrot.slane %v4090, 7
      %v4168 = vrot.slane %v4092, 7
      %v4169 = vsel %vm4130, %v4167, %v4168
      %v4170 = vrot.slane %v4091, 7
      %v4171 = vrot.slane %v4093, 7
      %v4172 = vsel %vm4130, %v4170, %v4171
      %v4173 = vrot.slane %v4094, 7
      %v4174 = vrot.slane %v4096, 7
      %v4175 = vsel %vm4130, %v4173, %v4174
      %v4176 = vrot.slane %v4095, 7
      %v4177 = vrot.slane %v4097, 7
      %v4178 = vsel %vm4130, %v4176, %v4177
      %v4195 = vld [vmem:[#allocation5 + $0x10] sm:$0xff]
      %v4196 = vld [vmem:[#allocation5 + $0x18] sm:$0xff]
      %v4197 = vld [vmem:[#allocation5 + $0x40] sm:$0xff]
      %v4198 = vld [vmem:[#allocation5 + $0x48] sm:$0xff]
      %v4199 = vld [vmem:[#allocation5 + $0x70] sm:$0xff]
      %v4200 = vld [vmem:[#allocation5 + $0x78] sm:$0xff]
      %v4201 = vld [vmem:[#allocation5 + $0xa0] sm:$0xff]
      %v4202 = vld [vmem:[#allocation5 + $0xa8] sm:$0xff]
      %v4203 = vld [vmem:[#allocation5 + $0xd0] sm:$0xff]
      %v4204 = vld [vmem:[#allocation5 + $0xd8] sm:$0xff]
      %v4205 = vld [vmem:[#allocation5 + $0x100] sm:$0xff]
      %v4206 = vld [vmem:[#allocation5 + $0x108] sm:$0xff]
      %v4207 = vld [vmem:[#allocation5 + $0x130] sm:$0xff]
      %v4208 = vld [vmem:[#allocation5 + $0x138] sm:$0xff]
      %v4209 = vld [vmem:[#allocation5 + $0x160] sm:$0xff]
      %v4210 = vld [vmem:[#allocation5 + $0x168] sm:$0xff]
      %v4211 = vld [vmem:[#allocation5 + $0x10] sm:$0xfe]
      %v4212 = vld [vmem:[#allocation5 + $0x18] sm:$0xfe]
      %v4213 = vld [vmem:[#allocation5 + $0x20] sm:$0x1]
      %v4214 = vld [vmem:[#allocation5 + $0x28] sm:$0x1]
      %v4215 = vld [vmem:[#allocation5 + $0x40] sm:$0xfe]
      %v4216 = vld [vmem:[#allocation5 + $0x48] sm:$0xfe]
      %v4217 = vld [vmem:[#allocation5 + $0x50] sm:$0x1]
      %v4218 = vld [vmem:[#allocation5 + $0x58] sm:$0x1]
      %v4219 = vld [vmem:[#allocation5 + $0x70] sm:$0xfe]
      %v4220 = vld [vmem:[#allocation5 + $0x78] sm:$0xfe]
      %v4221 = vld [vmem:[#allocation5 + $0x80] sm:$0x1]
      %v4222 = vld [vmem:[#allocation5 + $0x88] sm:$0x1]
      %v4223 = vld [vmem:[#allocation5 + $0xa0] sm:$0xfe]
      %v4224 = vld [vmem:[#allocation5 + $0xa8] sm:$0xfe]
      %v4225 = vld [vmem:[#allocation5 + $0xb0] sm:$0x1]
      %v4226 = vld [vmem:[#allocation5 + $0xb8] sm:$0x1]
      %v4227 = vld [vmem:[#allocation5 + $0xd0] sm:$0xfe]
      %v4228 = vld [vmem:[#allocation5 + $0xd8] sm:$0xfe]
      %v4229 = vld [vmem:[#allocation5 + $0xe0] sm:$0x1]
      %v4230 = vld [vmem:[#allocation5 + $0xe8] sm:$0x1]
      %v4231 = vld [vmem:[#allocation5 + $0x100] sm:$0xfe]
      %v4232 = vld [vmem:[#allocation5 + $0x108] sm:$0xfe]
      %v4233 = vld [vmem:[#allocation5 + $0x110] sm:$0x1]
      %v4234 = vld [vmem:[#allocation5 + $0x118] sm:$0x1]
      %v4235 = vld [vmem:[#allocation5 + $0x130] sm:$0xfe]
      %v4236 = vld [vmem:[#allocation5 + $0x138] sm:$0xfe]
      %v4237 = vld [vmem:[#allocation5 + $0x140] sm:$0x1]
      %v4238 = vld [vmem:[#allocation5 + $0x148] sm:$0x1]
      %v4239 = vld [vmem:[#allocation5 + $0x160] sm:$0xfe]
      %v4240 = vld [vmem:[#allocation5 + $0x168] sm:$0xfe]
      %v4241 = vld [vmem:[#allocation5 + $0x170] sm:$0x1]
      %v4242 = vld [vmem:[#allocation5 + $0x178] sm:$0x1]
      %vm4275 = vcmask 1046528
      %v4276 = vrot.slane %v4211, 1
      %v4277 = vrot.slane %v4213, 1
      %v4278 = vsel %vm4275, %v4276, %v4277
      %v4279 = vrot.slane %v4212, 1
      %v4280 = vrot.slane %v4214, 1
      %v4281 = vsel %vm4275, %v4279, %v4280
      %v4282 = vrot.slane %v4215, 1
      %v4283 = vrot.slane %v4217, 1
      %v4284 = vsel %vm4275, %v4282, %v4283
      %v4285 = vrot.slane %v4216, 1
      %v4286 = vrot.slane %v4218, 1
      %v4287 = vsel %vm4275, %v4285, %v4286
      %v4288 = vrot.slane %v4219, 1
      %v4289 = vrot.slane %v4221, 1
      %v4290 = vsel %vm4275, %v4288, %v4289
      %v4291 = vrot.slane %v4220, 1
      %v4292 = vrot.slane %v4222, 1
      %v4293 = vsel %vm4275, %v4291, %v4292
      %v4294 = vrot.slane %v4223, 1
      %v4295 = vrot.slane %v4225, 1
      %v4296 = vsel %vm4275, %v4294, %v4295
      %v4297 = vrot.slane %v4224, 1
      %v4298 = vrot.slane %v4226, 1
      %v4299 = vsel %vm4275, %v4297, %v4298
      %v4300 = vrot.slane %v4227, 1
      %v4301 = vrot.slane %v4229, 1
      %v4302 = vsel %vm4275, %v4300, %v4301
      %v4303 = vrot.slane %v4228, 1
      %v4304 = vrot.slane %v4230, 1
      %v4305 = vsel %vm4275, %v4303, %v4304
      %v4306 = vrot.slane %v4231, 1
      %v4307 = vrot.slane %v4233, 1
      %v4308 = vsel %vm4275, %v4306, %v4307
      %v4309 = vrot.slane %v4232, 1
      %v4310 = vrot.slane %v4234, 1
      %v4311 = vsel %vm4275, %v4309, %v4310
      %v4312 = vrot.slane %v4235, 1
      %v4313 = vrot.slane %v4237, 1
      %v4314 = vsel %vm4275, %v4312, %v4313
      %v4315 = vrot.slane %v4236, 1
      %v4316 = vrot.slane %v4238, 1
      %v4317 = vsel %vm4275, %v4315, %v4316
      %v4318 = vrot.slane %v4239, 1
      %v4319 = vrot.slane %v4241, 1
      %v4320 = vsel %vm4275, %v4318, %v4319
      %v4321 = vrot.slane %v4240, 1
      %v4322 = vrot.slane %v4242, 1
      %v4323 = vsel %vm4275, %v4321, %v4322
      %v4340 = vld [vmem:[%s4049] sm:$0x80]
      %v4341 = vld [vmem:[%s4049 + $0x8] sm:$0x80]
      %v4342 = vld [vmem:[%s4049 + $0x10] sm:$0x7f]
      %v4343 = vld [vmem:[%s4049 + $0x18] sm:$0x7f]
      %v4344 = vld [vmem:[%s4049 + $0x30] sm:$0x80]
      %v4345 = vld [vmem:[%s4049 + $0x38] sm:$0x80]
      %v4346 = vld [vmem:[%s4049 + $0x40] sm:$0x7f]
      %v4347 = vld [vmem:[%s4049 + $0x48] sm:$0x7f]
      %v4348 = vld [vmem:[%s4049 + $0x60] sm:$0x80]
      %v4349 = vld [vmem:[%s4049 + $0x68] sm:$0x80]
      %v4350 = vld [vmem:[%s4049 + $0x70] sm:$0x7f]
      %v4351 = vld [vmem:[%s4049 + $0x78] sm:$0x7f]
      %v4352 = vld [vmem:[%s4049 + $0x90] sm:$0x80]
      %v4353 = vld [vmem:[%s4049 + $0x98] sm:$0x80]
      %v4354 = vld [vmem:[%s4049 + $0xa0] sm:$0x7f]
      %v4355 = vld [vmem:[%s4049 + $0xa8] sm:$0x7f]
      %v4356 = vld [vmem:[%s4049 + $0xc0] sm:$0x80]
      %v4357 = vld [vmem:[%s4049 + $0xc8] sm:$0x80]
      %v4358 = vld [vmem:[%s4049 + $0xd0] sm:$0x7f]
      %v4359 = vld [vmem:[%s4049 + $0xd8] sm:$0x7f]
      %v4360 = vld [vmem:[%s4049 + $0xf0] sm:$0x80]
      %v4361 = vld [vmem:[%s4049 + $0xf8] sm:$0x80]
      %v4362 = vld [vmem:[%s4049 + $0x100] sm:$0x7f]
      %v4363 = vld [vmem:[%s4049 + $0x108] sm:$0x7f]
      %v4364 = vld [vmem:[%s4049 + $0x120] sm:$0x80]
      %v4365 = vld [vmem:[%s4049 + $0x128] sm:$0x80]
      %v4366 = vld [vmem:[%s4049 + $0x130] sm:$0x7f]
      %v4367 = vld [vmem:[%s4049 + $0x138] sm:$0x7f]
      %v4368 = vld [vmem:[%s4049 + $0x150] sm:$0x80]
      %v4369 = vld [vmem:[%s4049 + $0x158] sm:$0x80]
      %v4370 = vld [vmem:[%s4049 + $0x160] sm:$0x7f]
      %v4371 = vld [vmem:[%s4049 + $0x168] sm:$0x7f]
      %v4404 = vrot.slane %v4340, 7
      %v4405 = vrot.slane %v4342, 7
      %v4406 = vsel %vm4130, %v4404, %v4405
      %v4407 = vrot.slane %v4341, 7
      %v4408 = vrot.slane %v4343, 7
      %v4409 = vsel %vm4130, %v4407, %v4408
      %v4410 = vrot.slane %v4344, 7
      %v4411 = vrot.slane %v4346, 7
      %v4412 = vsel %vm4130, %v4410, %v4411
      %v4413 = vrot.slane %v4345, 7
      %v4414 = vrot.slane %v4347, 7
      %v4415 = vsel %vm4130, %v4413, %v4414
      %v4416 = vrot.slane %v4348, 7
      %v4417 = vrot.slane %v4350, 7
      %v4418 = vsel %vm4130, %v4416, %v4417
      %v4419 = vrot.slane %v4349, 7
      %v4420 = vrot.slane %v4351, 7
      %v4421 = vsel %vm4130, %v4419, %v4420
      %v4422 = vrot.slane %v4352, 7
      %v4423 = vrot.slane %v4354, 7
      %v4424 = vsel %vm4130, %v4422, %v4423
      %v4425 = vrot.slane %v4353, 7
      %v4426 = vrot.slane %v4355, 7
      %v4427 = vsel %vm4130, %v4425, %v4426
      %v4428 = vrot.slane %v4356, 7
      %v4429 = vrot.slane %v4358, 7
      %v4430 = vsel %vm4130, %v4428, %v4429
      %v4431 = vrot.slane %v4357, 7
      %v4432 = vrot.slane %v4359, 7
      %v4433 = vsel %vm4130, %v4431, %v4432
      %v4434 = vrot.slane %v4360, 7
      %v4435 = vrot.slane %v4362, 7
      %v4436 = vsel %vm4130, %v4434, %v4435
      %v4437 = vrot.slane %v4361, 7
      %v4438 = vrot.slane %v4363, 7
      %v4439 = vsel %vm4130, %v4437, %v4438
      %v4440 = vrot.slane %v4364, 7
      %v4441 = vrot.slane %v4366, 7
      %v4442 = vsel %vm4130, %v4440, %v4441
      %v4443 = vrot.slane %v4365, 7
      %v4444 = vrot.slane %v4367, 7
      %v4445 = vsel %vm4130, %v4443, %v4444
      %v4446 = vrot.slane %v4368, 7
      %v4447 = vrot.slane %v4370, 7
      %v4448 = vsel %vm4130, %v4446, %v4447
      %v4449 = vrot.slane %v4369, 7
      %v4450 = vrot.slane %v4371, 7
      %v4451 = vsel %vm4130, %v4449, %v4450
      %v4468 = vld [vmem:[%s4049 + $0x10] sm:$0xff]
      %v4469 = vld [vmem:[%s4049 + $0x18] sm:$0xff]
      %v4470 = vld [vmem:[%s4049 + $0x40] sm:$0xff]
      %v4471 = vld [vmem:[%s4049 + $0x48] sm:$0xff]
      %v4472 = vld [vmem:[%s4049 + $0x70] sm:$0xff]
      %v4473 = vld [vmem:[%s4049 + $0x78] sm:$0xff]
      %v4474 = vld [vmem:[%s4049 + $0xa0] sm:$0xff]
      %v4475 = vld [vmem:[%s4049 + $0xa8] sm:$0xff]
      %v4476 = vld [vmem:[%s4049 + $0xd0] sm:$0xff]
      %v4477 = vld [vmem:[%s4049 + $0xd8] sm:$0xff]
      %v4478 = vld [vmem:[%s4049 + $0x100] sm:$0xff]
      %v4479 = vld [vmem:[%s4049 + $0x108] sm:$0xff]
      %v4480 = vld [vmem:[%s4049 + $0x130] sm:$0xff]
      %v4481 = vld [vmem:[%s4049 + $0x138] sm:$0xff]
      %v4482 = vld [vmem:[%s4049 + $0x160] sm:$0xff]
      %v4483 = vld [vmem:[%s4049 + $0x168] sm:$0xff]
      %v4484 = vld [vmem:[%s4049 + $0x10] sm:$0xfe]
      %v4485 = vld [vmem:[%s4049 + $0x18] sm:$0xfe]
      %v4486 = vld [vmem:[%s4049 + $0x20] sm:$0x1]
      %v4487 = vld [vmem:[%s4049 + $0x28] sm:$0x1]
      %v4488 = vld [vmem:[%s4049 + $0x40] sm:$0xfe]
      %v4489 = vld [vmem:[%s4049 + $0x48] sm:$0xfe]
      %v4490 = vld [vmem:[%s4049 + $0x50] sm:$0x1]
      %v4491 = vld [vmem:[%s4049 + $0x58] sm:$0x1]
      %v4492 = vld [vmem:[%s4049 + $0x70] sm:$0xfe]
      %v4493 = vld [vmem:[%s4049 + $0x78] sm:$0xfe]
      %v4494 = vld [vmem:[%s4049 + $0x80] sm:$0x1]
      %v4495 = vld [vmem:[%s4049 + $0x88] sm:$0x1]
      %v4496 = vld [vmem:[%s4049 + $0xa0] sm:$0xfe]
      %v4497 = vld [vmem:[%s4049 + $0xa8] sm:$0xfe]
      %v4498 = vld [vmem:[%s4049 + $0xb0] sm:$0x1]
      %v4499 = vld [vmem:[%s4049 + $0xb8] sm:$0x1]
      %v4500 = vld [vmem:[%s4049 + $0xd0] sm:$0xfe]
      %v4501 = vld [vmem:[%s4049 + $0xd8] sm:$0xfe]
      %v4502 = vld [vmem:[%s4049 + $0xe0] sm:$0x1]
      %v4503 = vld [vmem:[%s4049 + $0xe8] sm:$0x1]
      %v4504 = vld [vmem:[%s4049 + $0x100] sm:$0xfe]
      %v4505 = vld [vmem:[%s4049 + $0x108] sm:$0xfe]
      %v4506 = vld [vmem:[%s4049 + $0x110] sm:$0x1]
      %v4507 = vld [vmem:[%s4049 + $0x118] sm:$0x1]
      %v4508 = vld [vmem:[%s4049 + $0x130] sm:$0xfe]
      %v4509 = vld [vmem:[%s4049 + $0x138] sm:$0xfe]
      %v4510 = vld [vmem:[%s4049 + $0x140] sm:$0x1]
      %v4511 = vld [vmem:[%s4049 + $0x148] sm:$0x1]
      %v4512 = vld [vmem:[%s4049 + $0x160] sm:$0xfe]
      %v4513 = vld [vmem:[%s4049 + $0x168] sm:$0xfe]
      %v4514 = vld [vmem:[%s4049 + $0x170] sm:$0x1]
      %v4515 = vld [vmem:[%s4049 + $0x178] sm:$0x1]
      %v4548 = vrot.slane %v4484, 1
      %v4549 = vrot.slane %v4486, 1
      %v4550 = vsel %vm4275, %v4548, %v4549
      %v4551 = vrot.slane %v4485, 1
      %v4552 = vrot.slane %v4487, 1
      %v4553 = vsel %vm4275, %v4551, %v4552
      %v4554 = vrot.slane %v4488, 1
      %v4555 = vrot.slane %v4490, 1
      %v4556 = vsel %vm4275, %v4554, %v4555
      %v4557 = vrot.slane %v4489, 1
      %v4558 = vrot.slane %v4491, 1
      %v4559 = vsel %vm4275, %v4557, %v4558
      %v4560 = vrot.slane %v4492, 1
      %v4561 = vrot.slane %v4494, 1
      %v4562 = vsel %vm4275, %v4560, %v4561
      %v4563 = vrot.slane %v4493, 1
      %v4564 = vrot.slane %v4495, 1
      %v4565 = vsel %vm4275, %v4563, %v4564
      %v4566 = vrot.slane %v4496, 1
      %v4567 = vrot.slane %v4498, 1
      %v4568 = vsel %vm4275, %v4566, %v4567
      %v4569 = vrot.slane %v4497, 1
      %v4570 = vrot.slane %v4499, 1
      %v4571 = vsel %vm4275, %v4569, %v4570
      %v4572 = vrot.slane %v4500, 1
      %v4573 = vrot.slane %v4502, 1
      %v4574 = vsel %vm4275, %v4572, %v4573
      %v4575 = vrot.slane %v4501, 1
      %v4576 = vrot.slane %v4503, 1
      %v4577 = vsel %vm4275, %v4575, %v4576
      %v4578 = vrot.slane %v4504, 1
      %v4579 = vrot.slane %v4506, 1
      %v4580 = vsel %vm4275, %v4578, %v4579
      %v4581 = vrot.slane %v4505, 1
      %v4582 = vrot.slane %v4507, 1
      %v4583 = vsel %vm4275, %v4581, %v4582
      %v4584 = vrot.slane %v4508, 1
      %v4585 = vrot.slane %v4510, 1
      %v4586 = vsel %vm4275, %v4584, %v4585
      %v4587 = vrot.slane %v4509, 1
      %v4588 = vrot.slane %v4511, 1
      %v4589 = vsel %vm4275, %v4587, %v4588
      %v4590 = vrot.slane %v4512, 1
      %v4591 = vrot.slane %v4514, 1
      %v4592 = vsel %vm4275, %v4590, %v4591
      %v4593 = vrot.slane %v4513, 1
      %v4594 = vrot.slane %v4515, 1
      %v4595 = vsel %vm4275, %v4593, %v4594
      %s4612 = scalar_lea.vmem [#allocation5], 96
      %v4613 = vld [vmem:[%s4612] sm:$0x80]
      %v4614 = vld [vmem:[%s4612 + $0x8] sm:$0x80]
      %v4615 = vld [vmem:[%s4612 + $0x10] sm:$0x7f]
      %v4616 = vld [vmem:[%s4612 + $0x18] sm:$0x7f]
      %v4617 = vld [vmem:[%s4612 + $0x30] sm:$0x80]
      %v4618 = vld [vmem:[%s4612 + $0x38] sm:$0x80]
      %v4619 = vld [vmem:[%s4612 + $0x40] sm:$0x7f]
      %v4620 = vld [vmem:[%s4612 + $0x48] sm:$0x7f]
      %v4621 = vld [vmem:[%s4612 + $0x60] sm:$0x80]
      %v4622 = vld [vmem:[%s4612 + $0x68] sm:$0x80]
      %v4623 = vld [vmem:[%s4612 + $0x70] sm:$0x7f]
      %v4624 = vld [vmem:[%s4612 + $0x78] sm:$0x7f]
      %v4625 = vld [vmem:[%s4612 + $0x90] sm:$0x80]
      %v4626 = vld [vmem:[%s4612 + $0x98] sm:$0x80]
      %v4627 = vld [vmem:[%s4612 + $0xa0] sm:$0x7f]
      %v4628 = vld [vmem:[%s4612 + $0xa8] sm:$0x7f]
      %v4629 = vld [vmem:[%s4612 + $0xc0] sm:$0x80]
      %v4630 = vld [vmem:[%s4612 + $0xc8] sm:$0x80]
      %v4631 = vld [vmem:[%s4612 + $0xd0] sm:$0x7f]
      %v4632 = vld [vmem:[%s4612 + $0xd8] sm:$0x7f]
      %v4633 = vld [vmem:[%s4612 + $0xf0] sm:$0x80]
      %v4634 = vld [vmem:[%s4612 + $0xf8] sm:$0x80]
      %v4635 = vld [vmem:[%s4612 + $0x100] sm:$0x7f]
      %v4636 = vld [vmem:[%s4612 + $0x108] sm:$0x7f]
      %v4637 = vld [vmem:[%s4612 + $0x120] sm:$0x80]
      %v4638 = vld [vmem:[%s4612 + $0x128] sm:$0x80]
      %v4639 = vld [vmem:[%s4612 + $0x130] sm:$0x7f]
      %v4640 = vld [vmem:[%s4612 + $0x138] sm:$0x7f]
      %v4641 = vld [vmem:[%s4612 + $0x150] sm:$0x80]
      %v4642 = vld [vmem:[%s4612 + $0x158] sm:$0x80]
      %v4643 = vld [vmem:[%s4612 + $0x160] sm:$0x7f]
      %v4644 = vld [vmem:[%s4612 + $0x168] sm:$0x7f]
      %v4677 = vrot.slane %v4613, 7
      %v4678 = vrot.slane %v4615, 7
      %v4679 = vsel %vm4130, %v4677, %v4678
      %v4680 = vrot.slane %v4614, 7
      %v4681 = vrot.slane %v4616, 7
      %v4682 = vsel %vm4130, %v4680, %v4681
      %v4683 = vrot.slane %v4617, 7
      %v4684 = vrot.slane %v4619, 7
      %v4685 = vsel %vm4130, %v4683, %v4684
      %v4686 = vrot.slane %v4618, 7
      %v4687 = vrot.slane %v4620, 7
      %v4688 = vsel %vm4130, %v4686, %v4687
      %v4689 = vrot.slane %v4621, 7
      %v4690 = vrot.slane %v4623, 7
      %v4691 = vsel %vm4130, %v4689, %v4690
      %v4692 = vrot.slane %v4622, 7
      %v4693 = vrot.slane %v4624, 7
      %v4694 = vsel %vm4130, %v4692, %v4693
      %v4695 = vrot.slane %v4625, 7
      %v4696 = vrot.slane %v4627, 7
      %v4697 = vsel %vm4130, %v4695, %v4696
      %v4698 = vrot.slane %v4626, 7
      %v4699 = vrot.slane %v4628, 7
      %v4700 = vsel %vm4130, %v4698, %v4699
      %v4701 = vrot.slane %v4629, 7
      %v4702 = vrot.slane %v4631, 7
      %v4703 = vsel %vm4130, %v4701, %v4702
      %v4704 = vrot.slane %v4630, 7
      %v4705 = vrot.slane %v4632, 7
      %v4706 = vsel %vm4130, %v4704, %v4705
      %v4707 = vrot.slane %v4633, 7
      %v4708 = vrot.slane %v4635, 7
      %v4709 = vsel %vm4130, %v4707, %v4708
      %v4710 = vrot.slane %v4634, 7
      %v4711 = vrot.slane %v4636, 7
      %v4712 = vsel %vm4130, %v4710, %v4711
      %v4713 = vrot.slane %v4637, 7
      %v4714 = vrot.slane %v4639, 7
      %v4715 = vsel %vm4130, %v4713, %v4714
      %v4716 = vrot.slane %v4638, 7
      %v4717 = vrot.slane %v4640, 7
      %v4718 = vsel %vm4130, %v4716, %v4717
      %v4719 = vrot.slane %v4641, 7
      %v4720 = vrot.slane %v4643, 7
      %v4721 = vsel %vm4130, %v4719, %v4720
      %v4722 = vrot.slane %v4642, 7
      %v4723 = vrot.slane %v4644, 7
      %v4724 = vsel %vm4130, %v4722, %v4723
      %v4741 = vld [vmem:[%s4612 + $0x10] sm:$0xff]
      %v4742 = vld [vmem:[%s4612 + $0x18] sm:$0xff]
      %v4743 = vld [vmem:[%s4612 + $0x40] sm:$0xff]
      %v4744 = vld [vmem:[%s4612 + $0x48] sm:$0xff]
      %v4745 = vld [vmem:[%s4612 + $0x70] sm:$0xff]
      %v4746 = vld [vmem:[%s4612 + $0x78] sm:$0xff]
      %v4747 = vld [vmem:[%s4612 + $0xa0] sm:$0xff]
      %v4748 = vld [vmem:[%s4612 + $0xa8] sm:$0xff]
      %v4749 = vld [vmem:[%s4612 + $0xd0] sm:$0xff]
      %v4750 = vld [vmem:[%s4612 + $0xd8] sm:$0xff]
      %v4751 = vld [vmem:[%s4612 + $0x100] sm:$0xff]
      %v4752 = vld [vmem:[%s4612 + $0x108] sm:$0xff]
      %v4753 = vld [vmem:[%s4612 + $0x130] sm:$0xff]
      %v4754 = vld [vmem:[%s4612 + $0x138] sm:$0xff]
      %v4755 = vld [vmem:[%s4612 + $0x160] sm:$0xff]
      %v4756 = vld [vmem:[%s4612 + $0x168] sm:$0xff]
      %v4757 = vld [vmem:[%s4612 + $0x10] sm:$0xfe]
      %v4758 = vld [vmem:[%s4612 + $0x18] sm:$0xfe]
      %v4759 = vld [vmem:[%s4612 + $0x20] sm:$0x1]
      %v4760 = vld [vmem:[%s4612 + $0x28] sm:$0x1]
      %v4761 = vld [vmem:[%s4612 + $0x40] sm:$0xfe]
      %v4762 = vld [vmem:[%s4612 + $0x48] sm:$0xfe]
      %v4763 = vld [vmem:[%s4612 + $0x50] sm:$0x1]
      %v4764 = vld [vmem:[%s4612 + $0x58] sm:$0x1]
      %v4765 = vld [vmem:[%s4612 + $0x70] sm:$0xfe]
      %v4766 = vld [vmem:[%s4612 + $0x78] sm:$0xfe]
      %v4767 = vld [vmem:[%s4612 + $0x80] sm:$0x1]
      %v4768 = vld [vmem:[%s4612 + $0x88] sm:$0x1]
      %v4769 = vld [vmem:[%s4612 + $0xa0] sm:$0xfe]
      %v4770 = vld [vmem:[%s4612 + $0xa8] sm:$0xfe]
      %v4771 = vld [vmem:[%s4612 + $0xb0] sm:$0x1]
      %v4772 = vld [vmem:[%s4612 + $0xb8] sm:$0x1]
      %v4773 = vld [vmem:[%s4612 + $0xd0] sm:$0xfe]
      %v4774 = vld [vmem:[%s4612 + $0xd8] sm:$0xfe]
      %v4775 = vld [vmem:[%s4612 + $0xe0] sm:$0x1]
      %v4776 = vld [vmem:[%s4612 + $0xe8] sm:$0x1]
      %v4777 = vld [vmem:[%s4612 + $0x100] sm:$0xfe]
      %v4778 = vld [vmem:[%s4612 + $0x108] sm:$0xfe]
      %v4779 = vld [vmem:[%s4612 + $0x110] sm:$0x1]
      %v4780 = vld [vmem:[%s4612 + $0x118] sm:$0x1]
      %v4781 = vld [vmem:[%s4612 + $0x130] sm:$0xfe]
      %v4782 = vld [vmem:[%s4612 + $0x138] sm:$0xfe]
      %v4783 = vld [vmem:[%s4612 + $0x140] sm:$0x1]
      %v4784 = vld [vmem:[%s4612 + $0x148] sm:$0x1]
      %v4785 = vld [vmem:[%s4612 + $0x160] sm:$0xfe]
      %v4786 = vld [vmem:[%s4612 + $0x168] sm:$0xfe]
      %v4787 = vld [vmem:[%s4612 + $0x170] sm:$0x1]
      %v4788 = vld [vmem:[%s4612 + $0x178] sm:$0x1]
      %v4821 = vrot.slane %v4757, 1
      %v4822 = vrot.slane %v4759, 1
      %v4823 = vsel %vm4275, %v4821, %v4822
      %v4824 = vrot.slane %v4758, 1
      %v4825 = vrot.slane %v4760, 1
      %v4826 = vsel %vm4275, %v4824, %v4825
      %v4827 = vrot.slane %v4761, 1
      %v4828 = vrot.slane %v4763, 1
      %v4829 = vsel %vm4275, %v4827, %v4828
      %v4830 = vrot.slane %v4762, 1
      %v4831 = vrot.slane %v4764, 1
      %v4832 = vsel %vm4275, %v4830, %v4831
      %v4833 = vrot.slane %v4765, 1
      %v4834 = vrot.slane %v4767, 1
      %v4835 = vsel %vm4275, %v4833, %v4834
      %v4836 = vrot.slane %v4766, 1
      %v4837 = vrot.slane %v4768, 1
      %v4838 = vsel %vm4275, %v4836, %v4837
      %v4839 = vrot.slane %v4769, 1
      %v4840 = vrot.slane %v4771, 1
      %v4841 = vsel %vm4275, %v4839, %v4840
      %v4842 = vrot.slane %v4770, 1
      %v4843 = vrot.slane %v4772, 1
      %v4844 = vsel %vm4275, %v4842, %v4843
      %v4845 = vrot.slane %v4773, 1
      %v4846 = vrot.slane %v4775, 1
      %v4847 = vsel %vm4275, %v4845, %v4846
      %v4848 = vrot.slane %v4774, 1
      %v4849 = vrot.slane %v4776, 1
      %v4850 = vsel %vm4275, %v4848, %v4849
      %v4851 = vrot.slane %v4777, 1
      %v4852 = vrot.slane %v4779, 1
      %v4853 = vsel %vm4275, %v4851, %v4852
      %v4854 = vrot.slane %v4778, 1
      %v4855 = vrot.slane %v4780, 1
      %v4856 = vsel %vm4275, %v4854, %v4855
      %v4857 = vrot.slane %v4781, 1
      %v4858 = vrot.slane %v4783, 1
      %v4859 = vsel %vm4275, %v4857, %v4858
      %v4860 = vrot.slane %v4782, 1
      %v4861 = vrot.slane %v4784, 1
      %v4862 = vsel %vm4275, %v4860, %v4861
      %v4863 = vrot.slane %v4785, 1
      %v4864 = vrot.slane %v4787, 1
      %v4865 = vsel %vm4275, %v4863, %v4864
      %v4866 = vrot.slane %v4786, 1
      %v4867 = vrot.slane %v4788, 1
      %v4868 = vsel %vm4275, %v4866, %v4867
      %v4885 = vpack.c.bf16 %v4139, %v4133
      %v4886 = vpack.c.bf16 %v4142, %v4136
      %v4887 = vpack.c.bf16 %v4197, %v4195
      %v4888 = vpack.c.bf16 %v4198, %v4196
      %v4889 = vpack.c.bf16 %v4284, %v4278
      %v4890 = vpack.c.bf16 %v4287, %v4281
      %v4891 = vpack.c.bf16 %v4412, %v4406
      %v4892 = vpack.c.bf16 %v4415, %v4409
      %v4893 = vpack.c.bf16 %v4470, %v4468
      %v4894 = vpack.c.bf16 %v4471, %v4469
      %v4895 = vpack.c.bf16 %v4556, %v4550
      %v4896 = vpack.c.bf16 %v4559, %v4553
      %v4897 = vpack.c.bf16 %v4685, %v4679
      %v4898 = vpack.c.bf16 %v4688, %v4682
      %v4899 = vpack.c.bf16 %v4743, %v4741
      %v4900 = vpack.c.bf16 %v4744, %v4742
      %v4901 = vpack.c.bf16 %v4829, %v4823
      %v4902 = vpack.c.bf16 %v4832, %v4826
      %v4903 = vpack.c.bf16 %v4151, %v4145
      %v4904 = vpack.c.bf16 %v4154, %v4148
      %v4905 = vpack.c.bf16 %v4201, %v4199
      %v4906 = vpack.c.bf16 %v4202, %v4200
      %v4907 = vpack.c.bf16 %v4296, %v4290
      %v4908 = vpack.c.bf16 %v4299, %v4293
      %v4909 = vpack.c.bf16 %v4424, %v4418
      %v4910 = vpack.c.bf16 %v4427, %v4421
      %v4911 = vpack.c.bf16 %v4474, %v4472
      %v4912 = vpack.c.bf16 %v4475, %v4473
      %v4913 = vpack.c.bf16 %v4568, %v4562
      %v4914 = vpack.c.bf16 %v4571, %v4565
      %v4915 = vpack.c.bf16 %v4697, %v4691
      %v4916 = vpack.c.bf16 %v4700, %v4694
      %v4917 = vpack.c.bf16 %v4747, %v4745
      %v4918 = vpack.c.bf16 %v4748, %v4746
      %v4919 = vpack.c.bf16 %v4841, %v4835
      %v4920 = vpack.c.bf16 %v4844, %v4838
      %v4921 = vpack.c.bf16 %v4163, %v4157
      %v4922 = vpack.c.bf16 %v4166, %v4160
      %v4923 = vpack.c.bf16 %v4205, %v4203
      %v4924 = vpack.c.bf16 %v4206, %v4204
      %v4925 = vpack.c.bf16 %v4308, %v4302
      %v4926 = vpack.c.bf16 %v4311, %v4305
      %v4927 = vpack.c.bf16 %v4436, %v4430
      %v4928 = vpack.c.bf16 %v4439, %v4433
      %v4929 = vpack.c.bf16 %v4478, %v4476
      %v4930 = vpack.c.bf16 %v4479, %v4477
      %v4931 = vpack.c.bf16 %v4580, %v4574
      %v4932 = vpack.c.bf16 %v4583, %v4577
      %v4933 = vpack.c.bf16 %v4709, %v4703
      %v4934 = vpack.c.bf16 %v4712, %v4706
      %v4935 = vpack.c.bf16 %v4751, %v4749
      %v4936 = vpack.c.bf16 %v4752, %v4750
      %v4937 = vpack.c.bf16 %v4853, %v4847
      %v4938 = vpack.c.bf16 %v4856, %v4850
      %v4939 = vpack.c.bf16 %v4175, %v4169
      %v4940 = vpack.c.bf16 %v4178, %v4172
      %v4941 = vpack.c.bf16 %v4209, %v4207
      %v4942 = vpack.c.bf16 %v4210, %v4208
      %v4943 = vpack.c.bf16 %v4320, %v4314
      %v4944 = vpack.c.bf16 %v4323, %v4317
      %v4945 = vpack.c.bf16 %v4448, %v4442
      %v4946 = vpack.c.bf16 %v4451, %v4445
      %v4947 = vpack.c.bf16 %v4482, %v4480
      %v4948 = vpack.c.bf16 %v4483, %v4481
      %v4949 = vpack.c.bf16 %v4592, %v4586
      %v4950 = vpack.c.bf16 %v4595, %v4589
      %v4951 = vpack.c.bf16 %v4721, %v4715
      %v4952 = vpack.c.bf16 %v4724, %v4718
      %v4953 = vpack.c.bf16 %v4755, %v4753
      %v4954 = vpack.c.bf16 %v4756, %v4754
      %v4955 = vpack.c.bf16 %v4865, %v4859
      %v4956 = vpack.c.bf16 %v4868, %v4862
      %v4957 = vld [vmem:[%s7] sm:$0xff]
      %v4958 = vld [vmem:[%s7 + $0x8] sm:$0xff]
      %v4959 = vld [vmem:[%s7 + $0x10] sm:$0xff]
      %v4960 = vld [vmem:[%s7 + $0x18] sm:$0xff]
      %v4961 = vld [vmem:[%s7 + $0x20] sm:$0xff]
      %v4962 = vld [vmem:[%s7 + $0x28] sm:$0xff]
      %v4963 = vld [vmem:[%s7 + $0x30] sm:$0xff]
      %v4964 = vld [vmem:[%s7 + $0x38] sm:$0xff]
      %v4965 = vld [vmem:[%s7 + $0x40] sm:$0xff]
      %v4966 = vld [vmem:[%s7 + $0x48] sm:$0xff]
      %v4967 = vld [vmem:[%s7 + $0x50] sm:$0xff]
      %v4968 = vld [vmem:[%s7 + $0x58] sm:$0xff]
      %v4969 = vld [vmem:[%s7 + $0x60] sm:$0xff]
      %v4970 = vld [vmem:[%s7 + $0x68] sm:$0xff]
      %v4971 = vld [vmem:[%s7 + $0x70] sm:$0xff]
      %v4972 = vld [vmem:[%s7 + $0x78] sm:$0xff]
      %v4973 = vld [vmem:[%s7 + $0x80] sm:$0xff]
      %v4974 = vld [vmem:[%s7 + $0x88] sm:$0xff]
      %v4975 = vld [vmem:[%s7 + $0x90] sm:$0xff]
      %v4976 = vld [vmem:[%s7 + $0x98] sm:$0xff]
      %v4977 = vld [vmem:[%s7 + $0xa0] sm:$0xff]
      %v4978 = vld [vmem:[%s7 + $0xa8] sm:$0xff]
      %v4979 = vld [vmem:[%s7 + $0xb0] sm:$0xff]
      %v4980 = vld [vmem:[%s7 + $0xb8] sm:$0xff]
      %v4981 = vld [vmem:[%s7 + $0xc0] sm:$0xff]
      %v4982 = vld [vmem:[%s7 + $0xc8] sm:$0xff]
      %v4983 = vld [vmem:[%s7 + $0xd0] sm:$0xff]
      %v4984 = vld [vmem:[%s7 + $0xd8] sm:$0xff]
      %v4985 = vld [vmem:[%s7 + $0xe0] sm:$0xff]
      %v4986 = vld [vmem:[%s7 + $0xe8] sm:$0xff]
      %v4987 = vld [vmem:[%s7 + $0xf0] sm:$0xff]
      %v4988 = vld [vmem:[%s7 + $0xf8] sm:$0xff]
      %v4989 = vld [vmem:[%s7 + $0x100] sm:$0xff]
      %v4990 = vld [vmem:[%s7 + $0x108] sm:$0xff]
      %v4991 = vld [vmem:[%s7 + $0x110] sm:$0xff]
      %v4992 = vld [vmem:[%s7 + $0x118] sm:$0xff]
      %v4993 = vld [vmem:[%s7 + $0x120] sm:$0xff]
      %v4994 = vld [vmem:[%s7 + $0x128] sm:$0xff]
      %v4995 = vld [vmem:[%s7 + $0x130] sm:$0xff]
      %v4996 = vld [vmem:[%s7 + $0x138] sm:$0xff]
      %v4997 = vld [vmem:[%s7 + $0x140] sm:$0xff]
      %v4998 = vld [vmem:[%s7 + $0x148] sm:$0xff]
      %v4999 = vld [vmem:[%s7 + $0x150] sm:$0xff]
      %v5000 = vld [vmem:[%s7 + $0x158] sm:$0xff]
      %v5001 = vld [vmem:[%s7 + $0x160] sm:$0xff]
      %v5002 = vld [vmem:[%s7 + $0x168] sm:$0xff]
      %v5003 = vld [vmem:[%s7 + $0x170] sm:$0xff]
      %v5004 = vld [vmem:[%s7 + $0x178] sm:$0xff]
      %v5005 = vld [vmem:[%s7 + $0x180] sm:$0xff]
      %v5006 = vld [vmem:[%s7 + $0x188] sm:$0xff]
      %v5007 = vld [vmem:[%s7 + $0x190] sm:$0xff]
      %v5008 = vld [vmem:[%s7 + $0x198] sm:$0xff]
      %v5009 = vld [vmem:[%s7 + $0x1a0] sm:$0xff]
      %v5010 = vld [vmem:[%s7 + $0x1a8] sm:$0xff]
      %v5011 = vld [vmem:[%s7 + $0x1b0] sm:$0xff]
      %v5012 = vld [vmem:[%s7 + $0x1b8] sm:$0xff]
      %v5013 = vld [vmem:[%s7 + $0x1c0] sm:$0xff]
      %v5014 = vld [vmem:[%s7 + $0x1c8] sm:$0xff]
      %v5015 = vld [vmem:[%s7 + $0x1d0] sm:$0xff]
      %v5016 = vld [vmem:[%s7 + $0x1d8] sm:$0xff]
      %v5017 = vld [vmem:[%s7 + $0x1e0] sm:$0xff]
      %v5018 = vld [vmem:[%s7 + $0x1e8] sm:$0xff]
      %v5019 = vld [vmem:[%s7 + $0x1f0] sm:$0xff]
      %v5020 = vld [vmem:[%s7 + $0x1f8] sm:$0xff]
      %v5021 = vld [vmem:[%s7 + $0x200] sm:$0xff]
      %v5022 = vld [vmem:[%s7 + $0x208] sm:$0xff]
      %v5023 = vld [vmem:[%s7 + $0x210] sm:$0xff]
      %v5024 = vld [vmem:[%s7 + $0x218] sm:$0xff]
      %v5025 = vld [vmem:[%s7 + $0x220] sm:$0xff]
      %v5026 = vld [vmem:[%s7 + $0x228] sm:$0xff]
      %v5027 = vld [vmem:[%s7 + $0x230] sm:$0xff]
      %v5028 = vld [vmem:[%s7 + $0x238] sm:$0xff]
      %v5029 = vld [vmem:[%s7 + $0x240] sm:$0xff]
      %v5030 = vld [vmem:[%s7 + $0x248] sm:$0xff]
      %v5031 = vld [vmem:[%s7 + $0x250] sm:$0xff]
      %v5032 = vld [vmem:[%s7 + $0x258] sm:$0xff]
      %v5033 = vld [vmem:[%s7 + $0x260] sm:$0xff]
      %v5034 = vld [vmem:[%s7 + $0x268] sm:$0xff]
      %v5035 = vld [vmem:[%s7 + $0x270] sm:$0xff]
      %v5036 = vld [vmem:[%s7 + $0x278] sm:$0xff]
      %v5037 = vld [vmem:[%s7 + $0x280] sm:$0xff]
      %v5038 = vld [vmem:[%s7 + $0x288] sm:$0xff]
      %v5039 = vld [vmem:[%s7 + $0x290] sm:$0xff]
      %v5040 = vld [vmem:[%s7 + $0x298] sm:$0xff]
      %v5041 = vld [vmem:[%s7 + $0x2a0] sm:$0xff]
      %v5042 = vld [vmem:[%s7 + $0x2a8] sm:$0xff]
      %v5043 = vld [vmem:[%s7 + $0x2b0] sm:$0xff]
      %v5044 = vld [vmem:[%s7 + $0x2b8] sm:$0xff]
      %v5045 = vld [vmem:[%s7 + $0x2c0] sm:$0xff]
      %v5046 = vld [vmem:[%s7 + $0x2c8] sm:$0xff]
      %v5047 = vld [vmem:[%s7 + $0x2d0] sm:$0xff]
      %v5048 = vld [vmem:[%s7 + $0x2d8] sm:$0xff]
      %v5049 = vld [vmem:[%s7 + $0x2e0] sm:$0xff]
      %v5050 = vld [vmem:[%s7 + $0x2e8] sm:$0xff]
      %v5051 = vld [vmem:[%s7 + $0x2f0] sm:$0xff]
      %v5052 = vld [vmem:[%s7 + $0x2f8] sm:$0xff]
      %v5053 = vld [vmem:[%s7 + $0x300] sm:$0xff]
      %v5054 = vld [vmem:[%s7 + $0x308] sm:$0xff]
      %v5055 = vld [vmem:[%s7 + $0x310] sm:$0xff]
      %v5056 = vld [vmem:[%s7 + $0x318] sm:$0xff]
      %v5057 = vld [vmem:[%s7 + $0x320] sm:$0xff]
      %v5058 = vld [vmem:[%s7 + $0x328] sm:$0xff]
      %v5059 = vld [vmem:[%s7 + $0x330] sm:$0xff]
      %v5060 = vld [vmem:[%s7 + $0x338] sm:$0xff]
      %v5061 = vld [vmem:[%s7 + $0x340] sm:$0xff]
      %v5062 = vld [vmem:[%s7 + $0x348] sm:$0xff]
      %v5063 = vld [vmem:[%s7 + $0x350] sm:$0xff]
      %v5064 = vld [vmem:[%s7 + $0x358] sm:$0xff]
      %v5065 = vld [vmem:[%s7 + $0x360] sm:$0xff]
      %v5066 = vld [vmem:[%s7 + $0x368] sm:$0xff]
      %v5067 = vld [vmem:[%s7 + $0x370] sm:$0xff]
      %v5068 = vld [vmem:[%s7 + $0x378] sm:$0xff]
      %v5069 = vld [vmem:[%s7 + $0x380] sm:$0xff]
      %v5070 = vld [vmem:[%s7 + $0x388] sm:$0xff]
      %v5071 = vld [vmem:[%s7 + $0x390] sm:$0xff]
      %v5072 = vld [vmem:[%s7 + $0x398] sm:$0xff]
      %v5073 = vld [vmem:[%s7 + $0x3a0] sm:$0xff]
      %v5074 = vld [vmem:[%s7 + $0x3a8] sm:$0xff]
      %v5075 = vld [vmem:[%s7 + $0x3b0] sm:$0xff]
      %v5076 = vld [vmem:[%s7 + $0x3b8] sm:$0xff]
      %v5077 = vld [vmem:[%s7 + $0x3c0] sm:$0xff]
      %v5078 = vld [vmem:[%s7 + $0x3c8] sm:$0xff]
      %v5079 = vld [vmem:[%s7 + $0x3d0] sm:$0xff]
      %v5080 = vld [vmem:[%s7 + $0x3d8] sm:$0xff]
      %v5081 = vld [vmem:[%s7 + $0x3e0] sm:$0xff]
      %v5082 = vld [vmem:[%s7 + $0x3e8] sm:$0xff]
      %v5083 = vld [vmem:[%s7 + $0x3f0] sm:$0xff]
      %v5084 = vld [vmem:[%s7 + $0x3f8] sm:$0xff]
      %v5085 = vld [vmem:[%s7 + $0x400] sm:$0xff]
      %v5086 = vld [vmem:[%s7 + $0x408] sm:$0xff]
      %v5087 = vld [vmem:[%s7 + $0x410] sm:$0xff]
      %v5088 = vld [vmem:[%s7 + $0x418] sm:$0xff]
      %v5089 = vld [vmem:[%s7 + $0x420] sm:$0xff]
      %v5090 = vld [vmem:[%s7 + $0x428] sm:$0xff]
      %v5091 = vld [vmem:[%s7 + $0x430] sm:$0xff]
      %v5092 = vld [vmem:[%s7 + $0x438] sm:$0xff]
      %v5093 = vld [vmem:[%s7 + $0x440] sm:$0xff]
      %v5094 = vld [vmem:[%s7 + $0x448] sm:$0xff]
      %v5095 = vld [vmem:[%s7 + $0x450] sm:$0xff]
      %v5096 = vld [vmem:[%s7 + $0x458] sm:$0xff]
      %v5097 = vld [vmem:[%s7 + $0x460] sm:$0xff]
      %v5098 = vld [vmem:[%s7 + $0x468] sm:$0xff]
      %v5099 = vld [vmem:[%s7 + $0x470] sm:$0xff]
      %v5100 = vld [vmem:[%s7 + $0x478] sm:$0xff]
      %v5101 = vld [vmem:[%s7 + $0x480] sm:$0xff]
      %v5102 = vld [vmem:[%s7 + $0x488] sm:$0xff]
      %v5103 = vld [vmem:[%s7 + $0x490] sm:$0xff]
      %v5104 = vld [vmem:[%s7 + $0x498] sm:$0xff]
      %v5105 = vld [vmem:[%s7 + $0x4a0] sm:$0xff]
      %v5106 = vld [vmem:[%s7 + $0x4a8] sm:$0xff]
      %v5107 = vld [vmem:[%s7 + $0x4b0] sm:$0xff]
      %v5108 = vld [vmem:[%s7 + $0x4b8] sm:$0xff]
      %v5109 = vld [vmem:[%s7 + $0x4c0] sm:$0xff]
      %v5110 = vld [vmem:[%s7 + $0x4c8] sm:$0xff]
      %v5111 = vld [vmem:[%s7 + $0x4d0] sm:$0xff]
      %v5112 = vld [vmem:[%s7 + $0x4d8] sm:$0xff]
      %v5113 = vld [vmem:[%s7 + $0x4e0] sm:$0xff]
      %v5114 = vld [vmem:[%s7 + $0x4e8] sm:$0xff]
      %v5115 = vld [vmem:[%s7 + $0x4f0] sm:$0xff]
      %v5116 = vld [vmem:[%s7 + $0x4f8] sm:$0xff]
      %v5117 = vld [vmem:[%s7 + $0x500] sm:$0xff]
      %v5118 = vld [vmem:[%s7 + $0x508] sm:$0xff]
      %v5119 = vld [vmem:[%s7 + $0x510] sm:$0xff]
      %v5120 = vld [vmem:[%s7 + $0x518] sm:$0xff]
      %v5121 = vld [vmem:[%s7 + $0x520] sm:$0xff]
      %v5122 = vld [vmem:[%s7 + $0x528] sm:$0xff]
      %v5123 = vld [vmem:[%s7 + $0x530] sm:$0xff]
      %v5124 = vld [vmem:[%s7 + $0x538] sm:$0xff]
      %v5125 = vld [vmem:[%s7 + $0x540] sm:$0xff]
      %v5126 = vld [vmem:[%s7 + $0x548] sm:$0xff]
      %v5127 = vld [vmem:[%s7 + $0x550] sm:$0xff]
      %v5128 = vld [vmem:[%s7 + $0x558] sm:$0xff]
      %v5129 = vld [vmem:[%s7 + $0x560] sm:$0xff]
      %v5130 = vld [vmem:[%s7 + $0x568] sm:$0xff]
      %v5131 = vld [vmem:[%s7 + $0x570] sm:$0xff]
      %v5132 = vld [vmem:[%s7 + $0x578] sm:$0xff]
      %v5133 = vld [vmem:[%s7 + $0x580] sm:$0xff]
      %v5134 = vld [vmem:[%s7 + $0x588] sm:$0xff]
      %v5135 = vld [vmem:[%s7 + $0x590] sm:$0xff]
      %v5136 = vld [vmem:[%s7 + $0x598] sm:$0xff]
      %v5137 = vld [vmem:[%s7 + $0x5a0] sm:$0xff]
      %v5138 = vld [vmem:[%s7 + $0x5a8] sm:$0xff]
      %v5139 = vld [vmem:[%s7 + $0x5b0] sm:$0xff]
      %v5140 = vld [vmem:[%s7 + $0x5b8] sm:$0xff]
      %v5141 = vld [vmem:[%s7 + $0x5c0] sm:$0xff]
      %v5142 = vld [vmem:[%s7 + $0x5c8] sm:$0xff]
      %v5143 = vld [vmem:[%s7 + $0x5d0] sm:$0xff]
      %v5144 = vld [vmem:[%s7 + $0x5d8] sm:$0xff]
      %v5145 = vld [vmem:[%s7 + $0x5e0] sm:$0xff]
      %v5146 = vld [vmem:[%s7 + $0x5e8] sm:$0xff]
      %v5147 = vld [vmem:[%s7 + $0x5f0] sm:$0xff]
      %v5148 = vld [vmem:[%s7 + $0x5f8] sm:$0xff]
      %v5149 = vld [vmem:[%s7 + $0x600] sm:$0xff]
      %v5150 = vld [vmem:[%s7 + $0x608] sm:$0xff]
      %v5151 = vld [vmem:[%s7 + $0x610] sm:$0xff]
      %v5152 = vld [vmem:[%s7 + $0x618] sm:$0xff]
      %v5153 = vld [vmem:[%s7 + $0x620] sm:$0xff]
      %v5154 = vld [vmem:[%s7 + $0x628] sm:$0xff]
      %v5155 = vld [vmem:[%s7 + $0x630] sm:$0xff]
      %v5156 = vld [vmem:[%s7 + $0x638] sm:$0xff]
      %v5157 = vld [vmem:[%s7 + $0x640] sm:$0xff]
      %v5158 = vld [vmem:[%s7 + $0x648] sm:$0xff]
      %v5159 = vld [vmem:[%s7 + $0x650] sm:$0xff]
      %v5160 = vld [vmem:[%s7 + $0x658] sm:$0xff]
      %v5161 = vld [vmem:[%s7 + $0x660] sm:$0xff]
      %v5162 = vld [vmem:[%s7 + $0x668] sm:$0xff]
      %v5163 = vld [vmem:[%s7 + $0x670] sm:$0xff]
      %v5164 = vld [vmem:[%s7 + $0x678] sm:$0xff]
      %v5165 = vld [vmem:[%s7 + $0x680] sm:$0xff]
      %v5166 = vld [vmem:[%s7 + $0x688] sm:$0xff]
      %v5167 = vld [vmem:[%s7 + $0x690] sm:$0xff]
      %v5168 = vld [vmem:[%s7 + $0x698] sm:$0xff]
      %v5169 = vld [vmem:[%s7 + $0x6a0] sm:$0xff]
      %v5170 = vld [vmem:[%s7 + $0x6a8] sm:$0xff]
      %v5171 = vld [vmem:[%s7 + $0x6b0] sm:$0xff]
      %v5172 = vld [vmem:[%s7 + $0x6b8] sm:$0xff]
      %v5173 = vld [vmem:[%s7 + $0x6c0] sm:$0xff]
      %v5174 = vld [vmem:[%s7 + $0x6c8] sm:$0xff]
      %v5175 = vld [vmem:[%s7 + $0x6d0] sm:$0xff]
      %v5176 = vld [vmem:[%s7 + $0x6d8] sm:$0xff]
      %v5177 = vld [vmem:[%s7 + $0x6e0] sm:$0xff]
      %v5178 = vld [vmem:[%s7 + $0x6e8] sm:$0xff]
      %v5179 = vld [vmem:[%s7 + $0x6f0] sm:$0xff]
      %v5180 = vld [vmem:[%s7 + $0x6f8] sm:$0xff]
      %v5181 = vld [vmem:[%s7 + $0x700] sm:$0xff]
      %v5182 = vld [vmem:[%s7 + $0x708] sm:$0xff]
      %v5183 = vld [vmem:[%s7 + $0x710] sm:$0xff]
      %v5184 = vld [vmem:[%s7 + $0x718] sm:$0xff]
      %v5185 = vld [vmem:[%s7 + $0x720] sm:$0xff]
      %v5186 = vld [vmem:[%s7 + $0x728] sm:$0xff]
      %v5187 = vld [vmem:[%s7 + $0x730] sm:$0xff]
      %v5188 = vld [vmem:[%s7 + $0x738] sm:$0xff]
      %v5189 = vld [vmem:[%s7 + $0x740] sm:$0xff]
      %v5190 = vld [vmem:[%s7 + $0x748] sm:$0xff]
      %v5191 = vld [vmem:[%s7 + $0x750] sm:$0xff]
      %v5192 = vld [vmem:[%s7 + $0x758] sm:$0xff]
      %v5193 = vld [vmem:[%s7 + $0x760] sm:$0xff]
      %v5194 = vld [vmem:[%s7 + $0x768] sm:$0xff]
      %v5195 = vld [vmem:[%s7 + $0x770] sm:$0xff]
      %v5196 = vld [vmem:[%s7 + $0x778] sm:$0xff]
      %v5197 = vld [vmem:[%s7 + $0x780] sm:$0xff]
      %v5198 = vld [vmem:[%s7 + $0x788] sm:$0xff]
      %v5199 = vld [vmem:[%s7 + $0x790] sm:$0xff]
      %v5200 = vld [vmem:[%s7 + $0x798] sm:$0xff]
      %v5201 = vld [vmem:[%s7 + $0x7a0] sm:$0xff]
      %v5202 = vld [vmem:[%s7 + $0x7a8] sm:$0xff]
      %v5203 = vld [vmem:[%s7 + $0x7b0] sm:$0xff]
      %v5204 = vld [vmem:[%s7 + $0x7b8] sm:$0xff]
      %v5205 = vld [vmem:[%s7 + $0x7c0] sm:$0xff]
      %v5206 = vld [vmem:[%s7 + $0x7c8] sm:$0xff]
      %v5207 = vld [vmem:[%s7 + $0x7d0] sm:$0xff]
      %v5208 = vld [vmem:[%s7 + $0x7d8] sm:$0xff]
      %v5209 = vld [vmem:[%s7 + $0x7e0] sm:$0xff]
      %v5210 = vld [vmem:[%s7 + $0x7e8] sm:$0xff]
      %v5211 = vld [vmem:[%s7 + $0x7f0] sm:$0xff]
      %v5212 = vld [vmem:[%s7 + $0x7f8] sm:$0xff]
      %v5213 = vld [vmem:[%s7 + $0x800] sm:$0xff]
      %v5214 = vld [vmem:[%s7 + $0x808] sm:$0xff]
      %v5215 = vld [vmem:[%s7 + $0x810] sm:$0xff]
      %v5216 = vld [vmem:[%s7 + $0x818] sm:$0xff]
      %v5217 = vld [vmem:[%s7 + $0x820] sm:$0xff]
      %v5218 = vld [vmem:[%s7 + $0x828] sm:$0xff]
      %v5219 = vld [vmem:[%s7 + $0x830] sm:$0xff]
      %v5220 = vld [vmem:[%s7 + $0x838] sm:$0xff]
      %v5221 = vld [vmem:[%s7 + $0x840] sm:$0xff]
      %v5222 = vld [vmem:[%s7 + $0x848] sm:$0xff]
      %v5223 = vld [vmem:[%s7 + $0x850] sm:$0xff]
      %v5224 = vld [vmem:[%s7 + $0x858] sm:$0xff]
      %v5225 = vld [vmem:[%s7 + $0x860] sm:$0xff]
      %v5226 = vld [vmem:[%s7 + $0x868] sm:$0xff]
      %v5227 = vld [vmem:[%s7 + $0x870] sm:$0xff]
      %v5228 = vld [vmem:[%s7 + $0x878] sm:$0xff]
      %v5229 = vld [vmem:[%s7 + $0x880] sm:$0xff]
      %v5230 = vld [vmem:[%s7 + $0x888] sm:$0xff]
      %v5231 = vld [vmem:[%s7 + $0x890] sm:$0xff]
      %v5232 = vld [vmem:[%s7 + $0x898] sm:$0xff]
      %v5233 = vld [vmem:[%s7 + $0x8a0] sm:$0xff]
      %v5234 = vld [vmem:[%s7 + $0x8a8] sm:$0xff]
      %v5235 = vld [vmem:[%s7 + $0x8b0] sm:$0xff]
      %v5236 = vld [vmem:[%s7 + $0x8b8] sm:$0xff]
      %v5237 = vld [vmem:[%s7 + $0x8c0] sm:$0xff]
      %v5238 = vld [vmem:[%s7 + $0x8c8] sm:$0xff]
      %v5239 = vld [vmem:[%s7 + $0x8d0] sm:$0xff]
      %v5240 = vld [vmem:[%s7 + $0x8d8] sm:$0xff]
      %v5241 = vld [vmem:[%s7 + $0x8e0] sm:$0xff]
      %v5242 = vld [vmem:[%s7 + $0x8e8] sm:$0xff]
      %v5243 = vld [vmem:[%s7 + $0x8f0] sm:$0xff]
      %v5244 = vld [vmem:[%s7 + $0x8f8] sm:$0xff]
      %v5245 = vld [vmem:[%s8] sm:$0x3]
      %v5247 = vlaneseq
      %v5248 = vshrl.u32 %v5247, 7
      %v5249 = vsub.s32 0, %v5248
      %v5250 = vrot.slane %v5245, %v5249
      %v5251 = vlaneseq
      %v5252 = vshrl.u32 %v5251, 7
      %v5253 = vsub.s32 1, %v5252
      %v5254 = vrot.slane %v5245, %v5253
      %v5545 = vunpack.c.l.b16 %v4957
      %v5546 = vunpack.c.h.b16 %v4957
      %v5547 = vunpack.c.l.b16 %v4958
      %v5548 = vunpack.c.h.b16 %v4958
      %v5549 = vunpack.c.l.b16 %v4959
      %v5550 = vunpack.c.h.b16 %v4959
      %v5551 = vunpack.c.l.b16 %v4960
      %v5552 = vunpack.c.h.b16 %v4960
      %v5553 = vunpack.c.l.b16 %v4961
      %v5554 = vunpack.c.h.b16 %v4961
      %v5555 = vunpack.c.l.b16 %v4962
      %v5556 = vunpack.c.h.b16 %v4962
      %v5557 = vunpack.c.l.b16 %v4963
      %v5558 = vunpack.c.h.b16 %v4963
      %v5559 = vunpack.c.l.b16 %v4964
      %v5560 = vunpack.c.h.b16 %v4964
      %v5561 = vunpack.c.l.b16 %v4965
      %v5562 = vunpack.c.h.b16 %v4965
      %v5563 = vunpack.c.l.b16 %v4966
      %v5564 = vunpack.c.h.b16 %v4966
      %v5565 = vunpack.c.l.b16 %v4967
      %v5566 = vunpack.c.h.b16 %v4967
      %v5567 = vunpack.c.l.b16 %v4968
      %v5568 = vunpack.c.h.b16 %v4968
      %v5569 = vunpack.c.l.b16 %v4969
      %v5570 = vunpack.c.h.b16 %v4969
      %v5571 = vunpack.c.l.b16 %v4970
      %v5572 = vunpack.c.h.b16 %v4970
      %v5573 = vunpack.c.l.b16 %v4971
      %v5574 = vunpack.c.h.b16 %v4971
      %v5575 = vunpack.c.l.b16 %v4972
      %v5576 = vunpack.c.h.b16 %v4972
      %v5577 = vunpack.c.l.b16 %v4973
      %v5578 = vunpack.c.h.b16 %v4973
      %v5579 = vunpack.c.l.b16 %v4974
      %v5580 = vunpack.c.h.b16 %v4974
      %v5581 = vunpack.c.l.b16 %v4975
      %v5582 = vunpack.c.h.b16 %v4975
      %v5583 = vunpack.c.l.b16 %v4976
      %v5584 = vunpack.c.h.b16 %v4976
      %v5585 = vunpack.c.l.b16 %v4977
      %v5586 = vunpack.c.h.b16 %v4977
      %v5587 = vunpack.c.l.b16 %v4978
      %v5588 = vunpack.c.h.b16 %v4978
      %v5589 = vunpack.c.l.b16 %v4979
      %v5590 = vunpack.c.h.b16 %v4979
      %v5591 = vunpack.c.l.b16 %v4980
      %v5592 = vunpack.c.h.b16 %v4980
      %v5593 = vunpack.c.l.b16 %v4981
      %v5594 = vunpack.c.h.b16 %v4981
      %v5595 = vunpack.c.l.b16 %v4982
      %v5596 = vunpack.c.h.b16 %v4982
      %v5597 = vunpack.c.l.b16 %v4983
      %v5598 = vunpack.c.h.b16 %v4983
      %v5599 = vunpack.c.l.b16 %v4984
      %v5600 = vunpack.c.h.b16 %v4984
      %v5601 = vunpack.c.l.b16 %v4985
      %v5602 = vunpack.c.h.b16 %v4985
      %v5603 = vunpack.c.l.b16 %v4986
      %v5604 = vunpack.c.h.b16 %v4986
      %v5605 = vunpack.c.l.b16 %v4987
      %v5606 = vunpack.c.h.b16 %v4987
      %v5607 = vunpack.c.l.b16 %v4988
      %v5608 = vunpack.c.h.b16 %v4988
      %v5609 = vunpack.c.l.b16 %v4989
      %v5610 = vunpack.c.h.b16 %v4989
      %v5611 = vunpack.c.l.b16 %v4990
      %v5612 = vunpack.c.h.b16 %v4990
      %v5613 = vunpack.c.l.b16 %v4991
      %v5614 = vunpack.c.h.b16 %v4991
      %v5615 = vunpack.c.l.b16 %v4992
      %v5616 = vunpack.c.h.b16 %v4992
      %v5617 = vunpack.c.l.b16 %v4993
      %v5618 = vunpack.c.h.b16 %v4993
      %v5619 = vunpack.c.l.b16 %v4994
      %v5620 = vunpack.c.h.b16 %v4994
      %v5621 = vunpack.c.l.b16 %v4995
      %v5622 = vunpack.c.h.b16 %v4995
      %v5623 = vunpack.c.l.b16 %v4996
      %v5624 = vunpack.c.h.b16 %v4996
      %v5625 = vunpack.c.l.b16 %v4997
      %v5626 = vunpack.c.h.b16 %v4997
      %v5627 = vunpack.c.l.b16 %v4998
      %v5628 = vunpack.c.h.b16 %v4998
      %v5629 = vunpack.c.l.b16 %v4999
      %v5630 = vunpack.c.h.b16 %v4999
      %v5631 = vunpack.c.l.b16 %v5000
      %v5632 = vunpack.c.h.b16 %v5000
      %v5633 = vunpack.c.l.b16 %v5001
      %v5634 = vunpack.c.h.b16 %v5001
      %v5635 = vunpack.c.l.b16 %v5002
      %v5636 = vunpack.c.h.b16 %v5002
      %v5637 = vunpack.c.l.b16 %v5003
      %v5638 = vunpack.c.h.b16 %v5003
      %v5639 = vunpack.c.l.b16 %v5004
      %v5640 = vunpack.c.h.b16 %v5004
      %v5641 = vunpack.c.l.b16 %v5005
      %v5642 = vunpack.c.h.b16 %v5005
      %v5643 = vunpack.c.l.b16 %v5006
      %v5644 = vunpack.c.h.b16 %v5006
      %v5645 = vunpack.c.l.b16 %v5007
      %v5646 = vunpack.c.h.b16 %v5007
      %v5647 = vunpack.c.l.b16 %v5008
      %v5648 = vunpack.c.h.b16 %v5008
      %v5649 = vunpack.c.l.b16 %v5009
      %v5650 = vunpack.c.h.b16 %v5009
      %v5651 = vunpack.c.l.b16 %v5010
      %v5652 = vunpack.c.h.b16 %v5010
      %v5653 = vunpack.c.l.b16 %v5011
      %v5654 = vunpack.c.h.b16 %v5011
      %v5655 = vunpack.c.l.b16 %v5012
      %v5656 = vunpack.c.h.b16 %v5012
      %v5657 = vunpack.c.l.b16 %v5013
      %v5658 = vunpack.c.h.b16 %v5013
      %v5659 = vunpack.c.l.b16 %v5014
      %v5660 = vunpack.c.h.b16 %v5014
      %v5661 = vunpack.c.l.b16 %v5015
      %v5662 = vunpack.c.h.b16 %v5015
      %v5663 = vunpack.c.l.b16 %v5016
      %v5664 = vunpack.c.h.b16 %v5016
      %v5665 = vunpack.c.l.b16 %v5017
      %v5666 = vunpack.c.h.b16 %v5017
      %v5667 = vunpack.c.l.b16 %v5018
      %v5668 = vunpack.c.h.b16 %v5018
      %v5669 = vunpack.c.l.b16 %v5019
      %v5670 = vunpack.c.h.b16 %v5019
      %v5671 = vunpack.c.l.b16 %v5020
      %v5672 = vunpack.c.h.b16 %v5020
      %v5673 = vunpack.c.l.b16 %v5021
      %v5674 = vunpack.c.h.b16 %v5021
      %v5675 = vunpack.c.l.b16 %v5022
      %v5676 = vunpack.c.h.b16 %v5022
      %v5677 = vunpack.c.l.b16 %v5023
      %v5678 = vunpack.c.h.b16 %v5023
      %v5679 = vunpack.c.l.b16 %v5024
      %v5680 = vunpack.c.h.b16 %v5024
      %v5681 = vunpack.c.l.b16 %v5025
      %v5682 = vunpack.c.h.b16 %v5025
      %v5683 = vunpack.c.l.b16 %v5026
      %v5684 = vunpack.c.h.b16 %v5026
      %v5685 = vunpack.c.l.b16 %v5027
      %v5686 = vunpack.c.h.b16 %v5027
      %v5687 = vunpack.c.l.b16 %v5028
      %v5688 = vunpack.c.h.b16 %v5028
      %v5689 = vunpack.c.l.b16 %v5029
      %v5690 = vunpack.c.h.b16 %v5029
      %v5691 = vunpack.c.l.b16 %v5030
      %v5692 = vunpack.c.h.b16 %v5030
      %v5693 = vunpack.c.l.b16 %v5031
      %v5694 = vunpack.c.h.b16 %v5031
      %v5695 = vunpack.c.l.b16 %v5032
      %v5696 = vunpack.c.h.b16 %v5032
      %v5697 = vunpack.c.l.b16 %v5033
      %v5698 = vunpack.c.h.b16 %v5033
      %v5699 = vunpack.c.l.b16 %v5034
      %v5700 = vunpack.c.h.b16 %v5034
      %v5701 = vunpack.c.l.b16 %v5035
      %v5702 = vunpack.c.h.b16 %v5035
      %v5703 = vunpack.c.l.b16 %v5036
      %v5704 = vunpack.c.h.b16 %v5036
      %v5705 = vunpack.c.l.b16 %v5037
      %v5706 = vunpack.c.h.b16 %v5037
      %v5707 = vunpack.c.l.b16 %v5038
      %v5708 = vunpack.c.h.b16 %v5038
      %v5709 = vunpack.c.l.b16 %v5039
      %v5710 = vunpack.c.h.b16 %v5039
      %v5711 = vunpack.c.l.b16 %v5040
      %v5712 = vunpack.c.h.b16 %v5040
      %v5713 = vunpack.c.l.b16 %v5041
      %v5714 = vunpack.c.h.b16 %v5041
      %v5715 = vunpack.c.l.b16 %v5042
      %v5716 = vunpack.c.h.b16 %v5042
      %v5717 = vunpack.c.l.b16 %v5043
      %v5718 = vunpack.c.h.b16 %v5043
      %v5719 = vunpack.c.l.b16 %v5044
      %v5720 = vunpack.c.h.b16 %v5044
      %v5721 = vunpack.c.l.b16 %v5045
      %v5722 = vunpack.c.h.b16 %v5045
      %v5723 = vunpack.c.l.b16 %v5046
      %v5724 = vunpack.c.h.b16 %v5046
      %v5725 = vunpack.c.l.b16 %v5047
      %v5726 = vunpack.c.h.b16 %v5047
      %v5727 = vunpack.c.l.b16 %v5048
      %v5728 = vunpack.c.h.b16 %v5048
      %v5729 = vunpack.c.l.b16 %v5049
      %v5730 = vunpack.c.h.b16 %v5049
      %v5731 = vunpack.c.l.b16 %v5050
      %v5732 = vunpack.c.h.b16 %v5050
      %v5733 = vunpack.c.l.b16 %v5051
      %v5734 = vunpack.c.h.b16 %v5051
      %v5735 = vunpack.c.l.b16 %v5052
      %v5736 = vunpack.c.h.b16 %v5052
      %v5737 = vunpack.c.l.b16 %v5053
      %v5738 = vunpack.c.h.b16 %v5053
      %v5739 = vunpack.c.l.b16 %v5054
      %v5740 = vunpack.c.h.b16 %v5054
      %v5741 = vunpack.c.l.b16 %v5055
      %v5742 = vunpack.c.h.b16 %v5055
      %v5743 = vunpack.c.l.b16 %v5056
      %v5744 = vunpack.c.h.b16 %v5056
      %v5745 = vunpack.c.l.b16 %v5057
      %v5746 = vunpack.c.h.b16 %v5057
      %v5747 = vunpack.c.l.b16 %v5058
      %v5748 = vunpack.c.h.b16 %v5058
      %v5749 = vunpack.c.l.b16 %v5059
      %v5750 = vunpack.c.h.b16 %v5059
      %v5751 = vunpack.c.l.b16 %v5060
      %v5752 = vunpack.c.h.b16 %v5060
      %v5753 = vunpack.c.l.b16 %v5061
      %v5754 = vunpack.c.h.b16 %v5061
      %v5755 = vunpack.c.l.b16 %v5062
      %v5756 = vunpack.c.h.b16 %v5062
      %v5757 = vunpack.c.l.b16 %v5063
      %v5758 = vunpack.c.h.b16 %v5063
      %v5759 = vunpack.c.l.b16 %v5064
      %v5760 = vunpack.c.h.b16 %v5064
      %v5761 = vunpack.c.l.b16 %v5065
      %v5762 = vunpack.c.h.b16 %v5065
      %v5763 = vunpack.c.l.b16 %v5066
      %v5764 = vunpack.c.h.b16 %v5066
      %v5765 = vunpack.c.l.b16 %v5067
      %v5766 = vunpack.c.h.b16 %v5067
      %v5767 = vunpack.c.l.b16 %v5068
      %v5768 = vunpack.c.h.b16 %v5068
      %v5769 = vunpack.c.l.b16 %v5069
      %v5770 = vunpack.c.h.b16 %v5069
      %v5771 = vunpack.c.l.b16 %v5070
      %v5772 = vunpack.c.h.b16 %v5070
      %v5773 = vunpack.c.l.b16 %v5071
      %v5774 = vunpack.c.h.b16 %v5071
      %v5775 = vunpack.c.l.b16 %v5072
      %v5776 = vunpack.c.h.b16 %v5072
      %v5777 = vunpack.c.l.b16 %v5073
      %v5778 = vunpack.c.h.b16 %v5073
      %v5779 = vunpack.c.l.b16 %v5074
      %v5780 = vunpack.c.h.b16 %v5074
      %v5781 = vunpack.c.l.b16 %v5075
      %v5782 = vunpack.c.h.b16 %v5075
      %v5783 = vunpack.c.l.b16 %v5076
      %v5784 = vunpack.c.h.b16 %v5076
      %v5785 = vunpack.c.l.b16 %v5077
      %v5786 = vunpack.c.h.b16 %v5077
      %v5787 = vunpack.c.l.b16 %v5078
      %v5788 = vunpack.c.h.b16 %v5078
      %v5789 = vunpack.c.l.b16 %v5079
      %v5790 = vunpack.c.h.b16 %v5079
      %v5791 = vunpack.c.l.b16 %v5080
      %v5792 = vunpack.c.h.b16 %v5080
      %v5793 = vunpack.c.l.b16 %v5081
      %v5794 = vunpack.c.h.b16 %v5081
      %v5795 = vunpack.c.l.b16 %v5082
      %v5796 = vunpack.c.h.b16 %v5082
      %v5797 = vunpack.c.l.b16 %v5083
      %v5798 = vunpack.c.h.b16 %v5083
      %v5799 = vunpack.c.l.b16 %v5084
      %v5800 = vunpack.c.h.b16 %v5084
      %v5801 = vunpack.c.l.b16 %v5085
      %v5802 = vunpack.c.h.b16 %v5085
      %v5803 = vunpack.c.l.b16 %v5086
      %v5804 = vunpack.c.h.b16 %v5086
      %v5805 = vunpack.c.l.b16 %v5087
      %v5806 = vunpack.c.h.b16 %v5087
      %v5807 = vunpack.c.l.b16 %v5088
      %v5808 = vunpack.c.h.b16 %v5088
      %v5809 = vunpack.c.l.b16 %v5089
      %v5810 = vunpack.c.h.b16 %v5089
      %v5811 = vunpack.c.l.b16 %v5090
      %v5812 = vunpack.c.h.b16 %v5090
      %v5813 = vunpack.c.l.b16 %v5091
      %v5814 = vunpack.c.h.b16 %v5091
      %v5815 = vunpack.c.l.b16 %v5092
      %v5816 = vunpack.c.h.b16 %v5092
      %v5817 = vunpack.c.l.b16 %v5093
      %v5818 = vunpack.c.h.b16 %v5093
      %v5819 = vunpack.c.l.b16 %v5094
      %v5820 = vunpack.c.h.b16 %v5094
      %v5821 = vunpack.c.l.b16 %v5095
      %v5822 = vunpack.c.h.b16 %v5095
      %v5823 = vunpack.c.l.b16 %v5096
      %v5824 = vunpack.c.h.b16 %v5096
      %v5825 = vunpack.c.l.b16 %v5097
      %v5826 = vunpack.c.h.b16 %v5097
      %v5827 = vunpack.c.l.b16 %v5098
      %v5828 = vunpack.c.h.b16 %v5098
      %v5829 = vunpack.c.l.b16 %v5099
      %v5830 = vunpack.c.h.b16 %v5099
      %v5831 = vunpack.c.l.b16 %v5100
      %v5832 = vunpack.c.h.b16 %v5100
      %v5833 = vunpack.c.l.b16 %v5101
      %v5834 = vunpack.c.h.b16 %v5101
      %v5835 = vunpack.c.l.b16 %v5102
      %v5836 = vunpack.c.h.b16 %v5102
      %v5837 = vunpack.c.l.b16 %v5103
      %v5838 = vunpack.c.h.b16 %v5103
      %v5839 = vunpack.c.l.b16 %v5104
      %v5840 = vunpack.c.h.b16 %v5104
      %v5841 = vunpack.c.l.b16 %v5105
      %v5842 = vunpack.c.h.b16 %v5105
      %v5843 = vunpack.c.l.b16 %v5106
      %v5844 = vunpack.c.h.b16 %v5106
      %v5845 = vunpack.c.l.b16 %v5107
      %v5846 = vunpack.c.h.b16 %v5107
      %v5847 = vunpack.c.l.b16 %v5108
      %v5848 = vunpack.c.h.b16 %v5108
      %v5849 = vunpack.c.l.b16 %v5109
      %v5850 = vunpack.c.h.b16 %v5109
      %v5851 = vunpack.c.l.b16 %v5110
      %v5852 = vunpack.c.h.b16 %v5110
      %v5853 = vunpack.c.l.b16 %v5111
      %v5854 = vunpack.c.h.b16 %v5111
      %v5855 = vunpack.c.l.b16 %v5112
      %v5856 = vunpack.c.h.b16 %v5112
      %v5857 = vunpack.c.l.b16 %v5113
      %v5858 = vunpack.c.h.b16 %v5113
      %v5859 = vunpack.c.l.b16 %v5114
      %v5860 = vunpack.c.h.b16 %v5114
      %v5861 = vunpack.c.l.b16 %v5115
      %v5862 = vunpack.c.h.b16 %v5115
      %v5863 = vunpack.c.l.b16 %v5116
      %v5864 = vunpack.c.h.b16 %v5116
      %v5865 = vunpack.c.l.b16 %v5117
      %v5866 = vunpack.c.h.b16 %v5117
      %v5867 = vunpack.c.l.b16 %v5118
      %v5868 = vunpack.c.h.b16 %v5118
      %v5869 = vunpack.c.l.b16 %v5119
      %v5870 = vunpack.c.h.b16 %v5119
      %v5871 = vunpack.c.l.b16 %v5120
      %v5872 = vunpack.c.h.b16 %v5120
      %v5873 = vunpack.c.l.b16 %v5121
      %v5874 = vunpack.c.h.b16 %v5121
      %v5875 = vunpack.c.l.b16 %v5122
      %v5876 = vunpack.c.h.b16 %v5122
      %v5877 = vunpack.c.l.b16 %v5123
      %v5878 = vunpack.c.h.b16 %v5123
      %v5879 = vunpack.c.l.b16 %v5124
      %v5880 = vunpack.c.h.b16 %v5124
      %v5881 = vunpack.c.l.b16 %v5125
      %v5882 = vunpack.c.h.b16 %v5125
      %v5883 = vunpack.c.l.b16 %v5126
      %v5884 = vunpack.c.h.b16 %v5126
      %v5885 = vunpack.c.l.b16 %v5127
      %v5886 = vunpack.c.h.b16 %v5127
      %v5887 = vunpack.c.l.b16 %v5128
      %v5888 = vunpack.c.h.b16 %v5128
      %v5889 = vunpack.c.l.b16 %v5129
      %v5890 = vunpack.c.h.b16 %v5129
      %v5891 = vunpack.c.l.b16 %v5130
      %v5892 = vunpack.c.h.b16 %v5130
      %v5893 = vunpack.c.l.b16 %v5131
      %v5894 = vunpack.c.h.b16 %v5131
      %v5895 = vunpack.c.l.b16 %v5132
      %v5896 = vunpack.c.h.b16 %v5132
      %v5897 = vunpack.c.l.b16 %v5133
      %v5898 = vunpack.c.h.b16 %v5133
      %v5899 = vunpack.c.l.b16 %v5134
      %v5900 = vunpack.c.h.b16 %v5134
      %v5901 = vunpack.c.l.b16 %v5135
      %v5902 = vunpack.c.h.b16 %v5135
      %v5903 = vunpack.c.l.b16 %v5136
      %v5904 = vunpack.c.h.b16 %v5136
      %v5905 = vunpack.c.l.b16 %v5137
      %v5906 = vunpack.c.h.b16 %v5137
      %v5907 = vunpack.c.l.b16 %v5138
      %v5908 = vunpack.c.h.b16 %v5138
      %v5909 = vunpack.c.l.b16 %v5139
      %v5910 = vunpack.c.h.b16 %v5139
      %v5911 = vunpack.c.l.b16 %v5140
      %v5912 = vunpack.c.h.b16 %v5140
      %v5913 = vunpack.c.l.b16 %v5141
      %v5914 = vunpack.c.h.b16 %v5141
      %v5915 = vunpack.c.l.b16 %v5142
      %v5916 = vunpack.c.h.b16 %v5142
      %v5917 = vunpack.c.l.b16 %v5143
      %v5918 = vunpack.c.h.b16 %v5143
      %v5919 = vunpack.c.l.b16 %v5144
      %v5920 = vunpack.c.h.b16 %v5144
      %v5921 = vunpack.c.l.b16 %v5145
      %v5922 = vunpack.c.h.b16 %v5145
      %v5923 = vunpack.c.l.b16 %v5146
      %v5924 = vunpack.c.h.b16 %v5146
      %v5925 = vunpack.c.l.b16 %v5147
      %v5926 = vunpack.c.h.b16 %v5147
      %v5927 = vunpack.c.l.b16 %v5148
      %v5928 = vunpack.c.h.b16 %v5148
      %v5929 = vunpack.c.l.b16 %v5149
      %v5930 = vunpack.c.h.b16 %v5149
      %v5931 = vunpack.c.l.b16 %v5150
      %v5932 = vunpack.c.h.b16 %v5150
      %v5933 = vunpack.c.l.b16 %v5151
      %v5934 = vunpack.c.h.b16 %v5151
      %v5935 = vunpack.c.l.b16 %v5152
      %v5936 = vunpack.c.h.b16 %v5152
      %v5937 = vunpack.c.l.b16 %v5153
      %v5938 = vunpack.c.h.b16 %v5153
      %v5939 = vunpack.c.l.b16 %v5154
      %v5940 = vunpack.c.h.b16 %v5154
      %v5941 = vunpack.c.l.b16 %v5155
      %v5942 = vunpack.c.h.b16 %v5155
      %v5943 = vunpack.c.l.b16 %v5156
      %v5944 = vunpack.c.h.b16 %v5156
      %v5945 = vunpack.c.l.b16 %v5157
      %v5946 = vunpack.c.h.b16 %v5157
      %v5947 = vunpack.c.l.b16 %v5158
      %v5948 = vunpack.c.h.b16 %v5158
      %v5949 = vunpack.c.l.b16 %v5159
      %v5950 = vunpack.c.h.b16 %v5159
      %v5951 = vunpack.c.l.b16 %v5160
      %v5952 = vunpack.c.h.b16 %v5160
      %v5953 = vunpack.c.l.b16 %v5161
      %v5954 = vunpack.c.h.b16 %v5161
      %v5955 = vunpack.c.l.b16 %v5162
      %v5956 = vunpack.c.h.b16 %v5162
      %v5957 = vunpack.c.l.b16 %v5163
      %v5958 = vunpack.c.h.b16 %v5163
      %v5959 = vunpack.c.l.b16 %v5164
      %v5960 = vunpack.c.h.b16 %v5164
      %v5961 = vunpack.c.l.b16 %v5165
      %v5962 = vunpack.c.h.b16 %v5165
      %v5963 = vunpack.c.l.b16 %v5166
      %v5964 = vunpack.c.h.b16 %v5166
      %v5965 = vunpack.c.l.b16 %v5167
      %v5966 = vunpack.c.h.b16 %v5167
      %v5967 = vunpack.c.l.b16 %v5168
      %v5968 = vunpack.c.h.b16 %v5168
      %v5969 = vunpack.c.l.b16 %v5169
      %v5970 = vunpack.c.h.b16 %v5169
      %v5971 = vunpack.c.l.b16 %v5170
      %v5972 = vunpack.c.h.b16 %v5170
      %v5973 = vunpack.c.l.b16 %v5171
      %v5974 = vunpack.c.h.b16 %v5171
      %v5975 = vunpack.c.l.b16 %v5172
      %v5976 = vunpack.c.h.b16 %v5172
      %v5977 = vunpack.c.l.b16 %v5173
      %v5978 = vunpack.c.h.b16 %v5173
      %v5979 = vunpack.c.l.b16 %v5174
      %v5980 = vunpack.c.h.b16 %v5174
      %v5981 = vunpack.c.l.b16 %v5175
      %v5982 = vunpack.c.h.b16 %v5175
      %v5983 = vunpack.c.l.b16 %v5176
      %v5984 = vunpack.c.h.b16 %v5176
      %v5985 = vunpack.c.l.b16 %v5177
      %v5986 = vunpack.c.h.b16 %v5177
      %v5987 = vunpack.c.l.b16 %v5178
      %v5988 = vunpack.c.h.b16 %v5178
      %v5989 = vunpack.c.l.b16 %v5179
      %v5990 = vunpack.c.h.b16 %v5179
      %v5991 = vunpack.c.l.b16 %v5180
      %v5992 = vunpack.c.h.b16 %v5180
      %v5993 = vunpack.c.l.b16 %v5181
      %v5994 = vunpack.c.h.b16 %v5181
      %v5995 = vunpack.c.l.b16 %v5182
      %v5996 = vunpack.c.h.b16 %v5182
      %v5997 = vunpack.c.l.b16 %v5183
      %v5998 = vunpack.c.h.b16 %v5183
      %v5999 = vunpack.c.l.b16 %v5184
      %v6000 = vunpack.c.h.b16 %v5184
      %v6001 = vunpack.c.l.b16 %v5185
      %v6002 = vunpack.c.h.b16 %v5185
      %v6003 = vunpack.c.l.b16 %v5186
      %v6004 = vunpack.c.h.b16 %v5186
      %v6005 = vunpack.c.l.b16 %v5187
      %v6006 = vunpack.c.h.b16 %v5187
      %v6007 = vunpack.c.l.b16 %v5188
      %v6008 = vunpack.c.h.b16 %v5188
      %v6009 = vunpack.c.l.b16 %v5189
      %v6010 = vunpack.c.h.b16 %v5189
      %v6011 = vunpack.c.l.b16 %v5190
      %v6012 = vunpack.c.h.b16 %v5190
      %v6013 = vunpack.c.l.b16 %v5191
      %v6014 = vunpack.c.h.b16 %v5191
      %v6015 = vunpack.c.l.b16 %v5192
      %v6016 = vunpack.c.h.b16 %v5192
      %v6017 = vunpack.c.l.b16 %v5193
      %v6018 = vunpack.c.h.b16 %v5193
      %v6019 = vunpack.c.l.b16 %v5194
      %v6020 = vunpack.c.h.b16 %v5194
      %v6021 = vunpack.c.l.b16 %v5195
      %v6022 = vunpack.c.h.b16 %v5195
      %v6023 = vunpack.c.l.b16 %v5196
      %v6024 = vunpack.c.h.b16 %v5196
      %v6025 = vunpack.c.l.b16 %v5197
      %v6026 = vunpack.c.h.b16 %v5197
      %v6027 = vunpack.c.l.b16 %v5198
      %v6028 = vunpack.c.h.b16 %v5198
      %v6029 = vunpack.c.l.b16 %v5199
      %v6030 = vunpack.c.h.b16 %v5199
      %v6031 = vunpack.c.l.b16 %v5200
      %v6032 = vunpack.c.h.b16 %v5200
      %v6033 = vunpack.c.l.b16 %v5201
      %v6034 = vunpack.c.h.b16 %v5201
      %v6035 = vunpack.c.l.b16 %v5202
      %v6036 = vunpack.c.h.b16 %v5202
      %v6037 = vunpack.c.l.b16 %v5203
      %v6038 = vunpack.c.h.b16 %v5203
      %v6039 = vunpack.c.l.b16 %v5204
      %v6040 = vunpack.c.h.b16 %v5204
      %v6041 = vunpack.c.l.b16 %v5205
      %v6042 = vunpack.c.h.b16 %v5205
      %v6043 = vunpack.c.l.b16 %v5206
      %v6044 = vunpack.c.h.b16 %v5206
      %v6045 = vunpack.c.l.b16 %v5207
      %v6046 = vunpack.c.h.b16 %v5207
      %v6047 = vunpack.c.l.b16 %v5208
      %v6048 = vunpack.c.h.b16 %v5208
      %v6049 = vunpack.c.l.b16 %v5209
      %v6050 = vunpack.c.h.b16 %v5209
      %v6051 = vunpack.c.l.b16 %v5210
      %v6052 = vunpack.c.h.b16 %v5210
      %v6053 = vunpack.c.l.b16 %v5211
      %v6054 = vunpack.c.h.b16 %v5211
      %v6055 = vunpack.c.l.b16 %v5212
      %v6056 = vunpack.c.h.b16 %v5212
      %v6057 = vunpack.c.l.b16 %v5213
      %v6058 = vunpack.c.h.b16 %v5213
      %v6059 = vunpack.c.l.b16 %v5214
      %v6060 = vunpack.c.h.b16 %v5214
      %v6061 = vunpack.c.l.b16 %v5215
      %v6062 = vunpack.c.h.b16 %v5215
      %v6063 = vunpack.c.l.b16 %v5216
      %v6064 = vunpack.c.h.b16 %v5216
      %v6065 = vunpack.c.l.b16 %v5217
      %v6066 = vunpack.c.h.b16 %v5217
      %v6067 = vunpack.c.l.b16 %v5218
      %v6068 = vunpack.c.h.b16 %v5218
      %v6069 = vunpack.c.l.b16 %v5219
      %v6070 = vunpack.c.h.b16 %v5219
      %v6071 = vunpack.c.l.b16 %v5220
      %v6072 = vunpack.c.h.b16 %v5220
      %v6073 = vunpack.c.l.b16 %v5221
      %v6074 = vunpack.c.h.b16 %v5221
      %v6075 = vunpack.c.l.b16 %v5222
      %v6076 = vunpack.c.h.b16 %v5222
      %v6077 = vunpack.c.l.b16 %v5223
      %v6078 = vunpack.c.h.b16 %v5223
      %v6079 = vunpack.c.l.b16 %v5224
      %v6080 = vunpack.c.h.b16 %v5224
      %v6081 = vunpack.c.l.b16 %v5225
      %v6082 = vunpack.c.h.b16 %v5225
      %v6083 = vunpack.c.l.b16 %v5226
      %v6084 = vunpack.c.h.b16 %v5226
      %v6085 = vunpack.c.l.b16 %v5227
      %v6086 = vunpack.c.h.b16 %v5227
      %v6087 = vunpack.c.l.b16 %v5228
      %v6088 = vunpack.c.h.b16 %v5228
      %v6089 = vunpack.c.l.b16 %v5229
      %v6090 = vunpack.c.h.b16 %v5229
      %v6091 = vunpack.c.l.b16 %v5230
      %v6092 = vunpack.c.h.b16 %v5230
      %v6093 = vunpack.c.l.b16 %v5231
      %v6094 = vunpack.c.h.b16 %v5231
      %v6095 = vunpack.c.l.b16 %v5232
      %v6096 = vunpack.c.h.b16 %v5232
      %v6097 = vunpack.c.l.b16 %v5233
      %v6098 = vunpack.c.h.b16 %v5233
      %v6099 = vunpack.c.l.b16 %v5234
      %v6100 = vunpack.c.h.b16 %v5234
      %v6101 = vunpack.c.l.b16 %v5235
      %v6102 = vunpack.c.h.b16 %v5235
      %v6103 = vunpack.c.l.b16 %v5236
      %v6104 = vunpack.c.h.b16 %v5236
      %v6105 = vunpack.c.l.b16 %v5237
      %v6106 = vunpack.c.h.b16 %v5237
      %v6107 = vunpack.c.l.b16 %v5238
      %v6108 = vunpack.c.h.b16 %v5238
      %v6109 = vunpack.c.l.b16 %v5239
      %v6110 = vunpack.c.h.b16 %v5239
      %v6111 = vunpack.c.l.b16 %v5240
      %v6112 = vunpack.c.h.b16 %v5240
      %v6113 = vunpack.c.l.b16 %v5241
      %v6114 = vunpack.c.h.b16 %v5241
      %v6115 = vunpack.c.l.b16 %v5242
      %v6116 = vunpack.c.h.b16 %v5242
      %v6117 = vunpack.c.l.b16 %v5243
      %v6118 = vunpack.c.h.b16 %v5243
      %v6119 = vunpack.c.l.b16 %v5244
      %v6120 = vunpack.c.h.b16 %v5244
      %v6121 = vpack.c.b16 %v5547, %v5545
      %v6122 = vpack.c.b16 %v5548, %v5546
      %v6123 = vpack.c.b16 %v5551, %v5549
      %v6124 = vpack.c.b16 %v5552, %v5550
      %v6125 = vpack.c.b16 %v5555, %v5553
      %v6126 = vpack.c.b16 %v5556, %v5554
      %v6127 = vpack.c.b16 %v5559, %v5557
      %v6128 = vpack.c.b16 %v5560, %v5558
      %v6129 = vpack.c.b16 %v5563, %v5561
      %v6130 = vpack.c.b16 %v5564, %v5562
      %v6131 = vpack.c.b16 %v5567, %v5565
      %v6132 = vpack.c.b16 %v5568, %v5566
      %v6133 = vpack.c.b16 %v5571, %v5569
      %v6134 = vpack.c.b16 %v5572, %v5570
      %v6135 = vpack.c.b16 %v5575, %v5573
      %v6136 = vpack.c.b16 %v5576, %v5574
      %v6137 = vpack.c.b16 %v5579, %v5577
      %v6138 = vpack.c.b16 %v5580, %v5578
      %v6139 = vpack.c.b16 %v5583, %v5581
      %v6140 = vpack.c.b16 %v5584, %v5582
      %v6141 = vpack.c.b16 %v5587, %v5585
      %v6142 = vpack.c.b16 %v5588, %v5586
      %v6143 = vpack.c.b16 %v5591, %v5589
      %v6144 = vpack.c.b16 %v5592, %v5590
      %v6145 = vpack.c.b16 %v5595, %v5593
      %v6146 = vpack.c.b16 %v5596, %v5594
      %v6147 = vpack.c.b16 %v5599, %v5597
      %v6148 = vpack.c.b16 %v5600, %v5598
      %v6149 = vpack.c.b16 %v5603, %v5601
      %v6150 = vpack.c.b16 %v5604, %v5602
      %v6151 = vpack.c.b16 %v5607, %v5605
      %v6152 = vpack.c.b16 %v5608, %v5606
      %v6153 = vpack.c.b16 %v5611, %v5609
      %v6154 = vpack.c.b16 %v5612, %v5610
      %v6155 = vpack.c.b16 %v5615, %v5613
      %v6156 = vpack.c.b16 %v5616, %v5614
      %v6157 = vpack.c.b16 %v5619, %v5617
      %v6158 = vpack.c.b16 %v5620, %v5618
      %v6159 = vpack.c.b16 %v5623, %v5621
      %v6160 = vpack.c.b16 %v5624, %v5622
      %v6161 = vpack.c.b16 %v5627, %v5625
      %v6162 = vpack.c.b16 %v5628, %v5626
      %v6163 = vpack.c.b16 %v5631, %v5629
      %v6164 = vpack.c.b16 %v5632, %v5630
      %v6165 = vpack.c.b16 %v5635, %v5633
      %v6166 = vpack.c.b16 %v5636, %v5634
      %v6167 = vpack.c.b16 %v5639, %v5637
      %v6168 = vpack.c.b16 %v5640, %v5638
      %v6169 = vpack.c.b16 %v5643, %v5641
      %v6170 = vpack.c.b16 %v5644, %v5642
      %v6171 = vpack.c.b16 %v5647, %v5645
      %v6172 = vpack.c.b16 %v5648, %v5646
      %v6173 = vpack.c.b16 %v5651, %v5649
      %v6174 = vpack.c.b16 %v5652, %v5650
      %v6175 = vpack.c.b16 %v5655, %v5653
      %v6176 = vpack.c.b16 %v5656, %v5654
      %v6177 = vpack.c.b16 %v5659, %v5657
      %v6178 = vpack.c.b16 %v5660, %v5658
      %v6179 = vpack.c.b16 %v5663, %v5661
      %v6180 = vpack.c.b16 %v5664, %v5662
      %v6181 = vpack.c.b16 %v5667, %v5665
      %v6182 = vpack.c.b16 %v5668, %v5666
      %v6183 = vpack.c.b16 %v5671, %v5669
      %v6184 = vpack.c.b16 %v5672, %v5670
      %v6185 = vpack.c.b16 %v5675, %v5673
      %v6186 = vpack.c.b16 %v5676, %v5674
      %v6187 = vpack.c.b16 %v5679, %v5677
      %v6188 = vpack.c.b16 %v5680, %v5678
      %v6189 = vpack.c.b16 %v5683, %v5681
      %v6190 = vpack.c.b16 %v5684, %v5682
      %v6191 = vpack.c.b16 %v5687, %v5685
      %v6192 = vpack.c.b16 %v5688, %v5686
      %v6193 = vpack.c.b16 %v5691, %v5689
      %v6194 = vpack.c.b16 %v5692, %v5690
      %v6195 = vpack.c.b16 %v5695, %v5693
      %v6196 = vpack.c.b16 %v5696, %v5694
      %v6197 = vpack.c.b16 %v5699, %v5697
      %v6198 = vpack.c.b16 %v5700, %v5698
      %v6199 = vpack.c.b16 %v5703, %v5701
      %v6200 = vpack.c.b16 %v5704, %v5702
      %v6201 = vpack.c.b16 %v5707, %v5705
      %v6202 = vpack.c.b16 %v5708, %v5706
      %v6203 = vpack.c.b16 %v5711, %v5709
      %v6204 = vpack.c.b16 %v5712, %v5710
      %v6205 = vpack.c.b16 %v5715, %v5713
      %v6206 = vpack.c.b16 %v5716, %v5714
      %v6207 = vpack.c.b16 %v5719, %v5717
      %v6208 = vpack.c.b16 %v5720, %v5718
      %v6209 = vpack.c.b16 %v5723, %v5721
      %v6210 = vpack.c.b16 %v5724, %v5722
      %v6211 = vpack.c.b16 %v5727, %v5725
      %v6212 = vpack.c.b16 %v5728, %v5726
      %v6213 = vpack.c.b16 %v5731, %v5729
      %v6214 = vpack.c.b16 %v5732, %v5730
      %v6215 = vpack.c.b16 %v5735, %v5733
      %v6216 = vpack.c.b16 %v5736, %v5734
      %v6217 = vpack.c.b16 %v5739, %v5737
      %v6218 = vpack.c.b16 %v5740, %v5738
      %v6219 = vpack.c.b16 %v5743, %v5741
      %v6220 = vpack.c.b16 %v5744, %v5742
      %v6221 = vpack.c.b16 %v5747, %v5745
      %v6222 = vpack.c.b16 %v5748, %v5746
      %v6223 = vpack.c.b16 %v5751, %v5749
      %v6224 = vpack.c.b16 %v5752, %v5750
      %v6225 = vpack.c.b16 %v5755, %v5753
      %v6226 = vpack.c.b16 %v5756, %v5754
      %v6227 = vpack.c.b16 %v5759, %v5757
      %v6228 = vpack.c.b16 %v5760, %v5758
      %v6229 = vpack.c.b16 %v5763, %v5761
      %v6230 = vpack.c.b16 %v5764, %v5762
      %v6231 = vpack.c.b16 %v5767, %v5765
      %v6232 = vpack.c.b16 %v5768, %v5766
      %v6233 = vpack.c.b16 %v5771, %v5769
      %v6234 = vpack.c.b16 %v5772, %v5770
      %v6235 = vpack.c.b16 %v5775, %v5773
      %v6236 = vpack.c.b16 %v5776, %v5774
      %v6237 = vpack.c.b16 %v5779, %v5777
      %v6238 = vpack.c.b16 %v5780, %v5778
      %v6239 = vpack.c.b16 %v5783, %v5781
      %v6240 = vpack.c.b16 %v5784, %v5782
      %v6241 = vpack.c.b16 %v5787, %v5785
      %v6242 = vpack.c.b16 %v5788, %v5786
      %v6243 = vpack.c.b16 %v5791, %v5789
      %v6244 = vpack.c.b16 %v5792, %v5790
      %v6245 = vpack.c.b16 %v5795, %v5793
      %v6246 = vpack.c.b16 %v5796, %v5794
      %v6247 = vpack.c.b16 %v5799, %v5797
      %v6248 = vpack.c.b16 %v5800, %v5798
      %v6249 = vpack.c.b16 %v5803, %v5801
      %v6250 = vpack.c.b16 %v5804, %v5802
      %v6251 = vpack.c.b16 %v5807, %v5805
      %v6252 = vpack.c.b16 %v5808, %v5806
      %v6253 = vpack.c.b16 %v5811, %v5809
      %v6254 = vpack.c.b16 %v5812, %v5810
      %v6255 = vpack.c.b16 %v5815, %v5813
      %v6256 = vpack.c.b16 %v5816, %v5814
      %v6257 = vpack.c.b16 %v5819, %v5817
      %v6258 = vpack.c.b16 %v5820, %v5818
      %v6259 = vpack.c.b16 %v5823, %v5821
      %v6260 = vpack.c.b16 %v5824, %v5822
      %v6261 = vpack.c.b16 %v5827, %v5825
      %v6262 = vpack.c.b16 %v5828, %v5826
      %v6263 = vpack.c.b16 %v5831, %v5829
      %v6264 = vpack.c.b16 %v5832, %v5830
      %v6265 = vpack.c.b16 %v5835, %v5833
      %v6266 = vpack.c.b16 %v5836, %v5834
      %v6267 = vpack.c.b16 %v5839, %v5837
      %v6268 = vpack.c.b16 %v5840, %v5838
      %v6269 = vpack.c.b16 %v5843, %v5841
      %v6270 = vpack.c.b16 %v5844, %v5842
      %v6271 = vpack.c.b16 %v5847, %v5845
      %v6272 = vpack.c.b16 %v5848, %v5846
      %v6273 = vpack.c.b16 %v5851, %v5849
      %v6274 = vpack.c.b16 %v5852, %v5850
      %v6275 = vpack.c.b16 %v5855, %v5853
      %v6276 = vpack.c.b16 %v5856, %v5854
      %v6277 = vpack.c.b16 %v5859, %v5857
      %v6278 = vpack.c.b16 %v5860, %v5858
      %v6279 = vpack.c.b16 %v5863, %v5861
      %v6280 = vpack.c.b16 %v5864, %v5862
      %v6281 = vpack.c.b16 %v5867, %v5865
      %v6282 = vpack.c.b16 %v5868, %v5866
      %v6283 = vpack.c.b16 %v5871, %v5869
      %v6284 = vpack.c.b16 %v5872, %v5870
      %v6285 = vpack.c.b16 %v5875, %v5873
      %v6286 = vpack.c.b16 %v5876, %v5874
      %v6287 = vpack.c.b16 %v5879, %v5877
      %v6288 = vpack.c.b16 %v5880, %v5878
      %v6289 = vpack.c.b16 %v5883, %v5881
      %v6290 = vpack.c.b16 %v5884, %v5882
      %v6291 = vpack.c.b16 %v5887, %v5885
      %v6292 = vpack.c.b16 %v5888, %v5886
      %v6293 = vpack.c.b16 %v5891, %v5889
      %v6294 = vpack.c.b16 %v5892, %v5890
      %v6295 = vpack.c.b16 %v5895, %v5893
      %v6296 = vpack.c.b16 %v5896, %v5894
      %v6297 = vpack.c.b16 %v5899, %v5897
      %v6298 = vpack.c.b16 %v5900, %v5898
      %v6299 = vpack.c.b16 %v5903, %v5901
      %v6300 = vpack.c.b16 %v5904, %v5902
      %v6301 = vpack.c.b16 %v5907, %v5905
      %v6302 = vpack.c.b16 %v5908, %v5906
      %v6303 = vpack.c.b16 %v5911, %v5909
      %v6304 = vpack.c.b16 %v5912, %v5910
      %v6305 = vpack.c.b16 %v5915, %v5913
      %v6306 = vpack.c.b16 %v5916, %v5914
      %v6307 = vpack.c.b16 %v5919, %v5917
      %v6308 = vpack.c.b16 %v5920, %v5918
      %v6309 = vpack.c.b16 %v5923, %v5921
      %v6310 = vpack.c.b16 %v5924, %v5922
      %v6311 = vpack.c.b16 %v5927, %v5925
      %v6312 = vpack.c.b16 %v5928, %v5926
      %v6313 = vpack.c.b16 %v5931, %v5929
      %v6314 = vpack.c.b16 %v5932, %v5930
      %v6315 = vpack.c.b16 %v5935, %v5933
      %v6316 = vpack.c.b16 %v5936, %v5934
      %v6317 = vpack.c.b16 %v5939, %v5937
      %v6318 = vpack.c.b16 %v5940, %v5938
      %v6319 = vpack.c.b16 %v5943, %v5941
      %v6320 = vpack.c.b16 %v5944, %v5942
      %v6321 = vpack.c.b16 %v5947, %v5945
      %v6322 = vpack.c.b16 %v5948, %v5946
      %v6323 = vpack.c.b16 %v5951, %v5949
      %v6324 = vpack.c.b16 %v5952, %v5950
      %v6325 = vpack.c.b16 %v5955, %v5953
      %v6326 = vpack.c.b16 %v5956, %v5954
      %v6327 = vpack.c.b16 %v5959, %v5957
      %v6328 = vpack.c.b16 %v5960, %v5958
      %v6329 = vpack.c.b16 %v5963, %v5961
      %v6330 = vpack.c.b16 %v5964, %v5962
      %v6331 = vpack.c.b16 %v5967, %v5965
      %v6332 = vpack.c.b16 %v5968, %v5966
      %v6333 = vpack.c.b16 %v5971, %v5969
      %v6334 = vpack.c.b16 %v5972, %v5970
      %v6335 = vpack.c.b16 %v5975, %v5973
      %v6336 = vpack.c.b16 %v5976, %v5974
      %v6337 = vpack.c.b16 %v5979, %v5977
      %v6338 = vpack.c.b16 %v5980, %v5978
      %v6339 = vpack.c.b16 %v5983, %v5981
      %v6340 = vpack.c.b16 %v5984, %v5982
      %v6341 = vpack.c.b16 %v5987, %v5985
      %v6342 = vpack.c.b16 %v5988, %v5986
      %v6343 = vpack.c.b16 %v5991, %v5989
      %v6344 = vpack.c.b16 %v5992, %v5990
      %v6345 = vpack.c.b16 %v5995, %v5993
      %v6346 = vpack.c.b16 %v5996, %v5994
      %v6347 = vpack.c.b16 %v5999, %v5997
      %v6348 = vpack.c.b16 %v6000, %v5998
      %v6349 = vpack.c.b16 %v6003, %v6001
      %v6350 = vpack.c.b16 %v6004, %v6002
      %v6351 = vpack.c.b16 %v6007, %v6005
      %v6352 = vpack.c.b16 %v6008, %v6006
      %v6353 = vpack.c.b16 %v6011, %v6009
      %v6354 = vpack.c.b16 %v6012, %v6010
      %v6355 = vpack.c.b16 %v6015, %v6013
      %v6356 = vpack.c.b16 %v6016, %v6014
      %v6357 = vpack.c.b16 %v6019, %v6017
      %v6358 = vpack.c.b16 %v6020, %v6018
      %v6359 = vpack.c.b16 %v6023, %v6021
      %v6360 = vpack.c.b16 %v6024, %v6022
      %v6361 = vpack.c.b16 %v6027, %v6025
      %v6362 = vpack.c.b16 %v6028, %v6026
      %v6363 = vpack.c.b16 %v6031, %v6029
      %v6364 = vpack.c.b16 %v6032, %v6030
      %v6365 = vpack.c.b16 %v6035, %v6033
      %v6366 = vpack.c.b16 %v6036, %v6034
      %v6367 = vpack.c.b16 %v6039, %v6037
      %v6368 = vpack.c.b16 %v6040, %v6038
      %v6369 = vpack.c.b16 %v6043, %v6041
      %v6370 = vpack.c.b16 %v6044, %v6042
      %v6371 = vpack.c.b16 %v6047, %v6045
      %v6372 = vpack.c.b16 %v6048, %v6046
      %v6373 = vpack.c.b16 %v6051, %v6049
      %v6374 = vpack.c.b16 %v6052, %v6050
      %v6375 = vpack.c.b16 %v6055, %v6053
      %v6376 = vpack.c.b16 %v6056, %v6054
      %v6377 = vpack.c.b16 %v6059, %v6057
      %v6378 = vpack.c.b16 %v6060, %v6058
      %v6379 = vpack.c.b16 %v6063, %v6061
      %v6380 = vpack.c.b16 %v6064, %v6062
      %v6381 = vpack.c.b16 %v6067, %v6065
      %v6382 = vpack.c.b16 %v6068, %v6066
      %v6383 = vpack.c.b16 %v6071, %v6069
      %v6384 = vpack.c.b16 %v6072, %v6070
      %v6385 = vpack.c.b16 %v6075, %v6073
      %v6386 = vpack.c.b16 %v6076, %v6074
      %v6387 = vpack.c.b16 %v6079, %v6077
      %v6388 = vpack.c.b16 %v6080, %v6078
      %v6389 = vpack.c.b16 %v6083, %v6081
      %v6390 = vpack.c.b16 %v6084, %v6082
      %v6391 = vpack.c.b16 %v6087, %v6085
      %v6392 = vpack.c.b16 %v6088, %v6086
      %v6393 = vpack.c.b16 %v6091, %v6089
      %v6394 = vpack.c.b16 %v6092, %v6090
      %v6395 = vpack.c.b16 %v6095, %v6093
      %v6396 = vpack.c.b16 %v6096, %v6094
      %v6397 = vpack.c.b16 %v6099, %v6097
      %v6398 = vpack.c.b16 %v6100, %v6098
      %v6399 = vpack.c.b16 %v6103, %v6101
      %v6400 = vpack.c.b16 %v6104, %v6102
      %v6401 = vpack.c.b16 %v6107, %v6105
      %v6402 = vpack.c.b16 %v6108, %v6106
      %v6403 = vpack.c.b16 %v6111, %v6109
      %v6404 = vpack.c.b16 %v6112, %v6110
      %v6405 = vpack.c.b16 %v6115, %v6113
      %v6406 = vpack.c.b16 %v6116, %v6114
      %v6407 = vpack.c.b16 %v6119, %v6117
      %v6408 = vpack.c.b16 %v6120, %v6118
      %6697 = vmatprep.subr.bf16.mxu0 %v6122
      %6698 = vmatpush1.bf16.msra.mxu0 %v6121
      %6699 = vmatprep.subr.bf16.mxu0 %v6124
      %6700 = vmatpush1.bf16.msra.mxu0 %v6123
      %6701 = vmatprep.subr.bf16.mxu0 %v6126
      %6702 = vmatpush1.bf16.msra.mxu0 %v6125
      %6703 = vmatprep.subr.bf16.mxu0 %v6128
      %6704 = vmatpush1.bf16.msra.mxu0 %v6127
      %6705 = vmatprep.subr.bf16.mxu0 %v6130
      %6706 = vmatpush1.bf16.msra.mxu0 %v6129
      %6707 = vmatprep.subr.bf16.mxu0 %v6132
      %6708 = vmatpush1.bf16.msra.mxu0 %v6131
      %6709 = vmatprep.subr.bf16.mxu0 %v6134
      %6710 = vmatpush1.bf16.msra.mxu0 %v6133
      %6711 = vmatprep.subr.bf16.mxu0 %v6136
      %6712 = vmatpush1.bf16.msra.mxu0 %v6135
      %6713 = vmatprep.subr.bf16.mxu0 %v6138
      %6714 = vmatpush1.bf16.msra.mxu0 %v6137
      %6715 = vmatprep.subr.bf16.mxu0 %v6140
      %6716 = vmatpush1.bf16.msra.mxu0 %v6139
      %6717 = vmatprep.subr.bf16.mxu0 %v6142
      %6718 = vmatpush1.bf16.msra.mxu0 %v6141
      %6719 = vmatprep.subr.bf16.mxu0 %v6144
      %6720 = vmatpush1.bf16.msra.mxu0 %v6143
      %6721 = vmatprep.subr.bf16.mxu0 %v6146
      %6722 = vmatpush1.bf16.msra.mxu0 %v6145
      %6723 = vmatprep.subr.bf16.mxu0 %v6148
      %6724 = vmatpush1.bf16.msra.mxu0 %v6147
      %6725 = vmatprep.subr.bf16.mxu0 %v6150
      %6726 = vmatpush1.bf16.msra.mxu0 %v6149
      %6727 = vmatprep.subr.bf16.mxu0 %v6152
      %6728 = vmatpush1.bf16.msra.mxu0 %v6151
      %6729 = vmatprep.mubr.bf16.mxu0 %v4886
      %6730 = vmatmul.mubr.bf16.gmra.mrb[0].mxu0 %v4885
      %v6731 = vpop.f32.mrb[0].mxu0
      %v6732 = vadd.f32 %v5250, %v6731
      %v6733 = vpop.f32.mrb[0].mxu0
      %v6734 = vadd.f32 %v5254, %v6733
      %v6735 = vpop.f32.mrb[0].mxu0
      %v6736 = vadd.f32 %v5250, %v6735
      %v6737 = vpop.f32.mrb[0].mxu0
      %v6738 = vadd.f32 %v5254, %v6737
      %6739 = vmatprep.mubr.bf16.mxu0 %v4904
      %6740 = vmatmul.mubr.bf16.gmra.mrb[0].mxu0 %v4903
      %v6741 = vpop.f32.mrb[0].mxu0
      %v6742 = vadd.f32 %v5250, %v6741
      %v6743 = vpop.f32.mrb[0].mxu0
      %v6744 = vadd.f32 %v5254, %v6743
      %v6745 = vpop.f32.mrb[0].mxu0
      %v6746 = vadd.f32 %v5250, %v6745
      %v6747 = vpop.f32.mrb[0].mxu0
      %v6748 = vadd.f32 %v5254, %v6747
      %6749 = vmatprep.mubr.bf16.mxu0 %v4922
      %6750 = vmatmul.mubr.bf16.gmra.mrb[0].mxu0 %v4921
      %v6751 = vpop.f32.mrb[0].mxu0
      %v6752 = vadd.f32 %v5250, %v6751
      %v6753 = vpop.f32.mrb[0].mxu0
      %v6754 = vadd.f32 %v5254, %v6753
      %v6755 = vpop.f32.mrb[0].mxu0
      %v6756 = vadd.f32 %v5250, %v6755
      %v6757 = vpop.f32.mrb[0].mxu0
      %v6758 = vadd.f32 %v5254, %v6757
      %6759 = vmatprep.mubr.bf16.mxu0 %v4940
      %6760 = vmatmul.mubr.bf16.gmra.mrb[0].mxu0 %v4939
      %v6761 = vpop.f32.mrb[0].mxu0
      %v6762 = vadd.f32 %v5250, %v6761
      %v6763 = vpop.f32.mrb[0].mxu0
      %v6764 = vadd.f32 %v5254, %v6763
      %v6765 = vpop.f32.mrb[0].mxu0
      %v6766 = vadd.f32 %v5250, %v6765
      %v6767 = vpop.f32.mrb[0].mxu0
      %v6768 = vadd.f32 %v5254, %v6767
      %6769 = vdwg.mxu0
      %6770 = vmatprep.subr.bf16.mxu0 %v6154
      %6771 = vmatpush1.bf16.msra.mxu0 %v6153
      %6772 = vmatprep.subr.bf16.mxu0 %v6156
      %6773 = vmatpush1.bf16.msra.mxu0 %v6155
      %6774 = vmatprep.subr.bf16.mxu0 %v6158
      %6775 = vmatpush1.bf16.msra.mxu0 %v6157
      %6776 = vmatprep.subr.bf16.mxu0 %v6160
      %6777 = vmatpush1.bf16.msra.mxu0 %v6159
      %6778 = vmatprep.subr.bf16.mxu0 %v6162
      %6779 = vmatpush1.bf16.msra.mxu0 %v6161
      %6780 = vmatprep.subr.bf16.mxu0 %v6164
      %6781 = vmatpush1.bf16.msra.mxu0 %v6163
      %6782 = vmatprep.subr.bf16.mxu0 %v6166
      %6783 = vmatpush1.bf16.msra.mxu0 %v6165
      %6784 = vmatprep.subr.bf16.mxu0 %v6168
      %6785 = vmatpush1.bf16.msra.mxu0 %v6167
      %6786 = vmatprep.subr.bf16.mxu0 %v6170
      %6787 = vmatpush1.bf16.msra.mxu0 %v6169
      %6788 = vmatprep.subr.bf16.mxu0 %v6172
      %6789 = vmatpush1.bf16.msra.mxu0 %v6171
      %6790 = vmatprep.subr.bf16.mxu0 %v6174
      %6791 = vmatpush1.bf16.msra.mxu0 %v6173
      %6792 = vmatprep.subr.bf16.mxu0 %v6176
      %6793 = vmatpush1.bf16.msra.mxu0 %v6175
      %6794 = vmatprep.subr.bf16.mxu0 %v6178
      %6795 = vmatpush1.bf16.msra.mxu0 %v6177
      %6796 = vmatprep.subr.bf16.mxu0 %v6180
      %6797 = vmatpush1.bf16.msra.mxu0 %v6179
      %6798 = vmatprep.subr.bf16.mxu0 %v6182
      %6799 = vmatpush1.bf16.msra.mxu0 %v6181
      %6800 = vmatprep.subr.bf16.mxu0 %v6184
      %6801 = vmatpush1.bf16.msra.mxu0 %v6183
      %6802 = vmatprep.mubr.bf16.mxu0 %v4888
      %6803 = vmatmul.mubr.bf16.gmra.mrb[0].mxu0 %v4887
      %v6804 = vpop.f32.mrb[0].mxu0
      %v6805 = vadd.f32 %v6732, %v6804
      %v6806 = vpop.f32.mrb[0].mxu0
      %v6807 = vadd.f32 %v6734, %v6806
      %v6808 = vpop.f32.mrb[0].mxu0
      %v6809 = vadd.f32 %v6736, %v6808
      %v6810 = vpop.f32.mrb[0].mxu0
      %v6811 = vadd.f32 %v6738, %v6810
      %6812 = vmatprep.mubr.bf16.mxu0 %v4906
      %6813 = vmatmul.mubr.bf16.gmra.mrb[0].mxu0 %v4905
      %v6814 = vpop.f32.mrb[0].mxu0
      %v6815 = vadd.f32 %v6742, %v6814
      %v6816 = vpop.f32.mrb[0].mxu0
      %v6817 = vadd.f32 %v6744, %v6816
      %v6818 = vpop.f32.mrb[0].mxu0
      %v6819 = vadd.f32 %v6746, %v6818
      %v6820 = vpop.f32.mrb[0].mxu0
      %v6821 = vadd.f32 %v6748, %v6820
      %6822 = vmatprep.mubr.bf16.mxu0 %v4924
      %6823 = vmatmul.mubr.bf16.gmra.mrb[0].mxu0 %v4923
      %v6824 = vpop.f32.mrb[0].mxu0
      %v6825 = vadd.f32 %v6752, %v6824
      %v6826 = vpop.f32.mrb[0].mxu0
      %v6827 = vadd.f32 %v6754, %v6826
      %v6828 = vpop.f32.mrb[0].mxu0
      %v6829 = vadd.f32 %v6756, %v6828
      %v6830 = vpop.f32.mrb[0].mxu0
      %v6831 = vadd.f32 %v6758, %v6830
      %6832 = vmatprep.mubr.bf16.mxu0 %v4942
      %6833 = vmatmul.mubr.bf16.gmra.mrb[0].mxu0 %v4941
      %v6834 = vpop.f32.mrb[0].mxu0
      %v6835 = vadd.f32 %v6762, %v6834
      %v6836 = vpop.f32.mrb[0].mxu0
      %v6837 = vadd.f32 %v6764, %v6836
      %v6838 = vpop.f32.mrb[0].mxu0
      %v6839 = vadd.f32 %v6766, %v6838
      %v6840 = vpop.f32.mrb[0].mxu0
      %v6841 = vadd.f32 %v6768, %v6840
      %6842 = vdwg.mxu0
      %6843 = vmatprep.subr.bf16.mxu0 %v6186
      %6844 = vmatpush1.bf16.msra.mxu0 %v6185
      %6845 = vmatprep.subr.bf16.mxu0 %v6188
      %6846 = vmatpush1.bf16.msra.mxu0 %v6187
      %6847 = vmatprep.subr.bf16.mxu0 %v6190
      %6848 = vmatpush1.bf16.msra.mxu0 %v6189
      %6849 = vmatprep.subr.bf16.mxu0 %v6192
      %6850 = vmatpush1.bf16.msra.mxu0 %v6191
      %6851 = vmatprep.subr.bf16.mxu0 %v6194
      %6852 = vmatpush1.bf16.msra.mxu0 %v6193
      %6853 = vmatprep.subr.bf16.mxu0 %v6196
      %6854 = vmatpush1.bf16.msra.mxu0 %v6195
      %6855 = vmatprep.subr.bf16.mxu0 %v6198
      %6856 = vmatpush1.bf16.msra.mxu0 %v6197
      %6857 = vmatprep.subr.bf16.mxu0 %v6200
      %6858 = vmatpush1.bf16.msra.mxu0 %v6199
      %6859 = vmatprep.subr.bf16.mxu0 %v6202
      %6860 = vmatpush1.bf16.msra.mxu0 %v6201
      %6861 = vmatprep.subr.bf16.mxu0 %v6204
      %6862 = vmatpush1.bf16.msra.mxu0 %v6203
      %6863 = vmatprep.subr.bf16.mxu0 %v6206
      %6864 = vmatpush1.bf16.msra.mxu0 %v6205
      %6865 = vmatprep.subr.bf16.mxu0 %v6208
      %6866 = vmatpush1.bf16.msra.mxu0 %v6207
      %6867 = vmatprep.subr.bf16.mxu0 %v6210
      %6868 = vmatpush1.bf16.msra.mxu0 %v6209
      %6869 = vmatprep.subr.bf16.mxu0 %v6212
      %6870 = vmatpush1.bf16.msra.mxu0 %v6211
      %6871 = vmatprep.subr.bf16.mxu0 %v6214
      %6872 = vmatpush1.bf16.msra.mxu0 %v6213
      %6873 = vmatprep.subr.bf16.mxu0 %v6216
      %6874 = vmatpush1.bf16.msra.mxu0 %v6215
      %6875 = vmatprep.mubr.bf16.mxu0 %v4890
      %6876 = vmatmul.mubr.bf16.gmra.mrb[0].mxu0 %v4889
      %v6877 = vpop.f32.mrb[0].mxu0
      %v6878 = vadd.f32 %v6805, %v6877
      %v6879 = vpop.f32.mrb[0].mxu0
      %v6880 = vadd.f32 %v6807, %v6879
      %v6881 = vpop.f32.mrb[0].mxu0
      %v6882 = vadd.f32 %v6809, %v6881
      %v6883 = vpop.f32.mrb[0].mxu0
      %v6884 = vadd.f32 %v6811, %v6883
      %6885 = vmatprep.mubr.bf16.mxu0 %v4908
      %6886 = vmatmul.mubr.bf16.gmra.mrb[0].mxu0 %v4907
      %v6887 = vpop.f32.mrb[0].mxu0
      %v6888 = vadd.f32 %v6815, %v6887
      %v6889 = vpop.f32.mrb[0].mxu0
      %v6890 = vadd.f32 %v6817, %v6889
      %v6891 = vpop.f32.mrb[0].mxu0
      %v6892 = vadd.f32 %v6819, %v6891
      %v6893 = vpop.f32.mrb[0].mxu0
      %v6894 = vadd.f32 %v6821, %v6893
      %6895 = vmatprep.mubr.bf16.mxu0 %v4926
      %6896 = vmatmul.mubr.bf16.gmra.mrb[0].mxu0 %v4925
      %v6897 = vpop.f32.mrb[0].mxu0
      %v6898 = vadd.f32 %v6825, %v6897
      %v6899 = vpop.f32.mrb[0].mxu0
      %v6900 = vadd.f32 %v6827, %v6899
      %v6901 = vpop.f32.mrb[0].mxu0
      %v6902 = vadd.f32 %v6829, %v6901
      %v6903 = vpop.f32.mrb[0].mxu0
      %v6904 = vadd.f32 %v6831, %v6903
      %6905 = vmatprep.mubr.bf16.mxu0 %v4944
      %6906 = vmatmul.mubr.bf16.gmra.mrb[0].mxu0 %v4943
      %v6907 = vpop.f32.mrb[0].mxu0
      %v6908 = vadd.f32 %v6835, %v6907
      %v6909 = vpop.f32.mrb[0].mxu0
      %v6910 = vadd.f32 %v6837, %v6909
      %v6911 = vpop.f32.mrb[0].mxu0
      %v6912 = vadd.f32 %v6839, %v6911
      %v6913 = vpop.f32.mrb[0].mxu0
      %v6914 = vadd.f32 %v6841, %v6913
      %6915 = vdwg.mxu0
      %6916 = vmatprep.subr.bf16.mxu0 %v6218
      %6917 = vmatpush1.bf16.msra.mxu0 %v6217
      %6918 = vmatprep.subr.bf16.mxu0 %v6220
      %6919 = vmatpush1.bf16.msra.mxu0 %v6219
      %6920 = vmatprep.subr.bf16.mxu0 %v6222
      %6921 = vmatpush1.bf16.msra.mxu0 %v6221
      %6922 = vmatprep.subr.bf16.mxu0 %v6224
      %6923 = vmatpush1.bf16.msra.mxu0 %v6223
      %6924 = vmatprep.subr.bf16.mxu0 %v6226
      %6925 = vmatpush1.bf16.msra.mxu0 %v6225
      %6926 = vmatprep.subr.bf16.mxu0 %v6228
      %6927 = vmatpush1.bf16.msra.mxu0 %v6227
      %6928 = vmatprep.subr.bf16.mxu0 %v6230
      %6929 = vmatpush1.bf16.msra.mxu0 %v6229
      %6930 = vmatprep.subr.bf16.mxu0 %v6232
      %6931 = vmatpush1.bf16.msra.mxu0 %v6231
      %6932 = vmatprep.subr.bf16.mxu0 %v6234
      %6933 = vmatpush1.bf16.msra.mxu0 %v6233
      %6934 = vmatprep.subr.bf16.mxu0 %v6236
      %6935 = vmatpush1.bf16.msra.mxu0 %v6235
      %6936 = vmatprep.subr.bf16.mxu0 %v6238
      %6937 = vmatpush1.bf16.msra.mxu0 %v6237
      %6938 = vmatprep.subr.bf16.mxu0 %v6240
      %6939 = vmatpush1.bf16.msra.mxu0 %v6239
      %6940 = vmatprep.subr.bf16.mxu0 %v6242
      %6941 = vmatpush1.bf16.msra.mxu0 %v6241
      %6942 = vmatprep.subr.bf16.mxu0 %v6244
      %6943 = vmatpush1.bf16.msra.mxu0 %v6243
      %6944 = vmatprep.subr.bf16.mxu0 %v6246
      %6945 = vmatpush1.bf16.msra.mxu0 %v6245
      %6946 = vmatprep.subr.bf16.mxu0 %v6248
      %6947 = vmatpush1.bf16.msra.mxu0 %v6247
      %6948 = vmatprep.mubr.bf16.mxu0 %v4892
      %6949 = vmatmul.mubr.bf16.gmra.mrb[0].mxu0 %v4891
      %v6950 = vpop.f32.mrb[0].mxu0
      %v6951 = vadd.f32 %v6878, %v6950
      %v6952 = vpop.f32.mrb[0].mxu0
      %v6953 = vadd.f32 %v6880, %v6952
      %v6954 = vpop.f32.mrb[0].mxu0
      %v6955 = vadd.f32 %v6882, %v6954
      %v6956 = vpop.f32.mrb[0].mxu0
      %v6957 = vadd.f32 %v6884, %v6956
      %6958 = vmatprep.mubr.bf16.mxu0 %v4910
      %6959 = vmatmul.mubr.bf16.gmra.mrb[0].mxu0 %v4909
      %v6960 = vpop.f32.mrb[0].mxu0
      %v6961 = vadd.f32 %v6888, %v6960
      %v6962 = vpop.f32.mrb[0].mxu0
      %v6963 = vadd.f32 %v6890, %v6962
      %v6964 = vpop.f32.mrb[0].mxu0
      %v6965 = vadd.f32 %v6892, %v6964
      %v6966 = vpop.f32.mrb[0].mxu0
      %v6967 = vadd.f32 %v6894, %v6966
      %6968 = vmatprep.mubr.bf16.mxu0 %v4928
      %6969 = vmatmul.mubr.bf16.gmra.mrb[0].mxu0 %v4927
      %v6970 = vpop.f32.mrb[0].mxu0
      %v6971 = vadd.f32 %v6898, %v6970
      %v6972 = vpop.f32.mrb[0].mxu0
      %v6973 = vadd.f32 %v6900, %v6972
      %v6974 = vpop.f32.mrb[0].mxu0
      %v6975 = vadd.f32 %v6902, %v6974
      %v6976 = vpop.f32.mrb[0].mxu0
      %v6977 = vadd.f32 %v6904, %v6976
      %6978 = vmatprep.mubr.bf16.mxu0 %v4946
      %6979 = vmatmul.mubr.bf16.gmra.mrb[0].mxu0 %v4945
      %v6980 = vpop.f32.mrb[0].mxu0
      %v6981 = vadd.f32 %v6908, %v6980
      %v6982 = vpop.f32.mrb[0].mxu0
      %v6983 = vadd.f32 %v6910, %v6982
      %v6984 = vpop.f32.mrb[0].mxu0
      %v6985 = vadd.f32 %v6912, %v6984
      %v6986 = vpop.f32.mrb[0].mxu0
      %v6987 = vadd.f32 %v6914, %v6986
      %6988 = vdwg.mxu0
      %6989 = vmatprep.subr.bf16.mxu0 %v6250
      %6990 = vmatpush1.bf16.msra.mxu0 %v6249
      %6991 = vmatprep.subr.bf16.mxu0 %v6252
      %6992 = vmatpush1.bf16.msra.mxu0 %v6251
      %6993 = vmatprep.subr.bf16.mxu0 %v6254
      %6994 = vmatpush1.bf16.msra.mxu0 %v6253
      %6995 = vmatprep.subr.bf16.mxu0 %v6256
      %6996 = vmatpush1.bf16.msra.mxu0 %v6255
      %6997 = vmatprep.subr.bf16.mxu0 %v6258
      %6998 = vmatpush1.bf16.msra.mxu0 %v6257
      %6999 = vmatprep.subr.bf16.mxu0 %v6260
      %7000 = vmatpush1.bf16.msra.mxu0 %v6259
      %7001 = vmatprep.subr.bf16.mxu0 %v6262
      %7002 = vmatpush1.bf16.msra.mxu0 %v6261
      %7003 = vmatprep.subr.bf16.mxu0 %v6264
      %7004 = vmatpush1.bf16.msra.mxu0 %v6263
      %7005 = vmatprep.subr.bf16.mxu0 %v6266
      %7006 = vmatpush1.bf16.msra.mxu0 %v6265
      %7007 = vmatprep.subr.bf16.mxu0 %v6268
      %7008 = vmatpush1.bf16.msra.mxu0 %v6267
      %7009 = vmatprep.subr.bf16.mxu0 %v6270
      %7010 = vmatpush1.bf16.msra.mxu0 %v6269
      %7011 = vmatprep.subr.bf16.mxu0 %v6272
      %7012 = vmatpush1.bf16.msra.mxu0 %v6271
      %7013 = vmatprep.subr.bf16.mxu0 %v6274
      %7014 = vmatpush1.bf16.msra.mxu0 %v6273
      %7015 = vmatprep.subr.bf16.mxu0 %v6276
      %7016 = vmatpush1.bf16.msra.mxu0 %v6275
      %7017 = vmatprep.subr.bf16.mxu0 %v6278
      %7018 = vmatpush1.bf16.msra.mxu0 %v6277
      %7019 = vmatprep.subr.bf16.mxu0 %v6280
      %7020 = vmatpush1.bf16.msra.mxu0 %v6279
      %7021 = vmatprep.mubr.bf16.mxu0 %v4894
      %7022 = vmatmul.mubr.bf16.gmra.mrb[0].mxu0 %v4893
      %v7023 = vpop.f32.mrb[0].mxu0
      %v7024 = vadd.f32 %v6951, %v7023
      %v7025 = vpop.f32.mrb[0].mxu0
      %v7026 = vadd.f32 %v6953, %v7025
      %v7027 = vpop.f32.mrb[0].mxu0
      %v7028 = vadd.f32 %v6955, %v7027
      %v7029 = vpop.f32.mrb[0].mxu0
      %v7030 = vadd.f32 %v6957, %v7029
      %7031 = vmatprep.mubr.bf16.mxu0 %v4912
      %7032 = vmatmul.mubr.bf16.gmra.mrb[0].mxu0 %v4911
      %v7033 = vpop.f32.mrb[0].mxu0
      %v7034 = vadd.f32 %v6961, %v7033
      %v7035 = vpop.f32.mrb[0].mxu0
      %v7036 = vadd.f32 %v6963, %v7035
      %v7037 = vpop.f32.mrb[0].mxu0
      %v7038 = vadd.f32 %v6965, %v7037
      %v7039 = vpop.f32.mrb[0].mxu0
      %v7040 = vadd.f32 %v6967, %v7039
      %7041 = vmatprep.mubr.bf16.mxu0 %v4930
      %7042 = vmatmul.mubr.bf16.gmra.mrb[0].mxu0 %v4929
      %v7043 = vpop.f32.mrb[0].mxu0
      %v7044 = vadd.f32 %v6971, %v7043
      %v7045 = vpop.f32.mrb[0].mxu0
      %v7046 = vadd.f32 %v6973, %v7045
      %v7047 = vpop.f32.mrb[0].mxu0
      %v7048 = vadd.f32 %v6975, %v7047
      %v7049 = vpop.f32.mrb[0].mxu0
      %v7050 = vadd.f32 %v6977, %v7049
      %7051 = vmatprep.mubr.bf16.mxu0 %v4948
      %7052 = vmatmul.mubr.bf16.gmra.mrb[0].mxu0 %v4947
      %v7053 = vpop.f32.mrb[0].mxu0
      %v7054 = vadd.f32 %v6981, %v7053
      %v7055 = vpop.f32.mrb[0].mxu0
      %v7056 = vadd.f32 %v6983, %v7055
      %v7057 = vpop.f32.mrb[0].mxu0
      %v7058 = vadd.f32 %v6985, %v7057
      %v7059 = vpop.f32.mrb[0].mxu0
      %v7060 = vadd.f32 %v6987, %v7059
      %7061 = vdwg.mxu0
      %7062 = vmatprep.subr.bf16.mxu0 %v6282
      %7063 = vmatpush1.bf16.msra.mxu0 %v6281
      %7064 = vmatprep.subr.bf16.mxu0 %v6284
      %7065 = vmatpush1.bf16.msra.mxu0 %v6283
      %7066 = vmatprep.subr.bf16.mxu0 %v6286
      %7067 = vmatpush1.bf16.msra.mxu0 %v6285
      %7068 = vmatprep.subr.bf16.mxu0 %v6288
      %7069 = vmatpush1.bf16.msra.mxu0 %v6287
      %7070 = vmatprep.subr.bf16.mxu0 %v6290
      %7071 = vmatpush1.bf16.msra.mxu0 %v6289
      %7072 = vmatprep.subr.bf16.mxu0 %v6292
      %7073 = vmatpush1.bf16.msra.mxu0 %v6291
      %7074 = vmatprep.subr.bf16.mxu0 %v6294
      %7075 = vmatpush1.bf16.msra.mxu0 %v6293
      %7076 = vmatprep.subr.bf16.mxu0 %v6296
      %7077 = vmatpush1.bf16.msra.mxu0 %v6295
      %7078 = vmatprep.subr.bf16.mxu0 %v6298
      %7079 = vmatpush1.bf16.msra.mxu0 %v6297
      %7080 = vmatprep.subr.bf16.mxu0 %v6300
      %7081 = vmatpush1.bf16.msra.mxu0 %v6299
      %7082 = vmatprep.subr.bf16.mxu0 %v6302
      %7083 = vmatpush1.bf16.msra.mxu0 %v6301
      %7084 = vmatprep.subr.bf16.mxu0 %v6304
      %7085 = vmatpush1.bf16.msra.mxu0 %v6303
      %7086 = vmatprep.subr.bf16.mxu0 %v6306
      %7087 = vmatpush1.bf16.msra.mxu0 %v6305
      %7088 = vmatprep.subr.bf16.mxu0 %v6308
      %7089 = vmatpush1.bf16.msra.mxu0 %v6307
      %7090 = vmatprep.subr.bf16.mxu0 %v6310
      %7091 = vmatpush1.bf16.msra.mxu0 %v6309
      %7092 = vmatprep.subr.bf16.mxu0 %v6312
      %7093 = vmatpush1.bf16.msra.mxu0 %v6311
      %7094 = vmatprep.mubr.bf16.mxu0 %v4896
      %7095 = vmatmul.mubr.bf16.gmra.mrb[0].mxu0 %v4895
      %v7096 = vpop.f32.mrb[0].mxu0
      %v7097 = vadd.f32 %v7024, %v7096
      %v7098 = vpop.f32.mrb[0].mxu0
      %v7099 = vadd.f32 %v7026, %v7098
      %v7100 = vpop.f32.mrb[0].mxu0
      %v7101 = vadd.f32 %v7028, %v7100
      %v7102 = vpop.f32.mrb[0].mxu0
      %v7103 = vadd.f32 %v7030, %v7102
      %7104 = vmatprep.mubr.bf16.mxu0 %v4914
      %7105 = vmatmul.mubr.bf16.gmra.mrb[0].mxu0 %v4913
      %v7106 = vpop.f32.mrb[0].mxu0
      %v7107 = vadd.f32 %v7034, %v7106
      %v7108 = vpop.f32.mrb[0].mxu0
      %v7109 = vadd.f32 %v7036, %v7108
      %v7110 = vpop.f32.mrb[0].mxu0
      %v7111 = vadd.f32 %v7038, %v7110
      %v7112 = vpop.f32.mrb[0].mxu0
      %v7113 = vadd.f32 %v7040, %v7112
      %7114 = vmatprep.mubr.bf16.mxu0 %v4932
      %7115 = vmatmul.mubr.bf16.gmra.mrb[0].mxu0 %v4931
      %v7116 = vpop.f32.mrb[0].mxu0
      %v7117 = vadd.f32 %v7044, %v7116
      %v7118 = vpop.f32.mrb[0].mxu0
      %v7119 = vadd.f32 %v7046, %v7118
      %v7120 = vpop.f32.mrb[0].mxu0
      %v7121 = vadd.f32 %v7048, %v7120
      %v7122 = vpop.f32.mrb[0].mxu0
      %v7123 = vadd.f32 %v7050, %v7122
      %7124 = vmatprep.mubr.bf16.mxu0 %v4950
      %7125 = vmatmul.mubr.bf16.gmra.mrb[0].mxu0 %v4949
      %v7126 = vpop.f32.mrb[0].mxu0
      %v7127 = vadd.f32 %v7054, %v7126
      %v7128 = vpop.f32.mrb[0].mxu0
      %v7129 = vadd.f32 %v7056, %v7128
      %v7130 = vpop.f32.mrb[0].mxu0
      %v7131 = vadd.f32 %v7058, %v7130
      %v7132 = vpop.f32.mrb[0].mxu0
      %v7133 = vadd.f32 %v7060, %v7132
      %7134 = vdwg.mxu0
      %7135 = vmatprep.subr.bf16.mxu0 %v6314
      %7136 = vmatpush1.bf16.msra.mxu0 %v6313
      %7137 = vmatprep.subr.bf16.mxu0 %v6316
      %7138 = vmatpush1.bf16.msra.mxu0 %v6315
      %7139 = vmatprep.subr.bf16.mxu0 %v6318
      %7140 = vmatpush1.bf16.msra.mxu0 %v6317
      %7141 = vmatprep.subr.bf16.mxu0 %v6320
      %7142 = vmatpush1.bf16.msra.mxu0 %v6319
      %7143 = vmatprep.subr.bf16.mxu0 %v6322
      %7144 = vmatpush1.bf16.msra.mxu0 %v6321
      %7145 = vmatprep.subr.bf16.mxu0 %v6324
      %7146 = vmatpush1.bf16.msra.mxu0 %v6323
      %7147 = vmatprep.subr.bf16.mxu0 %v6326
      %7148 = vmatpush1.bf16.msra.mxu0 %v6325
      %7149 = vmatprep.subr.bf16.mxu0 %v6328
      %7150 = vmatpush1.bf16.msra.mxu0 %v6327
      %7151 = vmatprep.subr.bf16.mxu0 %v6330
      %7152 = vmatpush1.bf16.msra.mxu0 %v6329
      %7153 = vmatprep.subr.bf16.mxu0 %v6332
      %7154 = vmatpush1.bf16.msra.mxu0 %v6331
      %7155 = vmatprep.subr.bf16.mxu0 %v6334
      %7156 = vmatpush1.bf16.msra.mxu0 %v6333
      %7157 = vmatprep.subr.bf16.mxu0 %v6336
      %7158 = vmatpush1.bf16.msra.mxu0 %v6335
      %7159 = vmatprep.subr.bf16.mxu0 %v6338
      %7160 = vmatpush1.bf16.msra.mxu0 %v6337
      %7161 = vmatprep.subr.bf16.mxu0 %v6340
      %7162 = vmatpush1.bf16.msra.mxu0 %v6339
      %7163 = vmatprep.subr.bf16.mxu0 %v6342
      %7164 = vmatpush1.bf16.msra.mxu0 %v6341
      %7165 = vmatprep.subr.bf16.mxu0 %v6344
      %7166 = vmatpush1.bf16.msra.mxu0 %v6343
      %7167 = vmatprep.mubr.bf16.mxu0 %v4898
      %7168 = vmatmul.mubr.bf16.gmra.mrb[0].mxu0 %v4897
      %v7169 = vpop.f32.mrb[0].mxu0
      %v7170 = vadd.f32 %v7097, %v7169
      %v7171 = vpop.f32.mrb[0].mxu0
      %v7172 = vadd.f32 %v7099, %v7171
      %v7173 = vpop.f32.mrb[0].mxu0
      %v7174 = vadd.f32 %v7101, %v7173
      %v7175 = vpop.f32.mrb[0].mxu0
      %v7176 = vadd.f32 %v7103, %v7175
      %7177 = vmatprep.mubr.bf16.mxu0 %v4916
      %7178 = vmatmul.mubr.bf16.gmra.mrb[0].mxu0 %v4915
      %v7179 = vpop.f32.mrb[0].mxu0
      %v7180 = vadd.f32 %v7107, %v7179
      %v7181 = vpop.f32.mrb[0].mxu0
      %v7182 = vadd.f32 %v7109, %v7181
      %v7183 = vpop.f32.mrb[0].mxu0
      %v7184 = vadd.f32 %v7111, %v7183
      %v7185 = vpop.f32.mrb[0].mxu0
      %v7186 = vadd.f32 %v7113, %v7185
      %7187 = vmatprep.mubr.bf16.mxu0 %v4934
      %7188 = vmatmul.mubr.bf16.gmra.mrb[0].mxu0 %v4933
      %v7189 = vpop.f32.mrb[0].mxu0
      %v7190 = vadd.f32 %v7117, %v7189
      %v7191 = vpop.f32.mrb[0].mxu0
      %v7192 = vadd.f32 %v7119, %v7191
      %v7193 = vpop.f32.mrb[0].mxu0
      %v7194 = vadd.f32 %v7121, %v7193
      %v7195 = vpop.f32.mrb[0].mxu0
      %v7196 = vadd.f32 %v7123, %v7195
      %7197 = vmatprep.mubr.bf16.mxu0 %v4952
      %7198 = vmatmul.mubr.bf16.gmra.mrb[0].mxu0 %v4951
      %v7199 = vpop.f32.mrb[0].mxu0
      %v7200 = vadd.f32 %v7127, %v7199
      %v7201 = vpop.f32.mrb[0].mxu0
      %v7202 = vadd.f32 %v7129, %v7201
      %v7203 = vpop.f32.mrb[0].mxu0
      %v7204 = vadd.f32 %v7131, %v7203
      %v7205 = vpop.f32.mrb[0].mxu0
      %v7206 = vadd.f32 %v7133, %v7205
      %7207 = vdwg.mxu0
      %7208 = vmatprep.subr.bf16.mxu0 %v6346
      %7209 = vmatpush1.bf16.msra.mxu0 %v6345
      %7210 = vmatprep.subr.bf16.mxu0 %v6348
      %7211 = vmatpush1.bf16.msra.mxu0 %v6347
      %7212 = vmatprep.subr.bf16.mxu0 %v6350
      %7213 = vmatpush1.bf16.msra.mxu0 %v6349
      %7214 = vmatprep.subr.bf16.mxu0 %v6352
      %7215 = vmatpush1.bf16.msra.mxu0 %v6351
      %7216 = vmatprep.subr.bf16.mxu0 %v6354
      %7217 = vmatpush1.bf16.msra.mxu0 %v6353
      %7218 = vmatprep.subr.bf16.mxu0 %v6356
      %7219 = vmatpush1.bf16.msra.mxu0 %v6355
      %7220 = vmatprep.subr.bf16.mxu0 %v6358
      %7221 = vmatpush1.bf16.msra.mxu0 %v6357
      %7222 = vmatprep.subr.bf16.mxu0 %v6360
      %7223 = vmatpush1.bf16.msra.mxu0 %v6359
      %7224 = vmatprep.subr.bf16.mxu0 %v6362
      %7225 = vmatpush1.bf16.msra.mxu0 %v6361
      %7226 = vmatprep.subr.bf16.mxu0 %v6364
      %7227 = vmatpush1.bf16.msra.mxu0 %v6363
      %7228 = vmatprep.subr.bf16.mxu0 %v6366
      %7229 = vmatpush1.bf16.msra.mxu0 %v6365
      %7230 = vmatprep.subr.bf16.mxu0 %v6368
      %7231 = vmatpush1.bf16.msra.mxu0 %v6367
      %7232 = vmatprep.subr.bf16.mxu0 %v6370
      %7233 = vmatpush1.bf16.msra.mxu0 %v6369
      %7234 = vmatprep.subr.bf16.mxu0 %v6372
      %7235 = vmatpush1.bf16.msra.mxu0 %v6371
      %7236 = vmatprep.subr.bf16.mxu0 %v6374
      %7237 = vmatpush1.bf16.msra.mxu0 %v6373
      %7238 = vmatprep.subr.bf16.mxu0 %v6376
      %7239 = vmatpush1.bf16.msra.mxu0 %v6375
      %7240 = vmatprep.mubr.bf16.mxu0 %v4900
      %7241 = vmatmul.mubr.bf16.gmra.mrb[0].mxu0 %v4899
      %v7242 = vpop.f32.mrb[0].mxu0
      %v7243 = vadd.f32 %v7170, %v7242
      %v7244 = vpop.f32.mrb[0].mxu0
      %v7245 = vadd.f32 %v7172, %v7244
      %v7246 = vpop.f32.mrb[0].mxu0
      %v7247 = vadd.f32 %v7174, %v7246
      %v7248 = vpop.f32.mrb[0].mxu0
      %v7249 = vadd.f32 %v7176, %v7248
      %7250 = vmatprep.mubr.bf16.mxu0 %v4918
      %7251 = vmatmul.mubr.bf16.gmra.mrb[0].mxu0 %v4917
      %v7252 = vpop.f32.mrb[0].mxu0
      %v7253 = vadd.f32 %v7180, %v7252
      %v7254 = vpop.f32.mrb[0].mxu0
      %v7255 = vadd.f32 %v7182, %v7254
      %v7256 = vpop.f32.mrb[0].mxu0
      %v7257 = vadd.f32 %v7184, %v7256
      %v7258 = vpop.f32.mrb[0].mxu0
      %v7259 = vadd.f32 %v7186, %v7258
      %7260 = vmatprep.mubr.bf16.mxu0 %v4936
      %7261 = vmatmul.mubr.bf16.gmra.mrb[0].mxu0 %v4935
      %v7262 = vpop.f32.mrb[0].mxu0
      %v7263 = vadd.f32 %v7190, %v7262
      %v7264 = vpop.f32.mrb[0].mxu0
      %v7265 = vadd.f32 %v7192, %v7264
      %v7266 = vpop.f32.mrb[0].mxu0
      %v7267 = vadd.f32 %v7194, %v7266
      %v7268 = vpop.f32.mrb[0].mxu0
      %v7269 = vadd.f32 %v7196, %v7268
      %7270 = vmatprep.mubr.bf16.mxu0 %v4954
      %7271 = vmatmul.mubr.bf16.gmra.mrb[0].mxu0 %v4953
      %v7272 = vpop.f32.mrb[0].mxu0
      %v7273 = vadd.f32 %v7200, %v7272
      %v7274 = vpop.f32.mrb[0].mxu0
      %v7275 = vadd.f32 %v7202, %v7274
      %v7276 = vpop.f32.mrb[0].mxu0
      %v7277 = vadd.f32 %v7204, %v7276
      %v7278 = vpop.f32.mrb[0].mxu0
      %v7279 = vadd.f32 %v7206, %v7278
      %7280 = vdwg.mxu0
      %7281 = vmatprep.subr.bf16.mxu0 %v6378
      %7282 = vmatpush1.bf16.msra.mxu0 %v6377
      %7283 = vmatprep.subr.bf16.mxu0 %v6380
      %7284 = vmatpush1.bf16.msra.mxu0 %v6379
      %7285 = vmatprep.subr.bf16.mxu0 %v6382
      %7286 = vmatpush1.bf16.msra.mxu0 %v6381
      %7287 = vmatprep.subr.bf16.mxu0 %v6384
      %7288 = vmatpush1.bf16.msra.mxu0 %v6383
      %7289 = vmatprep.subr.bf16.mxu0 %v6386
      %7290 = vmatpush1.bf16.msra.mxu0 %v6385
      %7291 = vmatprep.subr.bf16.mxu0 %v6388
      %7292 = vmatpush1.bf16.msra.mxu0 %v6387
      %7293 = vmatprep.subr.bf16.mxu0 %v6390
      %7294 = vmatpush1.bf16.msra.mxu0 %v6389
      %7295 = vmatprep.subr.bf16.mxu0 %v6392
      %7296 = vmatpush1.bf16.msra.mxu0 %v6391
      %7297 = vmatprep.subr.bf16.mxu0 %v6394
      %7298 = vmatpush1.bf16.msra.mxu0 %v6393
      %7299 = vmatprep.subr.bf16.mxu0 %v6396
      %7300 = vmatpush1.bf16.msra.mxu0 %v6395
      %7301 = vmatprep.subr.bf16.mxu0 %v6398
      %7302 = vmatpush1.bf16.msra.mxu0 %v6397
      %7303 = vmatprep.subr.bf16.mxu0 %v6400
      %7304 = vmatpush1.bf16.msra.mxu0 %v6399
      %7305 = vmatprep.subr.bf16.mxu0 %v6402
      %7306 = vmatpush1.bf16.msra.mxu0 %v6401
      %7307 = vmatprep.subr.bf16.mxu0 %v6404
      %7308 = vmatpush1.bf16.msra.mxu0 %v6403
      %7309 = vmatprep.subr.bf16.mxu0 %v6406
      %7310 = vmatpush1.bf16.msra.mxu0 %v6405
      %7311 = vmatprep.subr.bf16.mxu0 %v6408
      %7312 = vmatpush1.bf16.msra.mxu0 %v6407
      %7313 = vmatprep.mubr.bf16.mxu0 %v4902
      %7314 = vmatmul.mubr.bf16.gmra.mrb[0].mxu0 %v4901
      %v7315 = vpop.f32.mrb[0].mxu0
      %v7316 = vadd.f32 %v7243, %v7315
      %v7317 = vpop.f32.mrb[0].mxu0
      %v7318 = vadd.f32 %v7245, %v7317
      %v7319 = vpop.f32.mrb[0].mxu0
      %v7320 = vadd.f32 %v7247, %v7319
      %v7321 = vpop.f32.mrb[0].mxu0
      %v7322 = vadd.f32 %v7249, %v7321
      %7323 = vmatprep.mubr.bf16.mxu0 %v4920
      %7324 = vmatmul.mubr.bf16.gmra.mrb[0].mxu0 %v4919
      %v7325 = vpop.f32.mrb[0].mxu0
      %v7326 = vadd.f32 %v7253, %v7325
      %v7327 = vpop.f32.mrb[0].mxu0
      %v7328 = vadd.f32 %v7255, %v7327
      %v7329 = vpop.f32.mrb[0].mxu0
      %v7330 = vadd.f32 %v7257, %v7329
      %v7331 = vpop.f32.mrb[0].mxu0
      %v7332 = vadd.f32 %v7259, %v7331
      %7333 = vmatprep.mubr.bf16.mxu0 %v4938
      %7334 = vmatmul.mubr.bf16.gmra.mrb[0].mxu0 %v4937
      %v7335 = vpop.f32.mrb[0].mxu0
      %v7336 = vadd.f32 %v7263, %v7335
      %v7337 = vpop.f32.mrb[0].mxu0
      %v7338 = vadd.f32 %v7265, %v7337
      %v7339 = vpop.f32.mrb[0].mxu0
      %v7340 = vadd.f32 %v7267, %v7339
      %v7341 = vpop.f32.mrb[0].mxu0
      %v7342 = vadd.f32 %v7269, %v7341
      %7343 = vmatprep.mubr.bf16.mxu0 %v4956
      %7344 = vmatmul.mubr.bf16.gmra.mrb[0].mxu0 %v4955
      %v7345 = vpop.f32.mrb[0].mxu0
      %v7346 = vadd.f32 %v7273, %v7345
      %v7347 = vpop.f32.mrb[0].mxu0
      %v7348 = vadd.f32 %v7275, %v7347
      %v7349 = vpop.f32.mrb[0].mxu0
      %v7350 = vadd.f32 %v7277, %v7349
      %v7351 = vpop.f32.mrb[0].mxu0
      %v7352 = vadd.f32 %v7279, %v7351
      %7353 = vdwg.mxu0
      %v7354 = vmax.f32 %v7316, 0.0
      %v7355 = vmax.f32 %v7318, 0.0
      %v7356 = vmax.f32 %v7320, 0.0
      %v7357 = vmax.f32 %v7322, 0.0
      %v7358 = vmax.f32 %v7326, 0.0
      %v7359 = vmax.f32 %v7328, 0.0
      %v7360 = vmax.f32 %v7330, 0.0
      %v7361 = vmax.f32 %v7332, 0.0
      %v7362 = vmax.f32 %v7336, 0.0
      %v7363 = vmax.f32 %v7338, 0.0
      %v7364 = vmax.f32 %v7340, 0.0
      %v7365 = vmax.f32 %v7342, 0.0
      %v7366 = vmax.f32 %v7346, 0.0
      %v7367 = vmax.f32 %v7348, 0.0
      %v7368 = vmax.f32 %v7350, 0.0
      %v7369 = vmax.f32 %v7352, 0.0
      %s7370 = scalar_lea.vmem [#allocation6], 48
      %7371 = vst [vmem:[%s7370 + $0x10] sm:$0xff] %v7354
      %7372 = vst [vmem:[%s7370 + $0x18] sm:$0xff] %v7355
      %7373 = vst [vmem:[%s7370 + $0x40] sm:$0xff] %v7356
      %7374 = vst [vmem:[%s7370 + $0x48] sm:$0xff] %v7357
      %7375 = vst [vmem:[%s7370 + $0x70] sm:$0xff] %v7358
      %7376 = vst [vmem:[%s7370 + $0x78] sm:$0xff] %v7359
      %7377 = vst [vmem:[%s7370 + $0xa0] sm:$0xff] %v7360
      %7378 = vst [vmem:[%s7370 + $0xa8] sm:$0xff] %v7361
      %7379 = vst [vmem:[%s7370 + $0xd0] sm:$0xff] %v7362
      %7380 = vst [vmem:[%s7370 + $0xd8] sm:$0xff] %v7363
      %7381 = vst [vmem:[%s7370 + $0x100] sm:$0xff] %v7364
      %7382 = vst [vmem:[%s7370 + $0x108] sm:$0xff] %v7365
      %7383 = vst [vmem:[%s7370 + $0x130] sm:$0xff] %v7366
      %7384 = vst [vmem:[%s7370 + $0x138] sm:$0xff] %v7367
      %7385 = vst [vmem:[%s7370 + $0x160] sm:$0xff] %v7368
      %7386 = vst [vmem:[%s7370 + $0x168] sm:$0xff] %v7369
      %v7387 = vld [vmem:[#allocation6] sm:$0x80]
      %v7388 = vld [vmem:[#allocation6 + $0x8] sm:$0x80]
      %v7389 = vld [vmem:[#allocation6 + $0x10] sm:$0x7f]
      %v7390 = vld [vmem:[#allocation6 + $0x18] sm:$0x7f]
      %v7391 = vld [vmem:[#allocation6 + $0x30] sm:$0x80]
      %v7392 = vld [vmem:[#allocation6 + $0x38] sm:$0x80]
      %v7393 = vld [vmem:[#allocation6 + $0x40] sm:$0x7f]
      %v7394 = vld [vmem:[#allocation6 + $0x48] sm:$0x7f]
      %v7395 = vld [vmem:[#allocation6 + $0x60] sm:$0x80]
      %v7396 = vld [vmem:[#allocation6 + $0x68] sm:$0x80]
      %v7397 = vld [vmem:[#allocation6 + $0x70] sm:$0x7f]
      %v7398 = vld [vmem:[#allocation6 + $0x78] sm:$0x7f]
      %v7399 = vld [vmem:[#allocation6 + $0x90] sm:$0x80]
      %v7400 = vld [vmem:[#allocation6 + $0x98] sm:$0x80]
      %v7401 = vld [vmem:[#allocation6 + $0xa0] sm:$0x7f]
      %v7402 = vld [vmem:[#allocation6 + $0xa8] sm:$0x7f]
      %v7403 = vld [vmem:[#allocation6 + $0xc0] sm:$0x80]
      %v7404 = vld [vmem:[#allocation6 + $0xc8] sm:$0x80]
      %v7405 = vld [vmem:[#allocation6 + $0xd0] sm:$0x7f]
      %v7406 = vld [vmem:[#allocation6 + $0xd8] sm:$0x7f]
      %v7407 = vld [vmem:[#allocation6 + $0xf0] sm:$0x80]
      %v7408 = vld [vmem:[#allocation6 + $0xf8] sm:$0x80]
      %v7409 = vld [vmem:[#allocation6 + $0x100] sm:$0x7f]
      %v7410 = vld [vmem:[#allocation6 + $0x108] sm:$0x7f]
      %v7411 = vld [vmem:[#allocation6 + $0x120] sm:$0x80]
      %v7412 = vld [vmem:[#allocation6 + $0x128] sm:$0x80]
      %v7413 = vld [vmem:[#allocation6 + $0x130] sm:$0x7f]
      %v7414 = vld [vmem:[#allocation6 + $0x138] sm:$0x7f]
      %v7415 = vld [vmem:[#allocation6 + $0x150] sm:$0x80]
      %v7416 = vld [vmem:[#allocation6 + $0x158] sm:$0x80]
      %v7417 = vld [vmem:[#allocation6 + $0x160] sm:$0x7f]
      %v7418 = vld [vmem:[#allocation6 + $0x168] sm:$0x7f]
      %v7451 = vrot.slane %v7387, 7
      %v7452 = vrot.slane %v7389, 7
      %v7453 = vsel %vm4130, %v7451, %v7452
      %v7454 = vrot.slane %v7388, 7
      %v7455 = vrot.slane %v7390, 7
      %v7456 = vsel %vm4130, %v7454, %v7455
      %v7457 = vrot.slane %v7391, 7
      %v7458 = vrot.slane %v7393, 7
      %v7459 = vsel %vm4130, %v7457, %v7458
      %v7460 = vrot.slane %v7392, 7
      %v7461 = vrot.slane %v7394, 7
      %v7462 = vsel %vm4130, %v7460, %v7461
      %v7463 = vrot.slane %v7395, 7
      %v7464 = vrot.slane %v7397, 7
      %v7465 = vsel %vm4130, %v7463, %v7464
      %v7466 = vrot.slane %v7396, 7
      %v7467 = vrot.slane %v7398, 7
      %v7468 = vsel %vm4130, %v7466, %v7467
      %v7469 = vrot.slane %v7399, 7
      %v7470 = vrot.slane %v7401, 7
      %v7471 = vsel %vm4130, %v7469, %v7470
      %v7472 = vrot.slane %v7400, 7
      %v7473 = vrot.slane %v7402, 7
      %v7474 = vsel %vm4130, %v7472, %v7473
      %v7475 = vrot.slane %v7403, 7
      %v7476 = vrot.slane %v7405, 7
      %v7477 = vsel %vm4130, %v7475, %v7476
      %v7478 = vrot.slane %v7404, 7
      %v7479 = vrot.slane %v7406, 7
      %v7480 = vsel %vm4130, %v7478, %v7479
      %v7481 = vrot.slane %v7407, 7
      %v7482 = vrot.slane %v7409, 7
      %v7483 = vsel %vm4130, %v7481, %v7482
      %v7484 = vrot.slane %v7408, 7
      %v7485 = vrot.slane %v7410, 7
      %v7486 = vsel %vm4130, %v7484, %v7485
      %v7487 = vrot.slane %v7411, 7
      %v7488 = vrot.slane %v7413, 7
      %v7489 = vsel %vm4130, %v7487, %v7488
      %v7490 = vrot.slane %v7412, 7
      %v7491 = vrot.slane %v7414, 7
      %v7492 = vsel %vm4130, %v7490, %v7491
      %v7493 = vrot.slane %v7415, 7
      %v7494 = vrot.slane %v7417, 7
      %v7495 = vsel %vm4130, %v7493, %v7494
      %v7496 = vrot.slane %v7416, 7
      %v7497 = vrot.slane %v7418, 7
      %v7498 = vsel %vm4130, %v7496, %v7497
      %v7515 = vld [vmem:[#allocation6 + $0x10] sm:$0xff]
      %v7516 = vld [vmem:[#allocation6 + $0x18] sm:$0xff]
      %v7517 = vld [vmem:[#allocation6 + $0x40] sm:$0xff]
      %v7518 = vld [vmem:[#allocation6 + $0x48] sm:$0xff]
      %v7519 = vld [vmem:[#allocation6 + $0x70] sm:$0xff]
      %v7520 = vld [vmem:[#allocation6 + $0x78] sm:$0xff]
      %v7521 = vld [vmem:[#allocation6 + $0xa0] sm:$0xff]
      %v7522 = vld [vmem:[#allocation6 + $0xa8] sm:$0xff]
      %v7523 = vld [vmem:[#allocation6 + $0xd0] sm:$0xff]
      %v7524 = vld [vmem:[#allocation6 + $0xd8] sm:$0xff]
      %v7525 = vld [vmem:[#allocation6 + $0x100] sm:$0xff]
      %v7526 = vld [vmem:[#allocation6 + $0x108] sm:$0xff]
      %v7527 = vld [vmem:[#allocation6 + $0x130] sm:$0xff]
      %v7528 = vld [vmem:[#allocation6 + $0x138] sm:$0xff]
      %v7529 = vld [vmem:[#allocation6 + $0x160] sm:$0xff]
      %v7530 = vld [vmem:[#allocation6 + $0x168] sm:$0xff]
      %v7531 = vld [vmem:[#allocation6 + $0x10] sm:$0xfe]
      %v7532 = vld [vmem:[#allocation6 + $0x18] sm:$0xfe]
      %v7533 = vld [vmem:[#allocation6 + $0x20] sm:$0x1]
      %v7534 = vld [vmem:[#allocation6 + $0x28] sm:$0x1]
      %v7535 = vld [vmem:[#allocation6 + $0x40] sm:$0xfe]
      %v7536 = vld [vmem:[#allocation6 + $0x48] sm:$0xfe]
      %v7537 = vld [vmem:[#allocation6 + $0x50] sm:$0x1]
      %v7538 = vld [vmem:[#allocation6 + $0x58] sm:$0x1]
      %v7539 = vld [vmem:[#allocation6 + $0x70] sm:$0xfe]
      %v7540 = vld [vmem:[#allocation6 + $0x78] sm:$0xfe]
      %v7541 = vld [vmem:[#allocation6 + $0x80] sm:$0x1]
      %v7542 = vld [vmem:[#allocation6 + $0x88] sm:$0x1]
      %v7543 = vld [vmem:[#allocation6 + $0xa0] sm:$0xfe]
      %v7544 = vld [vmem:[#allocation6 + $0xa8] sm:$0xfe]
      %v7545 = vld [vmem:[#allocation6 + $0xb0] sm:$0x1]
      %v7546 = vld [vmem:[#allocation6 + $0xb8] sm:$0x1]
      %v7547 = vld [vmem:[#allocation6 + $0xd0] sm:$0xfe]
      %v7548 = vld [vmem:[#allocation6 + $0xd8] sm:$0xfe]
      %v7549 = vld [vmem:[#allocation6 + $0xe0] sm:$0x1]
      %v7550 = vld [vmem:[#allocation6 + $0xe8] sm:$0x1]
      %v7551 = vld [vmem:[#allocation6 + $0x100] sm:$0xfe]
      %v7552 = vld [vmem:[#allocation6 + $0x108] sm:$0xfe]
      %v7553 = vld [vmem:[#allocation6 + $0x110] sm:$0x1]
      %v7554 = vld [vmem:[#allocation6 + $0x118] sm:$0x1]
      %v7555 = vld [vmem:[#allocation6 + $0x130] sm:$0xfe]
      %v7556 = vld [vmem:[#allocation6 + $0x138] sm:$0xfe]
      %v7557 = vld [vmem:[#allocation6 + $0x140] sm:$0x1]
      %v7558 = vld [vmem:[#allocation6 + $0x148] sm:$0x1]
      %v7559 = vld [vmem:[#allocation6 + $0x160] sm:$0xfe]
      %v7560 = vld [vmem:[#allocation6 + $0x168] sm:$0xfe]
      %v7561 = vld [vmem:[#allocation6 + $0x170] sm:$0x1]
      %v7562 = vld [vmem:[#allocation6 + $0x178] sm:$0x1]
      %v7595 = vrot.slane %v7531, 1
      %v7596 = vrot.slane %v7533, 1
      %v7597 = vsel %vm4275, %v7595, %v7596
      %v7598 = vrot.slane %v7532, 1
      %v7599 = vrot.slane %v7534, 1
      %v7600 = vsel %vm4275, %v7598, %v7599
      %v7601 = vrot.slane %v7535, 1
      %v7602 = vrot.slane %v7537, 1
      %v7603 = vsel %vm4275, %v7601, %v7602
      %v7604 = vrot.slane %v7536, 1
      %v7605 = vrot.slane %v7538, 1
      %v7606 = vsel %vm4275, %v7604, %v7605
      %v7607 = vrot.slane %v7539, 1
      %v7608 = vrot.slane %v7541, 1
      %v7609 = vsel %vm4275, %v7607, %v7608
      %v7610 = vrot.slane %v7540, 1
      %v7611 = vrot.slane %v7542, 1
      %v7612 = vsel %vm4275, %v7610, %v7611
      %v7613 = vrot.slane %v7543, 1
      %v7614 = vrot.slane %v7545, 1
      %v7615 = vsel %vm4275, %v7613, %v7614
      %v7616 = vrot.slane %v7544, 1
      %v7617 = vrot.slane %v7546, 1
      %v7618 = vsel %vm4275, %v7616, %v7617
      %v7619 = vrot.slane %v7547, 1
      %v7620 = vrot.slane %v7549, 1
      %v7621 = vsel %vm4275, %v7619, %v7620
      %v7622 = vrot.slane %v7548, 1
      %v7623 = vrot.slane %v7550, 1
      %v7624 = vsel %vm4275, %v7622, %v7623
      %v7625 = vrot.slane %v7551, 1
      %v7626 = vrot.slane %v7553, 1
      %v7627 = vsel %vm4275, %v7625, %v7626
      %v7628 = vrot.slane %v7552, 1
      %v7629 = vrot.slane %v7554, 1
      %v7630 = vsel %vm4275, %v7628, %v7629
      %v7631 = vrot.slane %v7555, 1
      %v7632 = vrot.slane %v7557, 1
      %v7633 = vsel %vm4275, %v7631, %v7632
      %v7634 = vrot.slane %v7556, 1
      %v7635 = vrot.slane %v7558, 1
      %v7636 = vsel %vm4275, %v7634, %v7635
      %v7637 = vrot.slane %v7559, 1
      %v7638 = vrot.slane %v7561, 1
      %v7639 = vsel %vm4275, %v7637, %v7638
      %v7640 = vrot.slane %v7560, 1
      %v7641 = vrot.slane %v7562, 1
      %v7642 = vsel %vm4275, %v7640, %v7641
      %v7659 = vld [vmem:[%s7370] sm:$0x80]
      %v7660 = vld [vmem:[%s7370 + $0x8] sm:$0x80]
      %v7661 = vld [vmem:[%s7370 + $0x10] sm:$0x7f]
      %v7662 = vld [vmem:[%s7370 + $0x18] sm:$0x7f]
      %v7663 = vld [vmem:[%s7370 + $0x30] sm:$0x80]
      %v7664 = vld [vmem:[%s7370 + $0x38] sm:$0x80]
      %v7665 = vld [vmem:[%s7370 + $0x40] sm:$0x7f]
      %v7666 = vld [vmem:[%s7370 + $0x48] sm:$0x7f]
      %v7667 = vld [vmem:[%s7370 + $0x60] sm:$0x80]
      %v7668 = vld [vmem:[%s7370 + $0x68] sm:$0x80]
      %v7669 = vld [vmem:[%s7370 + $0x70] sm:$0x7f]
      %v7670 = vld [vmem:[%s7370 + $0x78] sm:$0x7f]
      %v7671 = vld [vmem:[%s7370 + $0x90] sm:$0x80]
      %v7672 = vld [vmem:[%s7370 + $0x98] sm:$0x80]
      %v7673 = vld [vmem:[%s7370 + $0xa0] sm:$0x7f]
      %v7674 = vld [vmem:[%s7370 + $0xa8] sm:$0x7f]
      %v7675 = vld [vmem:[%s7370 + $0xc0] sm:$0x80]
      %v7676 = vld [vmem:[%s7370 + $0xc8] sm:$0x80]
      %v7677 = vld [vmem:[%s7370 + $0xd0] sm:$0x7f]
      %v7678 = vld [vmem:[%s7370 + $0xd8] sm:$0x7f]
      %v7679 = vld [vmem:[%s7370 + $0xf0] sm:$0x80]
      %v7680 = vld [vmem:[%s7370 + $0xf8] sm:$0x80]
      %v7681 = vld [vmem:[%s7370 + $0x100] sm:$0x7f]
      %v7682 = vld [vmem:[%s7370 + $0x108] sm:$0x7f]
      %v7683 = vld [vmem:[%s7370 + $0x120] sm:$0x80]
      %v7684 = vld [vmem:[%s7370 + $0x128] sm:$0x80]
      %v7685 = vld [vmem:[%s7370 + $0x130] sm:$0x7f]
      %v7686 = vld [vmem:[%s7370 + $0x138] sm:$0x7f]
      %v7687 = vld [vmem:[%s7370 + $0x150] sm:$0x80]
      %v7688 = vld [vmem:[%s7370 + $0x158] sm:$0x80]
      %v7689 = vld [vmem:[%s7370 + $0x160] sm:$0x7f]
      %v7690 = vld [vmem:[%s7370 + $0x168] sm:$0x7f]
      %v7723 = vrot.slane %v7659, 7
      %v7724 = vrot.slane %v7661, 7
      %v7725 = vsel %vm4130, %v7723, %v7724
      %v7726 = vrot.slane %v7660, 7
      %v7727 = vrot.slane %v7662, 7
      %v7728 = vsel %vm4130, %v7726, %v7727
      %v7729 = vrot.slane %v7663, 7
      %v7730 = vrot.slane %v7665, 7
      %v7731 = vsel %vm4130, %v7729, %v7730
      %v7732 = vrot.slane %v7664, 7
      %v7733 = vrot.slane %v7666, 7
      %v7734 = vsel %vm4130, %v7732, %v7733
      %v7735 = vrot.slane %v7667, 7
      %v7736 = vrot.slane %v7669, 7
      %v7737 = vsel %vm4130, %v7735, %v7736
      %v7738 = vrot.slane %v7668, 7
      %v7739 = vrot.slane %v7670, 7
      %v7740 = vsel %vm4130, %v7738, %v7739
      %v7741 = vrot.slane %v7671, 7
      %v7742 = vrot.slane %v7673, 7
      %v7743 = vsel %vm4130, %v7741, %v7742
      %v7744 = vrot.slane %v7672, 7
      %v7745 = vrot.slane %v7674, 7
      %v7746 = vsel %vm4130, %v7744, %v7745
      %v7747 = vrot.slane %v7675, 7
      %v7748 = vrot.slane %v7677, 7
      %v7749 = vsel %vm4130, %v7747, %v7748
      %v7750 = vrot.slane %v7676, 7
      %v7751 = vrot.slane %v7678, 7
      %v7752 = vsel %vm4130, %v7750, %v7751
      %v7753 = vrot.slane %v7679, 7
      %v7754 = vrot.slane %v7681, 7
      %v7755 = vsel %vm4130, %v7753, %v7754
      %v7756 = vrot.slane %v7680, 7
      %v7757 = vrot.slane %v7682, 7
      %v7758 = vsel %vm4130, %v7756, %v7757
      %v7759 = vrot.slane %v7683, 7
      %v7760 = vrot.slane %v7685, 7
      %v7761 = vsel %vm4130, %v7759, %v7760
      %v7762 = vrot.slane %v7684, 7
      %v7763 = vrot.slane %v7686, 7
      %v7764 = vsel %vm4130, %v7762, %v7763
      %v7765 = vrot.slane %v7687, 7
      %v7766 = vrot.slane %v7689, 7
      %v7767 = vsel %vm4130, %v7765, %v7766
      %v7768 = vrot.slane %v7688, 7
      %v7769 = vrot.slane %v7690, 7
      %v7770 = vsel %vm4130, %v7768, %v7769
      %v7787 = vld [vmem:[%s7370 + $0x10] sm:$0xff]
      %v7788 = vld [vmem:[%s7370 + $0x18] sm:$0xff]
      %v7789 = vld [vmem:[%s7370 + $0x40] sm:$0xff]
      %v7790 = vld [vmem:[%s7370 + $0x48] sm:$0xff]
      %v7791 = vld [vmem:[%s7370 + $0x70] sm:$0xff]
      %v7792 = vld [vmem:[%s7370 + $0x78] sm:$0xff]
      %v7793 = vld [vmem:[%s7370 + $0xa0] sm:$0xff]
      %v7794 = vld [vmem:[%s7370 + $0xa8] sm:$0xff]
      %v7795 = vld [vmem:[%s7370 + $0xd0] sm:$0xff]
      %v7796 = vld [vmem:[%s7370 + $0xd8] sm:$0xff]
      %v7797 = vld [vmem:[%s7370 + $0x100] sm:$0xff]
      %v7798 = vld [vmem:[%s7370 + $0x108] sm:$0xff]
      %v7799 = vld [vmem:[%s7370 + $0x130] sm:$0xff]
      %v7800 = vld [vmem:[%s7370 + $0x138] sm:$0xff]
      %v7801 = vld [vmem:[%s7370 + $0x160] sm:$0xff]
      %v7802 = vld [vmem:[%s7370 + $0x168] sm:$0xff]
      %v7803 = vld [vmem:[%s7370 + $0x10] sm:$0xfe]
      %v7804 = vld [vmem:[%s7370 + $0x18] sm:$0xfe]
      %v7805 = vld [vmem:[%s7370 + $0x20] sm:$0x1]
      %v7806 = vld [vmem:[%s7370 + $0x28] sm:$0x1]
      %v7807 = vld [vmem:[%s7370 + $0x40] sm:$0xfe]
      %v7808 = vld [vmem:[%s7370 + $0x48] sm:$0xfe]
      %v7809 = vld [vmem:[%s7370 + $0x50] sm:$0x1]
      %v7810 = vld [vmem:[%s7370 + $0x58] sm:$0x1]
      %v7811 = vld [vmem:[%s7370 + $0x70] sm:$0xfe]
      %v7812 = vld [vmem:[%s7370 + $0x78] sm:$0xfe]
      %v7813 = vld [vmem:[%s7370 + $0x80] sm:$0x1]
      %v7814 = vld [vmem:[%s7370 + $0x88] sm:$0x1]
      %v7815 = vld [vmem:[%s7370 + $0xa0] sm:$0xfe]
      %v7816 = vld [vmem:[%s7370 + $0xa8] sm:$0xfe]
      %v7817 = vld [vmem:[%s7370 + $0xb0] sm:$0x1]
      %v7818 = vld [vmem:[%s7370 + $0xb8] sm:$0x1]
      %v7819 = vld [vmem:[%s7370 + $0xd0] sm:$0xfe]
      %v7820 = vld [vmem:[%s7370 + $0xd8] sm:$0xfe]
      %v7821 = vld [vmem:[%s7370 + $0xe0] sm:$0x1]
      %v7822 = vld [vmem:[%s7370 + $0xe8] sm:$0x1]
      %v7823 = vld [vmem:[%s7370 + $0x100] sm:$0xfe]
      %v7824 = vld [vmem:[%s7370 + $0x108] sm:$0xfe]
      %v7825 = vld [vmem:[%s7370 + $0x110] sm:$0x1]
      %v7826 = vld [vmem:[%s7370 + $0x118] sm:$0x1]
      %v7827 = vld [vmem:[%s7370 + $0x130] sm:$0xfe]
      %v7828 = vld [vmem:[%s7370 + $0x138] sm:$0xfe]
      %v7829 = vld [vmem:[%s7370 + $0x140] sm:$0x1]
      %v7830 = vld [vmem:[%s7370 + $0x148] sm:$0x1]
      %v7831 = vld [vmem:[%s7370 + $0x160] sm:$0xfe]
      %v7832 = vld [vmem:[%s7370 + $0x168] sm:$0xfe]
      %v7833 = vld [vmem:[%s7370 + $0x170] sm:$0x1]
      %v7834 = vld [vmem:[%s7370 + $0x178] sm:$0x1]
      %v7867 = vrot.slane %v7803, 1
      %v7868 = vrot.slane %v7805, 1
      %v7869 = vsel %vm4275, %v7867, %v7868
      %v7870 = vrot.slane %v7804, 1
      %v7871 = vrot.slane %v7806, 1
      %v7872 = vsel %vm4275, %v7870, %v7871
      %v7873 = vrot.slane %v7807, 1
      %v7874 = vrot.slane %v7809, 1
      %v7875 = vsel %vm4275, %v7873, %v7874
      %v7876 = vrot.slane %v7808, 1
      %v7877 = vrot.slane %v7810, 1
      %v7878 = vsel %vm4275, %v7876, %v7877
      %v7879 = vrot.slane %v7811, 1
      %v7880 = vrot.slane %v7813, 1
      %v7881 = vsel %vm4275, %v7879, %v7880
      %v7882 = vrot.slane %v7812, 1
      %v7883 = vrot.slane %v7814, 1
      %v7884 = vsel %vm4275, %v7882, %v7883
      %v7885 = vrot.slane %v7815, 1
      %v7886 = vrot.slane %v7817, 1
      %v7887 = vsel %vm4275, %v7885, %v7886
      %v7888 = vrot.slane %v7816, 1
      %v7889 = vrot.slane %v7818, 1
      %v7890 = vsel %vm4275, %v7888, %v7889
      %v7891 = vrot.slane %v7819, 1
      %v7892 = vrot.slane %v7821, 1
      %v7893 = vsel %vm4275, %v7891, %v7892
      %v7894 = vrot.slane %v7820, 1
      %v7895 = vrot.slane %v7822, 1
      %v7896 = vsel %vm4275, %v7894, %v7895
      %v7897 = vrot.slane %v7823, 1
      %v7898 = vrot.slane %v7825, 1
      %v7899 = vsel %vm4275, %v7897, %v7898
      %v7900 = vrot.slane %v7824, 1
      %v7901 = vrot.slane %v7826, 1
      %v7902 = vsel %vm4275, %v7900, %v7901
      %v7903 = vrot.slane %v7827, 1
      %v7904 = vrot.slane %v7829, 1
      %v7905 = vsel %vm4275, %v7903, %v7904
      %v7906 = vrot.slane %v7828, 1
      %v7907 = vrot.slane %v7830, 1
      %v7908 = vsel %vm4275, %v7906, %v7907
      %v7909 = vrot.slane %v7831, 1
      %v7910 = vrot.slane %v7833, 1
      %v7911 = vsel %vm4275, %v7909, %v7910
      %v7912 = vrot.slane %v7832, 1
      %v7913 = vrot.slane %v7834, 1
      %v7914 = vsel %vm4275, %v7912, %v7913
      %s7931 = scalar_lea.vmem [#allocation6], 96
      %v7932 = vld [vmem:[%s7931] sm:$0x80]
      %v7933 = vld [vmem:[%s7931 + $0x8] sm:$0x80]
      %v7934 = vld [vmem:[%s7931 + $0x10] sm:$0x7f]
      %v7935 = vld [vmem:[%s7931 + $0x18] sm:$0x7f]
      %v7936 = vld [vmem:[%s7931 + $0x30] sm:$0x80]
      %v7937 = vld [vmem:[%s7931 + $0x38] sm:$0x80]
      %v7938 = vld [vmem:[%s7931 + $0x40] sm:$0x7f]
      %v7939 = vld [vmem:[%s7931 + $0x48] sm:$0x7f]
      %v7940 = vld [vmem:[%s7931 + $0x60] sm:$0x80]
      %v7941 = vld [vmem:[%s7931 + $0x68] sm:$0x80]
      %v7942 = vld [vmem:[%s7931 + $0x70] sm:$0x7f]
      %v7943 = vld [vmem:[%s7931 + $0x78] sm:$0x7f]
      %v7944 = vld [vmem:[%s7931 + $0x90] sm:$0x80]
      %v7945 = vld [vmem:[%s7931 + $0x98] sm:$0x80]
      %v7946 = vld [vmem:[%s7931 + $0xa0] sm:$0x7f]
      %v7947 = vld [vmem:[%s7931 + $0xa8] sm:$0x7f]
      %v7948 = vld [vmem:[%s7931 + $0xc0] sm:$0x80]
      %v7949 = vld [vmem:[%s7931 + $0xc8] sm:$0x80]
      %v7950 = vld [vmem:[%s7931 + $0xd0] sm:$0x7f]
      %v7951 = vld [vmem:[%s7931 + $0xd8] sm:$0x7f]
      %v7952 = vld [vmem:[%s7931 + $0xf0] sm:$0x80]
      %v7953 = vld [vmem:[%s7931 + $0xf8] sm:$0x80]
      %v7954 = vld [vmem:[%s7931 + $0x100] sm:$0x7f]
      %v7955 = vld [vmem:[%s7931 + $0x108] sm:$0x7f]
      %v7956 = vld [vmem:[%s7931 + $0x120] sm:$0x80]
      %v7957 = vld [vmem:[%s7931 + $0x128] sm:$0x80]
      %v7958 = vld [vmem:[%s7931 + $0x130] sm:$0x7f]
      %v7959 = vld [vmem:[%s7931 + $0x138] sm:$0x7f]
      %v7960 = vld [vmem:[%s7931 + $0x150] sm:$0x80]
      %v7961 = vld [vmem:[%s7931 + $0x158] sm:$0x80]
      %v7962 = vld [vmem:[%s7931 + $0x160] sm:$0x7f]
      %v7963 = vld [vmem:[%s7931 + $0x168] sm:$0x7f]
      %v7996 = vrot.slane %v7932, 7
      %v7997 = vrot.slane %v7934, 7
      %v7998 = vsel %vm4130, %v7996, %v7997
      %v7999 = vrot.slane %v7933, 7
      %v8000 = vrot.slane %v7935, 7
      %v8001 = vsel %vm4130, %v7999, %v8000
      %v8002 = vrot.slane %v7936, 7
      %v8003 = vrot.slane %v7938, 7
      %v8004 = vsel %vm4130, %v8002, %v8003
      %v8005 = vrot.slane %v7937, 7
      %v8006 = vrot.slane %v7939, 7
      %v8007 = vsel %vm4130, %v8005, %v8006
      %v8008 = vrot.slane %v7940, 7
      %v8009 = vrot.slane %v7942, 7
      %v8010 = vsel %vm4130, %v8008, %v8009
      %v8011 = vrot.slane %v7941, 7
      %v8012 = vrot.slane %v7943, 7
      %v8013 = vsel %vm4130, %v8011, %v8012
      %v8014 = vrot.slane %v7944, 7
      %v8015 = vrot.slane %v7946, 7
      %v8016 = vsel %vm4130, %v8014, %v8015
      %v8017 = vrot.slane %v7945, 7
      %v8018 = vrot.slane %v7947, 7
      %v8019 = vsel %vm4130, %v8017, %v8018
      %v8020 = vrot.slane %v7948, 7
      %v8021 = vrot.slane %v7950, 7
      %v8022 = vsel %vm4130, %v8020, %v8021
      %v8023 = vrot.slane %v7949, 7
      %v8024 = vrot.slane %v7951, 7
      %v8025 = vsel %vm4130, %v8023, %v8024
      %v8026 = vrot.slane %v7952, 7
      %v8027 = vrot.slane %v7954, 7
      %v8028 = vsel %vm4130, %v8026, %v8027
      %v8029 = vrot.slane %v7953, 7
      %v8030 = vrot.slane %v7955, 7
      %v8031 = vsel %vm4130, %v8029, %v8030
      %v8032 = vrot.slane %v7956, 7
      %v8033 = vrot.slane %v7958, 7
      %v8034 = vsel %vm4130, %v8032, %v8033
      %v8035 = vrot.slane %v7957, 7
      %v8036 = vrot.slane %v7959, 7
      %v8037 = vsel %vm4130, %v8035, %v8036
      %v8038 = vrot.slane %v7960, 7
      %v8039 = vrot.slane %v7962, 7
      %v8040 = vsel %vm4130, %v8038, %v8039
      %v8041 = vrot.slane %v7961, 7
      %v8042 = vrot.slane %v7963, 7
      %v8043 = vsel %vm4130, %v8041, %v8042
      %v8060 = vld [vmem:[%s7931 + $0x10] sm:$0xff]
      %v8061 = vld [vmem:[%s7931 + $0x18] sm:$0xff]
      %v8062 = vld [vmem:[%s7931 + $0x40] sm:$0xff]
      %v8063 = vld [vmem:[%s7931 + $0x48] sm:$0xff]
      %v8064 = vld [vmem:[%s7931 + $0x70] sm:$0xff]
      %v8065 = vld [vmem:[%s7931 + $0x78] sm:$0xff]
      %v8066 = vld [vmem:[%s7931 + $0xa0] sm:$0xff]
      %v8067 = vld [vmem:[%s7931 + $0xa8] sm:$0xff]
      %v8068 = vld [vmem:[%s7931 + $0xd0] sm:$0xff]
      %v8069 = vld [vmem:[%s7931 + $0xd8] sm:$0xff]
      %v8070 = vld [vmem:[%s7931 + $0x100] sm:$0xff]
      %v8071 = vld [vmem:[%s7931 + $0x108] sm:$0xff]
      %v8072 = vld [vmem:[%s7931 + $0x130] sm:$0xff]
      %v8073 = vld [vmem:[%s7931 + $0x138] sm:$0xff]
      %v8074 = vld [vmem:[%s7931 + $0x160] sm:$0xff]
      %v8075 = vld [vmem:[%s7931 + $0x168] sm:$0xff]
      %v8076 = vld [vmem:[%s7931 + $0x10] sm:$0xfe]
      %v8077 = vld [vmem:[%s7931 + $0x18] sm:$0xfe]
      %v8078 = vld [vmem:[%s7931 + $0x20] sm:$0x1]
      %v8079 = vld [vmem:[%s7931 + $0x28] sm:$0x1]
      %v8080 = vld [vmem:[%s7931 + $0x40] sm:$0xfe]
      %v8081 = vld [vmem:[%s7931 + $0x48] sm:$0xfe]
      %v8082 = vld [vmem:[%s7931 + $0x50] sm:$0x1]
      %v8083 = vld [vmem:[%s7931 + $0x58] sm:$0x1]
      %v8084 = vld [vmem:[%s7931 + $0x70] sm:$0xfe]
      %v8085 = vld [vmem:[%s7931 + $0x78] sm:$0xfe]
      %v8086 = vld [vmem:[%s7931 + $0x80] sm:$0x1]
      %v8087 = vld [vmem:[%s7931 + $0x88] sm:$0x1]
      %v8088 = vld [vmem:[%s7931 + $0xa0] sm:$0xfe]
      %v8089 = vld [vmem:[%s7931 + $0xa8] sm:$0xfe]
      %v8090 = vld [vmem:[%s7931 + $0xb0] sm:$0x1]
      %v8091 = vld [vmem:[%s7931 + $0xb8] sm:$0x1]
      %v8092 = vld [vmem:[%s7931 + $0xd0] sm:$0xfe]
      %v8093 = vld [vmem:[%s7931 + $0xd8] sm:$0xfe]
      %v8094 = vld [vmem:[%s7931 + $0xe0] sm:$0x1]
      %v8095 = vld [vmem:[%s7931 + $0xe8] sm:$0x1]
      %v8096 = vld [vmem:[%s7931 + $0x100] sm:$0xfe]
      %v8097 = vld [vmem:[%s7931 + $0x108] sm:$0xfe]
      %v8098 = vld [vmem:[%s7931 + $0x110] sm:$0x1]
      %v8099 = vld [vmem:[%s7931 + $0x118] sm:$0x1]
      %v8100 = vld [vmem:[%s7931 + $0x130] sm:$0xfe]
      %v8101 = vld [vmem:[%s7931 + $0x138] sm:$0xfe]
      %v8102 = vld [vmem:[%s7931 + $0x140] sm:$0x1]
      %v8103 = vld [vmem:[%s7931 + $0x148] sm:$0x1]
      %v8104 = vld [vmem:[%s7931 + $0x160] sm:$0xfe]
      %v8105 = vld [vmem:[%s7931 + $0x168] sm:$0xfe]
      %v8106 = vld [vmem:[%s7931 + $0x170] sm:$0x1]
      %v8107 = vld [vmem:[%s7931 + $0x178] sm:$0x1]
      %v8140 = vrot.slane %v8076, 1
      %v8141 = vrot.slane %v8078, 1
      %v8142 = vsel %vm4275, %v8140, %v8141
      %v8143 = vrot.slane %v8077, 1
      %v8144 = vrot.slane %v8079, 1
      %v8145 = vsel %vm4275, %v8143, %v8144
      %v8146 = vrot.slane %v8080, 1
      %v8147 = vrot.slane %v8082, 1
      %v8148 = vsel %vm4275, %v8146, %v8147
      %v8149 = vrot.slane %v8081, 1
      %v8150 = vrot.slane %v8083, 1
      %v8151 = vsel %vm4275, %v8149, %v8150
      %v8152 = vrot.slane %v8084, 1
      %v8153 = vrot.slane %v8086, 1
      %v8154 = vsel %vm4275, %v8152, %v8153
      %v8155 = vrot.slane %v8085, 1
      %v8156 = vrot.slane %v8087, 1
      %v8157 = vsel %vm4275, %v8155, %v8156
      %v8158 = vrot.slane %v8088, 1
      %v8159 = vrot.slane %v8090, 1
      %v8160 = vsel %vm4275, %v8158, %v8159
      %v8161 = vrot.slane %v8089, 1
      %v8162 = vrot.slane %v8091, 1
      %v8163 = vsel %vm4275, %v8161, %v8162
      %v8164 = vrot.slane %v8092, 1
      %v8165 = vrot.slane %v8094, 1
      %v8166 = vsel %vm4275, %v8164, %v8165
      %v8167 = vrot.slane %v8093, 1
      %v8168 = vrot.slane %v8095, 1
      %v8169 = vsel %vm4275, %v8167, %v8168
      %v8170 = vrot.slane %v8096, 1
      %v8171 = vrot.slane %v8098, 1
      %v8172 = vsel %vm4275, %v8170, %v8171
      %v8173 = vrot.slane %v8097, 1
      %v8174 = vrot.slane %v8099, 1
      %v8175 = vsel %vm4275, %v8173, %v8174
      %v8176 = vrot.slane %v8100, 1
      %v8177 = vrot.slane %v8102, 1
      %v8178 = vsel %vm4275, %v8176, %v8177
      %v8179 = vrot.slane %v8101, 1
      %v8180 = vrot.slane %v8103, 1
      %v8181 = vsel %vm4275, %v8179, %v8180
      %v8182 = vrot.slane %v8104, 1
      %v8183 = vrot.slane %v8106, 1
      %v8184 = vsel %vm4275, %v8182, %v8183
      %v8185 = vrot.slane %v8105, 1
      %v8186 = vrot.slane %v8107, 1
      %v8187 = vsel %vm4275, %v8185, %v8186
      %v8204 = vpack.c.bf16 %v7459, %v7453
      %v8205 = vpack.c.bf16 %v7462, %v7456
      %v8206 = vpack.c.bf16 %v7517, %v7515
      %v8207 = vpack.c.bf16 %v7518, %v7516
      %v8208 = vpack.c.bf16 %v7603, %v7597
      %v8209 = vpack.c.bf16 %v7606, %v7600
      %v8210 = vpack.c.bf16 %v7731, %v7725
      %v8211 = vpack.c.bf16 %v7734, %v7728
      %v8212 = vpack.c.bf16 %v7789, %v7787
      %v8213 = vpack.c.bf16 %v7790, %v7788
      %v8214 = vpack.c.bf16 %v7875, %v7869
      %v8215 = vpack.c.bf16 %v7878, %v7872
      %v8216 = vpack.c.bf16 %v8004, %v7998
      %v8217 = vpack.c.bf16 %v8007, %v8001
      %v8218 = vpack.c.bf16 %v8062, %v8060
      %v8219 = vpack.c.bf16 %v8063, %v8061
      %v8220 = vpack.c.bf16 %v8148, %v8142
      %v8221 = vpack.c.bf16 %v8151, %v8145
      %v8222 = vpack.c.bf16 %v7471, %v7465
      %v8223 = vpack.c.bf16 %v7474, %v7468
      %v8224 = vpack.c.bf16 %v7521, %v7519
      %v8225 = vpack.c.bf16 %v7522, %v7520
      %v8226 = vpack.c.bf16 %v7615, %v7609
      %v8227 = vpack.c.bf16 %v7618, %v7612
      %v8228 = vpack.c.bf16 %v7743, %v7737
      %v8229 = vpack.c.bf16 %v7746, %v7740
      %v8230 = vpack.c.bf16 %v7793, %v7791
      %v8231 = vpack.c.bf16 %v7794, %v7792
      %v8232 = vpack.c.bf16 %v7887, %v7881
      %v8233 = vpack.c.bf16 %v7890, %v7884
      %v8234 = vpack.c.bf16 %v8016, %v8010
      %v8235 = vpack.c.bf16 %v8019, %v8013
      %v8236 = vpack.c.bf16 %v8066, %v8064
      %v8237 = vpack.c.bf16 %v8067, %v8065
      %v8238 = vpack.c.bf16 %v8160, %v8154
      %v8239 = vpack.c.bf16 %v8163, %v8157
      %v8240 = vpack.c.bf16 %v7483, %v7477
      %v8241 = vpack.c.bf16 %v7486, %v7480
      %v8242 = vpack.c.bf16 %v7525, %v7523
      %v8243 = vpack.c.bf16 %v7526, %v7524
      %v8244 = vpack.c.bf16 %v7627, %v7621
      %v8245 = vpack.c.bf16 %v7630, %v7624
      %v8246 = vpack.c.bf16 %v7755, %v7749
      %v8247 = vpack.c.bf16 %v7758, %v7752
      %v8248 = vpack.c.bf16 %v7797, %v7795
      %v8249 = vpack.c.bf16 %v7798, %v7796
      %v8250 = vpack.c.bf16 %v7899, %v7893
      %v8251 = vpack.c.bf16 %v7902, %v7896
      %v8252 = vpack.c.bf16 %v8028, %v8022
      %v8253 = vpack.c.bf16 %v8031, %v8025
      %v8254 = vpack.c.bf16 %v8070, %v8068
      %v8255 = vpack.c.bf16 %v8071, %v8069
      %v8256 = vpack.c.bf16 %v8172, %v8166
      %v8257 = vpack.c.bf16 %v8175, %v8169
      %v8258 = vpack.c.bf16 %v7495, %v7489
      %v8259 = vpack.c.bf16 %v7498, %v7492
      %v8260 = vpack.c.bf16 %v7529, %v7527
      %v8261 = vpack.c.bf16 %v7530, %v7528
      %v8262 = vpack.c.bf16 %v7639, %v7633
      %v8263 = vpack.c.bf16 %v7642, %v7636
      %v8264 = vpack.c.bf16 %v7767, %v7761
      %v8265 = vpack.c.bf16 %v7770, %v7764
      %v8266 = vpack.c.bf16 %v7801, %v7799
      %v8267 = vpack.c.bf16 %v7802, %v7800
      %v8268 = vpack.c.bf16 %v7911, %v7905
      %v8269 = vpack.c.bf16 %v7914, %v7908
      %v8270 = vpack.c.bf16 %v8040, %v8034
      %v8271 = vpack.c.bf16 %v8043, %v8037
      %v8272 = vpack.c.bf16 %v8074, %v8072
      %v8273 = vpack.c.bf16 %v8075, %v8073
      %v8274 = vpack.c.bf16 %v8184, %v8178
      %v8275 = vpack.c.bf16 %v8187, %v8181
      %v8276 = vld [vmem:[%s9] sm:$0xf]
      %v8277 = vld [vmem:[%s9 + $0x4] sm:$0xf]
      %v8278 = vld [vmem:[%s9 + $0x8] sm:$0xf]
      %v8279 = vld [vmem:[%s9 + $0xc] sm:$0xf]
      %v8280 = vld [vmem:[%s9 + $0x10] sm:$0xf]
      %v8281 = vld [vmem:[%s9 + $0x14] sm:$0xf]
      %v8282 = vld [vmem:[%s9 + $0x18] sm:$0xf]
      %v8283 = vld [vmem:[%s9 + $0x1c] sm:$0xf]
      %v8284 = vld [vmem:[%s9 + $0x20] sm:$0xf]
      %v8285 = vld [vmem:[%s9 + $0x24] sm:$0xf]
      %v8286 = vld [vmem:[%s9 + $0x28] sm:$0xf]
      %v8287 = vld [vmem:[%s9 + $0x2c] sm:$0xf]
      %v8288 = vld [vmem:[%s9 + $0x30] sm:$0xf]
      %v8289 = vld [vmem:[%s9 + $0x34] sm:$0xf]
      %v8290 = vld [vmem:[%s9 + $0x38] sm:$0xf]
      %v8291 = vld [vmem:[%s9 + $0x3c] sm:$0xf]
      %v8292 = vld [vmem:[%s9 + $0x40] sm:$0xf]
      %v8293 = vld [vmem:[%s9 + $0x44] sm:$0xf]
      %v8294 = vld [vmem:[%s9 + $0x48] sm:$0xf]
      %v8295 = vld [vmem:[%s9 + $0x4c] sm:$0xf]
      %v8296 = vld [vmem:[%s9 + $0x50] sm:$0xf]
      %v8297 = vld [vmem:[%s9 + $0x54] sm:$0xf]
      %v8298 = vld [vmem:[%s9 + $0x58] sm:$0xf]
      %v8299 = vld [vmem:[%s9 + $0x5c] sm:$0xf]
      %v8300 = vld [vmem:[%s9 + $0x60] sm:$0xf]
      %v8301 = vld [vmem:[%s9 + $0x64] sm:$0xf]
      %v8302 = vld [vmem:[%s9 + $0x68] sm:$0xf]
      %v8303 = vld [vmem:[%s9 + $0x6c] sm:$0xf]
      %v8304 = vld [vmem:[%s9 + $0x70] sm:$0xf]
      %v8305 = vld [vmem:[%s9 + $0x74] sm:$0xf]
      %v8306 = vld [vmem:[%s9 + $0x78] sm:$0xf]
      %v8307 = vld [vmem:[%s9 + $0x7c] sm:$0xf]
      %v8308 = vld [vmem:[%s9 + $0x80] sm:$0xf]
      %v8309 = vld [vmem:[%s9 + $0x84] sm:$0xf]
      %v8310 = vld [vmem:[%s9 + $0x88] sm:$0xf]
      %v8311 = vld [vmem:[%s9 + $0x8c] sm:$0xf]
      %v8312 = vld [vmem:[%s9 + $0x90] sm:$0xf]
      %v8313 = vld [vmem:[%s9 + $0x94] sm:$0xf]
      %v8314 = vld [vmem:[%s9 + $0x98] sm:$0xf]
      %v8315 = vld [vmem:[%s9 + $0x9c] sm:$0xf]
      %v8316 = vld [vmem:[%s9 + $0xa0] sm:$0xf]
      %v8317 = vld [vmem:[%s9 + $0xa4] sm:$0xf]
      %v8318 = vld [vmem:[%s9 + $0xa8] sm:$0xf]
      %v8319 = vld [vmem:[%s9 + $0xac] sm:$0xf]
      %v8320 = vld [vmem:[%s9 + $0xb0] sm:$0xf]
      %v8321 = vld [vmem:[%s9 + $0xb4] sm:$0xf]
      %v8322 = vld [vmem:[%s9 + $0xb8] sm:$0xf]
      %v8323 = vld [vmem:[%s9 + $0xbc] sm:$0xf]
      %v8324 = vld [vmem:[%s9 + $0xc0] sm:$0xf]
      %v8325 = vld [vmem:[%s9 + $0xc4] sm:$0xf]
      %v8326 = vld [vmem:[%s9 + $0xc8] sm:$0xf]
      %v8327 = vld [vmem:[%s9 + $0xcc] sm:$0xf]
      %v8328 = vld [vmem:[%s9 + $0xd0] sm:$0xf]
      %v8329 = vld [vmem:[%s9 + $0xd4] sm:$0xf]
      %v8330 = vld [vmem:[%s9 + $0xd8] sm:$0xf]
      %v8331 = vld [vmem:[%s9 + $0xdc] sm:$0xf]
      %v8332 = vld [vmem:[%s9 + $0xe0] sm:$0xf]
      %v8333 = vld [vmem:[%s9 + $0xe4] sm:$0xf]
      %v8334 = vld [vmem:[%s9 + $0xe8] sm:$0xf]
      %v8335 = vld [vmem:[%s9 + $0xec] sm:$0xf]
      %v8336 = vld [vmem:[%s9 + $0xf0] sm:$0xf]
      %v8337 = vld [vmem:[%s9 + $0xf4] sm:$0xf]
      %v8338 = vld [vmem:[%s9 + $0xf8] sm:$0xf]
      %v8339 = vld [vmem:[%s9 + $0xfc] sm:$0xf]
      %v8340 = vld [vmem:[%s9 + $0x100] sm:$0xf]
      %v8341 = vld [vmem:[%s9 + $0x104] sm:$0xf]
      %v8342 = vld [vmem:[%s9 + $0x108] sm:$0xf]
      %v8343 = vld [vmem:[%s9 + $0x10c] sm:$0xf]
      %v8344 = vld [vmem:[%s9 + $0x110] sm:$0xf]
      %v8345 = vld [vmem:[%s9 + $0x114] sm:$0xf]
      %v8346 = vld [vmem:[%s9 + $0x118] sm:$0xf]
      %v8347 = vld [vmem:[%s9 + $0x11c] sm:$0xf]
      %v8348 = vld [vmem:[%s9 + $0x120] sm:$0xf]
      %v8349 = vld [vmem:[%s9 + $0x124] sm:$0xf]
      %v8350 = vld [vmem:[%s9 + $0x128] sm:$0xf]
      %v8351 = vld [vmem:[%s9 + $0x12c] sm:$0xf]
      %v8352 = vld [vmem:[%s9 + $0x130] sm:$0xf]
      %v8353 = vld [vmem:[%s9 + $0x134] sm:$0xf]
      %v8354 = vld [vmem:[%s9 + $0x138] sm:$0xf]
      %v8355 = vld [vmem:[%s9 + $0x13c] sm:$0xf]
      %v8356 = vld [vmem:[%s9 + $0x140] sm:$0xf]
      %v8357 = vld [vmem:[%s9 + $0x144] sm:$0xf]
      %v8358 = vld [vmem:[%s9 + $0x148] sm:$0xf]
      %v8359 = vld [vmem:[%s9 + $0x14c] sm:$0xf]
      %v8360 = vld [vmem:[%s9 + $0x150] sm:$0xf]
      %v8361 = vld [vmem:[%s9 + $0x154] sm:$0xf]
      %v8362 = vld [vmem:[%s9 + $0x158] sm:$0xf]
      %v8363 = vld [vmem:[%s9 + $0x15c] sm:$0xf]
      %v8364 = vld [vmem:[%s9 + $0x160] sm:$0xf]
      %v8365 = vld [vmem:[%s9 + $0x164] sm:$0xf]
      %v8366 = vld [vmem:[%s9 + $0x168] sm:$0xf]
      %v8367 = vld [vmem:[%s9 + $0x16c] sm:$0xf]
      %v8368 = vld [vmem:[%s9 + $0x170] sm:$0xf]
      %v8369 = vld [vmem:[%s9 + $0x174] sm:$0xf]
      %v8370 = vld [vmem:[%s9 + $0x178] sm:$0xf]
      %v8371 = vld [vmem:[%s9 + $0x17c] sm:$0xf]
      %v8372 = vld [vmem:[%s9 + $0x180] sm:$0xf]
      %v8373 = vld [vmem:[%s9 + $0x184] sm:$0xf]
      %v8374 = vld [vmem:[%s9 + $0x188] sm:$0xf]
      %v8375 = vld [vmem:[%s9 + $0x18c] sm:$0xf]
      %v8376 = vld [vmem:[%s9 + $0x190] sm:$0xf]
      %v8377 = vld [vmem:[%s9 + $0x194] sm:$0xf]
      %v8378 = vld [vmem:[%s9 + $0x198] sm:$0xf]
      %v8379 = vld [vmem:[%s9 + $0x19c] sm:$0xf]
      %v8380 = vld [vmem:[%s9 + $0x1a0] sm:$0xf]
      %v8381 = vld [vmem:[%s9 + $0x1a4] sm:$0xf]
      %v8382 = vld [vmem:[%s9 + $0x1a8] sm:$0xf]
      %v8383 = vld [vmem:[%s9 + $0x1ac] sm:$0xf]
      %v8384 = vld [vmem:[%s9 + $0x1b0] sm:$0xf]
      %v8385 = vld [vmem:[%s9 + $0x1b4] sm:$0xf]
      %v8386 = vld [vmem:[%s9 + $0x1b8] sm:$0xf]
      %v8387 = vld [vmem:[%s9 + $0x1bc] sm:$0xf]
      %v8388 = vld [vmem:[%s9 + $0x1c0] sm:$0xf]
      %v8389 = vld [vmem:[%s9 + $0x1c4] sm:$0xf]
      %v8390 = vld [vmem:[%s9 + $0x1c8] sm:$0xf]
      %v8391 = vld [vmem:[%s9 + $0x1cc] sm:$0xf]
      %v8392 = vld [vmem:[%s9 + $0x1d0] sm:$0xf]
      %v8393 = vld [vmem:[%s9 + $0x1d4] sm:$0xf]
      %v8394 = vld [vmem:[%s9 + $0x1d8] sm:$0xf]
      %v8395 = vld [vmem:[%s9 + $0x1dc] sm:$0xf]
      %v8396 = vld [vmem:[%s9 + $0x1e0] sm:$0xf]
      %v8397 = vld [vmem:[%s9 + $0x1e4] sm:$0xf]
      %v8398 = vld [vmem:[%s9 + $0x1e8] sm:$0xf]
      %v8399 = vld [vmem:[%s9 + $0x1ec] sm:$0xf]
      %v8400 = vld [vmem:[%s9 + $0x1f0] sm:$0xf]
      %v8401 = vld [vmem:[%s9 + $0x1f4] sm:$0xf]
      %v8402 = vld [vmem:[%s9 + $0x1f8] sm:$0xf]
      %v8403 = vld [vmem:[%s9 + $0x1fc] sm:$0xf]
      %v8404 = vld [vmem:[%s9 + $0x200] sm:$0xf]
      %v8405 = vld [vmem:[%s9 + $0x204] sm:$0xf]
      %v8406 = vld [vmem:[%s9 + $0x208] sm:$0xf]
      %v8407 = vld [vmem:[%s9 + $0x20c] sm:$0xf]
      %v8408 = vld [vmem:[%s9 + $0x210] sm:$0xf]
      %v8409 = vld [vmem:[%s9 + $0x214] sm:$0xf]
      %v8410 = vld [vmem:[%s9 + $0x218] sm:$0xf]
      %v8411 = vld [vmem:[%s9 + $0x21c] sm:$0xf]
      %v8412 = vld [vmem:[%s9 + $0x220] sm:$0xf]
      %v8413 = vld [vmem:[%s9 + $0x224] sm:$0xf]
      %v8414 = vld [vmem:[%s9 + $0x228] sm:$0xf]
      %v8415 = vld [vmem:[%s9 + $0x22c] sm:$0xf]
      %v8416 = vld [vmem:[%s9 + $0x230] sm:$0xf]
      %v8417 = vld [vmem:[%s9 + $0x234] sm:$0xf]
      %v8418 = vld [vmem:[%s9 + $0x238] sm:$0xf]
      %v8419 = vld [vmem:[%s9 + $0x23c] sm:$0xf]
      %v8420 = vld [vmem:[%s9 + $0x240] sm:$0xf]
      %v8421 = vld [vmem:[%s9 + $0x244] sm:$0xf]
      %v8422 = vld [vmem:[%s9 + $0x248] sm:$0xf]
      %v8423 = vld [vmem:[%s9 + $0x24c] sm:$0xf]
      %v8424 = vld [vmem:[%s9 + $0x250] sm:$0xf]
      %v8425 = vld [vmem:[%s9 + $0x254] sm:$0xf]
      %v8426 = vld [vmem:[%s9 + $0x258] sm:$0xf]
      %v8427 = vld [vmem:[%s9 + $0x25c] sm:$0xf]
      %v8428 = vld [vmem:[%s9 + $0x260] sm:$0xf]
      %v8429 = vld [vmem:[%s9 + $0x264] sm:$0xf]
      %v8430 = vld [vmem:[%s9 + $0x268] sm:$0xf]
      %v8431 = vld [vmem:[%s9 + $0x26c] sm:$0xf]
      %v8432 = vld [vmem:[%s9 + $0x270] sm:$0xf]
      %v8433 = vld [vmem:[%s9 + $0x274] sm:$0xf]
      %v8434 = vld [vmem:[%s9 + $0x278] sm:$0xf]
      %v8435 = vld [vmem:[%s9 + $0x27c] sm:$0xf]
      %v8436 = vld [vmem:[%s9 + $0x280] sm:$0xf]
      %v8437 = vld [vmem:[%s9 + $0x284] sm:$0xf]
      %v8438 = vld [vmem:[%s9 + $0x288] sm:$0xf]
      %v8439 = vld [vmem:[%s9 + $0x28c] sm:$0xf]
      %v8440 = vld [vmem:[%s9 + $0x290] sm:$0xf]
      %v8441 = vld [vmem:[%s9 + $0x294] sm:$0xf]
      %v8442 = vld [vmem:[%s9 + $0x298] sm:$0xf]
      %v8443 = vld [vmem:[%s9 + $0x29c] sm:$0xf]
      %v8444 = vld [vmem:[%s9 + $0x2a0] sm:$0xf]
      %v8445 = vld [vmem:[%s9 + $0x2a4] sm:$0xf]
      %v8446 = vld [vmem:[%s9 + $0x2a8] sm:$0xf]
      %v8447 = vld [vmem:[%s9 + $0x2ac] sm:$0xf]
      %v8448 = vld [vmem:[%s9 + $0x2b0] sm:$0xf]
      %v8449 = vld [vmem:[%s9 + $0x2b4] sm:$0xf]
      %v8450 = vld [vmem:[%s9 + $0x2b8] sm:$0xf]
      %v8451 = vld [vmem:[%s9 + $0x2bc] sm:$0xf]
      %v8452 = vld [vmem:[%s9 + $0x2c0] sm:$0xf]
      %v8453 = vld [vmem:[%s9 + $0x2c4] sm:$0xf]
      %v8454 = vld [vmem:[%s9 + $0x2c8] sm:$0xf]
      %v8455 = vld [vmem:[%s9 + $0x2cc] sm:$0xf]
      %v8456 = vld [vmem:[%s9 + $0x2d0] sm:$0xf]
      %v8457 = vld [vmem:[%s9 + $0x2d4] sm:$0xf]
      %v8458 = vld [vmem:[%s9 + $0x2d8] sm:$0xf]
      %v8459 = vld [vmem:[%s9 + $0x2dc] sm:$0xf]
      %v8460 = vld [vmem:[%s9 + $0x2e0] sm:$0xf]
      %v8461 = vld [vmem:[%s9 + $0x2e4] sm:$0xf]
      %v8462 = vld [vmem:[%s9 + $0x2e8] sm:$0xf]
      %v8463 = vld [vmem:[%s9 + $0x2ec] sm:$0xf]
      %v8464 = vld [vmem:[%s9 + $0x2f0] sm:$0xf]
      %v8465 = vld [vmem:[%s9 + $0x2f4] sm:$0xf]
      %v8466 = vld [vmem:[%s9 + $0x2f8] sm:$0xf]
      %v8467 = vld [vmem:[%s9 + $0x2fc] sm:$0xf]
      %v8468 = vld [vmem:[%s9 + $0x300] sm:$0xf]
      %v8469 = vld [vmem:[%s9 + $0x304] sm:$0xf]
      %v8470 = vld [vmem:[%s9 + $0x308] sm:$0xf]
      %v8471 = vld [vmem:[%s9 + $0x30c] sm:$0xf]
      %v8472 = vld [vmem:[%s9 + $0x310] sm:$0xf]
      %v8473 = vld [vmem:[%s9 + $0x314] sm:$0xf]
      %v8474 = vld [vmem:[%s9 + $0x318] sm:$0xf]
      %v8475 = vld [vmem:[%s9 + $0x31c] sm:$0xf]
      %v8476 = vld [vmem:[%s9 + $0x320] sm:$0xf]
      %v8477 = vld [vmem:[%s9 + $0x324] sm:$0xf]
      %v8478 = vld [vmem:[%s9 + $0x328] sm:$0xf]
      %v8479 = vld [vmem:[%s9 + $0x32c] sm:$0xf]
      %v8480 = vld [vmem:[%s9 + $0x330] sm:$0xf]
      %v8481 = vld [vmem:[%s9 + $0x334] sm:$0xf]
      %v8482 = vld [vmem:[%s9 + $0x338] sm:$0xf]
      %v8483 = vld [vmem:[%s9 + $0x33c] sm:$0xf]
      %v8484 = vld [vmem:[%s9 + $0x340] sm:$0xf]
      %v8485 = vld [vmem:[%s9 + $0x344] sm:$0xf]
      %v8486 = vld [vmem:[%s9 + $0x348] sm:$0xf]
      %v8487 = vld [vmem:[%s9 + $0x34c] sm:$0xf]
      %v8488 = vld [vmem:[%s9 + $0x350] sm:$0xf]
      %v8489 = vld [vmem:[%s9 + $0x354] sm:$0xf]
      %v8490 = vld [vmem:[%s9 + $0x358] sm:$0xf]
      %v8491 = vld [vmem:[%s9 + $0x35c] sm:$0xf]
      %v8492 = vld [vmem:[%s9 + $0x360] sm:$0xf]
      %v8493 = vld [vmem:[%s9 + $0x364] sm:$0xf]
      %v8494 = vld [vmem:[%s9 + $0x368] sm:$0xf]
      %v8495 = vld [vmem:[%s9 + $0x36c] sm:$0xf]
      %v8496 = vld [vmem:[%s9 + $0x370] sm:$0xf]
      %v8497 = vld [vmem:[%s9 + $0x374] sm:$0xf]
      %v8498 = vld [vmem:[%s9 + $0x378] sm:$0xf]
      %v8499 = vld [vmem:[%s9 + $0x37c] sm:$0xf]
      %v8500 = vld [vmem:[%s9 + $0x380] sm:$0xf]
      %v8501 = vld [vmem:[%s9 + $0x384] sm:$0xf]
      %v8502 = vld [vmem:[%s9 + $0x388] sm:$0xf]
      %v8503 = vld [vmem:[%s9 + $0x38c] sm:$0xf]
      %v8504 = vld [vmem:[%s9 + $0x390] sm:$0xf]
      %v8505 = vld [vmem:[%s9 + $0x394] sm:$0xf]
      %v8506 = vld [vmem:[%s9 + $0x398] sm:$0xf]
      %v8507 = vld [vmem:[%s9 + $0x39c] sm:$0xf]
      %v8508 = vld [vmem:[%s9 + $0x3a0] sm:$0xf]
      %v8509 = vld [vmem:[%s9 + $0x3a4] sm:$0xf]
      %v8510 = vld [vmem:[%s9 + $0x3a8] sm:$0xf]
      %v8511 = vld [vmem:[%s9 + $0x3ac] sm:$0xf]
      %v8512 = vld [vmem:[%s9 + $0x3b0] sm:$0xf]
      %v8513 = vld [vmem:[%s9 + $0x3b4] sm:$0xf]
      %v8514 = vld [vmem:[%s9 + $0x3b8] sm:$0xf]
      %v8515 = vld [vmem:[%s9 + $0x3bc] sm:$0xf]
      %v8516 = vld [vmem:[%s9 + $0x3c0] sm:$0xf]
      %v8517 = vld [vmem:[%s9 + $0x3c4] sm:$0xf]
      %v8518 = vld [vmem:[%s9 + $0x3c8] sm:$0xf]
      %v8519 = vld [vmem:[%s9 + $0x3cc] sm:$0xf]
      %v8520 = vld [vmem:[%s9 + $0x3d0] sm:$0xf]
      %v8521 = vld [vmem:[%s9 + $0x3d4] sm:$0xf]
      %v8522 = vld [vmem:[%s9 + $0x3d8] sm:$0xf]
      %v8523 = vld [vmem:[%s9 + $0x3dc] sm:$0xf]
      %v8524 = vld [vmem:[%s9 + $0x3e0] sm:$0xf]
      %v8525 = vld [vmem:[%s9 + $0x3e4] sm:$0xf]
      %v8526 = vld [vmem:[%s9 + $0x3e8] sm:$0xf]
      %v8527 = vld [vmem:[%s9 + $0x3ec] sm:$0xf]
      %v8528 = vld [vmem:[%s9 + $0x3f0] sm:$0xf]
      %v8529 = vld [vmem:[%s9 + $0x3f4] sm:$0xf]
      %v8530 = vld [vmem:[%s9 + $0x3f8] sm:$0xf]
      %v8531 = vld [vmem:[%s9 + $0x3fc] sm:$0xf]
      %v8532 = vld [vmem:[%s9 + $0x400] sm:$0xf]
      %v8533 = vld [vmem:[%s9 + $0x404] sm:$0xf]
      %v8534 = vld [vmem:[%s9 + $0x408] sm:$0xf]
      %v8535 = vld [vmem:[%s9 + $0x40c] sm:$0xf]
      %v8536 = vld [vmem:[%s9 + $0x410] sm:$0xf]
      %v8537 = vld [vmem:[%s9 + $0x414] sm:$0xf]
      %v8538 = vld [vmem:[%s9 + $0x418] sm:$0xf]
      %v8539 = vld [vmem:[%s9 + $0x41c] sm:$0xf]
      %v8540 = vld [vmem:[%s9 + $0x420] sm:$0xf]
      %v8541 = vld [vmem:[%s9 + $0x424] sm:$0xf]
      %v8542 = vld [vmem:[%s9 + $0x428] sm:$0xf]
      %v8543 = vld [vmem:[%s9 + $0x42c] sm:$0xf]
      %v8544 = vld [vmem:[%s9 + $0x430] sm:$0xf]
      %v8545 = vld [vmem:[%s9 + $0x434] sm:$0xf]
      %v8546 = vld [vmem:[%s9 + $0x438] sm:$0xf]
      %v8547 = vld [vmem:[%s9 + $0x43c] sm:$0xf]
      %v8548 = vld [vmem:[%s9 + $0x440] sm:$0xf]
      %v8549 = vld [vmem:[%s9 + $0x444] sm:$0xf]
      %v8550 = vld [vmem:[%s9 + $0x448] sm:$0xf]
      %v8551 = vld [vmem:[%s9 + $0x44c] sm:$0xf]
      %v8552 = vld [vmem:[%s9 + $0x450] sm:$0xf]
      %v8553 = vld [vmem:[%s9 + $0x454] sm:$0xf]
      %v8554 = vld [vmem:[%s9 + $0x458] sm:$0xf]
      %v8555 = vld [vmem:[%s9 + $0x45c] sm:$0xf]
      %v8556 = vld [vmem:[%s9 + $0x460] sm:$0xf]
      %v8557 = vld [vmem:[%s9 + $0x464] sm:$0xf]
      %v8558 = vld [vmem:[%s9 + $0x468] sm:$0xf]
      %v8559 = vld [vmem:[%s9 + $0x46c] sm:$0xf]
      %v8560 = vld [vmem:[%s9 + $0x470] sm:$0xf]
      %v8561 = vld [vmem:[%s9 + $0x474] sm:$0xf]
      %v8562 = vld [vmem:[%s9 + $0x478] sm:$0xf]
      %v8563 = vld [vmem:[%s9 + $0x47c] sm:$0xf]
      %v8564 = vld [vmem:[%s10] sm:$0x1]
      %v8566 = vlaneseq
      %v8567 = vshrl.u32 %v8566, 7
      %v8568 = vsub.s32 0, %v8567
      %v8569 = vrot.slane %v8564, %v8568
      %v8859 = vunpack.c.l.b16 %v8276
      %v8860 = vunpack.c.l.b16 %v8277
      %v8861 = vunpack.c.l.b16 %v8278
      %v8862 = vunpack.c.l.b16 %v8279
      %v8863 = vunpack.c.l.b16 %v8280
      %v8864 = vunpack.c.l.b16 %v8281
      %v8865 = vunpack.c.l.b16 %v8282
      %v8866 = vunpack.c.l.b16 %v8283
      %v8867 = vunpack.c.l.b16 %v8284
      %v8868 = vunpack.c.l.b16 %v8285
      %v8869 = vunpack.c.l.b16 %v8286
      %v8870 = vunpack.c.l.b16 %v8287
      %v8871 = vunpack.c.l.b16 %v8288
      %v8872 = vunpack.c.l.b16 %v8289
      %v8873 = vunpack.c.l.b16 %v8290
      %v8874 = vunpack.c.l.b16 %v8291
      %v8875 = vunpack.c.l.b16 %v8292
      %v8876 = vunpack.c.l.b16 %v8293
      %v8877 = vunpack.c.l.b16 %v8294
      %v8878 = vunpack.c.l.b16 %v8295
      %v8879 = vunpack.c.l.b16 %v8296
      %v8880 = vunpack.c.l.b16 %v8297
      %v8881 = vunpack.c.l.b16 %v8298
      %v8882 = vunpack.c.l.b16 %v8299
      %v8883 = vunpack.c.l.b16 %v8300
      %v8884 = vunpack.c.l.b16 %v8301
      %v8885 = vunpack.c.l.b16 %v8302
      %v8886 = vunpack.c.l.b16 %v8303
      %v8887 = vunpack.c.l.b16 %v8304
      %v8888 = vunpack.c.l.b16 %v8305
      %v8889 = vunpack.c.l.b16 %v8306
      %v8890 = vunpack.c.l.b16 %v8307
      %v8891 = vunpack.c.l.b16 %v8308
      %v8892 = vunpack.c.l.b16 %v8309
      %v8893 = vunpack.c.l.b16 %v8310
      %v8894 = vunpack.c.l.b16 %v8311
      %v8895 = vunpack.c.l.b16 %v8312
      %v8896 = vunpack.c.l.b16 %v8313
      %v8897 = vunpack.c.l.b16 %v8314
      %v8898 = vunpack.c.l.b16 %v8315
      %v8899 = vunpack.c.l.b16 %v8316
      %v8900 = vunpack.c.l.b16 %v8317
      %v8901 = vunpack.c.l.b16 %v8318
      %v8902 = vunpack.c.l.b16 %v8319
      %v8903 = vunpack.c.l.b16 %v8320
      %v8904 = vunpack.c.l.b16 %v8321
      %v8905 = vunpack.c.l.b16 %v8322
      %v8906 = vunpack.c.l.b16 %v8323
      %v8907 = vunpack.c.l.b16 %v8324
      %v8908 = vunpack.c.l.b16 %v8325
      %v8909 = vunpack.c.l.b16 %v8326
      %v8910 = vunpack.c.l.b16 %v8327
      %v8911 = vunpack.c.l.b16 %v8328
      %v8912 = vunpack.c.l.b16 %v8329
      %v8913 = vunpack.c.l.b16 %v8330
      %v8914 = vunpack.c.l.b16 %v8331
      %v8915 = vunpack.c.l.b16 %v8332
      %v8916 = vunpack.c.l.b16 %v8333
      %v8917 = vunpack.c.l.b16 %v8334
      %v8918 = vunpack.c.l.b16 %v8335
      %v8919 = vunpack.c.l.b16 %v8336
      %v8920 = vunpack.c.l.b16 %v8337
      %v8921 = vunpack.c.l.b16 %v8338
      %v8922 = vunpack.c.l.b16 %v8339
      %v8923 = vunpack.c.l.b16 %v8340
      %v8924 = vunpack.c.l.b16 %v8341
      %v8925 = vunpack.c.l.b16 %v8342
      %v8926 = vunpack.c.l.b16 %v8343
      %v8927 = vunpack.c.l.b16 %v8344
      %v8928 = vunpack.c.l.b16 %v8345
      %v8929 = vunpack.c.l.b16 %v8346
      %v8930 = vunpack.c.l.b16 %v8347
      %v8931 = vunpack.c.l.b16 %v8348
      %v8932 = vunpack.c.l.b16 %v8349
      %v8933 = vunpack.c.l.b16 %v8350
      %v8934 = vunpack.c.l.b16 %v8351
      %v8935 = vunpack.c.l.b16 %v8352
      %v8936 = vunpack.c.l.b16 %v8353
      %v8937 = vunpack.c.l.b16 %v8354
      %v8938 = vunpack.c.l.b16 %v8355
      %v8939 = vunpack.c.l.b16 %v8356
      %v8940 = vunpack.c.l.b16 %v8357
      %v8941 = vunpack.c.l.b16 %v8358
      %v8942 = vunpack.c.l.b16 %v8359
      %v8943 = vunpack.c.l.b16 %v8360
      %v8944 = vunpack.c.l.b16 %v8361
      %v8945 = vunpack.c.l.b16 %v8362
      %v8946 = vunpack.c.l.b16 %v8363
      %v8947 = vunpack.c.l.b16 %v8364
      %v8948 = vunpack.c.l.b16 %v8365
      %v8949 = vunpack.c.l.b16 %v8366
      %v8950 = vunpack.c.l.b16 %v8367
      %v8951 = vunpack.c.l.b16 %v8368
      %v8952 = vunpack.c.l.b16 %v8369
      %v8953 = vunpack.c.l.b16 %v8370
      %v8954 = vunpack.c.l.b16 %v8371
      %v8955 = vunpack.c.l.b16 %v8372
      %v8956 = vunpack.c.l.b16 %v8373
      %v8957 = vunpack.c.l.b16 %v8374
      %v8958 = vunpack.c.l.b16 %v8375
      %v8959 = vunpack.c.l.b16 %v8376
      %v8960 = vunpack.c.l.b16 %v8377
      %v8961 = vunpack.c.l.b16 %v8378
      %v8962 = vunpack.c.l.b16 %v8379
      %v8963 = vunpack.c.l.b16 %v8380
      %v8964 = vunpack.c.l.b16 %v8381
      %v8965 = vunpack.c.l.b16 %v8382
      %v8966 = vunpack.c.l.b16 %v8383
      %v8967 = vunpack.c.l.b16 %v8384
      %v8968 = vunpack.c.l.b16 %v8385
      %v8969 = vunpack.c.l.b16 %v8386
      %v8970 = vunpack.c.l.b16 %v8387
      %v8971 = vunpack.c.l.b16 %v8388
      %v8972 = vunpack.c.l.b16 %v8389
      %v8973 = vunpack.c.l.b16 %v8390
      %v8974 = vunpack.c.l.b16 %v8391
      %v8975 = vunpack.c.l.b16 %v8392
      %v8976 = vunpack.c.l.b16 %v8393
      %v8977 = vunpack.c.l.b16 %v8394
      %v8978 = vunpack.c.l.b16 %v8395
      %v8979 = vunpack.c.l.b16 %v8396
      %v8980 = vunpack.c.l.b16 %v8397
      %v8981 = vunpack.c.l.b16 %v8398
      %v8982 = vunpack.c.l.b16 %v8399
      %v8983 = vunpack.c.l.b16 %v8400
      %v8984 = vunpack.c.l.b16 %v8401
      %v8985 = vunpack.c.l.b16 %v8402
      %v8986 = vunpack.c.l.b16 %v8403
      %v8987 = vunpack.c.l.b16 %v8404
      %v8988 = vunpack.c.l.b16 %v8405
      %v8989 = vunpack.c.l.b16 %v8406
      %v8990 = vunpack.c.l.b16 %v8407
      %v8991 = vunpack.c.l.b16 %v8408
      %v8992 = vunpack.c.l.b16 %v8409
      %v8993 = vunpack.c.l.b16 %v8410
      %v8994 = vunpack.c.l.b16 %v8411
      %v8995 = vunpack.c.l.b16 %v8412
      %v8996 = vunpack.c.l.b16 %v8413
      %v8997 = vunpack.c.l.b16 %v8414
      %v8998 = vunpack.c.l.b16 %v8415
      %v8999 = vunpack.c.l.b16 %v8416
      %v9000 = vunpack.c.l.b16 %v8417
      %v9001 = vunpack.c.l.b16 %v8418
      %v9002 = vunpack.c.l.b16 %v8419
      %v9003 = vunpack.c.l.b16 %v8420
      %v9004 = vunpack.c.l.b16 %v8421
      %v9005 = vunpack.c.l.b16 %v8422
      %v9006 = vunpack.c.l.b16 %v8423
      %v9007 = vunpack.c.l.b16 %v8424
      %v9008 = vunpack.c.l.b16 %v8425
      %v9009 = vunpack.c.l.b16 %v8426
      %v9010 = vunpack.c.l.b16 %v8427
      %v9011 = vunpack.c.l.b16 %v8428
      %v9012 = vunpack.c.l.b16 %v8429
      %v9013 = vunpack.c.l.b16 %v8430
      %v9014 = vunpack.c.l.b16 %v8431
      %v9015 = vunpack.c.l.b16 %v8432
      %v9016 = vunpack.c.l.b16 %v8433
      %v9017 = vunpack.c.l.b16 %v8434
      %v9018 = vunpack.c.l.b16 %v8435
      %v9019 = vunpack.c.l.b16 %v8436
      %v9020 = vunpack.c.l.b16 %v8437
      %v9021 = vunpack.c.l.b16 %v8438
      %v9022 = vunpack.c.l.b16 %v8439
      %v9023 = vunpack.c.l.b16 %v8440
      %v9024 = vunpack.c.l.b16 %v8441
      %v9025 = vunpack.c.l.b16 %v8442
      %v9026 = vunpack.c.l.b16 %v8443
      %v9027 = vunpack.c.l.b16 %v8444
      %v9028 = vunpack.c.l.b16 %v8445
      %v9029 = vunpack.c.l.b16 %v8446
      %v9030 = vunpack.c.l.b16 %v8447
      %v9031 = vunpack.c.l.b16 %v8448
      %v9032 = vunpack.c.l.b16 %v8449
      %v9033 = vunpack.c.l.b16 %v8450
      %v9034 = vunpack.c.l.b16 %v8451
      %v9035 = vunpack.c.l.b16 %v8452
      %v9036 = vunpack.c.l.b16 %v8453
      %v9037 = vunpack.c.l.b16 %v8454
      %v9038 = vunpack.c.l.b16 %v8455
      %v9039 = vunpack.c.l.b16 %v8456
      %v9040 = vunpack.c.l.b16 %v8457
      %v9041 = vunpack.c.l.b16 %v8458
      %v9042 = vunpack.c.l.b16 %v8459
      %v9043 = vunpack.c.l.b16 %v8460
      %v9044 = vunpack.c.l.b16 %v8461
      %v9045 = vunpack.c.l.b16 %v8462
      %v9046 = vunpack.c.l.b16 %v8463
      %v9047 = vunpack.c.l.b16 %v8464
      %v9048 = vunpack.c.l.b16 %v8465
      %v9049 = vunpack.c.l.b16 %v8466
      %v9050 = vunpack.c.l.b16 %v8467
      %v9051 = vunpack.c.l.b16 %v8468
      %v9052 = vunpack.c.l.b16 %v8469
      %v9053 = vunpack.c.l.b16 %v8470
      %v9054 = vunpack.c.l.b16 %v8471
      %v9055 = vunpack.c.l.b16 %v8472
      %v9056 = vunpack.c.l.b16 %v8473
      %v9057 = vunpack.c.l.b16 %v8474
      %v9058 = vunpack.c.l.b16 %v8475
      %v9059 = vunpack.c.l.b16 %v8476
      %v9060 = vunpack.c.l.b16 %v8477
      %v9061 = vunpack.c.l.b16 %v8478
      %v9062 = vunpack.c.l.b16 %v8479
      %v9063 = vunpack.c.l.b16 %v8480
      %v9064 = vunpack.c.l.b16 %v8481
      %v9065 = vunpack.c.l.b16 %v8482
      %v9066 = vunpack.c.l.b16 %v8483
      %v9067 = vunpack.c.l.b16 %v8484
      %v9068 = vunpack.c.l.b16 %v8485
      %v9069 = vunpack.c.l.b16 %v8486
      %v9070 = vunpack.c.l.b16 %v8487
      %v9071 = vunpack.c.l.b16 %v8488
      %v9072 = vunpack.c.l.b16 %v8489
      %v9073 = vunpack.c.l.b16 %v8490
      %v9074 = vunpack.c.l.b16 %v8491
      %v9075 = vunpack.c.l.b16 %v8492
      %v9076 = vunpack.c.l.b16 %v8493
      %v9077 = vunpack.c.l.b16 %v8494
      %v9078 = vunpack.c.l.b16 %v8495
      %v9079 = vunpack.c.l.b16 %v8496
      %v9080 = vunpack.c.l.b16 %v8497
      %v9081 = vunpack.c.l.b16 %v8498
      %v9082 = vunpack.c.l.b16 %v8499
      %v9083 = vunpack.c.l.b16 %v8500
      %v9084 = vunpack.c.l.b16 %v8501
      %v9085 = vunpack.c.l.b16 %v8502
      %v9086 = vunpack.c.l.b16 %v8503
      %v9087 = vunpack.c.l.b16 %v8504
      %v9088 = vunpack.c.l.b16 %v8505
      %v9089 = vunpack.c.l.b16 %v8506
      %v9090 = vunpack.c.l.b16 %v8507
      %v9091 = vunpack.c.l.b16 %v8508
      %v9092 = vunpack.c.l.b16 %v8509
      %v9093 = vunpack.c.l.b16 %v8510
      %v9094 = vunpack.c.l.b16 %v8511
      %v9095 = vunpack.c.l.b16 %v8512
      %v9096 = vunpack.c.l.b16 %v8513
      %v9097 = vunpack.c.l.b16 %v8514
      %v9098 = vunpack.c.l.b16 %v8515
      %v9099 = vunpack.c.l.b16 %v8516
      %v9100 = vunpack.c.l.b16 %v8517
      %v9101 = vunpack.c.l.b16 %v8518
      %v9102 = vunpack.c.l.b16 %v8519
      %v9103 = vunpack.c.l.b16 %v8520
      %v9104 = vunpack.c.l.b16 %v8521
      %v9105 = vunpack.c.l.b16 %v8522
      %v9106 = vunpack.c.l.b16 %v8523
      %v9107 = vunpack.c.l.b16 %v8524
      %v9108 = vunpack.c.l.b16 %v8525
      %v9109 = vunpack.c.l.b16 %v8526
      %v9110 = vunpack.c.l.b16 %v8527
      %v9111 = vunpack.c.l.b16 %v8528
      %v9112 = vunpack.c.l.b16 %v8529
      %v9113 = vunpack.c.l.b16 %v8530
      %v9114 = vunpack.c.l.b16 %v8531
      %v9115 = vunpack.c.l.b16 %v8532
      %v9116 = vunpack.c.l.b16 %v8533
      %v9117 = vunpack.c.l.b16 %v8534
      %v9118 = vunpack.c.l.b16 %v8535
      %v9119 = vunpack.c.l.b16 %v8536
      %v9120 = vunpack.c.l.b16 %v8537
      %v9121 = vunpack.c.l.b16 %v8538
      %v9122 = vunpack.c.l.b16 %v8539
      %v9123 = vunpack.c.l.b16 %v8540
      %v9124 = vunpack.c.l.b16 %v8541
      %v9125 = vunpack.c.l.b16 %v8542
      %v9126 = vunpack.c.l.b16 %v8543
      %v9127 = vunpack.c.l.b16 %v8544
      %v9128 = vunpack.c.l.b16 %v8545
      %v9129 = vunpack.c.l.b16 %v8546
      %v9130 = vunpack.c.l.b16 %v8547
      %v9131 = vunpack.c.l.b16 %v8548
      %v9132 = vunpack.c.l.b16 %v8549
      %v9133 = vunpack.c.l.b16 %v8550
      %v9134 = vunpack.c.l.b16 %v8551
      %v9135 = vunpack.c.l.b16 %v8552
      %v9136 = vunpack.c.l.b16 %v8553
      %v9137 = vunpack.c.l.b16 %v8554
      %v9138 = vunpack.c.l.b16 %v8555
      %v9139 = vunpack.c.l.b16 %v8556
      %v9140 = vunpack.c.l.b16 %v8557
      %v9141 = vunpack.c.l.b16 %v8558
      %v9142 = vunpack.c.l.b16 %v8559
      %v9143 = vunpack.c.l.b16 %v8560
      %v9144 = vunpack.c.l.b16 %v8561
      %v9145 = vunpack.c.l.b16 %v8562
      %v9146 = vunpack.c.l.b16 %v8563
      %v9147 = vpack.c.b16 %v8860, %v8859
      %v9148 = vpack.c.b16 %v8862, %v8861
      %v9149 = vpack.c.b16 %v8864, %v8863
      %v9150 = vpack.c.b16 %v8866, %v8865
      %v9151 = vpack.c.b16 %v8868, %v8867
      %v9152 = vpack.c.b16 %v8870, %v8869
      %v9153 = vpack.c.b16 %v8872, %v8871
      %v9154 = vpack.c.b16 %v8874, %v8873
      %v9155 = vpack.c.b16 %v8876, %v8875
      %v9156 = vpack.c.b16 %v8878, %v8877
      %v9157 = vpack.c.b16 %v8880, %v8879
      %v9158 = vpack.c.b16 %v8882, %v8881
      %v9159 = vpack.c.b16 %v8884, %v8883
      %v9160 = vpack.c.b16 %v8886, %v8885
      %v9161 = vpack.c.b16 %v8888, %v8887
      %v9162 = vpack.c.b16 %v8890, %v8889
      %v9163 = vpack.c.b16 %v8892, %v8891
      %v9164 = vpack.c.b16 %v8894, %v8893
      %v9165 = vpack.c.b16 %v8896, %v8895
      %v9166 = vpack.c.b16 %v8898, %v8897
      %v9167 = vpack.c.b16 %v8900, %v8899
      %v9168 = vpack.c.b16 %v8902, %v8901
      %v9169 = vpack.c.b16 %v8904, %v8903
      %v9170 = vpack.c.b16 %v8906, %v8905
      %v9171 = vpack.c.b16 %v8908, %v8907
      %v9172 = vpack.c.b16 %v8910, %v8909
      %v9173 = vpack.c.b16 %v8912, %v8911
      %v9174 = vpack.c.b16 %v8914, %v8913
      %v9175 = vpack.c.b16 %v8916, %v8915
      %v9176 = vpack.c.b16 %v8918, %v8917
      %v9177 = vpack.c.b16 %v8920, %v8919
      %v9178 = vpack.c.b16 %v8922, %v8921
      %v9179 = vpack.c.b16 %v8924, %v8923
      %v9180 = vpack.c.b16 %v8926, %v8925
      %v9181 = vpack.c.b16 %v8928, %v8927
      %v9182 = vpack.c.b16 %v8930, %v8929
      %v9183 = vpack.c.b16 %v8932, %v8931
      %v9184 = vpack.c.b16 %v8934, %v8933
      %v9185 = vpack.c.b16 %v8936, %v8935
      %v9186 = vpack.c.b16 %v8938, %v8937
      %v9187 = vpack.c.b16 %v8940, %v8939
      %v9188 = vpack.c.b16 %v8942, %v8941
      %v9189 = vpack.c.b16 %v8944, %v8943
      %v9190 = vpack.c.b16 %v8946, %v8945
      %v9191 = vpack.c.b16 %v8948, %v8947
      %v9192 = vpack.c.b16 %v8950, %v8949
      %v9193 = vpack.c.b16 %v8952, %v8951
      %v9194 = vpack.c.b16 %v8954, %v8953
      %v9195 = vpack.c.b16 %v8956, %v8955
      %v9196 = vpack.c.b16 %v8958, %v8957
      %v9197 = vpack.c.b16 %v8960, %v8959
      %v9198 = vpack.c.b16 %v8962, %v8961
      %v9199 = vpack.c.b16 %v8964, %v8963
      %v9200 = vpack.c.b16 %v8966, %v8965
      %v9201 = vpack.c.b16 %v8968, %v8967
      %v9202 = vpack.c.b16 %v8970, %v8969
      %v9203 = vpack.c.b16 %v8972, %v8971
      %v9204 = vpack.c.b16 %v8974, %v8973
      %v9205 = vpack.c.b16 %v8976, %v8975
      %v9206 = vpack.c.b16 %v8978, %v8977
      %v9207 = vpack.c.b16 %v8980, %v8979
      %v9208 = vpack.c.b16 %v8982, %v8981
      %v9209 = vpack.c.b16 %v8984, %v8983
      %v9210 = vpack.c.b16 %v8986, %v8985
      %v9211 = vpack.c.b16 %v8988, %v8987
      %v9212 = vpack.c.b16 %v8990, %v8989
      %v9213 = vpack.c.b16 %v8992, %v8991
      %v9214 = vpack.c.b16 %v8994, %v8993
      %v9215 = vpack.c.b16 %v8996, %v8995
      %v9216 = vpack.c.b16 %v8998, %v8997
      %v9217 = vpack.c.b16 %v9000, %v8999
      %v9218 = vpack.c.b16 %v9002, %v9001
      %v9219 = vpack.c.b16 %v9004, %v9003
      %v9220 = vpack.c.b16 %v9006, %v9005
      %v9221 = vpack.c.b16 %v9008, %v9007
      %v9222 = vpack.c.b16 %v9010, %v9009
      %v9223 = vpack.c.b16 %v9012, %v9011
      %v9224 = vpack.c.b16 %v9014, %v9013
      %v9225 = vpack.c.b16 %v9016, %v9015
      %v9226 = vpack.c.b16 %v9018, %v9017
      %v9227 = vpack.c.b16 %v9020, %v9019
      %v9228 = vpack.c.b16 %v9022, %v9021
      %v9229 = vpack.c.b16 %v9024, %v9023
      %v9230 = vpack.c.b16 %v9026, %v9025
      %v9231 = vpack.c.b16 %v9028, %v9027
      %v9232 = vpack.c.b16 %v9030, %v9029
      %v9233 = vpack.c.b16 %v9032, %v9031
      %v9234 = vpack.c.b16 %v9034, %v9033
      %v9235 = vpack.c.b16 %v9036, %v9035
      %v9236 = vpack.c.b16 %v9038, %v9037
      %v9237 = vpack.c.b16 %v9040, %v9039
      %v9238 = vpack.c.b16 %v9042, %v9041
      %v9239 = vpack.c.b16 %v9044, %v9043
      %v9240 = vpack.c.b16 %v9046, %v9045
      %v9241 = vpack.c.b16 %v9048, %v9047
      %v9242 = vpack.c.b16 %v9050, %v9049
      %v9243 = vpack.c.b16 %v9052, %v9051
      %v9244 = vpack.c.b16 %v9054, %v9053
      %v9245 = vpack.c.b16 %v9056, %v9055
      %v9246 = vpack.c.b16 %v9058, %v9057
      %v9247 = vpack.c.b16 %v9060, %v9059
      %v9248 = vpack.c.b16 %v9062, %v9061
      %v9249 = vpack.c.b16 %v9064, %v9063
      %v9250 = vpack.c.b16 %v9066, %v9065
      %v9251 = vpack.c.b16 %v9068, %v9067
      %v9252 = vpack.c.b16 %v9070, %v9069
      %v9253 = vpack.c.b16 %v9072, %v9071
      %v9254 = vpack.c.b16 %v9074, %v9073
      %v9255 = vpack.c.b16 %v9076, %v9075
      %v9256 = vpack.c.b16 %v9078, %v9077
      %v9257 = vpack.c.b16 %v9080, %v9079
      %v9258 = vpack.c.b16 %v9082, %v9081
      %v9259 = vpack.c.b16 %v9084, %v9083
      %v9260 = vpack.c.b16 %v9086, %v9085
      %v9261 = vpack.c.b16 %v9088, %v9087
      %v9262 = vpack.c.b16 %v9090, %v9089
      %v9263 = vpack.c.b16 %v9092, %v9091
      %v9264 = vpack.c.b16 %v9094, %v9093
      %v9265 = vpack.c.b16 %v9096, %v9095
      %v9266 = vpack.c.b16 %v9098, %v9097
      %v9267 = vpack.c.b16 %v9100, %v9099
      %v9268 = vpack.c.b16 %v9102, %v9101
      %v9269 = vpack.c.b16 %v9104, %v9103
      %v9270 = vpack.c.b16 %v9106, %v9105
      %v9271 = vpack.c.b16 %v9108, %v9107
      %v9272 = vpack.c.b16 %v9110, %v9109
      %v9273 = vpack.c.b16 %v9112, %v9111
      %v9274 = vpack.c.b16 %v9114, %v9113
      %v9275 = vpack.c.b16 %v9116, %v9115
      %v9276 = vpack.c.b16 %v9118, %v9117
      %v9277 = vpack.c.b16 %v9120, %v9119
      %v9278 = vpack.c.b16 %v9122, %v9121
      %v9279 = vpack.c.b16 %v9124, %v9123
      %v9280 = vpack.c.b16 %v9126, %v9125
      %v9281 = vpack.c.b16 %v9128, %v9127
      %v9282 = vpack.c.b16 %v9130, %v9129
      %v9283 = vpack.c.b16 %v9132, %v9131
      %v9284 = vpack.c.b16 %v9134, %v9133
      %v9285 = vpack.c.b16 %v9136, %v9135
      %v9286 = vpack.c.b16 %v9138, %v9137
      %v9287 = vpack.c.b16 %v9140, %v9139
      %v9288 = vpack.c.b16 %v9142, %v9141
      %v9289 = vpack.c.b16 %v9144, %v9143
      %v9290 = vpack.c.b16 %v9146, %v9145
      %9435 = vmatprep.subr.bf16.mxu0 0
      %9436 = vmatpush1.bf16.msra.mxu0 %v9147
      %9437 = vmatprep.subr.bf16.mxu0 0
      %9438 = vmatpush1.bf16.msra.mxu0 %v9148
      %9439 = vmatprep.subr.bf16.mxu0 0
      %9440 = vmatpush1.bf16.msra.mxu0 %v9149
      %9441 = vmatprep.subr.bf16.mxu0 0
      %9442 = vmatpush1.bf16.msra.mxu0 %v9150
      %9443 = vmatprep.subr.bf16.mxu0 0
      %9444 = vmatpush1.bf16.msra.mxu0 %v9151
      %9445 = vmatprep.subr.bf16.mxu0 0
      %9446 = vmatpush1.bf16.msra.mxu0 %v9152
      %9447 = vmatprep.subr.bf16.mxu0 0
      %9448 = vmatpush1.bf16.msra.mxu0 %v9153
      %9449 = vmatprep.subr.bf16.mxu0 0
      %9450 = vmatpush1.bf16.msra.mxu0 %v9154
      %9451 = vmatprep.subr.bf16.mxu0 0
      %9452 = vmatpush1.bf16.msra.mxu0 %v9155
      %9453 = vmatprep.subr.bf16.mxu0 0
      %9454 = vmatpush1.bf16.msra.mxu0 %v9156
      %9455 = vmatprep.subr.bf16.mxu0 0
      %9456 = vmatpush1.bf16.msra.mxu0 %v9157
      %9457 = vmatprep.subr.bf16.mxu0 0
      %9458 = vmatpush1.bf16.msra.mxu0 %v9158
      %9459 = vmatprep.subr.bf16.mxu0 0
      %9460 = vmatpush1.bf16.msra.mxu0 %v9159
      %9461 = vmatprep.subr.bf16.mxu0 0
      %9462 = vmatpush1.bf16.msra.mxu0 %v9160
      %9463 = vmatprep.subr.bf16.mxu0 0
      %9464 = vmatpush1.bf16.msra.mxu0 %v9161
      %9465 = vmatprep.subr.bf16.mxu0 0
      %9466 = vmatpush1.bf16.msra.mxu0 %v9162
      %9467 = vmatprep.mubr.bf16.mxu0 %v8205
      %9468 = vmatmul.mubr.bf16.gmra.mrb[0].mxu0 %v8204
      %v9469 = vpop.f32.mrb[0].mxu0
      %v9470 = vadd.f32 %v8569, %v9469
      %v9471 = vpop.f32.mrb[0].mxu0
      %v9472 = vpop.f32.mrb[0].mxu0
      %v9473 = vadd.f32 %v8569, %v9472
      %v9474 = vpop.f32.mrb[0].mxu0
      %9475 = vmatprep.mubr.bf16.mxu0 %v8223
      %9476 = vmatmul.mubr.bf16.gmra.mrb[0].mxu0 %v8222
      %v9477 = vpop.f32.mrb[0].mxu0
      %v9478 = vadd.f32 %v8569, %v9477
      %v9479 = vpop.f32.mrb[0].mxu0
      %v9480 = vpop.f32.mrb[0].mxu0
      %v9481 = vadd.f32 %v8569, %v9480
      %v9482 = vpop.f32.mrb[0].mxu0
      %9483 = vmatprep.mubr.bf16.mxu0 %v8241
      %9484 = vmatmul.mubr.bf16.gmra.mrb[0].mxu0 %v8240
      %v9485 = vpop.f32.mrb[0].mxu0
      %v9486 = vadd.f32 %v8569, %v9485
      %v9487 = vpop.f32.mrb[0].mxu0
      %v9488 = vpop.f32.mrb[0].mxu0
      %v9489 = vadd.f32 %v8569, %v9488
      %v9490 = vpop.f32.mrb[0].mxu0
      %9491 = vmatprep.mubr.bf16.mxu0 %v8259
      %9492 = vmatmul.mubr.bf16.gmra.mrb[0].mxu0 %v8258
      %v9493 = vpop.f32.mrb[0].mxu0
      %v9494 = vadd.f32 %v8569, %v9493
      %v9495 = vpop.f32.mrb[0].mxu0
      %v9496 = vpop.f32.mrb[0].mxu0
      %v9497 = vadd.f32 %v8569, %v9496
      %v9498 = vpop.f32.mrb[0].mxu0
      %9499 = vdwg.mxu0
      %9500 = vmatprep.subr.bf16.mxu0 0
      %9501 = vmatpush1.bf16.msra.mxu0 %v9163
      %9502 = vmatprep.subr.bf16.mxu0 0
      %9503 = vmatpush1.bf16.msra.mxu0 %v9164
      %9504 = vmatprep.subr.bf16.mxu0 0
      %9505 = vmatpush1.bf16.msra.mxu0 %v9165
      %9506 = vmatprep.subr.bf16.mxu0 0
      %9507 = vmatpush1.bf16.msra.mxu0 %v9166
      %9508 = vmatprep.subr.bf16.mxu0 0
      %9509 = vmatpush1.bf16.msra.mxu0 %v9167
      %9510 = vmatprep.subr.bf16.mxu0 0
      %9511 = vmatpush1.bf16.msra.mxu0 %v9168
      %9512 = vmatprep.subr.bf16.mxu0 0
      %9513 = vmatpush1.bf16.msra.mxu0 %v9169
      %9514 = vmatprep.subr.bf16.mxu0 0
      %9515 = vmatpush1.bf16.msra.mxu0 %v9170
      %9516 = vmatprep.subr.bf16.mxu0 0
      %9517 = vmatpush1.bf16.msra.mxu0 %v9171
      %9518 = vmatprep.subr.bf16.mxu0 0
      %9519 = vmatpush1.bf16.msra.mxu0 %v9172
      %9520 = vmatprep.subr.bf16.mxu0 0
      %9521 = vmatpush1.bf16.msra.mxu0 %v9173
      %9522 = vmatprep.subr.bf16.mxu0 0
      %9523 = vmatpush1.bf16.msra.mxu0 %v9174
      %9524 = vmatprep.subr.bf16.mxu0 0
      %9525 = vmatpush1.bf16.msra.mxu0 %v9175
      %9526 = vmatprep.subr.bf16.mxu0 0
      %9527 = vmatpush1.bf16.msra.mxu0 %v9176
      %9528 = vmatprep.subr.bf16.mxu0 0
      %9529 = vmatpush1.bf16.msra.mxu0 %v9177
      %9530 = vmatprep.subr.bf16.mxu0 0
      %9531 = vmatpush1.bf16.msra.mxu0 %v9178
      %9532 = vmatprep.mubr.bf16.mxu0 %v8207
      %9533 = vmatmul.mubr.bf16.gmra.mrb[0].mxu0 %v8206
      %v9534 = vpop.f32.mrb[0].mxu0
      %v9535 = vadd.f32 %v9470, %v9534
      %v9536 = vpop.f32.mrb[0].mxu0
      %v9537 = vpop.f32.mrb[0].mxu0
      %v9538 = vadd.f32 %v9473, %v9537
      %v9539 = vpop.f32.mrb[0].mxu0
      %9540 = vmatprep.mubr.bf16.mxu0 %v8225
      %9541 = vmatmul.mubr.bf16.gmra.mrb[0].mxu0 %v8224
      %v9542 = vpop.f32.mrb[0].mxu0
      %v9543 = vadd.f32 %v9478, %v9542
      %v9544 = vpop.f32.mrb[0].mxu0
      %v9545 = vpop.f32.mrb[0].mxu0
      %v9546 = vadd.f32 %v9481, %v9545
      %v9547 = vpop.f32.mrb[0].mxu0
      %9548 = vmatprep.mubr.bf16.mxu0 %v8243
      %9549 = vmatmul.mubr.bf16.gmra.mrb[0].mxu0 %v8242
      %v9550 = vpop.f32.mrb[0].mxu0
      %v9551 = vadd.f32 %v9486, %v9550
      %v9552 = vpop.f32.mrb[0].mxu0
      %v9553 = vpop.f32.mrb[0].mxu0
      %v9554 = vadd.f32 %v9489, %v9553
      %v9555 = vpop.f32.mrb[0].mxu0
      %9556 = vmatprep.mubr.bf16.mxu0 %v8261
      %9557 = vmatmul.mubr.bf16.gmra.mrb[0].mxu0 %v8260
      %v9558 = vpop.f32.mrb[0].mxu0
      %v9559 = vadd.f32 %v9494, %v9558
      %v9560 = vpop.f32.mrb[0].mxu0
      %v9561 = vpop.f32.mrb[0].mxu0
      %v9562 = vadd.f32 %v9497, %v9561
      %v9563 = vpop.f32.mrb[0].mxu0
      %9564 = vdwg.mxu0
      %9565 = vmatprep.subr.bf16.mxu0 0
      %9566 = vmatpush1.bf16.msra.mxu0 %v9179
      %9567 = vmatprep.subr.bf16.mxu0 0
      %9568 = vmatpush1.bf16.msra.mxu0 %v9180
      %9569 = vmatprep.subr.bf16.mxu0 0
      %9570 = vmatpush1.bf16.msra.mxu0 %v9181
      %9571 = vmatprep.subr.bf16.mxu0 0
      %9572 = vmatpush1.bf16.msra.mxu0 %v9182
      %9573 = vmatprep.subr.bf16.mxu0 0
      %9574 = vmatpush1.bf16.msra.mxu0 %v9183
      %9575 = vmatprep.subr.bf16.mxu0 0
      %9576 = vmatpush1.bf16.msra.mxu0 %v9184
      %9577 = vmatprep.subr.bf16.mxu0 0
      %9578 = vmatpush1.bf16.msra.mxu0 %v9185
      %9579 = vmatprep.subr.bf16.mxu0 0
      %9580 = vmatpush1.bf16.msra.mxu0 %v9186
      %9581 = vmatprep.subr.bf16.mxu0 0
      %9582 = vmatpush1.bf16.msra.mxu0 %v9187
      %9583 = vmatprep.subr.bf16.mxu0 0
      %9584 = vmatpush1.bf16.msra.mxu0 %v9188
      %9585 = vmatprep.subr.bf16.mxu0 0
      %9586 = vmatpush1.bf16.msra.mxu0 %v9189
      %9587 = vmatprep.subr.bf16.mxu0 0
      %9588 = vmatpush1.bf16.msra.mxu0 %v9190
      %9589 = vmatprep.subr.bf16.mxu0 0
      %9590 = vmatpush1.bf16.msra.mxu0 %v9191
      %9591 = vmatprep.subr.bf16.mxu0 0
      %9592 = vmatpush1.bf16.msra.mxu0 %v9192
      %9593 = vmatprep.subr.bf16.mxu0 0
      %9594 = vmatpush1.bf16.msra.mxu0 %v9193
      %9595 = vmatprep.subr.bf16.mxu0 0
      %9596 = vmatpush1.bf16.msra.mxu0 %v9194
      %9597 = vmatprep.mubr.bf16.mxu0 %v8209
      %9598 = vmatmul.mubr.bf16.gmra.mrb[0].mxu0 %v8208
      %v9599 = vpop.f32.mrb[0].mxu0
      %v9600 = vadd.f32 %v9535, %v9599
      %v9601 = vpop.f32.mrb[0].mxu0
      %v9602 = vpop.f32.mrb[0].mxu0
      %v9603 = vadd.f32 %v9538, %v9602
      %v9604 = vpop.f32.mrb[0].mxu0
      %9605 = vmatprep.mubr.bf16.mxu0 %v8227
      %9606 = vmatmul.mubr.bf16.gmra.mrb[0].mxu0 %v8226
      %v9607 = vpop.f32.mrb[0].mxu0
      %v9608 = vadd.f32 %v9543, %v9607
      %v9609 = vpop.f32.mrb[0].mxu0
      %v9610 = vpop.f32.mrb[0].mxu0
      %v9611 = vadd.f32 %v9546, %v9610
      %v9612 = vpop.f32.mrb[0].mxu0
      %9613 = vmatprep.mubr.bf16.mxu0 %v8245
      %9614 = vmatmul.mubr.bf16.gmra.mrb[0].mxu0 %v8244
      %v9615 = vpop.f32.mrb[0].mxu0
      %v9616 = vadd.f32 %v9551, %v9615
      %v9617 = vpop.f32.mrb[0].mxu0
      %v9618 = vpop.f32.mrb[0].mxu0
      %v9619 = vadd.f32 %v9554, %v9618
      %v9620 = vpop.f32.mrb[0].mxu0
      %9621 = vmatprep.mubr.bf16.mxu0 %v8263
      %9622 = vmatmul.mubr.bf16.gmra.mrb[0].mxu0 %v8262
      %v9623 = vpop.f32.mrb[0].mxu0
      %v9624 = vadd.f32 %v9559, %v9623
      %v9625 = vpop.f32.mrb[0].mxu0
      %v9626 = vpop.f32.mrb[0].mxu0
      %v9627 = vadd.f32 %v9562, %v9626
      %v9628 = vpop.f32.mrb[0].mxu0
      %9629 = vdwg.mxu0
      %9630 = vmatprep.subr.bf16.mxu0 0
      %9631 = vmatpush1.bf16.msra.mxu0 %v9195
      %9632 = vmatprep.subr.bf16.mxu0 0
      %9633 = vmatpush1.bf16.msra.mxu0 %v9196
      %9634 = vmatprep.subr.bf16.mxu0 0
      %9635 = vmatpush1.bf16.msra.mxu0 %v9197
      %9636 = vmatprep.subr.bf16.mxu0 0
      %9637 = vmatpush1.bf16.msra.mxu0 %v9198
      %9638 = vmatprep.subr.bf16.mxu0 0
      %9639 = vmatpush1.bf16.msra.mxu0 %v9199
      %9640 = vmatprep.subr.bf16.mxu0 0
      %9641 = vmatpush1.bf16.msra.mxu0 %v9200
      %9642 = vmatprep.subr.bf16.mxu0 0
      %9643 = vmatpush1.bf16.msra.mxu0 %v9201
      %9644 = vmatprep.subr.bf16.mxu0 0
      %9645 = vmatpush1.bf16.msra.mxu0 %v9202
      %9646 = vmatprep.subr.bf16.mxu0 0
      %9647 = vmatpush1.bf16.msra.mxu0 %v9203
      %9648 = vmatprep.subr.bf16.mxu0 0
      %9649 = vmatpush1.bf16.msra.mxu0 %v9204
      %9650 = vmatprep.subr.bf16.mxu0 0
      %9651 = vmatpush1.bf16.msra.mxu0 %v9205
      %9652 = vmatprep.subr.bf16.mxu0 0
      %9653 = vmatpush1.bf16.msra.mxu0 %v9206
      %9654 = vmatprep.subr.bf16.mxu0 0
      %9655 = vmatpush1.bf16.msra.mxu0 %v9207
      %9656 = vmatprep.subr.bf16.mxu0 0
      %9657 = vmatpush1.bf16.msra.mxu0 %v9208
      %9658 = vmatprep.subr.bf16.mxu0 0
      %9659 = vmatpush1.bf16.msra.mxu0 %v9209
      %9660 = vmatprep.subr.bf16.mxu0 0
      %9661 = vmatpush1.bf16.msra.mxu0 %v9210
      %9662 = vmatprep.mubr.bf16.mxu0 %v8211
      %9663 = vmatmul.mubr.bf16.gmra.mrb[0].mxu0 %v8210
      %v9664 = vpop.f32.mrb[0].mxu0
      %v9665 = vadd.f32 %v9600, %v9664
      %v9666 = vpop.f32.mrb[0].mxu0
      %v9667 = vpop.f32.mrb[0].mxu0
      %v9668 = vadd.f32 %v9603, %v9667
      %v9669 = vpop.f32.mrb[0].mxu0
      %9670 = vmatprep.mubr.bf16.mxu0 %v8229
      %9671 = vmatmul.mubr.bf16.gmra.mrb[0].mxu0 %v8228
      %v9672 = vpop.f32.mrb[0].mxu0
      %v9673 = vadd.f32 %v9608, %v9672
      %v9674 = vpop.f32.mrb[0].mxu0
      %v9675 = vpop.f32.mrb[0].mxu0
      %v9676 = vadd.f32 %v9611, %v9675
      %v9677 = vpop.f32.mrb[0].mxu0
      %9678 = vmatprep.mubr.bf16.mxu0 %v8247
      %9679 = vmatmul.mubr.bf16.gmra.mrb[0].mxu0 %v8246
      %v9680 = vpop.f32.mrb[0].mxu0
      %v9681 = vadd.f32 %v9616, %v9680
      %v9682 = vpop.f32.mrb[0].mxu0
      %v9683 = vpop.f32.mrb[0].mxu0
      %v9684 = vadd.f32 %v9619, %v9683
      %v9685 = vpop.f32.mrb[0].mxu0
      %9686 = vmatprep.mubr.bf16.mxu0 %v8265
      %9687 = vmatmul.mubr.bf16.gmra.mrb[0].mxu0 %v8264
      %v9688 = vpop.f32.mrb[0].mxu0
      %v9689 = vadd.f32 %v9624, %v9688
      %v9690 = vpop.f32.mrb[0].mxu0
      %v9691 = vpop.f32.mrb[0].mxu0
      %v9692 = vadd.f32 %v9627, %v9691
      %v9693 = vpop.f32.mrb[0].mxu0
      %9694 = vdwg.mxu0
      %9695 = vmatprep.subr.bf16.mxu0 0
      %9696 = vmatpush1.bf16.msra.mxu0 %v9211
      %9697 = vmatprep.subr.bf16.mxu0 0
      %9698 = vmatpush1.bf16.msra.mxu0 %v9212
      %9699 = vmatprep.subr.bf16.mxu0 0
      %9700 = vmatpush1.bf16.msra.mxu0 %v9213
      %9701 = vmatprep.subr.bf16.mxu0 0
      %9702 = vmatpush1.bf16.msra.mxu0 %v9214
      %9703 = vmatprep.subr.bf16.mxu0 0
      %9704 = vmatpush1.bf16.msra.mxu0 %v9215
      %9705 = vmatprep.subr.bf16.mxu0 0
      %9706 = vmatpush1.bf16.msra.mxu0 %v9216
      %9707 = vmatprep.subr.bf16.mxu0 0
      %9708 = vmatpush1.bf16.msra.mxu0 %v9217
      %9709 = vmatprep.subr.bf16.mxu0 0
      %9710 = vmatpush1.bf16.msra.mxu0 %v9218
      %9711 = vmatprep.subr.bf16.mxu0 0
      %9712 = vmatpush1.bf16.msra.mxu0 %v9219
      %9713 = vmatprep.subr.bf16.mxu0 0
      %9714 = vmatpush1.bf16.msra.mxu0 %v9220
      %9715 = vmatprep.subr.bf16.mxu0 0
      %9716 = vmatpush1.bf16.msra.mxu0 %v9221
      %9717 = vmatprep.subr.bf16.mxu0 0
      %9718 = vmatpush1.bf16.msra.mxu0 %v9222
      %9719 = vmatprep.subr.bf16.mxu0 0
      %9720 = vmatpush1.bf16.msra.mxu0 %v9223
      %9721 = vmatprep.subr.bf16.mxu0 0
      %9722 = vmatpush1.bf16.msra.mxu0 %v9224
      %9723 = vmatprep.subr.bf16.mxu0 0
      %9724 = vmatpush1.bf16.msra.mxu0 %v9225
      %9725 = vmatprep.subr.bf16.mxu0 0
      %9726 = vmatpush1.bf16.msra.mxu0 %v9226
      %9727 = vmatprep.mubr.bf16.mxu0 %v8213
      %9728 = vmatmul.mubr.bf16.gmra.mrb[0].mxu0 %v8212
      %v9729 = vpop.f32.mrb[0].mxu0
      %v9730 = vadd.f32 %v9665, %v9729
      %v9731 = vpop.f32.mrb[0].mxu0
      %v9732 = vpop.f32.mrb[0].mxu0
      %v9733 = vadd.f32 %v9668, %v9732
      %v9734 = vpop.f32.mrb[0].mxu0
      %9735 = vmatprep.mubr.bf16.mxu0 %v8231
      %9736 = vmatmul.mubr.bf16.gmra.mrb[0].mxu0 %v8230
      %v9737 = vpop.f32.mrb[0].mxu0
      %v9738 = vadd.f32 %v9673, %v9737
      %v9739 = vpop.f32.mrb[0].mxu0
      %v9740 = vpop.f32.mrb[0].mxu0
      %v9741 = vadd.f32 %v9676, %v9740
      %v9742 = vpop.f32.mrb[0].mxu0
      %9743 = vmatprep.mubr.bf16.mxu0 %v8249
      %9744 = vmatmul.mubr.bf16.gmra.mrb[0].mxu0 %v8248
      %v9745 = vpop.f32.mrb[0].mxu0
      %v9746 = vadd.f32 %v9681, %v9745
      %v9747 = vpop.f32.mrb[0].mxu0
      %v9748 = vpop.f32.mrb[0].mxu0
      %v9749 = vadd.f32 %v9684, %v9748
      %v9750 = vpop.f32.mrb[0].mxu0
      %9751 = vmatprep.mubr.bf16.mxu0 %v8267
      %9752 = vmatmul.mubr.bf16.gmra.mrb[0].mxu0 %v8266
      %v9753 = vpop.f32.mrb[0].mxu0
      %v9754 = vadd.f32 %v9689, %v9753
      %v9755 = vpop.f32.mrb[0].mxu0
      %v9756 = vpop.f32.mrb[0].mxu0
      %v9757 = vadd.f32 %v9692, %v9756
      %v9758 = vpop.f32.mrb[0].mxu0
      %9759 = vdwg.mxu0
      %9760 = vmatprep.subr.bf16.mxu0 0
      %9761 = vmatpush1.bf16.msra.mxu0 %v9227
      %9762 = vmatprep.subr.bf16.mxu0 0
      %9763 = vmatpush1.bf16.msra.mxu0 %v9228
      %9764 = vmatprep.subr.bf16.mxu0 0
      %9765 = vmatpush1.bf16.msra.mxu0 %v9229
      %9766 = vmatprep.subr.bf16.mxu0 0
      %9767 = vmatpush1.bf16.msra.mxu0 %v9230
      %9768 = vmatprep.subr.bf16.mxu0 0
      %9769 = vmatpush1.bf16.msra.mxu0 %v9231
      %9770 = vmatprep.subr.bf16.mxu0 0
      %9771 = vmatpush1.bf16.msra.mxu0 %v9232
      %9772 = vmatprep.subr.bf16.mxu0 0
      %9773 = vmatpush1.bf16.msra.mxu0 %v9233
      %9774 = vmatprep.subr.bf16.mxu0 0
      %9775 = vmatpush1.bf16.msra.mxu0 %v9234
      %9776 = vmatprep.subr.bf16.mxu0 0
      %9777 = vmatpush1.bf16.msra.mxu0 %v9235
      %9778 = vmatprep.subr.bf16.mxu0 0
      %9779 = vmatpush1.bf16.msra.mxu0 %v9236
      %9780 = vmatprep.subr.bf16.mxu0 0
      %9781 = vmatpush1.bf16.msra.mxu0 %v9237
      %9782 = vmatprep.subr.bf16.mxu0 0
      %9783 = vmatpush1.bf16.msra.mxu0 %v9238
      %9784 = vmatprep.subr.bf16.mxu0 0
      %9785 = vmatpush1.bf16.msra.mxu0 %v9239
      %9786 = vmatprep.subr.bf16.mxu0 0
      %9787 = vmatpush1.bf16.msra.mxu0 %v9240
      %9788 = vmatprep.subr.bf16.mxu0 0
      %9789 = vmatpush1.bf16.msra.mxu0 %v9241
      %9790 = vmatprep.subr.bf16.mxu0 0
      %9791 = vmatpush1.bf16.msra.mxu0 %v9242
      %9792 = vmatprep.mubr.bf16.mxu0 %v8215
      %9793 = vmatmul.mubr.bf16.gmra.mrb[0].mxu0 %v8214
      %v9794 = vpop.f32.mrb[0].mxu0
      %v9795 = vadd.f32 %v9730, %v9794
      %v9796 = vpop.f32.mrb[0].mxu0
      %v9797 = vpop.f32.mrb[0].mxu0
      %v9798 = vadd.f32 %v9733, %v9797
      %v9799 = vpop.f32.mrb[0].mxu0
      %9800 = vmatprep.mubr.bf16.mxu0 %v8233
      %9801 = vmatmul.mubr.bf16.gmra.mrb[0].mxu0 %v8232
      %v9802 = vpop.f32.mrb[0].mxu0
      %v9803 = vadd.f32 %v9738, %v9802
      %v9804 = vpop.f32.mrb[0].mxu0
      %v9805 = vpop.f32.mrb[0].mxu0
      %v9806 = vadd.f32 %v9741, %v9805
      %v9807 = vpop.f32.mrb[0].mxu0
      %9808 = vmatprep.mubr.bf16.mxu0 %v8251
      %9809 = vmatmul.mubr.bf16.gmra.mrb[0].mxu0 %v8250
      %v9810 = vpop.f32.mrb[0].mxu0
      %v9811 = vadd.f32 %v9746, %v9810
      %v9812 = vpop.f32.mrb[0].mxu0
      %v9813 = vpop.f32.mrb[0].mxu0
      %v9814 = vadd.f32 %v9749, %v9813
      %v9815 = vpop.f32.mrb[0].mxu0
      %9816 = vmatprep.mubr.bf16.mxu0 %v8269
      %9817 = vmatmul.mubr.bf16.gmra.mrb[0].mxu0 %v8268
      %v9818 = vpop.f32.mrb[0].mxu0
      %v9819 = vadd.f32 %v9754, %v9818
      %v9820 = vpop.f32.mrb[0].mxu0
      %v9821 = vpop.f32.mrb[0].mxu0
      %v9822 = vadd.f32 %v9757, %v9821
      %v9823 = vpop.f32.mrb[0].mxu0
      %9824 = vdwg.mxu0
      %9825 = vmatprep.subr.bf16.mxu0 0
      %9826 = vmatpush1.bf16.msra.mxu0 %v9243
      %9827 = vmatprep.subr.bf16.mxu0 0
      %9828 = vmatpush1.bf16.msra.mxu0 %v9244
      %9829 = vmatprep.subr.bf16.mxu0 0
      %9830 = vmatpush1.bf16.msra.mxu0 %v9245
      %9831 = vmatprep.subr.bf16.mxu0 0
      %9832 = vmatpush1.bf16.msra.mxu0 %v9246
      %9833 = vmatprep.subr.bf16.mxu0 0
      %9834 = vmatpush1.bf16.msra.mxu0 %v9247
      %9835 = vmatprep.subr.bf16.mxu0 0
      %9836 = vmatpush1.bf16.msra.mxu0 %v9248
      %9837 = vmatprep.subr.bf16.mxu0 0
      %9838 = vmatpush1.bf16.msra.mxu0 %v9249
      %9839 = vmatprep.subr.bf16.mxu0 0
      %9840 = vmatpush1.bf16.msra.mxu0 %v9250
      %9841 = vmatprep.subr.bf16.mxu0 0
      %9842 = vmatpush1.bf16.msra.mxu0 %v9251
      %9843 = vmatprep.subr.bf16.mxu0 0
      %9844 = vmatpush1.bf16.msra.mxu0 %v9252
      %9845 = vmatprep.subr.bf16.mxu0 0
      %9846 = vmatpush1.bf16.msra.mxu0 %v9253
      %9847 = vmatprep.subr.bf16.mxu0 0
      %9848 = vmatpush1.bf16.msra.mxu0 %v9254
      %9849 = vmatprep.subr.bf16.mxu0 0
      %9850 = vmatpush1.bf16.msra.mxu0 %v9255
      %9851 = vmatprep.subr.bf16.mxu0 0
      %9852 = vmatpush1.bf16.msra.mxu0 %v9256
      %9853 = vmatprep.subr.bf16.mxu0 0
      %9854 = vmatpush1.bf16.msra.mxu0 %v9257
      %9855 = vmatprep.subr.bf16.mxu0 0
      %9856 = vmatpush1.bf16.msra.mxu0 %v9258
      %9857 = vmatprep.mubr.bf16.mxu0 %v8217
      %9858 = vmatmul.mubr.bf16.gmra.mrb[0].mxu0 %v8216
      %v9859 = vpop.f32.mrb[0].mxu0
      %v9860 = vadd.f32 %v9795, %v9859
      %v9861 = vpop.f32.mrb[0].mxu0
      %v9862 = vpop.f32.mrb[0].mxu0
      %v9863 = vadd.f32 %v9798, %v9862
      %v9864 = vpop.f32.mrb[0].mxu0
      %9865 = vmatprep.mubr.bf16.mxu0 %v8235
      %9866 = vmatmul.mubr.bf16.gmra.mrb[0].mxu0 %v8234
      %v9867 = vpop.f32.mrb[0].mxu0
      %v9868 = vadd.f32 %v9803, %v9867
      %v9869 = vpop.f32.mrb[0].mxu0
      %v9870 = vpop.f32.mrb[0].mxu0
      %v9871 = vadd.f32 %v9806, %v9870
      %v9872 = vpop.f32.mrb[0].mxu0
      %9873 = vmatprep.mubr.bf16.mxu0 %v8253
      %9874 = vmatmul.mubr.bf16.gmra.mrb[0].mxu0 %v8252
      %v9875 = vpop.f32.mrb[0].mxu0
      %v9876 = vadd.f32 %v9811, %v9875
      %v9877 = vpop.f32.mrb[0].mxu0
      %v9878 = vpop.f32.mrb[0].mxu0
      %v9879 = vadd.f32 %v9814, %v9878
      %v9880 = vpop.f32.mrb[0].mxu0
      %9881 = vmatprep.mubr.bf16.mxu0 %v8271
      %9882 = vmatmul.mubr.bf16.gmra.mrb[0].mxu0 %v8270
      %v9883 = vpop.f32.mrb[0].mxu0
      %v9884 = vadd.f32 %v9819, %v9883
      %v9885 = vpop.f32.mrb[0].mxu0
      %v9886 = vpop.f32.mrb[0].mxu0
      %v9887 = vadd.f32 %v9822, %v9886
      %v9888 = vpop.f32.mrb[0].mxu0
      %9889 = vdwg.mxu0
      %9890 = vmatprep.subr.bf16.mxu0 0
      %9891 = vmatpush1.bf16.msra.mxu0 %v9259
      %9892 = vmatprep.subr.bf16.mxu0 0
      %9893 = vmatpush1.bf16.msra.mxu0 %v9260
      %9894 = vmatprep.subr.bf16.mxu0 0
      %9895 = vmatpush1.bf16.msra.mxu0 %v9261
      %9896 = vmatprep.subr.bf16.mxu0 0
      %9897 = vmatpush1.bf16.msra.mxu0 %v9262
      %9898 = vmatprep.subr.bf16.mxu0 0
      %9899 = vmatpush1.bf16.msra.mxu0 %v9263
      %9900 = vmatprep.subr.bf16.mxu0 0
      %9901 = vmatpush1.bf16.msra.mxu0 %v9264
      %9902 = vmatprep.subr.bf16.mxu0 0
      %9903 = vmatpush1.bf16.msra.mxu0 %v9265
      %9904 = vmatprep.subr.bf16.mxu0 0
      %9905 = vmatpush1.bf16.msra.mxu0 %v9266
      %9906 = vmatprep.subr.bf16.mxu0 0
      %9907 = vmatpush1.bf16.msra.mxu0 %v9267
      %9908 = vmatprep.subr.bf16.mxu0 0
      %9909 = vmatpush1.bf16.msra.mxu0 %v9268
      %9910 = vmatprep.subr.bf16.mxu0 0
      %9911 = vmatpush1.bf16.msra.mxu0 %v9269
      %9912 = vmatprep.subr.bf16.mxu0 0
      %9913 = vmatpush1.bf16.msra.mxu0 %v9270
      %9914 = vmatprep.subr.bf16.mxu0 0
      %9915 = vmatpush1.bf16.msra.mxu0 %v9271
      %9916 = vmatprep.subr.bf16.mxu0 0
      %9917 = vmatpush1.bf16.msra.mxu0 %v9272
      %9918 = vmatprep.subr.bf16.mxu0 0
      %9919 = vmatpush1.bf16.msra.mxu0 %v9273
      %9920 = vmatprep.subr.bf16.mxu0 0
      %9921 = vmatpush1.bf16.msra.mxu0 %v9274
      %9922 = vmatprep.mubr.bf16.mxu0 %v8219
      %9923 = vmatmul.mubr.bf16.gmra.mrb[0].mxu0 %v8218
      %v9924 = vpop.f32.mrb[0].mxu0
      %v9925 = vadd.f32 %v9860, %v9924
      %v9926 = vpop.f32.mrb[0].mxu0
      %v9927 = vpop.f32.mrb[0].mxu0
      %v9928 = vadd.f32 %v9863, %v9927
      %v9929 = vpop.f32.mrb[0].mxu0
      %9930 = vmatprep.mubr.bf16.mxu0 %v8237
      %9931 = vmatmul.mubr.bf16.gmra.mrb[0].mxu0 %v8236
      %v9932 = vpop.f32.mrb[0].mxu0
      %v9933 = vadd.f32 %v9868, %v9932
      %v9934 = vpop.f32.mrb[0].mxu0
      %v9935 = vpop.f32.mrb[0].mxu0
      %v9936 = vadd.f32 %v9871, %v9935
      %v9937 = vpop.f32.mrb[0].mxu0
      %9938 = vmatprep.mubr.bf16.mxu0 %v8255
      %9939 = vmatmul.mubr.bf16.gmra.mrb[0].mxu0 %v8254
      %v9940 = vpop.f32.mrb[0].mxu0
      %v9941 = vadd.f32 %v9876, %v9940
      %v9942 = vpop.f32.mrb[0].mxu0
      %v9943 = vpop.f32.mrb[0].mxu0
      %v9944 = vadd.f32 %v9879, %v9943
      %v9945 = vpop.f32.mrb[0].mxu0
      %9946 = vmatprep.mubr.bf16.mxu0 %v8273
      %9947 = vmatmul.mubr.bf16.gmra.mrb[0].mxu0 %v8272
      %v9948 = vpop.f32.mrb[0].mxu0
      %v9949 = vadd.f32 %v9884, %v9948
      %v9950 = vpop.f32.mrb[0].mxu0
      %v9951 = vpop.f32.mrb[0].mxu0
      %v9952 = vadd.f32 %v9887, %v9951
      %v9953 = vpop.f32.mrb[0].mxu0
      %9954 = vdwg.mxu0
      %9955 = vmatprep.subr.bf16.mxu0 0
      %9956 = vmatpush1.bf16.msra.mxu0 %v9275
      %9957 = vmatprep.subr.bf16.mxu0 0
      %9958 = vmatpush1.bf16.msra.mxu0 %v9276
      %9959 = vmatprep.subr.bf16.mxu0 0
      %9960 = vmatpush1.bf16.msra.mxu0 %v9277
      %9961 = vmatprep.subr.bf16.mxu0 0
      %9962 = vmatpush1.bf16.msra.mxu0 %v9278
      %9963 = vmatprep.subr.bf16.mxu0 0
      %9964 = vmatpush1.bf16.msra.mxu0 %v9279
      %9965 = vmatprep.subr.bf16.mxu0 0
      %9966 = vmatpush1.bf16.msra.mxu0 %v9280
      %9967 = vmatprep.subr.bf16.mxu0 0
      %9968 = vmatpush1.bf16.msra.mxu0 %v9281
      %9969 = vmatprep.subr.bf16.mxu0 0
      %9970 = vmatpush1.bf16.msra.mxu0 %v9282
      %9971 = vmatprep.subr.bf16.mxu0 0
      %9972 = vmatpush1.bf16.msra.mxu0 %v9283
      %9973 = vmatprep.subr.bf16.mxu0 0
      %9974 = vmatpush1.bf16.msra.mxu0 %v9284
      %9975 = vmatprep.subr.bf16.mxu0 0
      %9976 = vmatpush1.bf16.msra.mxu0 %v9285
      %9977 = vmatprep.subr.bf16.mxu0 0
      %9978 = vmatpush1.bf16.msra.mxu0 %v9286
      %9979 = vmatprep.subr.bf16.mxu0 0
      %9980 = vmatpush1.bf16.msra.mxu0 %v9287
      %9981 = vmatprep.subr.bf16.mxu0 0
      %9982 = vmatpush1.bf16.msra.mxu0 %v9288
      %9983 = vmatprep.subr.bf16.mxu0 0
      %9984 = vmatpush1.bf16.msra.mxu0 %v9289
      %9985 = vmatprep.subr.bf16.mxu0 0
      %9986 = vmatpush1.bf16.msra.mxu0 %v9290
      %9987 = vmatprep.mubr.bf16.mxu0 %v8221
      %9988 = vmatmul.mubr.bf16.gmra.mrb[0].mxu0 %v8220
      %v9989 = vpop.f32.mrb[0].mxu0
      %v9990 = vadd.f32 %v9925, %v9989
      %v9991 = vpop.f32.mrb[0].mxu0
      %v9992 = vpop.f32.mrb[0].mxu0
      %v9993 = vadd.f32 %v9928, %v9992
      %v9994 = vpop.f32.mrb[0].mxu0
      %9995 = vmatprep.mubr.bf16.mxu0 %v8239
      %9996 = vmatmul.mubr.bf16.gmra.mrb[0].mxu0 %v8238
      %v9997 = vpop.f32.mrb[0].mxu0
      %v9998 = vadd.f32 %v9933, %v9997
      %v9999 = vpop.f32.mrb[0].mxu0
      %v10000 = vpop.f32.mrb[0].mxu0
      %v10001 = vadd.f32 %v9936, %v10000
      %v10002 = vpop.f32.mrb[0].mxu0
      %10003 = vmatprep.mubr.bf16.mxu0 %v8257
      %10004 = vmatmul.mubr.bf16.gmra.mrb[0].mxu0 %v8256
      %v10005 = vpop.f32.mrb[0].mxu0
      %v10006 = vadd.f32 %v9941, %v10005
      %v10007 = vpop.f32.mrb[0].mxu0
      %v10008 = vpop.f32.mrb[0].mxu0
      %v10009 = vadd.f32 %v9944, %v10008
      %v10010 = vpop.f32.mrb[0].mxu0
      %10011 = vmatprep.mubr.bf16.mxu0 %v8275
      %10012 = vmatmul.mubr.bf16.gmra.mrb[0].mxu0 %v8274
      %v10013 = vpop.f32.mrb[0].mxu0
      %v10014 = vadd.f32 %v9949, %v10013
      %v10015 = vpop.f32.mrb[0].mxu0
      %v10016 = vpop.f32.mrb[0].mxu0
      %v10017 = vadd.f32 %v9952, %v10016
      %v10018 = vpop.f32.mrb[0].mxu0
      %10019 = vdwg.mxu0
      %v10020 = vxor.u32 %v9990, 2147483648
      %v10021 = vxor.u32 %v9993, 2147483648
      %v10022 = vxor.u32 %v9998, 2147483648
      %v10023 = vxor.u32 %v10001, 2147483648
      %v10024 = vxor.u32 %v10006, 2147483648
      %v10025 = vxor.u32 %v10009, 2147483648
      %v10026 = vxor.u32 %v10014, 2147483648
      %v10027 = vxor.u32 %v10017, 2147483648
      %v10028 = vmul.f32 %v10020, 1.442695
      %v10029 = vpow.pop %v10028
      %v10030 = vmul.f32 %v10021, 1.442695
      %v10031 = vpow.pop %v10030
      %v10032 = vmul.f32 %v10022, 1.442695
      %v10033 = vpow.pop %v10032
      %v10034 = vmul.f32 %v10023, 1.442695
      %v10035 = vpow.pop %v10034
      %v10036 = vmul.f32 %v10024, 1.442695
      %v10037 = vpow.pop %v10036
      %v10038 = vmul.f32 %v10025, 1.442695
      %v10039 = vpow.pop %v10038
      %v10040 = vmul.f32 %v10026, 1.442695
      %v10041 = vpow.pop %v10040
      %v10042 = vmul.f32 %v10027, 1.442695
      %v10043 = vpow.pop %v10042
      %v10044 = vadd.f32 %v10029, 1.0
      %v10045 = vadd.f32 %v10031, 1.0
      %v10046 = vadd.f32 %v10033, 1.0
      %v10047 = vadd.f32 %v10035, 1.0
      %v10048 = vadd.f32 %v10037, 1.0
      %v10049 = vadd.f32 %v10039, 1.0
      %v10050 = vadd.f32 %v10041, 1.0
      %v10051 = vadd.f32 %v10043, 1.0
      %v10052 = vrcp.pop %v10044
      %v10053 = vmul.f32 1.0, %v10052
      %v10054 = vrcp.pop %v10045
      %v10055 = vmul.f32 1.0, %v10054
      %v10056 = vrcp.pop %v10046
      %v10057 = vmul.f32 1.0, %v10056
      %v10058 = vrcp.pop %v10047
      %v10059 = vmul.f32 1.0, %v10058
      %v10060 = vrcp.pop %v10048
      %v10061 = vmul.f32 1.0, %v10060
      %v10062 = vrcp.pop %v10049
      %v10063 = vmul.f32 1.0, %v10062
      %v10064 = vrcp.pop %v10050
      %v10065 = vmul.f32 1.0, %v10064
      %v10066 = vrcp.pop %v10051
      %v10067 = vmul.f32 1.0, %v10066
      %10068 = vst [vmem:[%s386] sm:$0xff] %v10053
      %10069 = vst [vmem:[%s386 + $0x8] sm:$0xff] %v10055
      %10070 = vst [vmem:[%s386 + $0x10] sm:$0xff] %v10057
      %10071 = vst [vmem:[%s386 + $0x18] sm:$0xff] %v10059
      %10072 = vst [vmem:[%s386 + $0x20] sm:$0xff] %v10061
      %10073 = vst [vmem:[%s386 + $0x28] sm:$0xff] %v10063
      %10074 = vst [vmem:[%s386 + $0x30] sm:$0xff] %v10065
      %10075 = vst [vmem:[%s386 + $0x38] sm:$0xff] %v10067
      %p10076 = scmp.lt.s32.totalorder %s22, 1
      %s10077 = scalar_select %p10076, %s22, 1
      %s10078 = smul.addr %s10077, 8
      %s10079 = smul.addr %s10078, 8
      %s10080 = scalar_lea.vmem %s11, %s10079
      // Predicated region
      $region65: #{_lambda_.1} parent=63 // pred_check
        %p10081 = pneg %p276
      $region66: #{_lambda_.1} parent=63 // pred_check_branch
        %10083 = sbr.rel (%p10081) target = $region68
      $region67: #{_lambda_.1} parent=63 // pred_region
        _
      $region68: #{_lambda_.1} parent=63 // pred_fallthru
        _
    $region64: #{_lambda_.1} parent=5 // pred_fallthru
      _
    %p10084 = scmp.le.s32.totalorder 2, %s17
    // Predicated region
    $region69: #{_lambda_.1} parent=5 // pred_check
      %p10085 = pneg %p10084
    $region70: #{_lambda_.1} parent=5 // pred_check_branch
      %10087 = sbr.rel (%p10085) target = $region72
    $region71: #{_lambda_.1} parent=5 // pred_region
      %s10088 = ssub.s32 %s17, 2
      // Predicated region
      $region73: #{_lambda_.1} parent=71 // pred_check
        %p10089 = pneg %p282
      $region74: #{_lambda_.1} parent=71 // pred_check_branch
        %10091 = sbr.rel (%p10089) target = $region76
      $region75: #{_lambda_.1} parent=71 // pred_region
        %p10092 = scmp.lt.s32.totalorder %s23, 1
        %s10093 = scalar_select %p10092, %s23, 1
        %s10094 = smul.addr %s10093, 8
        %s10095 = smul.addr %s10094, 8
        %s10096 = scalar_lea.vmem %s11, %s10095
      $region76: #{_lambda_.1} parent=71 // pred_fallthru
        _
    $region72: #{_lambda_.1} parent=5 // pred_fallthru
      _
  $region6: #{_lambda_.1} parent=0 // loop_footer
    %s21 = sadd.s32 1, %s17
  $region7: #{_lambda_.1} parent=0 // loop_footer_branch
    %16 = sbr.rel target = $region3
  $region8: #{_lambda_.1} parent=0 // loop_exit
    _

</llo_original>
